<compile_context>
chip_gen: v7x
topology: tpu7x:2x2x1
jax: 0.10.0
libtpu: 0.0.40
codegen_flags: <defaults>
</compile_context>

<pallas_src>
import math

import jax
import jax.numpy as jnp
from jax.experimental import pallas as pl
from jax.experimental.pallas import tpu as pltpu

# ---- hyperparameters matching the PyTorch module defaults ----
VOCAB = 50
EMBED = 128                 # embed_dim default
NHEAD = 8                   # nn.TransformerEncoderLayer(nhead=8)
HEAD = EMBED // NHEAD       # 16
FF = 2048                   # TransformerEncoderLayer default dim_feedforward
NLAYERS = 2
MAX_LEN = 64
NUM_CLASSES = 2
LN_EPS = 1e-5


# ------------------------------------------------------------- shared math --

def _layer_norm(x, gamma, beta):
    mean = jnp.mean(x, axis=-1, keepdims=True)
    var = jnp.mean(jnp.square(x - mean), axis=-1, keepdims=True)
    return (x - mean) * jax.lax.rsqrt(var + LN_EPS) * gamma + beta


def _matmul_t(x, w):
    """x: (M, K) @ w: (N, K)^T -> (M, N); f32 accumulation on the MXU."""
    return jax.lax.dot_general(x, w, (((1,), (1,)), ((), ())),
                               preferred_element_type=jnp.float32)


# ---------------------------------------------------- kernel-side encoder ---

def _encoder_layer_kernel(x, tb, s, qkv_w, qkv_b, out_w, out_b,
                          ln1_g, ln1_b, ln2_g, ln2_b,
                          ff1_w, ff1_b, ff2_w, ff2_b):
    """One post-norm encoder layer. x: (TB*S, E) f32; weights bf16, biases f32.
    The 1/sqrt(HEAD) scale is pre-folded into the Q rows of qkv_w / qkv_b."""
    r = tb * s
    xb = x.astype(jnp.bfloat16)
    qkv = _matmul_t(xb, qkv_w) + qkv_b                       # (R, 3E) f32
    qkvb = qkv.astype(jnp.bfloat16)

    attn = jnp.zeros((r, EMBED), jnp.float32)
    for h in range(NHEAD):                                   # static unroll
        lo = h * HEAD
        q_h = qkvb[:, lo:lo + HEAD].reshape(tb, s, HEAD)
        k_h = qkvb[:, EMBED + lo:EMBED + lo + HEAD].reshape(tb, s, HEAD)
        v_h = qkvb[:, 2 * EMBED + lo:2 * EMBED + lo + HEAD].reshape(tb, s, HEAD)

        scores = jax.lax.dot_general(                        # (TB, S, S) f32
            q_h, k_h, (((2,), (2,)), ((0,), (0,))),
            preferred_element_type=jnp.float32)
        scores = scores - jnp.max(scores, axis=-1, keepdims=True)
        p = jnp.exp(scores)
        p = p * pl.reciprocal(jnp.sum(p, axis=-1, keepdims=True), approx=True)

        o_h = jax.lax.dot_general(                           # (TB, S, HEAD)
            p.astype(jnp.bfloat16), v_h, (((2,), (1,)), ((0,), (0,))),
            preferred_element_type=jnp.float32)
        o_hb = o_h.reshape(r, HEAD).astype(jnp.bfloat16)
        # per-head slice of the output projection (no concat needed):
        attn = attn + _matmul_t(o_hb, out_w[:, lo:lo + HEAD])  # (R, E) f32
    attn = attn + out_b

    x = _layer_norm(x + attn, ln1_g, ln1_b)                  # f32

    h1 = jnp.maximum(_matmul_t(x.astype(jnp.bfloat16), ff1_w) + ff1_b, 0.0)
    h2 = _matmul_t(h1.astype(jnp.bfloat16), ff2_w) + ff2_b   # (R, E) f32
    return _layer_norm(x + h2, ln2_g, ln2_b)


# ----------------------------------------------------------- Pallas kernel --

def transformer_kernel(x_ref,
                       qkv_w_ref, qkv_b_ref, out_w_ref, out_b_ref,
                       ln1_g_ref, ln1_b_ref, ln2_g_ref, ln2_b_ref,
                       ff1_w_ref, ff1_b_ref, ff2_w_ref, ff2_b_ref,
                       cls_w_ref, cls_b_ref,
                       o_ref):
    tb, s, e = x_ref.shape
    x = x_ref[...].reshape(tb * s, e)                        # (R, E) f32

    qkv_b = qkv_b_ref[...]
    out_b = out_b_ref[...]
    ln1_g = ln1_g_ref[...]
    ln1_b = ln1_b_ref[...]
    ln2_g = ln2_g_ref[...]
    ln2_b = ln2_b_ref[...]
    ff1_b = ff1_b_ref[...]
    ff2_b = ff2_b_ref[...]

    for l in range(NLAYERS):                                 # unrolled (static)
        x = _encoder_layer_kernel(
            x, tb, s,
            qkv_w_ref[l], qkv_b[l:l + 1],
            out_w_ref[l], out_b[l:l + 1],
            ln1_g[l:l + 1], ln1_b[l:l + 1],
            ln2_g[l:l + 1], ln2_b[l:l + 1],
            ff1_w_ref[l], ff1_b[l:l + 1],
            ff2_w_ref[l], ff2_b[l:l + 1])

    pooled = jnp.sum(x.reshape(tb, s, e), axis=1) * (1.0 / math.sqrt(s))
    logits = _matmul_t(pooled.astype(jnp.bfloat16), cls_w_ref[...]) + cls_b_ref[...]
    o_ref[...] = logits                                      # static full-block store


WEIGHT_NAMES = ["qkv_w", "qkv_b", "out_w", "out_b",
                "ln1_g", "ln1_b", "ln2_g", "ln2_b",
                "ff1_w", "ff1_b", "ff2_w", "ff2_b",
                "cls_w", "cls_b"]


def _choose_tiling(B, S):
    """Pick sequences-per-grid-step TB and padded batch Bp (TB*S ~ 256 rows)."""
    cap = max(1, 256 // S)
    if B <= cap:
        return B, B                      # single grid step, TB == full batch
    tb = max(8, (cap // 8) * 8)          # TB multiple of 8 -> valid (TB, 2) out block
    bp = ((B + tb - 1) // tb) * tb
    return tb, bp


def transformer_classifier_forward(tokens, prepped):
    B, S = tokens.shape
    pe = sinusoidal_pos_encoding(MAX_LEN, EMBED)
    # glue: embedding gather + positional encoding add (kept f32)
    x = prepped["emb"][tokens] + pe[:S][None, :, :]          # (B, S, E) f32

    TB, Bp = _choose_tiling(B, S)
    if Bp > B:
        x = jnp.pad(x, ((0, Bp - B), (0, 0), (0, 0)))

    weights = [prepped[n] for n in WEIGHT_NAMES]

    def full_spec(a):
        nd = a.ndim
        return pl.BlockSpec(a.shape, lambda i, _nd=nd: (0,) * _nd)

    grid_spec = pltpu.PrefetchScalarGridSpec(
        num_scalar_prefetch=0,
        grid=(Bp // TB,),
        in_specs=[pl.BlockSpec((TB, S, EMBED), lambda i: (i, 0, 0))]
                 + [full_spec(w) for w in weights],
        out_specs=pl.BlockSpec((TB, NUM_CLASSES), lambda i: (i, 0)),
    )

    out = pl.pallas_call(
        transformer_kernel,
        out_shape=jax.ShapeDtypeStruct((Bp, NUM_CLASSES), jnp.float32),
        grid_spec=grid_spec,
        compiler_params=pltpu.CompilerParams(
            dimension_semantics=("parallel",),
            vmem_limit_bytes=32 * 1024 * 1024),
    )(x, *weights)
    return out[:B]


# ----------------------------------------------------------- parameters -----

def sinusoidal_pos_encoding(max_len, embed_dim):
    pos = jnp.arange(max_len, dtype=jnp.float32)[:, None]
    rates = jnp.exp(jnp.arange(0, embed_dim, 2, dtype=jnp.float32)
                    * (-math.log(10000.0) / embed_dim))
    sin = jnp.sin(pos * rates)
    cos = jnp.cos(pos * rates)
    # even indices = sin, odd indices = cos (matches the torch code)
    return jnp.stack([sin, cos], axis=-1).reshape(max_len, embed_dim)


def init_params(key):
    ks = jax.random.split(key, 11)

    def nrm(k, shape, s=0.02):
        return jax.random.normal(k, shape, dtype=jnp.float32) * s

    return dict(
        emb=nrm(ks[0], (VOCAB, EMBED), 1.0),
        qkv_w=nrm(ks[1], (NLAYERS, 3 * EMBED, EMBED)),
        qkv_b=nrm(ks[2], (NLAYERS, 3 * EMBED)),
        out_w=nrm(ks[3], (NLAYERS, EMBED, EMBED)),
        out_b=nrm(ks[4], (NLAYERS, EMBED)),
        ln1_g=jnp.ones((NLAYERS, EMBED), jnp.float32),
        ln1_b=jnp.zeros((NLAYERS, EMBED), jnp.float32),
        ln2_g=jnp.ones((NLAYERS, EMBED), jnp.float32),
        ln2_b=jnp.zeros((NLAYERS, EMBED), jnp.float32),
        ff1_w=nrm(ks[5], (NLAYERS, FF, EMBED)),
        ff1_b=nrm(ks[6], (NLAYERS, FF)),
        ff2_w=nrm(ks[7], (NLAYERS, EMBED, FF)),
        ff2_b=nrm(ks[8], (NLAYERS, EMBED)),
        cls_w=nrm(ks[9], (NUM_CLASSES, EMBED)),
        cls_b=nrm(ks[10], (1, NUM_CLASSES)),
    )


def prepare_params(params):
    """One-time weight transform: fold 1/sqrt(HEAD) into the Q rows of the QKV
    projection and cast matmul weights to bf16 (biases / LN params stay f32)."""
    scale = 1.0 / math.sqrt(HEAD)
    qkv_w = params["qkv_w"].at[:, :EMBED, :].multiply(scale)
    qkv_b = params["qkv_b"].at[:, :EMBED].multiply(scale)
    prepped = dict(params)
    prepped["qkv_w"] = qkv_w.astype(jnp.bfloat16)
    prepped["qkv_b"] = qkv_b
    for name in ("out_w", "ff1_w", "ff2_w", "cls_w"):
        prepped[name] = params[name].astype(jnp.bfloat16)
    return prepped


# ----------------------------------------------------------- reference ------

def _linear_ref(x, w, b):
    return jnp.dot(x, w.T, preferred_element_type=jnp.float32) + b


def _encoder_layer_ref(x, qkv_w, qkv_b, out_w, out_b,
                       ln1_g, ln1_b, ln2_g, ln2_b,
                       ff1_w, ff1_b, ff2_w, ff2_b):
    qkv = _linear_ref(x, qkv_w, qkv_b)
    q = qkv[:, :EMBED]
    k = qkv[:, EMBED:2 * EMBED]
    v = qkv[:, 2 * EMBED:]
    scale = 1.0 / math.sqrt(HEAD)
    heads = []
    for h in range(NHEAD):
        sl = slice(h * HEAD, (h + 1) * HEAD)
        s = (q[:, sl] * scale) @ k[:, sl].T
        s = s - jnp.max(s, axis=-1, keepdims=True)
        p = jnp.exp(s)
        p = p / jnp.sum(p, axis=-1, keepdims=True)
        heads.append(p @ v[:, sl])
    attn = _linear_ref(jnp.concatenate(heads, axis=-1), out_w, out_b)
    x = _layer_norm(x + attn, ln1_g, ln1_b)
    h1 = jnp.maximum(_linear_ref(x, ff1_w, ff1_b), 0.0)
    h2 = _linear_ref(h1, ff2_w, ff2_b)
    return _layer_norm(x + h2, ln2_g, ln2_b)


def reference_forward(tokens, params):
    B, S = tokens.shape
    pe = sinusoidal_pos_encoding(MAX_LEN, EMBED)
    x = params["emb"][tokens] + pe[:S][None, :, :]

    def one(xb):
        for l in range(NLAYERS):
            xb = _encoder_layer_ref(
                xb,
                params["qkv_w"][l], params["qkv_b"][l:l + 1],
                params["out_w"][l], params["out_b"][l:l + 1],
                params["ln1_g"][l:l + 1], params["ln1_b"][l:l + 1],
                params["ln2_g"][l:l + 1], params["ln2_b"][l:l + 1],
                params["ff1_w"][l], params["ff1_b"][l:l + 1],
                params["ff2_w"][l], params["ff2_b"][l:l + 1])
        pooled = jnp.sum(xb, axis=0, keepdims=True) / math.sqrt(S)
        return _linear_ref(pooled, params["cls_w"], params["cls_b"])[0]

    return jax.vmap(one)(x)


# ----------------------------------------------------------------- main -----

if __name__ == "__main__":
    key = jax.random.PRNGKey(0)
    pkey, tkey = jax.random.split(key)
    params = init_params(pkey)
    prepped = prepare_params(params)     # one-time weight prep (bf16 + Q-scale fold)

    B, S = 2, 8
    tokens = jax.random.randint(tkey, (B, S), 0, VOCAB)      # int32 token ids

    out = jax.jit(transformer_classifier_forward)(tokens, prepped)
    out = jax.block_until_ready(out)

    with jax.default_matmul_precision("highest"):
        ref = jax.block_until_ready(reference_forward(tokens, params))

    assert out.shape == (B, NUM_CLASSES) and out.dtype == jnp.float32
    assert bool(jnp.all(jnp.isfinite(out)))
    assert bool(jnp.allclose(out, ref, atol=2e-2, rtol=2e-2)), (out, ref)
    # TODO(synk): dropout inside TransformerEncoderLayer is train-time only;
    # kernel implements eval-mode (identity) semantics.
    print("KERNEL_OK")
</pallas_src>

<mosaic_0001>
module attributes {stable_mosaic.version = 11 : i64} {
  func.func @transformer_kernel(%arg0: i32, %arg1: memref<2x8x128xf32, #tpu.memory_space<vmem>>, %arg2: memref<2x384x128xbf16, #tpu.memory_space<vmem>>, %arg3: memref<2x384xf32, #tpu.memory_space<vmem>>, %arg4: memref<2x128x128xbf16, #tpu.memory_space<vmem>>, %arg5: memref<2x128xf32, #tpu.memory_space<vmem>>, %arg6: memref<2x128xf32, #tpu.memory_space<vmem>>, %arg7: memref<2x128xf32, #tpu.memory_space<vmem>>, %arg8: memref<2x128xf32, #tpu.memory_space<vmem>>, %arg9: memref<2x128xf32, #tpu.memory_space<vmem>>, %arg10: memref<2x2048x128xbf16, #tpu.memory_space<vmem>>, %arg11: memref<2x2048xf32, #tpu.memory_space<vmem>>, %arg12: memref<2x128x2048xbf16, #tpu.memory_space<vmem>>, %arg13: memref<2x128xf32, #tpu.memory_space<vmem>>, %arg14: memref<2x128xbf16, #tpu.memory_space<vmem>>, %arg15: memref<1x2xf32, #tpu.memory_space<vmem>>, %arg16: memref<2x2xf32, #tpu.memory_space<vmem>>) attributes {dimension_semantics = [#tpu.dimension_semantics<parallel>], iteration_bounds = array<i64: 1>, scalar_prefetch = 0 : i64, scratch_operands = 0 : i64, tpu.core_type = #tpu.core_type<tc>, window_params = [{transform_indices = @transform_0, window_bounds = array<i64: 2, 8, 128>}, {pipeline_mode = #tpu.pipeline_mode<synchronous>, transform_indices = @transform_1, window_bounds = array<i64: 2, 384, 128>}, {pipeline_mode = #tpu.pipeline_mode<synchronous>, transform_indices = @transform_2, window_bounds = array<i64: 2, 384>}, {pipeline_mode = #tpu.pipeline_mode<synchronous>, transform_indices = @transform_3, window_bounds = array<i64: 2, 128, 128>}, {pipeline_mode = #tpu.pipeline_mode<synchronous>, transform_indices = @transform_4, window_bounds = array<i64: 2, 128>}, {pipeline_mode = #tpu.pipeline_mode<synchronous>, transform_indices = @transform_5, window_bounds = array<i64: 2, 128>}, {pipeline_mode = #tpu.pipeline_mode<synchronous>, transform_indices = @transform_6, window_bounds = array<i64: 2, 128>}, {pipeline_mode = #tpu.pipeline_mode<synchronous>, transform_indices = @transform_7, window_bounds = array<i64: 2, 128>}, {pipeline_mode = #tpu.pipeline_mode<synchronous>, transform_indices = @transform_8, window_bounds = array<i64: 2, 128>}, {pipeline_mode = #tpu.pipeline_mode<synchronous>, transform_indices = @transform_9, window_bounds = array<i64: 2, 2048, 128>}, {pipeline_mode = #tpu.pipeline_mode<synchronous>, transform_indices = @transform_10, window_bounds = array<i64: 2, 2048>}, {pipeline_mode = #tpu.pipeline_mode<synchronous>, transform_indices = @transform_11, window_bounds = array<i64: 2, 128, 2048>}, {pipeline_mode = #tpu.pipeline_mode<synchronous>, transform_indices = @transform_12, window_bounds = array<i64: 2, 128>}, {pipeline_mode = #tpu.pipeline_mode<synchronous>, transform_indices = @transform_13, window_bounds = array<i64: 2, 128>}, {pipeline_mode = #tpu.pipeline_mode<synchronous>, transform_indices = @transform_14, window_bounds = array<i64: 1, 2>}, {transform_indices = @transform_15, window_bounds = array<i64: 2, 2>}]} {
    %c0 = arith.constant 0 : index
    %c0_0 = arith.constant 0 : index
    %c0_1 = arith.constant 0 : index
    %0 = vector.load %arg1[%c0, %c0_0, %c0_1] : memref<2x8x128xf32, #tpu.memory_space<vmem>>, vector<2x8x128xf32>
    %1 = vector.shape_cast %0 : vector<2x8x128xf32> to vector<16x128xf32>
    %c0_2 = arith.constant 0 : index
    %c0_3 = arith.constant 0 : index
    %2 = vector.load %arg3[%c0_2, %c0_3] : memref<2x384xf32, #tpu.memory_space<vmem>>, vector<2x384xf32>
    %c0_4 = arith.constant 0 : index
    %c0_5 = arith.constant 0 : index
    %3 = vector.load %arg5[%c0_4, %c0_5] : memref<2x128xf32, #tpu.memory_space<vmem>>, vector<2x128xf32>
    %c0_6 = arith.constant 0 : index
    %c0_7 = arith.constant 0 : index
    %4 = vector.load %arg6[%c0_6, %c0_7] : memref<2x128xf32, #tpu.memory_space<vmem>>, vector<2x128xf32>
    %c0_8 = arith.constant 0 : index
    %c0_9 = arith.constant 0 : index
    %5 = vector.load %arg7[%c0_8, %c0_9] : memref<2x128xf32, #tpu.memory_space<vmem>>, vector<2x128xf32>
    %c0_10 = arith.constant 0 : index
    %c0_11 = arith.constant 0 : index
    %6 = vector.load %arg8[%c0_10, %c0_11] : memref<2x128xf32, #tpu.memory_space<vmem>>, vector<2x128xf32>
    %c0_12 = arith.constant 0 : index
    %c0_13 = arith.constant 0 : index
    %7 = vector.load %arg9[%c0_12, %c0_13] : memref<2x128xf32, #tpu.memory_space<vmem>>, vector<2x128xf32>
    %c0_14 = arith.constant 0 : index
    %c0_15 = arith.constant 0 : index
    %8 = vector.load %arg11[%c0_14, %c0_15] : memref<2x2048xf32, #tpu.memory_space<vmem>>, vector<2x2048xf32>
    %c0_16 = arith.constant 0 : index
    %c0_17 = arith.constant 0 : index
    %9 = vector.load %arg13[%c0_16, %c0_17] : memref<2x128xf32, #tpu.memory_space<vmem>>, vector<2x128xf32>
    %c0_18 = arith.constant 0 : index
    %c0_19 = arith.constant 0 : index
    %c0_20 = arith.constant 0 : index
    %10 = vector.load %arg2[%c0_18, %c0_19, %c0_20] : memref<2x384x128xbf16, #tpu.memory_space<vmem>>, vector<1x384x128xbf16>
    %11 = vector.shape_cast %10 : vector<1x384x128xbf16> to vector<384x128xbf16>
    %12 = vector.extract_strided_slice %2 {offsets = [0, 0], sizes = [1, 384], strides = [1, 1]} : vector<2x384xf32> to vector<1x384xf32>
    %c0_21 = arith.constant 0 : index
    %c0_22 = arith.constant 0 : index
    %c0_23 = arith.constant 0 : index
    %13 = vector.load %arg4[%c0_21, %c0_22, %c0_23] : memref<2x128x128xbf16, #tpu.memory_space<vmem>>, vector<1x128x128xbf16>
    %14 = vector.shape_cast %13 : vector<1x128x128xbf16> to vector<128x128xbf16>
    %15 = vector.extract_strided_slice %3 {offsets = [0, 0], sizes = [1, 128], strides = [1, 1]} : vector<2x128xf32> to vector<1x128xf32>
    %16 = vector.extract_strided_slice %4 {offsets = [0, 0], sizes = [1, 128], strides = [1, 1]} : vector<2x128xf32> to vector<1x128xf32>
    %17 = vector.extract_strided_slice %5 {offsets = [0, 0], sizes = [1, 128], strides = [1, 1]} : vector<2x128xf32> to vector<1x128xf32>
    %18 = vector.extract_strided_slice %6 {offsets = [0, 0], sizes = [1, 128], strides = [1, 1]} : vector<2x128xf32> to vector<1x128xf32>
    %19 = vector.extract_strided_slice %7 {offsets = [0, 0], sizes = [1, 128], strides = [1, 1]} : vector<2x128xf32> to vector<1x128xf32>
    %c0_24 = arith.constant 0 : index
    %c0_25 = arith.constant 0 : index
    %c0_26 = arith.constant 0 : index
    %20 = vector.load %arg10[%c0_24, %c0_25, %c0_26] : memref<2x2048x128xbf16, #tpu.memory_space<vmem>>, vector<1x2048x128xbf16>
    %21 = vector.shape_cast %20 : vector<1x2048x128xbf16> to vector<2048x128xbf16>
    %22 = vector.extract_strided_slice %8 {offsets = [0, 0], sizes = [1, 2048], strides = [1, 1]} : vector<2x2048xf32> to vector<1x2048xf32>
    %c0_27 = arith.constant 0 : index
    %c0_28 = arith.constant 0 : index
    %c0_29 = arith.constant 0 : index
    %23 = vector.load %arg12[%c0_27, %c0_28, %c0_29] : memref<2x128x2048xbf16, #tpu.memory_space<vmem>>, vector<1x128x2048xbf16>
    %24 = vector.shape_cast %23 : vector<1x128x2048xbf16> to vector<128x2048xbf16>
    %25 = vector.extract_strided_slice %9 {offsets = [0, 0], sizes = [1, 128], strides = [1, 1]} : vector<2x128xf32> to vector<1x128xf32>
    %26 = arith.truncf %1 : vector<16x128xf32> to vector<16x128xbf16>
    %cst = arith.constant dense<0.000000e+00> : vector<16x384xf32>
    %27 = tpu.matmul %26, %11, %cst {dimension_numbers = #tpu.dot_dimension_numbers<[1], [1], [0], [0], [0, 0, 1, 0], [], []>} : vector<16x128xbf16>, vector<384x128xbf16>, vector<16x384xf32> -> vector<16x384xf32>
    %28 = vector.broadcast %12 : vector<1x384xf32> to vector<16x384xf32>
    %29 = arith.addf %27, %28 : vector<16x384xf32>
    %30 = arith.truncf %29 : vector<16x384xf32> to vector<16x384xbf16>
    %cst_30 = arith.constant 0.000000e+00 : f32
    %31 = vector.broadcast %cst_30 : f32 to vector<16x128xf32>
    %32 = vector.extract_strided_slice %30 {offsets = [0, 0], sizes = [16, 16], strides = [1, 1]} : vector<16x384xbf16> to vector<16x16xbf16>
    %33 = vector.shape_cast %32 : vector<16x16xbf16> to vector<2x8x16xbf16>
    %34 = vector.extract_strided_slice %30 {offsets = [0, 128], sizes = [16, 16], strides = [1, 1]} : vector<16x384xbf16> to vector<16x16xbf16>
    %35 = vector.shape_cast %34 : vector<16x16xbf16> to vector<2x8x16xbf16>
    %36 = vector.extract_strided_slice %30 {offsets = [0, 256], sizes = [16, 16], strides = [1, 1]} : vector<16x384xbf16> to vector<16x16xbf16>
    %37 = vector.shape_cast %36 : vector<16x16xbf16> to vector<2x8x16xbf16>
    %cst_31 = arith.constant dense<0.000000e+00> : vector<2x8x8xf32>
    %38 = tpu.matmul %33, %35, %cst_31 {dimension_numbers = #tpu.dot_dimension_numbers<[2], [2], [1], [1], [0, 0, 0, 1, 1, 1], [0], [0]>} : vector<2x8x16xbf16>, vector<2x8x16xbf16>, vector<2x8x8xf32> -> vector<2x8x8xf32>
    %cst_32 = arith.constant dense<0xFF800000> : vector<2x8xf32>
    %39 = vector.multi_reduction <maximumf>, %38, %cst_32 [2] : vector<2x8x8xf32> to vector<2x8xf32>
    %40 = vector.shape_cast %39 : vector<2x8xf32> to vector<2x8x1xf32>
    %41 = vector.broadcast %40 : vector<2x8x1xf32> to vector<2x8x8xf32>
    %42 = arith.subf %38, %41 : vector<2x8x8xf32>
    %43 = math.exp %42 : vector<2x8x8xf32>
    %cst_33 = arith.constant dense<0.000000e+00> : vector<2x8xf32>
    %44 = vector.multi_reduction <add>, %43, %cst_33 [2] : vector<2x8x8xf32> to vector<2x8xf32>
    %45 = vector.shape_cast %44 : vector<2x8xf32> to vector<2x8x1xf32>
    %46 = tpu.reciprocal %45 {approx = true} : vector<2x8x1xf32> -> vector<2x8x1xf32>
    %47 = vector.broadcast %46 : vector<2x8x1xf32> to vector<2x8x8xf32>
    %48 = arith.mulf %43, %47 : vector<2x8x8xf32>
    %49 = arith.truncf %48 : vector<2x8x8xf32> to vector<2x8x8xbf16>
    %cst_34 = arith.constant dense<0.000000e+00> : vector<2x8x16xf32>
    %50 = tpu.matmul %49, %37, %cst_34 {dimension_numbers = #tpu.dot_dimension_numbers<[2], [1], [1], [2], [0, 0, 0, 1, 1, 2], [0], [0]>} : vector<2x8x8xbf16>, vector<2x8x16xbf16>, vector<2x8x16xf32> -> vector<2x8x16xf32>
    %51 = vector.shape_cast %50 : vector<2x8x16xf32> to vector<16x16xf32>
    %52 = arith.truncf %51 : vector<16x16xf32> to vector<16x16xbf16>
    %53 = vector.extract_strided_slice %14 {offsets = [0, 0], sizes = [128, 16], strides = [1, 1]} : vector<128x128xbf16> to vector<128x16xbf16>
    %cst_35 = arith.constant dense<0.000000e+00> : vector<16x128xf32>
    %54 = tpu.matmul %52, %53, %cst_35 {dimension_numbers = #tpu.dot_dimension_numbers<[1], [1], [0], [0], [0, 0, 1, 0], [], []>} : vector<16x16xbf16>, vector<128x16xbf16>, vector<16x128xf32> -> vector<16x128xf32>
    %55 = arith.addf %31, %54 : vector<16x128xf32>
    %56 = vector.extract_strided_slice %30 {offsets = [0, 16], sizes = [16, 16], strides = [1, 1]} : vector<16x384xbf16> to vector<16x16xbf16>
    %57 = vector.shape_cast %56 : vector<16x16xbf16> to vector<2x8x16xbf16>
    %58 = vector.extract_strided_slice %30 {offsets = [0, 144], sizes = [16, 16], strides = [1, 1]} : vector<16x384xbf16> to vector<16x16xbf16>
    %59 = vector.shape_cast %58 : vector<16x16xbf16> to vector<2x8x16xbf16>
    %60 = vector.extract_strided_slice %30 {offsets = [0, 272], sizes = [16, 16], strides = [1, 1]} : vector<16x384xbf16> to vector<16x16xbf16>
    %61 = vector.shape_cast %60 : vector<16x16xbf16> to vector<2x8x16xbf16>
    %cst_36 = arith.constant dense<0.000000e+00> : vector<2x8x8xf32>
    %62 = tpu.matmul %57, %59, %cst_36 {dimension_numbers = #tpu.dot_dimension_numbers<[2], [2], [1], [1], [0, 0, 0, 1, 1, 1], [0], [0]>} : vector<2x8x16xbf16>, vector<2x8x16xbf16>, vector<2x8x8xf32> -> vector<2x8x8xf32>
    %cst_37 = arith.constant dense<0xFF800000> : vector<2x8xf32>
    %63 = vector.multi_reduction <maximumf>, %62, %cst_37 [2] : vector<2x8x8xf32> to vector<2x8xf32>
    %64 = vector.shape_cast %63 : vector<2x8xf32> to vector<2x8x1xf32>
    %65 = vector.broadcast %64 : vector<2x8x1xf32> to vector<2x8x8xf32>
    %66 = arith.subf %62, %65 : vector<2x8x8xf32>
    %67 = math.exp %66 : vector<2x8x8xf32>
    %cst_38 = arith.constant dense<0.000000e+00> : vector<2x8xf32>
    %68 = vector.multi_reduction <add>, %67, %cst_38 [2] : vector<2x8x8xf32> to vector<2x8xf32>
    %69 = vector.shape_cast %68 : vector<2x8xf32> to vector<2x8x1xf32>
    %70 = tpu.reciprocal %69 {approx = true} : vector<2x8x1xf32> -> vector<2x8x1xf32>
    %71 = vector.broadcast %70 : vector<2x8x1xf32> to vector<2x8x8xf32>
    %72 = arith.mulf %67, %71 : vector<2x8x8xf32>
    %73 = arith.truncf %72 : vector<2x8x8xf32> to vector<2x8x8xbf16>
    %cst_39 = arith.constant dense<0.000000e+00> : vector<2x8x16xf32>
    %74 = tpu.matmul %73, %61, %cst_39 {dimension_numbers = #tpu.dot_dimension_numbers<[2], [1], [1], [2], [0, 0, 0, 1, 1, 2], [0], [0]>} : vector<2x8x8xbf16>, vector<2x8x16xbf16>, vector<2x8x16xf32> -> vector<2x8x16xf32>
    %75 = vector.shape_cast %74 : vector<2x8x16xf32> to vector<16x16xf32>
    %76 = arith.truncf %75 : vector<16x16xf32> to vector<16x16xbf16>
    %77 = vector.extract_strided_slice %14 {offsets = [0, 16], sizes = [128, 16], strides = [1, 1]} : vector<128x128xbf16> to vector<128x16xbf16>
    %cst_40 = arith.constant dense<0.000000e+00> : vector<16x128xf32>
    %78 = tpu.matmul %76, %77, %cst_40 {dimension_numbers = #tpu.dot_dimension_numbers<[1], [1], [0], [0], [0, 0, 1, 0], [], []>} : vector<16x16xbf16>, vector<128x16xbf16>, vector<16x128xf32> -> vector<16x128xf32>
    %79 = arith.addf %55, %78 : vector<16x128xf32>
    %80 = vector.extract_strided_slice %30 {offsets = [0, 32], sizes = [16, 16], strides = [1, 1]} : vector<16x384xbf16> to vector<16x16xbf16>
    %81 = vector.shape_cast %80 : vector<16x16xbf16> to vector<2x8x16xbf16>
    %82 = vector.extract_strided_slice %30 {offsets = [0, 160], sizes = [16, 16], strides = [1, 1]} : vector<16x384xbf16> to vector<16x16xbf16>
    %83 = vector.shape_cast %82 : vector<16x16xbf16> to vector<2x8x16xbf16>
    %84 = vector.extract_strided_slice %30 {offsets = [0, 288], sizes = [16, 16], strides = [1, 1]} : vector<16x384xbf16> to vector<16x16xbf16>
    %85 = vector.shape_cast %84 : vector<16x16xbf16> to vector<2x8x16xbf16>
    %cst_41 = arith.constant dense<0.000000e+00> : vector<2x8x8xf32>
    %86 = tpu.matmul %81, %83, %cst_41 {dimension_numbers = #tpu.dot_dimension_numbers<[2], [2], [1], [1], [0, 0, 0, 1, 1, 1], [0], [0]>} : vector<2x8x16xbf16>, vector<2x8x16xbf16>, vector<2x8x8xf32> -> vector<2x8x8xf32>
    %cst_42 = arith.constant dense<0xFF800000> : vector<2x8xf32>
    %87 = vector.multi_reduction <maximumf>, %86, %cst_42 [2] : vector<2x8x8xf32> to vector<2x8xf32>
    %88 = vector.shape_cast %87 : vector<2x8xf32> to vector<2x8x1xf32>
    %89 = vector.broadcast %88 : vector<2x8x1xf32> to vector<2x8x8xf32>
    %90 = arith.subf %86, %89 : vector<2x8x8xf32>
    %91 = math.exp %90 : vector<2x8x8xf32>
    %cst_43 = arith.constant dense<0.000000e+00> : vector<2x8xf32>
    %92 = vector.multi_reduction <add>, %91, %cst_43 [2] : vector<2x8x8xf32> to vector<2x8xf32>
    %93 = vector.shape_cast %92 : vector<2x8xf32> to vector<2x8x1xf32>
    %94 = tpu.reciprocal %93 {approx = true} : vector<2x8x1xf32> -> vector<2x8x1xf32>
    %95 = vector.broadcast %94 : vector<2x8x1xf32> to vector<2x8x8xf32>
    %96 = arith.mulf %91, %95 : vector<2x8x8xf32>
    %97 = arith.truncf %96 : vector<2x8x8xf32> to vector<2x8x8xbf16>
    %cst_44 = arith.constant dense<0.000000e+00> : vector<2x8x16xf32>
    %98 = tpu.matmul %97, %85, %cst_44 {dimension_numbers = #tpu.dot_dimension_numbers<[2], [1], [1], [2], [0, 0, 0, 1, 1, 2], [0], [0]>} : vector<2x8x8xbf16>, vector<2x8x16xbf16>, vector<2x8x16xf32> -> vector<2x8x16xf32>
    %99 = vector.shape_cast %98 : vector<2x8x16xf32> to vector<16x16xf32>
    %100 = arith.truncf %99 : vector<16x16xf32> to vector<16x16xbf16>
    %101 = vector.extract_strided_slice %14 {offsets = [0, 32], sizes = [128, 16], strides = [1, 1]} : vector<128x128xbf16> to vector<128x16xbf16>
    %cst_45 = arith.constant dense<0.000000e+00> : vector<16x128xf32>
    %102 = tpu.matmul %100, %101, %cst_45 {dimension_numbers = #tpu.dot_dimension_numbers<[1], [1], [0], [0], [0, 0, 1, 0], [], []>} : vector<16x16xbf16>, vector<128x16xbf16>, vector<16x128xf32> -> vector<16x128xf32>
    %103 = arith.addf %79, %102 : vector<16x128xf32>
    %104 = vector.extract_strided_slice %30 {offsets = [0, 48], sizes = [16, 16], strides = [1, 1]} : vector<16x384xbf16> to vector<16x16xbf16>
    %105 = vector.shape_cast %104 : vector<16x16xbf16> to vector<2x8x16xbf16>
    %106 = vector.extract_strided_slice %30 {offsets = [0, 176], sizes = [16, 16], strides = [1, 1]} : vector<16x384xbf16> to vector<16x16xbf16>
    %107 = vector.shape_cast %106 : vector<16x16xbf16> to vector<2x8x16xbf16>
    %108 = vector.extract_strided_slice %30 {offsets = [0, 304], sizes = [16, 16], strides = [1, 1]} : vector<16x384xbf16> to vector<16x16xbf16>
    %109 = vector.shape_cast %108 : vector<16x16xbf16> to vector<2x8x16xbf16>
    %cst_46 = arith.constant dense<0.000000e+00> : vector<2x8x8xf32>
    %110 = tpu.matmul %105, %107, %cst_46 {dimension_numbers = #tpu.dot_dimension_numbers<[2], [2], [1], [1], [0, 0, 0, 1, 1, 1], [0], [0]>} : vector<2x8x16xbf16>, vector<2x8x16xbf16>, vector<2x8x8xf32> -> vector<2x8x8xf32>
    %cst_47 = arith.constant dense<0xFF800000> : vector<2x8xf32>
    %111 = vector.multi_reduction <maximumf>, %110, %cst_47 [2] : vector<2x8x8xf32> to vector<2x8xf32>
    %112 = vector.shape_cast %111 : vector<2x8xf32> to vector<2x8x1xf32>
    %113 = vector.broadcast %112 : vector<2x8x1xf32> to vector<2x8x8xf32>
    %114 = arith.subf %110, %113 : vector<2x8x8xf32>
    %115 = math.exp %114 : vector<2x8x8xf32>
    %cst_48 = arith.constant dense<0.000000e+00> : vector<2x8xf32>
    %116 = vector.multi_reduction <add>, %115, %cst_48 [2] : vector<2x8x8xf32> to vector<2x8xf32>
    %117 = vector.shape_cast %116 : vector<2x8xf32> to vector<2x8x1xf32>
    %118 = tpu.reciprocal %117 {approx = true} : vector<2x8x1xf32> -> vector<2x8x1xf32>
    %119 = vector.broadcast %118 : vector<2x8x1xf32> to vector<2x8x8xf32>
    %120 = arith.mulf %115, %119 : vector<2x8x8xf32>
    %121 = arith.truncf %120 : vector<2x8x8xf32> to vector<2x8x8xbf16>
    %cst_49 = arith.constant dense<0.000000e+00> : vector<2x8x16xf32>
    %122 = tpu.matmul %121, %109, %cst_49 {dimension_numbers = #tpu.dot_dimension_numbers<[2], [1], [1], [2], [0, 0, 0, 1, 1, 2], [0], [0]>} : vector<2x8x8xbf16>, vector<2x8x16xbf16>, vector<2x8x16xf32> -> vector<2x8x16xf32>
    %123 = vector.shape_cast %122 : vector<2x8x16xf32> to vector<16x16xf32>
    %124 = arith.truncf %123 : vector<16x16xf32> to vector<16x16xbf16>
    %125 = vector.extract_strided_slice %14 {offsets = [0, 48], sizes = [128, 16], strides = [1, 1]} : vector<128x128xbf16> to vector<128x16xbf16>
    %cst_50 = arith.constant dense<0.000000e+00> : vector<16x128xf32>
    %126 = tpu.matmul %124, %125, %cst_50 {dimension_numbers = #tpu.dot_dimension_numbers<[1], [1], [0], [0], [0, 0, 1, 0], [], []>} : vector<16x16xbf16>, vector<128x16xbf16>, vector<16x128xf32> -> vector<16x128xf32>
    %127 = arith.addf %103, %126 : vector<16x128xf32>
    %128 = vector.extract_strided_slice %30 {offsets = [0, 64], sizes = [16, 16], strides = [1, 1]} : vector<16x384xbf16> to vector<16x16xbf16>
    %129 = vector.shape_cast %128 : vector<16x16xbf16> to vector<2x8x16xbf16>
    %130 = vector.extract_strided_slice %30 {offsets = [0, 192], sizes = [16, 16], strides = [1, 1]} : vector<16x384xbf16> to vector<16x16xbf16>
    %131 = vector.shape_cast %130 : vector<16x16xbf16> to vector<2x8x16xbf16>
    %132 = vector.extract_strided_slice %30 {offsets = [0, 320], sizes = [16, 16], strides = [1, 1]} : vector<16x384xbf16> to vector<16x16xbf16>
    %133 = vector.shape_cast %132 : vector<16x16xbf16> to vector<2x8x16xbf16>
    %cst_51 = arith.constant dense<0.000000e+00> : vector<2x8x8xf32>
    %134 = tpu.matmul %129, %131, %cst_51 {dimension_numbers = #tpu.dot_dimension_numbers<[2], [2], [1], [1], [0, 0, 0, 1, 1, 1], [0], [0]>} : vector<2x8x16xbf16>, vector<2x8x16xbf16>, vector<2x8x8xf32> -> vector<2x8x8xf32>
    %cst_52 = arith.constant dense<0xFF800000> : vector<2x8xf32>
    %135 = vector.multi_reduction <maximumf>, %134, %cst_52 [2] : vector<2x8x8xf32> to vector<2x8xf32>
    %136 = vector.shape_cast %135 : vector<2x8xf32> to vector<2x8x1xf32>
    %137 = vector.broadcast %136 : vector<2x8x1xf32> to vector<2x8x8xf32>
    %138 = arith.subf %134, %137 : vector<2x8x8xf32>
    %139 = math.exp %138 : vector<2x8x8xf32>
    %cst_53 = arith.constant dense<0.000000e+00> : vector<2x8xf32>
    %140 = vector.multi_reduction <add>, %139, %cst_53 [2] : vector<2x8x8xf32> to vector<2x8xf32>
    %141 = vector.shape_cast %140 : vector<2x8xf32> to vector<2x8x1xf32>
    %142 = tpu.reciprocal %141 {approx = true} : vector<2x8x1xf32> -> vector<2x8x1xf32>
    %143 = vector.broadcast %142 : vector<2x8x1xf32> to vector<2x8x8xf32>
    %144 = arith.mulf %139, %143 : vector<2x8x8xf32>
    %145 = arith.truncf %144 : vector<2x8x8xf32> to vector<2x8x8xbf16>
    %cst_54 = arith.constant dense<0.000000e+00> : vector<2x8x16xf32>
    %146 = tpu.matmul %145, %133, %cst_54 {dimension_numbers = #tpu.dot_dimension_numbers<[2], [1], [1], [2], [0, 0, 0, 1, 1, 2], [0], [0]>} : vector<2x8x8xbf16>, vector<2x8x16xbf16>, vector<2x8x16xf32> -> vector<2x8x16xf32>
    %147 = vector.shape_cast %146 : vector<2x8x16xf32> to vector<16x16xf32>
    %148 = arith.truncf %147 : vector<16x16xf32> to vector<16x16xbf16>
    %149 = vector.extract_strided_slice %14 {offsets = [0, 64], sizes = [128, 16], strides = [1, 1]} : vector<128x128xbf16> to vector<128x16xbf16>
    %cst_55 = arith.constant dense<0.000000e+00> : vector<16x128xf32>
    %150 = tpu.matmul %148, %149, %cst_55 {dimension_numbers = #tpu.dot_dimension_numbers<[1], [1], [0], [0], [0, 0, 1, 0], [], []>} : vector<16x16xbf16>, vector<128x16xbf16>, vector<16x128xf32> -> vector<16x128xf32>
    %151 = arith.addf %127, %150 : vector<16x128xf32>
    %152 = vector.extract_strided_slice %30 {offsets = [0, 80], sizes = [16, 16], strides = [1, 1]} : vector<16x384xbf16> to vector<16x16xbf16>
    %153 = vector.shape_cast %152 : vector<16x16xbf16> to vector<2x8x16xbf16>
    %154 = vector.extract_strided_slice %30 {offsets = [0, 208], sizes = [16, 16], strides = [1, 1]} : vector<16x384xbf16> to vector<16x16xbf16>
    %155 = vector.shape_cast %154 : vector<16x16xbf16> to vector<2x8x16xbf16>
    %156 = vector.extract_strided_slice %30 {offsets = [0, 336], sizes = [16, 16], strides = [1, 1]} : vector<16x384xbf16> to vector<16x16xbf16>
    %157 = vector.shape_cast %156 : vector<16x16xbf16> to vector<2x8x16xbf16>
    %cst_56 = arith.constant dense<0.000000e+00> : vector<2x8x8xf32>
    %158 = tpu.matmul %153, %155, %cst_56 {dimension_numbers = #tpu.dot_dimension_numbers<[2], [2], [1], [1], [0, 0, 0, 1, 1, 1], [0], [0]>} : vector<2x8x16xbf16>, vector<2x8x16xbf16>, vector<2x8x8xf32> -> vector<2x8x8xf32>
    %cst_57 = arith.constant dense<0xFF800000> : vector<2x8xf32>
    %159 = vector.multi_reduction <maximumf>, %158, %cst_57 [2] : vector<2x8x8xf32> to vector<2x8xf32>
    %160 = vector.shape_cast %159 : vector<2x8xf32> to vector<2x8x1xf32>
    %161 = vector.broadcast %160 : vector<2x8x1xf32> to vector<2x8x8xf32>
    %162 = arith.subf %158, %161 : vector<2x8x8xf32>
    %163 = math.exp %162 : vector<2x8x8xf32>
    %cst_58 = arith.constant dense<0.000000e+00> : vector<2x8xf32>
    %164 = vector.multi_reduction <add>, %163, %cst_58 [2] : vector<2x8x8xf32> to vector<2x8xf32>
    %165 = vector.shape_cast %164 : vector<2x8xf32> to vector<2x8x1xf32>
    %166 = tpu.reciprocal %165 {approx = true} : vector<2x8x1xf32> -> vector<2x8x1xf32>
    %167 = vector.broadcast %166 : vector<2x8x1xf32> to vector<2x8x8xf32>
    %168 = arith.mulf %163, %167 : vector<2x8x8xf32>
    %169 = arith.truncf %168 : vector<2x8x8xf32> to vector<2x8x8xbf16>
    %cst_59 = arith.constant dense<0.000000e+00> : vector<2x8x16xf32>
    %170 = tpu.matmul %169, %157, %cst_59 {dimension_numbers = #tpu.dot_dimension_numbers<[2], [1], [1], [2], [0, 0, 0, 1, 1, 2], [0], [0]>} : vector<2x8x8xbf16>, vector<2x8x16xbf16>, vector<2x8x16xf32> -> vector<2x8x16xf32>
    %171 = vector.shape_cast %170 : vector<2x8x16xf32> to vector<16x16xf32>
    %172 = arith.truncf %171 : vector<16x16xf32> to vector<16x16xbf16>
    %173 = vector.extract_strided_slice %14 {offsets = [0, 80], sizes = [128, 16], strides = [1, 1]} : vector<128x128xbf16> to vector<128x16xbf16>
    %cst_60 = arith.constant dense<0.000000e+00> : vector<16x128xf32>
    %174 = tpu.matmul %172, %173, %cst_60 {dimension_numbers = #tpu.dot_dimension_numbers<[1], [1], [0], [0], [0, 0, 1, 0], [], []>} : vector<16x16xbf16>, vector<128x16xbf16>, vector<16x128xf32> -> vector<16x128xf32>
    %175 = arith.addf %151, %174 : vector<16x128xf32>
    %176 = vector.extract_strided_slice %30 {offsets = [0, 96], sizes = [16, 16], strides = [1, 1]} : vector<16x384xbf16> to vector<16x16xbf16>
    %177 = vector.shape_cast %176 : vector<16x16xbf16> to vector<2x8x16xbf16>
    %178 = vector.extract_strided_slice %30 {offsets = [0, 224], sizes = [16, 16], strides = [1, 1]} : vector<16x384xbf16> to vector<16x16xbf16>
    %179 = vector.shape_cast %178 : vector<16x16xbf16> to vector<2x8x16xbf16>
    %180 = vector.extract_strided_slice %30 {offsets = [0, 352], sizes = [16, 16], strides = [1, 1]} : vector<16x384xbf16> to vector<16x16xbf16>
    %181 = vector.shape_cast %180 : vector<16x16xbf16> to vector<2x8x16xbf16>
    %cst_61 = arith.constant dense<0.000000e+00> : vector<2x8x8xf32>
    %182 = tpu.matmul %177, %179, %cst_61 {dimension_numbers = #tpu.dot_dimension_numbers<[2], [2], [1], [1], [0, 0, 0, 1, 1, 1], [0], [0]>} : vector<2x8x16xbf16>, vector<2x8x16xbf16>, vector<2x8x8xf32> -> vector<2x8x8xf32>
    %cst_62 = arith.constant dense<0xFF800000> : vector<2x8xf32>
    %183 = vector.multi_reduction <maximumf>, %182, %cst_62 [2] : vector<2x8x8xf32> to vector<2x8xf32>
    %184 = vector.shape_cast %183 : vector<2x8xf32> to vector<2x8x1xf32>
    %185 = vector.broadcast %184 : vector<2x8x1xf32> to vector<2x8x8xf32>
    %186 = arith.subf %182, %185 : vector<2x8x8xf32>
    %187 = math.exp %186 : vector<2x8x8xf32>
    %cst_63 = arith.constant dense<0.000000e+00> : vector<2x8xf32>
    %188 = vector.multi_reduction <add>, %187, %cst_63 [2] : vector<2x8x8xf32> to vector<2x8xf32>
    %189 = vector.shape_cast %188 : vector<2x8xf32> to vector<2x8x1xf32>
    %190 = tpu.reciprocal %189 {approx = true} : vector<2x8x1xf32> -> vector<2x8x1xf32>
    %191 = vector.broadcast %190 : vector<2x8x1xf32> to vector<2x8x8xf32>
    %192 = arith.mulf %187, %191 : vector<2x8x8xf32>
    %193 = arith.truncf %192 : vector<2x8x8xf32> to vector<2x8x8xbf16>
    %cst_64 = arith.constant dense<0.000000e+00> : vector<2x8x16xf32>
    %194 = tpu.matmul %193, %181, %cst_64 {dimension_numbers = #tpu.dot_dimension_numbers<[2], [1], [1], [2], [0, 0, 0, 1, 1, 2], [0], [0]>} : vector<2x8x8xbf16>, vector<2x8x16xbf16>, vector<2x8x16xf32> -> vector<2x8x16xf32>
    %195 = vector.shape_cast %194 : vector<2x8x16xf32> to vector<16x16xf32>
    %196 = arith.truncf %195 : vector<16x16xf32> to vector<16x16xbf16>
    %197 = vector.extract_strided_slice %14 {offsets = [0, 96], sizes = [128, 16], strides = [1, 1]} : vector<128x128xbf16> to vector<128x16xbf16>
    %cst_65 = arith.constant dense<0.000000e+00> : vector<16x128xf32>
    %198 = tpu.matmul %196, %197, %cst_65 {dimension_numbers = #tpu.dot_dimension_numbers<[1], [1], [0], [0], [0, 0, 1, 0], [], []>} : vector<16x16xbf16>, vector<128x16xbf16>, vector<16x128xf32> -> vector<16x128xf32>
    %199 = arith.addf %175, %198 : vector<16x128xf32>
    %200 = vector.extract_strided_slice %30 {offsets = [0, 112], sizes = [16, 16], strides = [1, 1]} : vector<16x384xbf16> to vector<16x16xbf16>
    %201 = vector.shape_cast %200 : vector<16x16xbf16> to vector<2x8x16xbf16>
    %202 = vector.extract_strided_slice %30 {offsets = [0, 240], sizes = [16, 16], strides = [1, 1]} : vector<16x384xbf16> to vector<16x16xbf16>
    %203 = vector.shape_cast %202 : vector<16x16xbf16> to vector<2x8x16xbf16>
    %204 = vector.extract_strided_slice %30 {offsets = [0, 368], sizes = [16, 16], strides = [1, 1]} : vector<16x384xbf16> to vector<16x16xbf16>
    %205 = vector.shape_cast %204 : vector<16x16xbf16> to vector<2x8x16xbf16>
    %cst_66 = arith.constant dense<0.000000e+00> : vector<2x8x8xf32>
    %206 = tpu.matmul %201, %203, %cst_66 {dimension_numbers = #tpu.dot_dimension_numbers<[2], [2], [1], [1], [0, 0, 0, 1, 1, 1], [0], [0]>} : vector<2x8x16xbf16>, vector<2x8x16xbf16>, vector<2x8x8xf32> -> vector<2x8x8xf32>
    %cst_67 = arith.constant dense<0xFF800000> : vector<2x8xf32>
    %207 = vector.multi_reduction <maximumf>, %206, %cst_67 [2] : vector<2x8x8xf32> to vector<2x8xf32>
    %208 = vector.shape_cast %207 : vector<2x8xf32> to vector<2x8x1xf32>
    %209 = vector.broadcast %208 : vector<2x8x1xf32> to vector<2x8x8xf32>
    %210 = arith.subf %206, %209 : vector<2x8x8xf32>
    %211 = math.exp %210 : vector<2x8x8xf32>
    %cst_68 = arith.constant dense<0.000000e+00> : vector<2x8xf32>
    %212 = vector.multi_reduction <add>, %211, %cst_68 [2] : vector<2x8x8xf32> to vector<2x8xf32>
    %213 = vector.shape_cast %212 : vector<2x8xf32> to vector<2x8x1xf32>
    %214 = tpu.reciprocal %213 {approx = true} : vector<2x8x1xf32> -> vector<2x8x1xf32>
    %215 = vector.broadcast %214 : vector<2x8x1xf32> to vector<2x8x8xf32>
    %216 = arith.mulf %211, %215 : vector<2x8x8xf32>
    %217 = arith.truncf %216 : vector<2x8x8xf32> to vector<2x8x8xbf16>
    %cst_69 = arith.constant dense<0.000000e+00> : vector<2x8x16xf32>
    %218 = tpu.matmul %217, %205, %cst_69 {dimension_numbers = #tpu.dot_dimension_numbers<[2], [1], [1], [2], [0, 0, 0, 1, 1, 2], [0], [0]>} : vector<2x8x8xbf16>, vector<2x8x16xbf16>, vector<2x8x16xf32> -> vector<2x8x16xf32>
    %219 = vector.shape_cast %218 : vector<2x8x16xf32> to vector<16x16xf32>
    %220 = arith.truncf %219 : vector<16x16xf32> to vector<16x16xbf16>
    %221 = vector.extract_strided_slice %14 {offsets = [0, 112], sizes = [128, 16], strides = [1, 1]} : vector<128x128xbf16> to vector<128x16xbf16>
    %cst_70 = arith.constant dense<0.000000e+00> : vector<16x128xf32>
    %222 = tpu.matmul %220, %221, %cst_70 {dimension_numbers = #tpu.dot_dimension_numbers<[1], [1], [0], [0], [0, 0, 1, 0], [], []>} : vector<16x16xbf16>, vector<128x16xbf16>, vector<16x128xf32> -> vector<16x128xf32>
    %223 = arith.addf %199, %222 : vector<16x128xf32>
    %224 = vector.broadcast %15 : vector<1x128xf32> to vector<16x128xf32>
    %225 = arith.addf %223, %224 : vector<16x128xf32>
    %226 = arith.addf %1, %225 : vector<16x128xf32>
    %cst_71 = arith.constant dense<0.000000e+00> : vector<16xf32>
    %227 = vector.multi_reduction <add>, %226, %cst_71 [1] : vector<16x128xf32> to vector<16xf32>
    %228 = vector.shape_cast %227 : vector<16xf32> to vector<16x1xf32>
    %cst_72 = arith.constant 1.280000e+02 : f32
    %229 = vector.broadcast %cst_72 : f32 to vector<16x1xf32>
    %230 = arith.divf %228, %229 : vector<16x1xf32>
    %231 = vector.broadcast %230 : vector<16x1xf32> to vector<16x128xf32>
    %232 = arith.subf %226, %231 : vector<16x128xf32>
    %233 = arith.mulf %232, %232 : vector<16x128xf32>
    %cst_73 = arith.constant dense<0.000000e+00> : vector<16xf32>
    %234 = vector.multi_reduction <add>, %233, %cst_73 [1] : vector<16x128xf32> to vector<16xf32>
    %235 = vector.shape_cast %234 : vector<16xf32> to vector<16x1xf32>
    %cst_74 = arith.constant 1.280000e+02 : f32
    %236 = vector.broadcast %cst_74 : f32 to vector<16x1xf32>
    %237 = arith.divf %235, %236 : vector<16x1xf32>
    %238 = vector.broadcast %230 : vector<16x1xf32> to vector<16x128xf32>
    %239 = arith.subf %226, %238 : vector<16x128xf32>
    %cst_75 = arith.constant 9.99999974E-6 : f32
    %240 = vector.broadcast %cst_75 : f32 to vector<16x1xf32>
    %241 = arith.addf %237, %240 : vector<16x1xf32>
    %242 = math.rsqrt %241 : vector<16x1xf32>
    %243 = vector.broadcast %242 : vector<16x1xf32> to vector<16x128xf32>
    %244 = arith.mulf %239, %243 : vector<16x128xf32>
    %245 = vector.broadcast %16 : vector<1x128xf32> to vector<16x128xf32>
    %246 = arith.mulf %244, %245 : vector<16x128xf32>
    %247 = vector.broadcast %17 : vector<1x128xf32> to vector<16x128xf32>
    %248 = arith.addf %246, %247 : vector<16x128xf32>
    %249 = arith.truncf %248 : vector<16x128xf32> to vector<16x128xbf16>
    %cst_76 = arith.constant dense<0.000000e+00> : vector<16x2048xf32>
    %250 = tpu.matmul %249, %21, %cst_76 {dimension_numbers = #tpu.dot_dimension_numbers<[1], [1], [0], [0], [0, 0, 1, 0], [], []>} : vector<16x128xbf16>, vector<2048x128xbf16>, vector<16x2048xf32> -> vector<16x2048xf32>
    %251 = vector.broadcast %22 : vector<1x2048xf32> to vector<16x2048xf32>
    %252 = arith.addf %250, %251 : vector<16x2048xf32>
    %cst_77 = arith.constant 0.000000e+00 : f32
    %253 = vector.broadcast %cst_77 : f32 to vector<16x2048xf32>
    %254 = arith.maximumf %252, %253 : vector<16x2048xf32>
    %255 = arith.truncf %254 : vector<16x2048xf32> to vector<16x2048xbf16>
    %cst_78 = arith.constant dense<0.000000e+00> : vector<16x128xf32>
    %256 = tpu.matmul %255, %24, %cst_78 {dimension_numbers = #tpu.dot_dimension_numbers<[1], [1], [0], [0], [0, 0, 1, 0], [], []>} : vector<16x2048xbf16>, vector<128x2048xbf16>, vector<16x128xf32> -> vector<16x128xf32>
    %257 = vector.broadcast %25 : vector<1x128xf32> to vector<16x128xf32>
    %258 = arith.addf %256, %257 : vector<16x128xf32>
    %259 = arith.addf %248, %258 : vector<16x128xf32>
    %cst_79 = arith.constant dense<0.000000e+00> : vector<16xf32>
    %260 = vector.multi_reduction <add>, %259, %cst_79 [1] : vector<16x128xf32> to vector<16xf32>
    %261 = vector.shape_cast %260 : vector<16xf32> to vector<16x1xf32>
    %cst_80 = arith.constant 1.280000e+02 : f32
    %262 = vector.broadcast %cst_80 : f32 to vector<16x1xf32>
    %263 = arith.divf %261, %262 : vector<16x1xf32>
    %264 = vector.broadcast %263 : vector<16x1xf32> to vector<16x128xf32>
    %265 = arith.subf %259, %264 : vector<16x128xf32>
    %266 = arith.mulf %265, %265 : vector<16x128xf32>
    %cst_81 = arith.constant dense<0.000000e+00> : vector<16xf32>
    %267 = vector.multi_reduction <add>, %266, %cst_81 [1] : vector<16x128xf32> to vector<16xf32>
    %268 = vector.shape_cast %267 : vector<16xf32> to vector<16x1xf32>
    %cst_82 = arith.constant 1.280000e+02 : f32
    %269 = vector.broadcast %cst_82 : f32 to vector<16x1xf32>
    %270 = arith.divf %268, %269 : vector<16x1xf32>
    %271 = vector.broadcast %263 : vector<16x1xf32> to vector<16x128xf32>
    %272 = arith.subf %259, %271 : vector<16x128xf32>
    %cst_83 = arith.constant 9.99999974E-6 : f32
    %273 = vector.broadcast %cst_83 : f32 to vector<16x1xf32>
    %274 = arith.addf %270, %273 : vector<16x1xf32>
    %275 = math.rsqrt %274 : vector<16x1xf32>
    %276 = vector.broadcast %275 : vector<16x1xf32> to vector<16x128xf32>
    %277 = arith.mulf %272, %276 : vector<16x128xf32>
    %278 = vector.broadcast %18 : vector<1x128xf32> to vector<16x128xf32>
    %279 = arith.mulf %277, %278 : vector<16x128xf32>
    %280 = vector.broadcast %19 : vector<1x128xf32> to vector<16x128xf32>
    %281 = arith.addf %279, %280 : vector<16x128xf32>
    %c1 = arith.constant 1 : index
    %c0_84 = arith.constant 0 : index
    %c0_85 = arith.constant 0 : index
    %282 = vector.load %arg2[%c1, %c0_84, %c0_85] : memref<2x384x128xbf16, #tpu.memory_space<vmem>>, vector<1x384x128xbf16>
    %283 = vector.shape_cast %282 : vector<1x384x128xbf16> to vector<384x128xbf16>
    %284 = vector.extract_strided_slice %2 {offsets = [1, 0], sizes = [1, 384], strides = [1, 1]} : vector<2x384xf32> to vector<1x384xf32>
    %c1_86 = arith.constant 1 : index
    %c0_87 = arith.constant 0 : index
    %c0_88 = arith.constant 0 : index
    %285 = vector.load %arg4[%c1_86, %c0_87, %c0_88] : memref<2x128x128xbf16, #tpu.memory_space<vmem>>, vector<1x128x128xbf16>
    %286 = vector.shape_cast %285 : vector<1x128x128xbf16> to vector<128x128xbf16>
    %287 = vector.extract_strided_slice %3 {offsets = [1, 0], sizes = [1, 128], strides = [1, 1]} : vector<2x128xf32> to vector<1x128xf32>
    %288 = vector.extract_strided_slice %4 {offsets = [1, 0], sizes = [1, 128], strides = [1, 1]} : vector<2x128xf32> to vector<1x128xf32>
    %289 = vector.extract_strided_slice %5 {offsets = [1, 0], sizes = [1, 128], strides = [1, 1]} : vector<2x128xf32> to vector<1x128xf32>
    %290 = vector.extract_strided_slice %6 {offsets = [1, 0], sizes = [1, 128], strides = [1, 1]} : vector<2x128xf32> to vector<1x128xf32>
    %291 = vector.extract_strided_slice %7 {offsets = [1, 0], sizes = [1, 128], strides = [1, 1]} : vector<2x128xf32> to vector<1x128xf32>
    %c1_89 = arith.constant 1 : index
    %c0_90 = arith.constant 0 : index
    %c0_91 = arith.constant 0 : index
    %292 = vector.load %arg10[%c1_89, %c0_90, %c0_91] : memref<2x2048x128xbf16, #tpu.memory_space<vmem>>, vector<1x2048x128xbf16>
    %293 = vector.shape_cast %292 : vector<1x2048x128xbf16> to vector<2048x128xbf16>
    %294 = vector.extract_strided_slice %8 {offsets = [1, 0], sizes = [1, 2048], strides = [1, 1]} : vector<2x2048xf32> to vector<1x2048xf32>
    %c1_92 = arith.constant 1 : index
    %c0_93 = arith.constant 0 : index
    %c0_94 = arith.constant 0 : index
    %295 = vector.load %arg12[%c1_92, %c0_93, %c0_94] : memref<2x128x2048xbf16, #tpu.memory_space<vmem>>, vector<1x128x2048xbf16>
    %296 = vector.shape_cast %295 : vector<1x128x2048xbf16> to vector<128x2048xbf16>
    %297 = vector.extract_strided_slice %9 {offsets = [1, 0], sizes = [1, 128], strides = [1, 1]} : vector<2x128xf32> to vector<1x128xf32>
    %298 = arith.truncf %281 : vector<16x128xf32> to vector<16x128xbf16>
    %cst_95 = arith.constant dense<0.000000e+00> : vector<16x384xf32>
    %299 = tpu.matmul %298, %283, %cst_95 {dimension_numbers = #tpu.dot_dimension_numbers<[1], [1], [0], [0], [0, 0, 1, 0], [], []>} : vector<16x128xbf16>, vector<384x128xbf16>, vector<16x384xf32> -> vector<16x384xf32>
    %300 = vector.broadcast %284 : vector<1x384xf32> to vector<16x384xf32>
    %301 = arith.addf %299, %300 : vector<16x384xf32>
    %302 = arith.truncf %301 : vector<16x384xf32> to vector<16x384xbf16>
    %cst_96 = arith.constant 0.000000e+00 : f32
    %303 = vector.broadcast %cst_96 : f32 to vector<16x128xf32>
    %304 = vector.extract_strided_slice %302 {offsets = [0, 0], sizes = [16, 16], strides = [1, 1]} : vector<16x384xbf16> to vector<16x16xbf16>
    %305 = vector.shape_cast %304 : vector<16x16xbf16> to vector<2x8x16xbf16>
    %306 = vector.extract_strided_slice %302 {offsets = [0, 128], sizes = [16, 16], strides = [1, 1]} : vector<16x384xbf16> to vector<16x16xbf16>
    %307 = vector.shape_cast %306 : vector<16x16xbf16> to vector<2x8x16xbf16>
    %308 = vector.extract_strided_slice %302 {offsets = [0, 256], sizes = [16, 16], strides = [1, 1]} : vector<16x384xbf16> to vector<16x16xbf16>
    %309 = vector.shape_cast %308 : vector<16x16xbf16> to vector<2x8x16xbf16>
    %cst_97 = arith.constant dense<0.000000e+00> : vector<2x8x8xf32>
    %310 = tpu.matmul %305, %307, %cst_97 {dimension_numbers = #tpu.dot_dimension_numbers<[2], [2], [1], [1], [0, 0, 0, 1, 1, 1], [0], [0]>} : vector<2x8x16xbf16>, vector<2x8x16xbf16>, vector<2x8x8xf32> -> vector<2x8x8xf32>
    %cst_98 = arith.constant dense<0xFF800000> : vector<2x8xf32>
    %311 = vector.multi_reduction <maximumf>, %310, %cst_98 [2] : vector<2x8x8xf32> to vector<2x8xf32>
    %312 = vector.shape_cast %311 : vector<2x8xf32> to vector<2x8x1xf32>
    %313 = vector.broadcast %312 : vector<2x8x1xf32> to vector<2x8x8xf32>
    %314 = arith.subf %310, %313 : vector<2x8x8xf32>
    %315 = math.exp %314 : vector<2x8x8xf32>
    %cst_99 = arith.constant dense<0.000000e+00> : vector<2x8xf32>
    %316 = vector.multi_reduction <add>, %315, %cst_99 [2] : vector<2x8x8xf32> to vector<2x8xf32>
    %317 = vector.shape_cast %316 : vector<2x8xf32> to vector<2x8x1xf32>
    %318 = tpu.reciprocal %317 {approx = true} : vector<2x8x1xf32> -> vector<2x8x1xf32>
    %319 = vector.broadcast %318 : vector<2x8x1xf32> to vector<2x8x8xf32>
    %320 = arith.mulf %315, %319 : vector<2x8x8xf32>
    %321 = arith.truncf %320 : vector<2x8x8xf32> to vector<2x8x8xbf16>
    %cst_100 = arith.constant dense<0.000000e+00> : vector<2x8x16xf32>
    %322 = tpu.matmul %321, %309, %cst_100 {dimension_numbers = #tpu.dot_dimension_numbers<[2], [1], [1], [2], [0, 0, 0, 1, 1, 2], [0], [0]>} : vector<2x8x8xbf16>, vector<2x8x16xbf16>, vector<2x8x16xf32> -> vector<2x8x16xf32>
    %323 = vector.shape_cast %322 : vector<2x8x16xf32> to vector<16x16xf32>
    %324 = arith.truncf %323 : vector<16x16xf32> to vector<16x16xbf16>
    %325 = vector.extract_strided_slice %286 {offsets = [0, 0], sizes = [128, 16], strides = [1, 1]} : vector<128x128xbf16> to vector<128x16xbf16>
    %cst_101 = arith.constant dense<0.000000e+00> : vector<16x128xf32>
    %326 = tpu.matmul %324, %325, %cst_101 {dimension_numbers = #tpu.dot_dimension_numbers<[1], [1], [0], [0], [0, 0, 1, 0], [], []>} : vector<16x16xbf16>, vector<128x16xbf16>, vector<16x128xf32> -> vector<16x128xf32>
    %327 = arith.addf %303, %326 : vector<16x128xf32>
    %328 = vector.extract_strided_slice %302 {offsets = [0, 16], sizes = [16, 16], strides = [1, 1]} : vector<16x384xbf16> to vector<16x16xbf16>
    %329 = vector.shape_cast %328 : vector<16x16xbf16> to vector<2x8x16xbf16>
    %330 = vector.extract_strided_slice %302 {offsets = [0, 144], sizes = [16, 16], strides = [1, 1]} : vector<16x384xbf16> to vector<16x16xbf16>
    %331 = vector.shape_cast %330 : vector<16x16xbf16> to vector<2x8x16xbf16>
    %332 = vector.extract_strided_slice %302 {offsets = [0, 272], sizes = [16, 16], strides = [1, 1]} : vector<16x384xbf16> to vector<16x16xbf16>
    %333 = vector.shape_cast %332 : vector<16x16xbf16> to vector<2x8x16xbf16>
    %cst_102 = arith.constant dense<0.000000e+00> : vector<2x8x8xf32>
    %334 = tpu.matmul %329, %331, %cst_102 {dimension_numbers = #tpu.dot_dimension_numbers<[2], [2], [1], [1], [0, 0, 0, 1, 1, 1], [0], [0]>} : vector<2x8x16xbf16>, vector<2x8x16xbf16>, vector<2x8x8xf32> -> vector<2x8x8xf32>
    %cst_103 = arith.constant dense<0xFF800000> : vector<2x8xf32>
    %335 = vector.multi_reduction <maximumf>, %334, %cst_103 [2] : vector<2x8x8xf32> to vector<2x8xf32>
    %336 = vector.shape_cast %335 : vector<2x8xf32> to vector<2x8x1xf32>
    %337 = vector.broadcast %336 : vector<2x8x1xf32> to vector<2x8x8xf32>
    %338 = arith.subf %334, %337 : vector<2x8x8xf32>
    %339 = math.exp %338 : vector<2x8x8xf32>
    %cst_104 = arith.constant dense<0.000000e+00> : vector<2x8xf32>
    %340 = vector.multi_reduction <add>, %339, %cst_104 [2] : vector<2x8x8xf32> to vector<2x8xf32>
    %341 = vector.shape_cast %340 : vector<2x8xf32> to vector<2x8x1xf32>
    %342 = tpu.reciprocal %341 {approx = true} : vector<2x8x1xf32> -> vector<2x8x1xf32>
    %343 = vector.broadcast %342 : vector<2x8x1xf32> to vector<2x8x8xf32>
    %344 = arith.mulf %339, %343 : vector<2x8x8xf32>
    %345 = arith.truncf %344 : vector<2x8x8xf32> to vector<2x8x8xbf16>
    %cst_105 = arith.constant dense<0.000000e+00> : vector<2x8x16xf32>
    %346 = tpu.matmul %345, %333, %cst_105 {dimension_numbers = #tpu.dot_dimension_numbers<[2], [1], [1], [2], [0, 0, 0, 1, 1, 2], [0], [0]>} : vector<2x8x8xbf16>, vector<2x8x16xbf16>, vector<2x8x16xf32> -> vector<2x8x16xf32>
    %347 = vector.shape_cast %346 : vector<2x8x16xf32> to vector<16x16xf32>
    %348 = arith.truncf %347 : vector<16x16xf32> to vector<16x16xbf16>
    %349 = vector.extract_strided_slice %286 {offsets = [0, 16], sizes = [128, 16], strides = [1, 1]} : vector<128x128xbf16> to vector<128x16xbf16>
    %cst_106 = arith.constant dense<0.000000e+00> : vector<16x128xf32>
    %350 = tpu.matmul %348, %349, %cst_106 {dimension_numbers = #tpu.dot_dimension_numbers<[1], [1], [0], [0], [0, 0, 1, 0], [], []>} : vector<16x16xbf16>, vector<128x16xbf16>, vector<16x128xf32> -> vector<16x128xf32>
    %351 = arith.addf %327, %350 : vector<16x128xf32>
    %352 = vector.extract_strided_slice %302 {offsets = [0, 32], sizes = [16, 16], strides = [1, 1]} : vector<16x384xbf16> to vector<16x16xbf16>
    %353 = vector.shape_cast %352 : vector<16x16xbf16> to vector<2x8x16xbf16>
    %354 = vector.extract_strided_slice %302 {offsets = [0, 160], sizes = [16, 16], strides = [1, 1]} : vector<16x384xbf16> to vector<16x16xbf16>
    %355 = vector.shape_cast %354 : vector<16x16xbf16> to vector<2x8x16xbf16>
    %356 = vector.extract_strided_slice %302 {offsets = [0, 288], sizes = [16, 16], strides = [1, 1]} : vector<16x384xbf16> to vector<16x16xbf16>
    %357 = vector.shape_cast %356 : vector<16x16xbf16> to vector<2x8x16xbf16>
    %cst_107 = arith.constant dense<0.000000e+00> : vector<2x8x8xf32>
    %358 = tpu.matmul %353, %355, %cst_107 {dimension_numbers = #tpu.dot_dimension_numbers<[2], [2], [1], [1], [0, 0, 0, 1, 1, 1], [0], [0]>} : vector<2x8x16xbf16>, vector<2x8x16xbf16>, vector<2x8x8xf32> -> vector<2x8x8xf32>
    %cst_108 = arith.constant dense<0xFF800000> : vector<2x8xf32>
    %359 = vector.multi_reduction <maximumf>, %358, %cst_108 [2] : vector<2x8x8xf32> to vector<2x8xf32>
    %360 = vector.shape_cast %359 : vector<2x8xf32> to vector<2x8x1xf32>
    %361 = vector.broadcast %360 : vector<2x8x1xf32> to vector<2x8x8xf32>
    %362 = arith.subf %358, %361 : vector<2x8x8xf32>
    %363 = math.exp %362 : vector<2x8x8xf32>
    %cst_109 = arith.constant dense<0.000000e+00> : vector<2x8xf32>
    %364 = vector.multi_reduction <add>, %363, %cst_109 [2] : vector<2x8x8xf32> to vector<2x8xf32>
    %365 = vector.shape_cast %364 : vector<2x8xf32> to vector<2x8x1xf32>
    %366 = tpu.reciprocal %365 {approx = true} : vector<2x8x1xf32> -> vector<2x8x1xf32>
    %367 = vector.broadcast %366 : vector<2x8x1xf32> to vector<2x8x8xf32>
    %368 = arith.mulf %363, %367 : vector<2x8x8xf32>
    %369 = arith.truncf %368 : vector<2x8x8xf32> to vector<2x8x8xbf16>
    %cst_110 = arith.constant dense<0.000000e+00> : vector<2x8x16xf32>
    %370 = tpu.matmul %369, %357, %cst_110 {dimension_numbers = #tpu.dot_dimension_numbers<[2], [1], [1], [2], [0, 0, 0, 1, 1, 2], [0], [0]>} : vector<2x8x8xbf16>, vector<2x8x16xbf16>, vector<2x8x16xf32> -> vector<2x8x16xf32>
    %371 = vector.shape_cast %370 : vector<2x8x16xf32> to vector<16x16xf32>
    %372 = arith.truncf %371 : vector<16x16xf32> to vector<16x16xbf16>
    %373 = vector.extract_strided_slice %286 {offsets = [0, 32], sizes = [128, 16], strides = [1, 1]} : vector<128x128xbf16> to vector<128x16xbf16>
    %cst_111 = arith.constant dense<0.000000e+00> : vector<16x128xf32>
    %374 = tpu.matmul %372, %373, %cst_111 {dimension_numbers = #tpu.dot_dimension_numbers<[1], [1], [0], [0], [0, 0, 1, 0], [], []>} : vector<16x16xbf16>, vector<128x16xbf16>, vector<16x128xf32> -> vector<16x128xf32>
    %375 = arith.addf %351, %374 : vector<16x128xf32>
    %376 = vector.extract_strided_slice %302 {offsets = [0, 48], sizes = [16, 16], strides = [1, 1]} : vector<16x384xbf16> to vector<16x16xbf16>
    %377 = vector.shape_cast %376 : vector<16x16xbf16> to vector<2x8x16xbf16>
    %378 = vector.extract_strided_slice %302 {offsets = [0, 176], sizes = [16, 16], strides = [1, 1]} : vector<16x384xbf16> to vector<16x16xbf16>
    %379 = vector.shape_cast %378 : vector<16x16xbf16> to vector<2x8x16xbf16>
    %380 = vector.extract_strided_slice %302 {offsets = [0, 304], sizes = [16, 16], strides = [1, 1]} : vector<16x384xbf16> to vector<16x16xbf16>
    %381 = vector.shape_cast %380 : vector<16x16xbf16> to vector<2x8x16xbf16>
    %cst_112 = arith.constant dense<0.000000e+00> : vector<2x8x8xf32>
    %382 = tpu.matmul %377, %379, %cst_112 {dimension_numbers = #tpu.dot_dimension_numbers<[2], [2], [1], [1], [0, 0, 0, 1, 1, 1], [0], [0]>} : vector<2x8x16xbf16>, vector<2x8x16xbf16>, vector<2x8x8xf32> -> vector<2x8x8xf32>
    %cst_113 = arith.constant dense<0xFF800000> : vector<2x8xf32>
    %383 = vector.multi_reduction <maximumf>, %382, %cst_113 [2] : vector<2x8x8xf32> to vector<2x8xf32>
    %384 = vector.shape_cast %383 : vector<2x8xf32> to vector<2x8x1xf32>
    %385 = vector.broadcast %384 : vector<2x8x1xf32> to vector<2x8x8xf32>
    %386 = arith.subf %382, %385 : vector<2x8x8xf32>
    %387 = math.exp %386 : vector<2x8x8xf32>
    %cst_114 = arith.constant dense<0.000000e+00> : vector<2x8xf32>
    %388 = vector.multi_reduction <add>, %387, %cst_114 [2] : vector<2x8x8xf32> to vector<2x8xf32>
    %389 = vector.shape_cast %388 : vector<2x8xf32> to vector<2x8x1xf32>
    %390 = tpu.reciprocal %389 {approx = true} : vector<2x8x1xf32> -> vector<2x8x1xf32>
    %391 = vector.broadcast %390 : vector<2x8x1xf32> to vector<2x8x8xf32>
    %392 = arith.mulf %387, %391 : vector<2x8x8xf32>
    %393 = arith.truncf %392 : vector<2x8x8xf32> to vector<2x8x8xbf16>
    %cst_115 = arith.constant dense<0.000000e+00> : vector<2x8x16xf32>
    %394 = tpu.matmul %393, %381, %cst_115 {dimension_numbers = #tpu.dot_dimension_numbers<[2], [1], [1], [2], [0, 0, 0, 1, 1, 2], [0], [0]>} : vector<2x8x8xbf16>, vector<2x8x16xbf16>, vector<2x8x16xf32> -> vector<2x8x16xf32>
    %395 = vector.shape_cast %394 : vector<2x8x16xf32> to vector<16x16xf32>
    %396 = arith.truncf %395 : vector<16x16xf32> to vector<16x16xbf16>
    %397 = vector.extract_strided_slice %286 {offsets = [0, 48], sizes = [128, 16], strides = [1, 1]} : vector<128x128xbf16> to vector<128x16xbf16>
    %cst_116 = arith.constant dense<0.000000e+00> : vector<16x128xf32>
    %398 = tpu.matmul %396, %397, %cst_116 {dimension_numbers = #tpu.dot_dimension_numbers<[1], [1], [0], [0], [0, 0, 1, 0], [], []>} : vector<16x16xbf16>, vector<128x16xbf16>, vector<16x128xf32> -> vector<16x128xf32>
    %399 = arith.addf %375, %398 : vector<16x128xf32>
    %400 = vector.extract_strided_slice %302 {offsets = [0, 64], sizes = [16, 16], strides = [1, 1]} : vector<16x384xbf16> to vector<16x16xbf16>
    %401 = vector.shape_cast %400 : vector<16x16xbf16> to vector<2x8x16xbf16>
    %402 = vector.extract_strided_slice %302 {offsets = [0, 192], sizes = [16, 16], strides = [1, 1]} : vector<16x384xbf16> to vector<16x16xbf16>
    %403 = vector.shape_cast %402 : vector<16x16xbf16> to vector<2x8x16xbf16>
    %404 = vector.extract_strided_slice %302 {offsets = [0, 320], sizes = [16, 16], strides = [1, 1]} : vector<16x384xbf16> to vector<16x16xbf16>
    %405 = vector.shape_cast %404 : vector<16x16xbf16> to vector<2x8x16xbf16>
    %cst_117 = arith.constant dense<0.000000e+00> : vector<2x8x8xf32>
    %406 = tpu.matmul %401, %403, %cst_117 {dimension_numbers = #tpu.dot_dimension_numbers<[2], [2], [1], [1], [0, 0, 0, 1, 1, 1], [0], [0]>} : vector<2x8x16xbf16>, vector<2x8x16xbf16>, vector<2x8x8xf32> -> vector<2x8x8xf32>
    %cst_118 = arith.constant dense<0xFF800000> : vector<2x8xf32>
    %407 = vector.multi_reduction <maximumf>, %406, %cst_118 [2] : vector<2x8x8xf32> to vector<2x8xf32>
    %408 = vector.shape_cast %407 : vector<2x8xf32> to vector<2x8x1xf32>
    %409 = vector.broadcast %408 : vector<2x8x1xf32> to vector<2x8x8xf32>
    %410 = arith.subf %406, %409 : vector<2x8x8xf32>
    %411 = math.exp %410 : vector<2x8x8xf32>
    %cst_119 = arith.constant dense<0.000000e+00> : vector<2x8xf32>
    %412 = vector.multi_reduction <add>, %411, %cst_119 [2] : vector<2x8x8xf32> to vector<2x8xf32>
    %413 = vector.shape_cast %412 : vector<2x8xf32> to vector<2x8x1xf32>
    %414 = tpu.reciprocal %413 {approx = true} : vector<2x8x1xf32> -> vector<2x8x1xf32>
    %415 = vector.broadcast %414 : vector<2x8x1xf32> to vector<2x8x8xf32>
    %416 = arith.mulf %411, %415 : vector<2x8x8xf32>
    %417 = arith.truncf %416 : vector<2x8x8xf32> to vector<2x8x8xbf16>
    %cst_120 = arith.constant dense<0.000000e+00> : vector<2x8x16xf32>
    %418 = tpu.matmul %417, %405, %cst_120 {dimension_numbers = #tpu.dot_dimension_numbers<[2], [1], [1], [2], [0, 0, 0, 1, 1, 2], [0], [0]>} : vector<2x8x8xbf16>, vector<2x8x16xbf16>, vector<2x8x16xf32> -> vector<2x8x16xf32>
    %419 = vector.shape_cast %418 : vector<2x8x16xf32> to vector<16x16xf32>
    %420 = arith.truncf %419 : vector<16x16xf32> to vector<16x16xbf16>
    %421 = vector.extract_strided_slice %286 {offsets = [0, 64], sizes = [128, 16], strides = [1, 1]} : vector<128x128xbf16> to vector<128x16xbf16>
    %cst_121 = arith.constant dense<0.000000e+00> : vector<16x128xf32>
    %422 = tpu.matmul %420, %421, %cst_121 {dimension_numbers = #tpu.dot_dimension_numbers<[1], [1], [0], [0], [0, 0, 1, 0], [], []>} : vector<16x16xbf16>, vector<128x16xbf16>, vector<16x128xf32> -> vector<16x128xf32>
    %423 = arith.addf %399, %422 : vector<16x128xf32>
    %424 = vector.extract_strided_slice %302 {offsets = [0, 80], sizes = [16, 16], strides = [1, 1]} : vector<16x384xbf16> to vector<16x16xbf16>
    %425 = vector.shape_cast %424 : vector<16x16xbf16> to vector<2x8x16xbf16>
    %426 = vector.extract_strided_slice %302 {offsets = [0, 208], sizes = [16, 16], strides = [1, 1]} : vector<16x384xbf16> to vector<16x16xbf16>
    %427 = vector.shape_cast %426 : vector<16x16xbf16> to vector<2x8x16xbf16>
    %428 = vector.extract_strided_slice %302 {offsets = [0, 336], sizes = [16, 16], strides = [1, 1]} : vector<16x384xbf16> to vector<16x16xbf16>
    %429 = vector.shape_cast %428 : vector<16x16xbf16> to vector<2x8x16xbf16>
    %cst_122 = arith.constant dense<0.000000e+00> : vector<2x8x8xf32>
    %430 = tpu.matmul %425, %427, %cst_122 {dimension_numbers = #tpu.dot_dimension_numbers<[2], [2], [1], [1], [0, 0, 0, 1, 1, 1], [0], [0]>} : vector<2x8x16xbf16>, vector<2x8x16xbf16>, vector<2x8x8xf32> -> vector<2x8x8xf32>
    %cst_123 = arith.constant dense<0xFF800000> : vector<2x8xf32>
    %431 = vector.multi_reduction <maximumf>, %430, %cst_123 [2] : vector<2x8x8xf32> to vector<2x8xf32>
    %432 = vector.shape_cast %431 : vector<2x8xf32> to vector<2x8x1xf32>
    %433 = vector.broadcast %432 : vector<2x8x1xf32> to vector<2x8x8xf32>
    %434 = arith.subf %430, %433 : vector<2x8x8xf32>
    %435 = math.exp %434 : vector<2x8x8xf32>
    %cst_124 = arith.constant dense<0.000000e+00> : vector<2x8xf32>
    %436 = vector.multi_reduction <add>, %435, %cst_124 [2] : vector<2x8x8xf32> to vector<2x8xf32>
    %437 = vector.shape_cast %436 : vector<2x8xf32> to vector<2x8x1xf32>
    %438 = tpu.reciprocal %437 {approx = true} : vector<2x8x1xf32> -> vector<2x8x1xf32>
    %439 = vector.broadcast %438 : vector<2x8x1xf32> to vector<2x8x8xf32>
    %440 = arith.mulf %435, %439 : vector<2x8x8xf32>
    %441 = arith.truncf %440 : vector<2x8x8xf32> to vector<2x8x8xbf16>
    %cst_125 = arith.constant dense<0.000000e+00> : vector<2x8x16xf32>
    %442 = tpu.matmul %441, %429, %cst_125 {dimension_numbers = #tpu.dot_dimension_numbers<[2], [1], [1], [2], [0, 0, 0, 1, 1, 2], [0], [0]>} : vector<2x8x8xbf16>, vector<2x8x16xbf16>, vector<2x8x16xf32> -> vector<2x8x16xf32>
    %443 = vector.shape_cast %442 : vector<2x8x16xf32> to vector<16x16xf32>
    %444 = arith.truncf %443 : vector<16x16xf32> to vector<16x16xbf16>
    %445 = vector.extract_strided_slice %286 {offsets = [0, 80], sizes = [128, 16], strides = [1, 1]} : vector<128x128xbf16> to vector<128x16xbf16>
    %cst_126 = arith.constant dense<0.000000e+00> : vector<16x128xf32>
    %446 = tpu.matmul %444, %445, %cst_126 {dimension_numbers = #tpu.dot_dimension_numbers<[1], [1], [0], [0], [0, 0, 1, 0], [], []>} : vector<16x16xbf16>, vector<128x16xbf16>, vector<16x128xf32> -> vector<16x128xf32>
    %447 = arith.addf %423, %446 : vector<16x128xf32>
    %448 = vector.extract_strided_slice %302 {offsets = [0, 96], sizes = [16, 16], strides = [1, 1]} : vector<16x384xbf16> to vector<16x16xbf16>
    %449 = vector.shape_cast %448 : vector<16x16xbf16> to vector<2x8x16xbf16>
    %450 = vector.extract_strided_slice %302 {offsets = [0, 224], sizes = [16, 16], strides = [1, 1]} : vector<16x384xbf16> to vector<16x16xbf16>
    %451 = vector.shape_cast %450 : vector<16x16xbf16> to vector<2x8x16xbf16>
    %452 = vector.extract_strided_slice %302 {offsets = [0, 352], sizes = [16, 16], strides = [1, 1]} : vector<16x384xbf16> to vector<16x16xbf16>
    %453 = vector.shape_cast %452 : vector<16x16xbf16> to vector<2x8x16xbf16>
    %cst_127 = arith.constant dense<0.000000e+00> : vector<2x8x8xf32>
    %454 = tpu.matmul %449, %451, %cst_127 {dimension_numbers = #tpu.dot_dimension_numbers<[2], [2], [1], [1], [0, 0, 0, 1, 1, 1], [0], [0]>} : vector<2x8x16xbf16>, vector<2x8x16xbf16>, vector<2x8x8xf32> -> vector<2x8x8xf32>
    %cst_128 = arith.constant dense<0xFF800000> : vector<2x8xf32>
    %455 = vector.multi_reduction <maximumf>, %454, %cst_128 [2] : vector<2x8x8xf32> to vector<2x8xf32>
    %456 = vector.shape_cast %455 : vector<2x8xf32> to vector<2x8x1xf32>
    %457 = vector.broadcast %456 : vector<2x8x1xf32> to vector<2x8x8xf32>
    %458 = arith.subf %454, %457 : vector<2x8x8xf32>
    %459 = math.exp %458 : vector<2x8x8xf32>
    %cst_129 = arith.constant dense<0.000000e+00> : vector<2x8xf32>
    %460 = vector.multi_reduction <add>, %459, %cst_129 [2] : vector<2x8x8xf32> to vector<2x8xf32>
    %461 = vector.shape_cast %460 : vector<2x8xf32> to vector<2x8x1xf32>
    %462 = tpu.reciprocal %461 {approx = true} : vector<2x8x1xf32> -> vector<2x8x1xf32>
    %463 = vector.broadcast %462 : vector<2x8x1xf32> to vector<2x8x8xf32>
    %464 = arith.mulf %459, %463 : vector<2x8x8xf32>
    %465 = arith.truncf %464 : vector<2x8x8xf32> to vector<2x8x8xbf16>
    %cst_130 = arith.constant dense<0.000000e+00> : vector<2x8x16xf32>
    %466 = tpu.matmul %465, %453, %cst_130 {dimension_numbers = #tpu.dot_dimension_numbers<[2], [1], [1], [2], [0, 0, 0, 1, 1, 2], [0], [0]>} : vector<2x8x8xbf16>, vector<2x8x16xbf16>, vector<2x8x16xf32> -> vector<2x8x16xf32>
    %467 = vector.shape_cast %466 : vector<2x8x16xf32> to vector<16x16xf32>
    %468 = arith.truncf %467 : vector<16x16xf32> to vector<16x16xbf16>
    %469 = vector.extract_strided_slice %286 {offsets = [0, 96], sizes = [128, 16], strides = [1, 1]} : vector<128x128xbf16> to vector<128x16xbf16>
    %cst_131 = arith.constant dense<0.000000e+00> : vector<16x128xf32>
    %470 = tpu.matmul %468, %469, %cst_131 {dimension_numbers = #tpu.dot_dimension_numbers<[1], [1], [0], [0], [0, 0, 1, 0], [], []>} : vector<16x16xbf16>, vector<128x16xbf16>, vector<16x128xf32> -> vector<16x128xf32>
    %471 = arith.addf %447, %470 : vector<16x128xf32>
    %472 = vector.extract_strided_slice %302 {offsets = [0, 112], sizes = [16, 16], strides = [1, 1]} : vector<16x384xbf16> to vector<16x16xbf16>
    %473 = vector.shape_cast %472 : vector<16x16xbf16> to vector<2x8x16xbf16>
    %474 = vector.extract_strided_slice %302 {offsets = [0, 240], sizes = [16, 16], strides = [1, 1]} : vector<16x384xbf16> to vector<16x16xbf16>
    %475 = vector.shape_cast %474 : vector<16x16xbf16> to vector<2x8x16xbf16>
    %476 = vector.extract_strided_slice %302 {offsets = [0, 368], sizes = [16, 16], strides = [1, 1]} : vector<16x384xbf16> to vector<16x16xbf16>
    %477 = vector.shape_cast %476 : vector<16x16xbf16> to vector<2x8x16xbf16>
    %cst_132 = arith.constant dense<0.000000e+00> : vector<2x8x8xf32>
    %478 = tpu.matmul %473, %475, %cst_132 {dimension_numbers = #tpu.dot_dimension_numbers<[2], [2], [1], [1], [0, 0, 0, 1, 1, 1], [0], [0]>} : vector<2x8x16xbf16>, vector<2x8x16xbf16>, vector<2x8x8xf32> -> vector<2x8x8xf32>
    %cst_133 = arith.constant dense<0xFF800000> : vector<2x8xf32>
    %479 = vector.multi_reduction <maximumf>, %478, %cst_133 [2] : vector<2x8x8xf32> to vector<2x8xf32>
    %480 = vector.shape_cast %479 : vector<2x8xf32> to vector<2x8x1xf32>
    %481 = vector.broadcast %480 : vector<2x8x1xf32> to vector<2x8x8xf32>
    %482 = arith.subf %478, %481 : vector<2x8x8xf32>
    %483 = math.exp %482 : vector<2x8x8xf32>
    %cst_134 = arith.constant dense<0.000000e+00> : vector<2x8xf32>
    %484 = vector.multi_reduction <add>, %483, %cst_134 [2] : vector<2x8x8xf32> to vector<2x8xf32>
    %485 = vector.shape_cast %484 : vector<2x8xf32> to vector<2x8x1xf32>
    %486 = tpu.reciprocal %485 {approx = true} : vector<2x8x1xf32> -> vector<2x8x1xf32>
    %487 = vector.broadcast %486 : vector<2x8x1xf32> to vector<2x8x8xf32>
    %488 = arith.mulf %483, %487 : vector<2x8x8xf32>
    %489 = arith.truncf %488 : vector<2x8x8xf32> to vector<2x8x8xbf16>
    %cst_135 = arith.constant dense<0.000000e+00> : vector<2x8x16xf32>
    %490 = tpu.matmul %489, %477, %cst_135 {dimension_numbers = #tpu.dot_dimension_numbers<[2], [1], [1], [2], [0, 0, 0, 1, 1, 2], [0], [0]>} : vector<2x8x8xbf16>, vector<2x8x16xbf16>, vector<2x8x16xf32> -> vector<2x8x16xf32>
    %491 = vector.shape_cast %490 : vector<2x8x16xf32> to vector<16x16xf32>
    %492 = arith.truncf %491 : vector<16x16xf32> to vector<16x16xbf16>
    %493 = vector.extract_strided_slice %286 {offsets = [0, 112], sizes = [128, 16], strides = [1, 1]} : vector<128x128xbf16> to vector<128x16xbf16>
    %cst_136 = arith.constant dense<0.000000e+00> : vector<16x128xf32>
    %494 = tpu.matmul %492, %493, %cst_136 {dimension_numbers = #tpu.dot_dimension_numbers<[1], [1], [0], [0], [0, 0, 1, 0], [], []>} : vector<16x16xbf16>, vector<128x16xbf16>, vector<16x128xf32> -> vector<16x128xf32>
    %495 = arith.addf %471, %494 : vector<16x128xf32>
    %496 = vector.broadcast %287 : vector<1x128xf32> to vector<16x128xf32>
    %497 = arith.addf %495, %496 : vector<16x128xf32>
    %498 = arith.addf %281, %497 : vector<16x128xf32>
    %cst_137 = arith.constant dense<0.000000e+00> : vector<16xf32>
    %499 = vector.multi_reduction <add>, %498, %cst_137 [1] : vector<16x128xf32> to vector<16xf32>
    %500 = vector.shape_cast %499 : vector<16xf32> to vector<16x1xf32>
    %cst_138 = arith.constant 1.280000e+02 : f32
    %501 = vector.broadcast %cst_138 : f32 to vector<16x1xf32>
    %502 = arith.divf %500, %501 : vector<16x1xf32>
    %503 = vector.broadcast %502 : vector<16x1xf32> to vector<16x128xf32>
    %504 = arith.subf %498, %503 : vector<16x128xf32>
    %505 = arith.mulf %504, %504 : vector<16x128xf32>
    %cst_139 = arith.constant dense<0.000000e+00> : vector<16xf32>
    %506 = vector.multi_reduction <add>, %505, %cst_139 [1] : vector<16x128xf32> to vector<16xf32>
    %507 = vector.shape_cast %506 : vector<16xf32> to vector<16x1xf32>
    %cst_140 = arith.constant 1.280000e+02 : f32
    %508 = vector.broadcast %cst_140 : f32 to vector<16x1xf32>
    %509 = arith.divf %507, %508 : vector<16x1xf32>
    %510 = vector.broadcast %502 : vector<16x1xf32> to vector<16x128xf32>
    %511 = arith.subf %498, %510 : vector<16x128xf32>
    %cst_141 = arith.constant 9.99999974E-6 : f32
    %512 = vector.broadcast %cst_141 : f32 to vector<16x1xf32>
    %513 = arith.addf %509, %512 : vector<16x1xf32>
    %514 = math.rsqrt %513 : vector<16x1xf32>
    %515 = vector.broadcast %514 : vector<16x1xf32> to vector<16x128xf32>
    %516 = arith.mulf %511, %515 : vector<16x128xf32>
    %517 = vector.broadcast %288 : vector<1x128xf32> to vector<16x128xf32>
    %518 = arith.mulf %516, %517 : vector<16x128xf32>
    %519 = vector.broadcast %289 : vector<1x128xf32> to vector<16x128xf32>
    %520 = arith.addf %518, %519 : vector<16x128xf32>
    %521 = arith.truncf %520 : vector<16x128xf32> to vector<16x128xbf16>
    %cst_142 = arith.constant dense<0.000000e+00> : vector<16x2048xf32>
    %522 = tpu.matmul %521, %293, %cst_142 {dimension_numbers = #tpu.dot_dimension_numbers<[1], [1], [0], [0], [0, 0, 1, 0], [], []>} : vector<16x128xbf16>, vector<2048x128xbf16>, vector<16x2048xf32> -> vector<16x2048xf32>
    %523 = vector.broadcast %294 : vector<1x2048xf32> to vector<16x2048xf32>
    %524 = arith.addf %522, %523 : vector<16x2048xf32>
    %cst_143 = arith.constant 0.000000e+00 : f32
    %525 = vector.broadcast %cst_143 : f32 to vector<16x2048xf32>
    %526 = arith.maximumf %524, %525 : vector<16x2048xf32>
    %527 = arith.truncf %526 : vector<16x2048xf32> to vector<16x2048xbf16>
    %cst_144 = arith.constant dense<0.000000e+00> : vector<16x128xf32>
    %528 = tpu.matmul %527, %296, %cst_144 {dimension_numbers = #tpu.dot_dimension_numbers<[1], [1], [0], [0], [0, 0, 1, 0], [], []>} : vector<16x2048xbf16>, vector<128x2048xbf16>, vector<16x128xf32> -> vector<16x128xf32>
    %529 = vector.broadcast %297 : vector<1x128xf32> to vector<16x128xf32>
    %530 = arith.addf %528, %529 : vector<16x128xf32>
    %531 = arith.addf %520, %530 : vector<16x128xf32>
    %cst_145 = arith.constant dense<0.000000e+00> : vector<16xf32>
    %532 = vector.multi_reduction <add>, %531, %cst_145 [1] : vector<16x128xf32> to vector<16xf32>
    %533 = vector.shape_cast %532 : vector<16xf32> to vector<16x1xf32>
    %cst_146 = arith.constant 1.280000e+02 : f32
    %534 = vector.broadcast %cst_146 : f32 to vector<16x1xf32>
    %535 = arith.divf %533, %534 : vector<16x1xf32>
    %536 = vector.broadcast %535 : vector<16x1xf32> to vector<16x128xf32>
    %537 = arith.subf %531, %536 : vector<16x128xf32>
    %538 = arith.mulf %537, %537 : vector<16x128xf32>
    %cst_147 = arith.constant dense<0.000000e+00> : vector<16xf32>
    %539 = vector.multi_reduction <add>, %538, %cst_147 [1] : vector<16x128xf32> to vector<16xf32>
    %540 = vector.shape_cast %539 : vector<16xf32> to vector<16x1xf32>
    %cst_148 = arith.constant 1.280000e+02 : f32
    %541 = vector.broadcast %cst_148 : f32 to vector<16x1xf32>
    %542 = arith.divf %540, %541 : vector<16x1xf32>
    %543 = vector.broadcast %535 : vector<16x1xf32> to vector<16x128xf32>
    %544 = arith.subf %531, %543 : vector<16x128xf32>
    %cst_149 = arith.constant 9.99999974E-6 : f32
    %545 = vector.broadcast %cst_149 : f32 to vector<16x1xf32>
    %546 = arith.addf %542, %545 : vector<16x1xf32>
    %547 = math.rsqrt %546 : vector<16x1xf32>
    %548 = vector.broadcast %547 : vector<16x1xf32> to vector<16x128xf32>
    %549 = arith.mulf %544, %548 : vector<16x128xf32>
    %550 = vector.broadcast %290 : vector<1x128xf32> to vector<16x128xf32>
    %551 = arith.mulf %549, %550 : vector<16x128xf32>
    %552 = vector.broadcast %291 : vector<1x128xf32> to vector<16x128xf32>
    %553 = arith.addf %551, %552 : vector<16x128xf32>
    %554 = vector.shape_cast %553 : vector<16x128xf32> to vector<2x8x128xf32>
    %cst_150 = arith.constant dense<0.000000e+00> : vector<2x128xf32>
    %555 = vector.multi_reduction <add>, %554, %cst_150 [1] : vector<2x8x128xf32> to vector<2x128xf32>
    %cst_151 = arith.constant 0.353553385 : f32
    %556 = vector.broadcast %cst_151 : f32 to vector<2x128xf32>
    %557 = arith.mulf %555, %556 : vector<2x128xf32>
    %558 = arith.truncf %557 : vector<2x128xf32> to vector<2x128xbf16>
    %c0_152 = arith.constant 0 : index
    %c0_153 = arith.constant 0 : index
    %559 = vector.load %arg14[%c0_152, %c0_153] : memref<2x128xbf16, #tpu.memory_space<vmem>>, vector<2x128xbf16>
    %cst_154 = arith.constant dense<0.000000e+00> : vector<2x2xf32>
    %560 = tpu.matmul %558, %559, %cst_154 {dimension_numbers = #tpu.dot_dimension_numbers<[1], [1], [0], [0], [0, 0, 1, 0], [], []>} : vector<2x128xbf16>, vector<2x128xbf16>, vector<2x2xf32> -> vector<2x2xf32>
    %c0_155 = arith.constant 0 : index
    %c0_156 = arith.constant 0 : index
    %561 = vector.load %arg15[%c0_155, %c0_156] : memref<1x2xf32, #tpu.memory_space<vmem>>, vector<1x2xf32>
    %562 = vector.broadcast %561 : vector<1x2xf32> to vector<2x2xf32>
    %563 = arith.addf %560, %562 : vector<2x2xf32>
    %c0_157 = arith.constant 0 : index
    %c0_158 = arith.constant 0 : index
    %564 = vector.load %arg16[%c0_157, %c0_158] : memref<2x2xf32, #tpu.memory_space<vmem>>, vector<2x2xf32>
    tpu.vector_store %arg16[%c0_157, %c0_158], %563 {strides = array<i32>} : memref<2x2xf32, #tpu.memory_space<vmem>>, vector<2x2xf32>,
    return
  }
  func.func @transform_0(%arg0: i32) -> (i32, i32, i32) {
    %c0_i32 = arith.constant 0 : i32
    %c0_i32_0 = arith.constant 0 : i32
    %c0_i32_1 = arith.constant 0 : i32
    return %arg0, %c0_i32, %c0_i32_0 : i32, i32, i32
  }
  func.func @transform_1(%arg0: i32) -> (i32, i32, i32) {
    %c0_i32 = arith.constant 0 : i32
    %c0_i32_0 = arith.constant 0 : i32
    %c0_i32_1 = arith.constant 0 : i32
    %c0_i32_2 = arith.constant 0 : i32
    return %c0_i32, %c0_i32_0, %c0_i32_1 : i32, i32, i32
  }
  func.func @transform_2(%arg0: i32) -> (i32, i32) {
    %c0_i32 = arith.constant 0 : i32
    %c0_i32_0 = arith.constant 0 : i32
    %c0_i32_1 = arith.constant 0 : i32
    return %c0_i32, %c0_i32_0 : i32, i32
  }
  func.func @transform_3(%arg0: i32) -> (i32, i32, i32) {
    %c0_i32 = arith.constant 0 : i32
    %c0_i32_0 = arith.constant 0 : i32
    %c0_i32_1 = arith.constant 0 : i32
    %c0_i32_2 = arith.constant 0 : i32
    return %c0_i32, %c0_i32_0, %c0_i32_1 : i32, i32, i32
  }
  func.func @transform_4(%arg0: i32) -> (i32, i32) {
    %c0_i32 = arith.constant 0 : i32
    %c0_i32_0 = arith.constant 0 : i32
    %c0_i32_1 = arith.constant 0 : i32
    return %c0_i32, %c0_i32_0 : i32, i32
  }
  func.func @transform_5(%arg0: i32) -> (i32, i32) {
    %c0_i32 = arith.constant 0 : i32
    %c0_i32_0 = arith.constant 0 : i32
    %c0_i32_1 = arith.constant 0 : i32
    return %c0_i32, %c0_i32_0 : i32, i32
  }
  func.func @transform_6(%arg0: i32) -> (i32, i32) {
    %c0_i32 = arith.constant 0 : i32
    %c0_i32_0 = arith.constant 0 : i32
    %c0_i32_1 = arith.constant 0 : i32
    return %c0_i32, %c0_i32_0 : i32, i32
  }
  func.func @transform_7(%arg0: i32) -> (i32, i32) {
    %c0_i32 = arith.constant 0 : i32
    %c0_i32_0 = arith.constant 0 : i32
    %c0_i32_1 = arith.constant 0 : i32
    return %c0_i32, %c0_i32_0 : i32, i32
  }
  func.func @transform_8(%arg0: i32) -> (i32, i32) {
    %c0_i32 = arith.constant 0 : i32
    %c0_i32_0 = arith.constant 0 : i32
    %c0_i32_1 = arith.constant 0 : i32
    return %c0_i32, %c0_i32_0 : i32, i32
  }
  func.func @transform_9(%arg0: i32) -> (i32, i32, i32) {
    %c0_i32 = arith.constant 0 : i32
    %c0_i32_0 = arith.constant 0 : i32
    %c0_i32_1 = arith.constant 0 : i32
    %c0_i32_2 = arith.constant 0 : i32
    return %c0_i32, %c0_i32_0, %c0_i32_1 : i32, i32, i32
  }
  func.func @transform_10(%arg0: i32) -> (i32, i32) {
    %c0_i32 = arith.constant 0 : i32
    %c0_i32_0 = arith.constant 0 : i32
    %c0_i32_1 = arith.constant 0 : i32
    return %c0_i32, %c0_i32_0 : i32, i32
  }
  func.func @transform_11(%arg0: i32) -> (i32, i32, i32) {
    %c0_i32 = arith.constant 0 : i32
    %c0_i32_0 = arith.constant 0 : i32
    %c0_i32_1 = arith.constant 0 : i32
    %c0_i32_2 = arith.constant 0 : i32
    return %c0_i32, %c0_i32_0, %c0_i32_1 : i32, i32, i32
  }
  func.func @transform_12(%arg0: i32) -> (i32, i32) {
    %c0_i32 = arith.constant 0 : i32
    %c0_i32_0 = arith.constant 0 : i32
    %c0_i32_1 = arith.constant 0 : i32
    return %c0_i32, %c0_i32_0 : i32, i32
  }
  func.func @transform_13(%arg0: i32) -> (i32, i32) {
    %c0_i32 = arith.constant 0 : i32
    %c0_i32_0 = arith.constant 0 : i32
    %c0_i32_1 = arith.constant 0 : i32
    return %c0_i32, %c0_i32_0 : i32, i32
  }
  func.func @transform_14(%arg0: i32) -> (i32, i32) {
    %c0_i32 = arith.constant 0 : i32
    %c0_i32_0 = arith.constant 0 : i32
    %c0_i32_1 = arith.constant 0 : i32
    return %c0_i32, %c0_i32_0 : i32, i32
  }
  func.func @transform_15(%arg0: i32) -> (i32, i32) {
    %c0_i32 = arith.constant 0 : i32
    %c0_i32_0 = arith.constant 0 : i32
    return %arg0, %c0_i32 : i32, i32
  }
}

</mosaic_0001>

<llo_original>
// kernel: transformer_classifier_forward.1
$region0: #{transformer_classifier_forward.1}
  #allocation0 [shape = 'u32[]', space=smem, size = 0x4, offset = 0x4, fixed_abs, tag = 'smem constant byte address 0x4 - core index']
  #allocation1 [shape = 'u32[144,128]{1,0:T(1,128)}', space=vmem, size = 0x12000, scoped, tag = 'internal scratch']
  %s0 = inlined_call_operand.vmem [shape: f32[2,8,128], index: 0, kind: input, shape index: {}]
  %s1 = inlined_call_operand.vmem [shape: bf16[2,384,128], index: 1, kind: input, shape index: {}]
  %s2 = inlined_call_operand.vmem [shape: f32[2,384], index: 2, kind: input, shape index: {}]
  %s3 = inlined_call_operand.vmem [shape: bf16[2,128,128], index: 3, kind: input, shape index: {}]
  %s4 = inlined_call_operand.vmem [shape: f32[2,128], index: 4, kind: input, shape index: {}]
  %s5 = inlined_call_operand.vmem [shape: f32[2,128], index: 5, kind: input, shape index: {}]
  %s6 = inlined_call_operand.vmem [shape: f32[2,128], index: 6, kind: input, shape index: {}]
  %s7 = inlined_call_operand.vmem [shape: f32[2,128], index: 7, kind: input, shape index: {}]
  %s8 = inlined_call_operand.vmem [shape: f32[2,128], index: 8, kind: input, shape index: {}]
  %s9 = inlined_call_operand.hbm [shape: bf16[2,2048,128], index: 9, kind: input, shape index: {}]
  %s10 = inlined_call_operand.vmem [shape: f32[2,2048], index: 10, kind: input, shape index: {}]
  %s11 = inlined_call_operand.hbm [shape: bf16[2,128,2048], index: 11, kind: input, shape index: {}]
  %s12 = inlined_call_operand.vmem [shape: f32[2,128], index: 12, kind: input, shape index: {}]
  %s13 = inlined_call_operand.vmem [shape: bf16[2,128], index: 13, kind: input, shape index: {}]
  %s14 = inlined_call_operand.vmem [shape: f32[1,2], index: 14, kind: input, shape index: {}]
  %s15 = inlined_call_operand.hbm [shape: f32[2,2], index: 15, kind: output, shape index: {}]
  %s16 = sld [smem:[#allocation0]]
  $region78: #{transformer_classifier_forward.1} parent=0
    _
  %s18 = ssub.s32 1, %s16
  %s19 = scalar_select 0, %s18, %s16
  $region1: #{transformer_classifier_forward.1} parent=0
    #allocation2 [shape = 'u8[1048576]{0}', space=vmem, size = 0x100000, scoped, tag = 'input window, operand 9, single buffered']
    #allocation3 [shape = 's32[1]{0}', space=sflag, size = 0x4, scoped, tag = 'scoped memory for transformer_classifier_forward.1']
    #allocation4 [shape = 's32[1]{0}', space=sflag, size = 0x4, scoped, tag = 'scoped memory for transformer_classifier_forward.1']
    #allocation5 [shape = 'u8[1048576]{0}', space=vmem, size = 0x100000, scoped, tag = 'input window, operand 11, single buffered']
    #allocation6 [shape = 's32[1]{0}', space=sflag, size = 0x4, scoped, tag = 'scoped memory for transformer_classifier_forward.1']
    #allocation7 [shape = 'u8[1024]{0}', space=vmem, size = 0x400, scoped, tag = 'output window, operand 0, single buffered']
    %20 = vsyncpa [#allocation3], 0
    %21 = vsyncpa [#allocation6], 0
    %22 = vsyncpa [#allocation4], 0
    // Predicated region
    $region2: #{transformer_classifier_forward.1} parent=1 // pred_check
      _
    $region3: #{transformer_classifier_forward.1} parent=1 // pred_check_branch
      %24 = sbr.rel (0) target = $region5
    $region4: #{transformer_classifier_forward.1} parent=1 // pred_region
      _
    $region5: #{transformer_classifier_forward.1} parent=1 // pred_fallthru
      _
    // Predicated region
    $region6: #{transformer_classifier_forward.1} parent=1 // pred_check
      _
    $region7: #{transformer_classifier_forward.1} parent=1 // pred_check_branch
      %26 = sbr.rel (0) target = $region9
    $region8: #{transformer_classifier_forward.1} parent=1 // pred_region
      _
    $region9: #{transformer_classifier_forward.1} parent=1 // pred_fallthru
      _
    // Predicated region
    $region10: #{transformer_classifier_forward.1} parent=1 // pred_check
      _
    $region11: #{transformer_classifier_forward.1} parent=1 // pred_check_branch
      %28 = sbr.rel (0) target = $region13
    $region12: #{transformer_classifier_forward.1} parent=1 // pred_region
      _
    $region13: #{transformer_classifier_forward.1} parent=1 // pred_fallthru
      _
    // Predicated region
    $region14: #{transformer_classifier_forward.1} parent=1 // pred_check
      _
    $region15: #{transformer_classifier_forward.1} parent=1 // pred_check_branch
      %30 = sbr.rel (0) target = $region17
    $region16: #{transformer_classifier_forward.1} parent=1 // pred_region
      _
    $region17: #{transformer_classifier_forward.1} parent=1 // pred_fallthru
      _
    // Predicated region
    $region18: #{transformer_classifier_forward.1} parent=1 // pred_check
      _
    $region19: #{transformer_classifier_forward.1} parent=1 // pred_check_branch
      %32 = sbr.rel (0) target = $region21
    $region20: #{transformer_classifier_forward.1} parent=1 // pred_region
      _
    $region21: #{transformer_classifier_forward.1} parent=1 // pred_fallthru
      _
    // Predicated region
    $region22: #{transformer_classifier_forward.1} parent=1 // pred_check
      _
    $region23: #{transformer_classifier_forward.1} parent=1 // pred_check_branch
      %34 = sbr.rel (0) target = $region25
    $region24: #{transformer_classifier_forward.1} parent=1 // pred_region
      _
    $region25: #{transformer_classifier_forward.1} parent=1 // pred_fallthru
      _
    // Predicated region
    $region26: #{transformer_classifier_forward.1} parent=1 // pred_check
      _
    $region27: #{transformer_classifier_forward.1} parent=1 // pred_check_branch
      %36 = sbr.rel (0) target = $region29
    $region28: #{transformer_classifier_forward.1} parent=1 // pred_region
      _
    $region29: #{transformer_classifier_forward.1} parent=1 // pred_fallthru
      _
    // Predicated region
    $region30: #{transformer_classifier_forward.1} parent=1 // pred_check
      _
    $region31: #{transformer_classifier_forward.1} parent=1 // pred_check_branch
      %38 = sbr.rel (0) target = $region33
    $region32: #{transformer_classifier_forward.1} parent=1 // pred_region
      _
    $region33: #{transformer_classifier_forward.1} parent=1 // pred_fallthru
      _
    // Predicated region
    $region34: #{transformer_classifier_forward.1} parent=1 // pred_check
      _
    $region35: #{transformer_classifier_forward.1} parent=1 // pred_check_branch
      %40 = sbr.rel (0) target = $region37
    $region36: #{transformer_classifier_forward.1} parent=1 // pred_region
      _
    $region37: #{transformer_classifier_forward.1} parent=1 // pred_fallthru
      _
    // Predicated region
    $region38: #{transformer_classifier_forward.1} parent=1 // pred_check
      _
    $region39: #{transformer_classifier_forward.1} parent=1 // pred_check_branch
      %42 = sbr.rel (0) target = $region41
    $region40: #{transformer_classifier_forward.1} parent=1 // pred_region
      %s44 = ssub.s32 32768, 32768
      %45 = vsyncadd [#allocation3], %s44
      %s46 = sshll.u32 [#allocation2], 4
      %s47 = int_to_ptr.vmem [resolvable:$true] %s46
      %52 = dma.hbm_to_vmem [thread:$0]  %s9, 32768, %s47, [#allocation3], 64, 64, 4
    $region41: #{transformer_classifier_forward.1} parent=1 // pred_fallthru
      _
    // Predicated region
    $region42: #{transformer_classifier_forward.1} parent=1 // pred_check
      _
    $region43: #{transformer_classifier_forward.1} parent=1 // pred_check_branch
      %54 = sbr.rel (0) target = $region45
    $region44: #{transformer_classifier_forward.1} parent=1 // pred_region
      _
    $region45: #{transformer_classifier_forward.1} parent=1 // pred_fallthru
      _
    // Predicated region
    $region46: #{transformer_classifier_forward.1} parent=1 // pred_check
      _
    $region47: #{transformer_classifier_forward.1} parent=1 // pred_check_branch
      %56 = sbr.rel (0) target = $region49
    $region48: #{transformer_classifier_forward.1} parent=1 // pred_region
      %s58 = ssub.s32 32768, 32768
      %59 = vsyncadd [#allocation6], %s58
      %s60 = sshll.u32 [#allocation5], 4
      %s61 = int_to_ptr.vmem [resolvable:$true] %s60
      %66 = dma.hbm_to_vmem [thread:$0]  %s11, 32768, %s61, [#allocation6], 1024, 1024, 64
    $region49: #{transformer_classifier_forward.1} parent=1 // pred_fallthru
      _
    // Predicated region
    $region50: #{transformer_classifier_forward.1} parent=1 // pred_check
      _
    $region51: #{transformer_classifier_forward.1} parent=1 // pred_check_branch
      %68 = sbr.rel (0) target = $region53
    $region52: #{transformer_classifier_forward.1} parent=1 // pred_region
      _
    $region53: #{transformer_classifier_forward.1} parent=1 // pred_fallthru
      _
    // Predicated region
    $region54: #{transformer_classifier_forward.1} parent=1 // pred_check
      _
    $region55: #{transformer_classifier_forward.1} parent=1 // pred_check_branch
      %70 = sbr.rel (0) target = $region57
    $region56: #{transformer_classifier_forward.1} parent=1 // pred_region
      _
    $region57: #{transformer_classifier_forward.1} parent=1 // pred_fallthru
      _
    // Predicated region
    $region58: #{transformer_classifier_forward.1} parent=1 // pred_check
      _
    $region59: #{transformer_classifier_forward.1} parent=1 // pred_check_branch
      %72 = sbr.rel (0) target = $region61
    $region60: #{transformer_classifier_forward.1} parent=1 // pred_region
      _
    $region61: #{transformer_classifier_forward.1} parent=1 // pred_fallthru
      _
    // Predicated region
    $region62: #{transformer_classifier_forward.1} parent=1 // pred_check
      _
    $region63: #{transformer_classifier_forward.1} parent=1 // pred_check_branch
      %74 = sbr.rel (0) target = $region65
    $region64: #{transformer_classifier_forward.1} parent=1 // pred_region
      %75 = dma.done [#allocation3], 32768
    $region65: #{transformer_classifier_forward.1} parent=1 // pred_fallthru
      _
    // Predicated region
    $region66: #{transformer_classifier_forward.1} parent=1 // pred_check
      _
    $region67: #{transformer_classifier_forward.1} parent=1 // pred_check_branch
      %77 = sbr.rel (0) target = $region69
    $region68: #{transformer_classifier_forward.1} parent=1 // pred_region
      %78 = dma.done [#allocation6], 32768
    $region69: #{transformer_classifier_forward.1} parent=1 // pred_fallthru
      _
    %v80 = vld [vmem:[%s0] sm:$0xff]
    %v81 = vld [vmem:[%s0 + $0x8] sm:$0xff]
    %v82 = vld [vmem:[%s2] sm:$0x3f]
    %v83 = vld [vmem:[%s4] sm:$0x3]
    %v84 = vld [vmem:[%s5] sm:$0x3]
    %v85 = vld [vmem:[%s6] sm:$0x3]
    %v86 = vld [vmem:[%s7] sm:$0x3]
    %v87 = vld [vmem:[%s8] sm:$0x3]
    %v88 = vld [vmem:[%s10] sm:$0xff]
    %v89 = vld [vmem:[%s10 + $0x8] sm:$0xff]
    %v90 = vld [vmem:[%s10 + $0x10] sm:$0xff]
    %v91 = vld [vmem:[%s10 + $0x18] sm:$0xff]
    %v92 = vld [vmem:[%s12] sm:$0x3]
    %v93 = vld [vmem:[%s1] sm:$0xf]
    %v94 = vld [vmem:[%s1 + $0x4] sm:$0xf]
    %v95 = vld [vmem:[%s1 + $0x8] sm:$0xf]
    %v96 = vld [vmem:[%s1 + $0xc] sm:$0xf]
    %v97 = vld [vmem:[%s1 + $0x10] sm:$0xf]
    %v98 = vld [vmem:[%s1 + $0x14] sm:$0xf]
    %v99 = vld [vmem:[%s1 + $0x18] sm:$0xf]
    %v100 = vld [vmem:[%s1 + $0x1c] sm:$0xf]
    %v101 = vld [vmem:[%s1 + $0x20] sm:$0xf]
    %v102 = vld [vmem:[%s1 + $0x24] sm:$0xf]
    %v103 = vld [vmem:[%s1 + $0x28] sm:$0xf]
    %v104 = vld [vmem:[%s1 + $0x2c] sm:$0xf]
    %v105 = vld [vmem:[%s1 + $0x30] sm:$0xf]
    %v106 = vld [vmem:[%s1 + $0x34] sm:$0xf]
    %v107 = vld [vmem:[%s1 + $0x38] sm:$0xf]
    %v108 = vld [vmem:[%s1 + $0x3c] sm:$0xf]
    %v109 = vld [vmem:[%s1 + $0x40] sm:$0xf]
    %v110 = vld [vmem:[%s1 + $0x44] sm:$0xf]
    %v111 = vld [vmem:[%s1 + $0x48] sm:$0xf]
    %v112 = vld [vmem:[%s1 + $0x4c] sm:$0xf]
    %v113 = vld [vmem:[%s1 + $0x50] sm:$0xf]
    %v114 = vld [vmem:[%s1 + $0x54] sm:$0xf]
    %v115 = vld [vmem:[%s1 + $0x58] sm:$0xf]
    %v116 = vld [vmem:[%s1 + $0x5c] sm:$0xf]
    %v117 = vld [vmem:[%s1 + $0x60] sm:$0xf]
    %v118 = vld [vmem:[%s1 + $0x64] sm:$0xf]
    %v119 = vld [vmem:[%s1 + $0x68] sm:$0xf]
    %v120 = vld [vmem:[%s1 + $0x6c] sm:$0xf]
    %v121 = vld [vmem:[%s1 + $0x70] sm:$0xf]
    %v122 = vld [vmem:[%s1 + $0x74] sm:$0xf]
    %v123 = vld [vmem:[%s1 + $0x78] sm:$0xf]
    %v124 = vld [vmem:[%s1 + $0x7c] sm:$0xf]
    %v125 = vld [vmem:[%s1 + $0x80] sm:$0xf]
    %v126 = vld [vmem:[%s1 + $0x84] sm:$0xf]
    %v127 = vld [vmem:[%s1 + $0x88] sm:$0xf]
    %v128 = vld [vmem:[%s1 + $0x8c] sm:$0xf]
    %v129 = vld [vmem:[%s1 + $0x90] sm:$0xf]
    %v130 = vld [vmem:[%s1 + $0x94] sm:$0xf]
    %v131 = vld [vmem:[%s1 + $0x98] sm:$0xf]
    %v132 = vld [vmem:[%s1 + $0x9c] sm:$0xf]
    %v133 = vld [vmem:[%s1 + $0xa0] sm:$0xf]
    %v134 = vld [vmem:[%s1 + $0xa4] sm:$0xf]
    %v135 = vld [vmem:[%s1 + $0xa8] sm:$0xf]
    %v136 = vld [vmem:[%s1 + $0xac] sm:$0xf]
    %v137 = vld [vmem:[%s1 + $0xb0] sm:$0xf]
    %v138 = vld [vmem:[%s1 + $0xb4] sm:$0xf]
    %v139 = vld [vmem:[%s1 + $0xb8] sm:$0xf]
    %v140 = vld [vmem:[%s1 + $0xbc] sm:$0xf]
    %v141 = vld [vmem:[%s3] sm:$0xf]
    %v142 = vld [vmem:[%s3 + $0x4] sm:$0xf]
    %v143 = vld [vmem:[%s3 + $0x8] sm:$0xf]
    %v144 = vld [vmem:[%s3 + $0xc] sm:$0xf]
    %v145 = vld [vmem:[%s3 + $0x10] sm:$0xf]
    %v146 = vld [vmem:[%s3 + $0x14] sm:$0xf]
    %v147 = vld [vmem:[%s3 + $0x18] sm:$0xf]
    %v148 = vld [vmem:[%s3 + $0x1c] sm:$0xf]
    %v149 = vld [vmem:[%s3 + $0x20] sm:$0xf]
    %v150 = vld [vmem:[%s3 + $0x24] sm:$0xf]
    %v151 = vld [vmem:[%s3 + $0x28] sm:$0xf]
    %v152 = vld [vmem:[%s3 + $0x2c] sm:$0xf]
    %v153 = vld [vmem:[%s3 + $0x30] sm:$0xf]
    %v154 = vld [vmem:[%s3 + $0x34] sm:$0xf]
    %v155 = vld [vmem:[%s3 + $0x38] sm:$0xf]
    %v156 = vld [vmem:[%s3 + $0x3c] sm:$0xf]
    %v157 = vld [vmem:[#allocation2] sm:$0xf]
    %v158 = vld [vmem:[#allocation2 + $0x4] sm:$0xf]
    %v159 = vld [vmem:[#allocation2 + $0x8] sm:$0xf]
    %v160 = vld [vmem:[#allocation2 + $0xc] sm:$0xf]
    %v161 = vld [vmem:[#allocation2 + $0x10] sm:$0xf]
    %v162 = vld [vmem:[#allocation2 + $0x14] sm:$0xf]
    %v163 = vld [vmem:[#allocation2 + $0x18] sm:$0xf]
    %v164 = vld [vmem:[#allocation2 + $0x1c] sm:$0xf]
    %v165 = vld [vmem:[#allocation2 + $0x20] sm:$0xf]
    %v166 = vld [vmem:[#allocation2 + $0x24] sm:$0xf]
    %v167 = vld [vmem:[#allocation2 + $0x28] sm:$0xf]
    %v168 = vld [vmem:[#allocation2 + $0x2c] sm:$0xf]
    %v169 = vld [vmem:[#allocation2 + $0x30] sm:$0xf]
    %v170 = vld [vmem:[#allocation2 + $0x34] sm:$0xf]
    %v171 = vld [vmem:[#allocation2 + $0x38] sm:$0xf]
    %v172 = vld [vmem:[#allocation2 + $0x3c] sm:$0xf]
    %v173 = vld [vmem:[#allocation2 + $0x40] sm:$0xf]
    %v174 = vld [vmem:[#allocation2 + $0x44] sm:$0xf]
    %v175 = vld [vmem:[#allocation2 + $0x48] sm:$0xf]
    %v176 = vld [vmem:[#allocation2 + $0x4c] sm:$0xf]
    %v177 = vld [vmem:[#allocation2 + $0x50] sm:$0xf]
    %v178 = vld [vmem:[#allocation2 + $0x54] sm:$0xf]
    %v179 = vld [vmem:[#allocation2 + $0x58] sm:$0xf]
    %v180 = vld [vmem:[#allocation2 + $0x5c] sm:$0xf]
    %v181 = vld [vmem:[#allocation2 + $0x60] sm:$0xf]
    %v182 = vld [vmem:[#allocation2 + $0x64] sm:$0xf]
    %v183 = vld [vmem:[#allocation2 + $0x68] sm:$0xf]
    %v184 = vld [vmem:[#allocation2 + $0x6c] sm:$0xf]
    %v185 = vld [vmem:[#allocation2 + $0x70] sm:$0xf]
    %v186 = vld [vmem:[#allocation2 + $0x74] sm:$0xf]
    %v187 = vld [vmem:[#allocation2 + $0x78] sm:$0xf]
    %v188 = vld [vmem:[#allocation2 + $0x7c] sm:$0xf]
    %v189 = vld [vmem:[#allocation2 + $0x80] sm:$0xf]
    %v190 = vld [vmem:[#allocation2 + $0x84] sm:$0xf]
    %v191 = vld [vmem:[#allocation2 + $0x88] sm:$0xf]
    %v192 = vld [vmem:[#allocation2 + $0x8c] sm:$0xf]
    %v193 = vld [vmem:[#allocation2 + $0x90] sm:$0xf]
    %v194 = vld [vmem:[#allocation2 + $0x94] sm:$0xf]
    %v195 = vld [vmem:[#allocation2 + $0x98] sm:$0xf]
    %v196 = vld [vmem:[#allocation2 + $0x9c] sm:$0xf]
    %v197 = vld [vmem:[#allocation2 + $0xa0] sm:$0xf]
    %v198 = vld [vmem:[#allocation2 + $0xa4] sm:$0xf]
    %v199 = vld [vmem:[#allocation2 + $0xa8] sm:$0xf]
    %v200 = vld [vmem:[#allocation2 + $0xac] sm:$0xf]
    %v201 = vld [vmem:[#allocation2 + $0xb0] sm:$0xf]
    %v202 = vld [vmem:[#allocation2 + $0xb4] sm:$0xf]
    %v203 = vld [vmem:[#allocation2 + $0xb8] sm:$0xf]
    %v204 = vld [vmem:[#allocation2 + $0xbc] sm:$0xf]
    %v205 = vld [vmem:[#allocation2 + $0xc0] sm:$0xf]
    %v206 = vld [vmem:[#allocation2 + $0xc4] sm:$0xf]
    %v207 = vld [vmem:[#allocation2 + $0xc8] sm:$0xf]
    %v208 = vld [vmem:[#allocation2 + $0xcc] sm:$0xf]
    %v209 = vld [vmem:[#allocation2 + $0xd0] sm:$0xf]
    %v210 = vld [vmem:[#allocation2 + $0xd4] sm:$0xf]
    %v211 = vld [vmem:[#allocation2 + $0xd8] sm:$0xf]
    %v212 = vld [vmem:[#allocation2 + $0xdc] sm:$0xf]
    %v213 = vld [vmem:[#allocation2 + $0xe0] sm:$0xf]
    %v214 = vld [vmem:[#allocation2 + $0xe4] sm:$0xf]
    %v215 = vld [vmem:[#allocation2 + $0xe8] sm:$0xf]
    %v216 = vld [vmem:[#allocation2 + $0xec] sm:$0xf]
    %v217 = vld [vmem:[#allocation2 + $0xf0] sm:$0xf]
    %v218 = vld [vmem:[#allocation2 + $0xf4] sm:$0xf]
    %v219 = vld [vmem:[#allocation2 + $0xf8] sm:$0xf]
    %v220 = vld [vmem:[#allocation2 + $0xfc] sm:$0xf]
    %v221 = vld [vmem:[#allocation2 + $0x100] sm:$0xf]
    %v222 = vld [vmem:[#allocation2 + $0x104] sm:$0xf]
    %v223 = vld [vmem:[#allocation2 + $0x108] sm:$0xf]
    %v224 = vld [vmem:[#allocation2 + $0x10c] sm:$0xf]
    %v225 = vld [vmem:[#allocation2 + $0x110] sm:$0xf]
    %v226 = vld [vmem:[#allocation2 + $0x114] sm:$0xf]
    %v227 = vld [vmem:[#allocation2 + $0x118] sm:$0xf]
    %v228 = vld [vmem:[#allocation2 + $0x11c] sm:$0xf]
    %v229 = vld [vmem:[#allocation2 + $0x120] sm:$0xf]
    %v230 = vld [vmem:[#allocation2 + $0x124] sm:$0xf]
    %v231 = vld [vmem:[#allocation2 + $0x128] sm:$0xf]
    %v232 = vld [vmem:[#allocation2 + $0x12c] sm:$0xf]
    %v233 = vld [vmem:[#allocation2 + $0x130] sm:$0xf]
    %v234 = vld [vmem:[#allocation2 + $0x134] sm:$0xf]
    %v235 = vld [vmem:[#allocation2 + $0x138] sm:$0xf]
    %v236 = vld [vmem:[#allocation2 + $0x13c] sm:$0xf]
    %v237 = vld [vmem:[#allocation2 + $0x140] sm:$0xf]
    %v238 = vld [vmem:[#allocation2 + $0x144] sm:$0xf]
    %v239 = vld [vmem:[#allocation2 + $0x148] sm:$0xf]
    %v240 = vld [vmem:[#allocation2 + $0x14c] sm:$0xf]
    %v241 = vld [vmem:[#allocation2 + $0x150] sm:$0xf]
    %v242 = vld [vmem:[#allocation2 + $0x154] sm:$0xf]
    %v243 = vld [vmem:[#allocation2 + $0x158] sm:$0xf]
    %v244 = vld [vmem:[#allocation2 + $0x15c] sm:$0xf]
    %v245 = vld [vmem:[#allocation2 + $0x160] sm:$0xf]
    %v246 = vld [vmem:[#allocation2 + $0x164] sm:$0xf]
    %v247 = vld [vmem:[#allocation2 + $0x168] sm:$0xf]
    %v248 = vld [vmem:[#allocation2 + $0x16c] sm:$0xf]
    %v249 = vld [vmem:[#allocation2 + $0x170] sm:$0xf]
    %v250 = vld [vmem:[#allocation2 + $0x174] sm:$0xf]
    %v251 = vld [vmem:[#allocation2 + $0x178] sm:$0xf]
    %v252 = vld [vmem:[#allocation2 + $0x17c] sm:$0xf]
    %v253 = vld [vmem:[#allocation2 + $0x180] sm:$0xf]
    %v254 = vld [vmem:[#allocation2 + $0x184] sm:$0xf]
    %v255 = vld [vmem:[#allocation2 + $0x188] sm:$0xf]
    %v256 = vld [vmem:[#allocation2 + $0x18c] sm:$0xf]
    %v257 = vld [vmem:[#allocation2 + $0x190] sm:$0xf]
    %v258 = vld [vmem:[#allocation2 + $0x194] sm:$0xf]
    %v259 = vld [vmem:[#allocation2 + $0x198] sm:$0xf]
    %v260 = vld [vmem:[#allocation2 + $0x19c] sm:$0xf]
    %v261 = vld [vmem:[#allocation2 + $0x1a0] sm:$0xf]
    %v262 = vld [vmem:[#allocation2 + $0x1a4] sm:$0xf]
    %v263 = vld [vmem:[#allocation2 + $0x1a8] sm:$0xf]
    %v264 = vld [vmem:[#allocation2 + $0x1ac] sm:$0xf]
    %v265 = vld [vmem:[#allocation2 + $0x1b0] sm:$0xf]
    %v266 = vld [vmem:[#allocation2 + $0x1b4] sm:$0xf]
    %v267 = vld [vmem:[#allocation2 + $0x1b8] sm:$0xf]
    %v268 = vld [vmem:[#allocation2 + $0x1bc] sm:$0xf]
    %v269 = vld [vmem:[#allocation2 + $0x1c0] sm:$0xf]
    %v270 = vld [vmem:[#allocation2 + $0x1c4] sm:$0xf]
    %v271 = vld [vmem:[#allocation2 + $0x1c8] sm:$0xf]
    %v272 = vld [vmem:[#allocation2 + $0x1cc] sm:$0xf]
    %v273 = vld [vmem:[#allocation2 + $0x1d0] sm:$0xf]
    %v274 = vld [vmem:[#allocation2 + $0x1d4] sm:$0xf]
    %v275 = vld [vmem:[#allocation2 + $0x1d8] sm:$0xf]
    %v276 = vld [vmem:[#allocation2 + $0x1dc] sm:$0xf]
    %v277 = vld [vmem:[#allocation2 + $0x1e0] sm:$0xf]
    %v278 = vld [vmem:[#allocation2 + $0x1e4] sm:$0xf]
    %v279 = vld [vmem:[#allocation2 + $0x1e8] sm:$0xf]
    %v280 = vld [vmem:[#allocation2 + $0x1ec] sm:$0xf]
    %v281 = vld [vmem:[#allocation2 + $0x1f0] sm:$0xf]
    %v282 = vld [vmem:[#allocation2 + $0x1f4] sm:$0xf]
    %v283 = vld [vmem:[#allocation2 + $0x1f8] sm:$0xf]
    %v284 = vld [vmem:[#allocation2 + $0x1fc] sm:$0xf]
    %v285 = vld [vmem:[#allocation2 + $0x200] sm:$0xf]
    %v286 = vld [vmem:[#allocation2 + $0x204] sm:$0xf]
    %v287 = vld [vmem:[#allocation2 + $0x208] sm:$0xf]
    %v288 = vld [vmem:[#allocation2 + $0x20c] sm:$0xf]
    %v289 = vld [vmem:[#allocation2 + $0x210] sm:$0xf]
    %v290 = vld [vmem:[#allocation2 + $0x214] sm:$0xf]
    %v291 = vld [vmem:[#allocation2 + $0x218] sm:$0xf]
    %v292 = vld [vmem:[#allocation2 + $0x21c] sm:$0xf]
    %v293 = vld [vmem:[#allocation2 + $0x220] sm:$0xf]
    %v294 = vld [vmem:[#allocation2 + $0x224] sm:$0xf]
    %v295 = vld [vmem:[#allocation2 + $0x228] sm:$0xf]
    %v296 = vld [vmem:[#allocation2 + $0x22c] sm:$0xf]
    %v297 = vld [vmem:[#allocation2 + $0x230] sm:$0xf]
    %v298 = vld [vmem:[#allocation2 + $0x234] sm:$0xf]
    %v299 = vld [vmem:[#allocation2 + $0x238] sm:$0xf]
    %v300 = vld [vmem:[#allocation2 + $0x23c] sm:$0xf]
    %v301 = vld [vmem:[#allocation2 + $0x240] sm:$0xf]
    %v302 = vld [vmem:[#allocation2 + $0x244] sm:$0xf]
    %v303 = vld [vmem:[#allocation2 + $0x248] sm:$0xf]
    %v304 = vld [vmem:[#allocation2 + $0x24c] sm:$0xf]
    %v305 = vld [vmem:[#allocation2 + $0x250] sm:$0xf]
    %v306 = vld [vmem:[#allocation2 + $0x254] sm:$0xf]
    %v307 = vld [vmem:[#allocation2 + $0x258] sm:$0xf]
    %v308 = vld [vmem:[#allocation2 + $0x25c] sm:$0xf]
    %v309 = vld [vmem:[#allocation2 + $0x260] sm:$0xf]
    %v310 = vld [vmem:[#allocation2 + $0x264] sm:$0xf]
    %v311 = vld [vmem:[#allocation2 + $0x268] sm:$0xf]
    %v312 = vld [vmem:[#allocation2 + $0x26c] sm:$0xf]
    %v313 = vld [vmem:[#allocation2 + $0x270] sm:$0xf]
    %v314 = vld [vmem:[#allocation2 + $0x274] sm:$0xf]
    %v315 = vld [vmem:[#allocation2 + $0x278] sm:$0xf]
    %v316 = vld [vmem:[#allocation2 + $0x27c] sm:$0xf]
    %v317 = vld [vmem:[#allocation2 + $0x280] sm:$0xf]
    %v318 = vld [vmem:[#allocation2 + $0x284] sm:$0xf]
    %v319 = vld [vmem:[#allocation2 + $0x288] sm:$0xf]
    %v320 = vld [vmem:[#allocation2 + $0x28c] sm:$0xf]
    %v321 = vld [vmem:[#allocation2 + $0x290] sm:$0xf]
    %v322 = vld [vmem:[#allocation2 + $0x294] sm:$0xf]
    %v323 = vld [vmem:[#allocation2 + $0x298] sm:$0xf]
    %v324 = vld [vmem:[#allocation2 + $0x29c] sm:$0xf]
    %v325 = vld [vmem:[#allocation2 + $0x2a0] sm:$0xf]
    %v326 = vld [vmem:[#allocation2 + $0x2a4] sm:$0xf]
    %v327 = vld [vmem:[#allocation2 + $0x2a8] sm:$0xf]
    %v328 = vld [vmem:[#allocation2 + $0x2ac] sm:$0xf]
    %v329 = vld [vmem:[#allocation2 + $0x2b0] sm:$0xf]
    %v330 = vld [vmem:[#allocation2 + $0x2b4] sm:$0xf]
    %v331 = vld [vmem:[#allocation2 + $0x2b8] sm:$0xf]
    %v332 = vld [vmem:[#allocation2 + $0x2bc] sm:$0xf]
    %v333 = vld [vmem:[#allocation2 + $0x2c0] sm:$0xf]
    %v334 = vld [vmem:[#allocation2 + $0x2c4] sm:$0xf]
    %v335 = vld [vmem:[#allocation2 + $0x2c8] sm:$0xf]
    %v336 = vld [vmem:[#allocation2 + $0x2cc] sm:$0xf]
    %v337 = vld [vmem:[#allocation2 + $0x2d0] sm:$0xf]
    %v338 = vld [vmem:[#allocation2 + $0x2d4] sm:$0xf]
    %v339 = vld [vmem:[#allocation2 + $0x2d8] sm:$0xf]
    %v340 = vld [vmem:[#allocation2 + $0x2dc] sm:$0xf]
    %v341 = vld [vmem:[#allocation2 + $0x2e0] sm:$0xf]
    %v342 = vld [vmem:[#allocation2 + $0x2e4] sm:$0xf]
    %v343 = vld [vmem:[#allocation2 + $0x2e8] sm:$0xf]
    %v344 = vld [vmem:[#allocation2 + $0x2ec] sm:$0xf]
    %v345 = vld [vmem:[#allocation2 + $0x2f0] sm:$0xf]
    %v346 = vld [vmem:[#allocation2 + $0x2f4] sm:$0xf]
    %v347 = vld [vmem:[#allocation2 + $0x2f8] sm:$0xf]
    %v348 = vld [vmem:[#allocation2 + $0x2fc] sm:$0xf]
    %v349 = vld [vmem:[#allocation2 + $0x300] sm:$0xf]
    %v350 = vld [vmem:[#allocation2 + $0x304] sm:$0xf]
    %v351 = vld [vmem:[#allocation2 + $0x308] sm:$0xf]
    %v352 = vld [vmem:[#allocation2 + $0x30c] sm:$0xf]
    %v353 = vld [vmem:[#allocation2 + $0x310] sm:$0xf]
    %v354 = vld [vmem:[#allocation2 + $0x314] sm:$0xf]
    %v355 = vld [vmem:[#allocation2 + $0x318] sm:$0xf]
    %v356 = vld [vmem:[#allocation2 + $0x31c] sm:$0xf]
    %v357 = vld [vmem:[#allocation2 + $0x320] sm:$0xf]
    %v358 = vld [vmem:[#allocation2 + $0x324] sm:$0xf]
    %v359 = vld [vmem:[#allocation2 + $0x328] sm:$0xf]
    %v360 = vld [vmem:[#allocation2 + $0x32c] sm:$0xf]
    %v361 = vld [vmem:[#allocation2 + $0x330] sm:$0xf]
    %v362 = vld [vmem:[#allocation2 + $0x334] sm:$0xf]
    %v363 = vld [vmem:[#allocation2 + $0x338] sm:$0xf]
    %v364 = vld [vmem:[#allocation2 + $0x33c] sm:$0xf]
    %v365 = vld [vmem:[#allocation2 + $0x340] sm:$0xf]
    %v366 = vld [vmem:[#allocation2 + $0x344] sm:$0xf]
    %v367 = vld [vmem:[#allocation2 + $0x348] sm:$0xf]
    %v368 = vld [vmem:[#allocation2 + $0x34c] sm:$0xf]
    %v369 = vld [vmem:[#allocation2 + $0x350] sm:$0xf]
    %v370 = vld [vmem:[#allocation2 + $0x354] sm:$0xf]
    %v371 = vld [vmem:[#allocation2 + $0x358] sm:$0xf]
    %v372 = vld [vmem:[#allocation2 + $0x35c] sm:$0xf]
    %v373 = vld [vmem:[#allocation2 + $0x360] sm:$0xf]
    %v374 = vld [vmem:[#allocation2 + $0x364] sm:$0xf]
    %v375 = vld [vmem:[#allocation2 + $0x368] sm:$0xf]
    %v376 = vld [vmem:[#allocation2 + $0x36c] sm:$0xf]
    %v377 = vld [vmem:[#allocation2 + $0x370] sm:$0xf]
    %v378 = vld [vmem:[#allocation2 + $0x374] sm:$0xf]
    %v379 = vld [vmem:[#allocation2 + $0x378] sm:$0xf]
    %v380 = vld [vmem:[#allocation2 + $0x37c] sm:$0xf]
    %v381 = vld [vmem:[#allocation2 + $0x380] sm:$0xf]
    %v382 = vld [vmem:[#allocation2 + $0x384] sm:$0xf]
    %v383 = vld [vmem:[#allocation2 + $0x388] sm:$0xf]
    %v384 = vld [vmem:[#allocation2 + $0x38c] sm:$0xf]
    %v385 = vld [vmem:[#allocation2 + $0x390] sm:$0xf]
    %v386 = vld [vmem:[#allocation2 + $0x394] sm:$0xf]
    %v387 = vld [vmem:[#allocation2 + $0x398] sm:$0xf]
    %v388 = vld [vmem:[#allocation2 + $0x39c] sm:$0xf]
    %v389 = vld [vmem:[#allocation2 + $0x3a0] sm:$0xf]
    %v390 = vld [vmem:[#allocation2 + $0x3a4] sm:$0xf]
    %v391 = vld [vmem:[#allocation2 + $0x3a8] sm:$0xf]
    %v392 = vld [vmem:[#allocation2 + $0x3ac] sm:$0xf]
    %v393 = vld [vmem:[#allocation2 + $0x3b0] sm:$0xf]
    %v394 = vld [vmem:[#allocation2 + $0x3b4] sm:$0xf]
    %v395 = vld [vmem:[#allocation2 + $0x3b8] sm:$0xf]
    %v396 = vld [vmem:[#allocation2 + $0x3bc] sm:$0xf]
    %v397 = vld [vmem:[#allocation2 + $0x3c0] sm:$0xf]
    %v398 = vld [vmem:[#allocation2 + $0x3c4] sm:$0xf]
    %v399 = vld [vmem:[#allocation2 + $0x3c8] sm:$0xf]
    %v400 = vld [vmem:[#allocation2 + $0x3cc] sm:$0xf]
    %v401 = vld [vmem:[#allocation2 + $0x3d0] sm:$0xf]
    %v402 = vld [vmem:[#allocation2 + $0x3d4] sm:$0xf]
    %v403 = vld [vmem:[#allocation2 + $0x3d8] sm:$0xf]
    %v404 = vld [vmem:[#allocation2 + $0x3dc] sm:$0xf]
    %v405 = vld [vmem:[#allocation2 + $0x3e0] sm:$0xf]
    %v406 = vld [vmem:[#allocation2 + $0x3e4] sm:$0xf]
    %v407 = vld [vmem:[#allocation2 + $0x3e8] sm:$0xf]
    %v408 = vld [vmem:[#allocation2 + $0x3ec] sm:$0xf]
    %v409 = vld [vmem:[#allocation2 + $0x3f0] sm:$0xf]
    %v410 = vld [vmem:[#allocation2 + $0x3f4] sm:$0xf]
    %v411 = vld [vmem:[#allocation2 + $0x3f8] sm:$0xf]
    %v412 = vld [vmem:[#allocation2 + $0x3fc] sm:$0xf]
    %v413 = vld [vmem:[#allocation5] sm:$0xff]
    %v414 = vld [vmem:[#allocation5 + $0x8] sm:$0xff]
    %v415 = vld [vmem:[#allocation5 + $0x10] sm:$0xff]
    %v416 = vld [vmem:[#allocation5 + $0x18] sm:$0xff]
    %v417 = vld [vmem:[#allocation5 + $0x20] sm:$0xff]
    %v418 = vld [vmem:[#allocation5 + $0x28] sm:$0xff]
    %v419 = vld [vmem:[#allocation5 + $0x30] sm:$0xff]
    %v420 = vld [vmem:[#allocation5 + $0x38] sm:$0xff]
    %v421 = vld [vmem:[#allocation5 + $0x40] sm:$0xff]
    %v422 = vld [vmem:[#allocation5 + $0x48] sm:$0xff]
    %v423 = vld [vmem:[#allocation5 + $0x50] sm:$0xff]
    %v424 = vld [vmem:[#allocation5 + $0x58] sm:$0xff]
    %v425 = vld [vmem:[#allocation5 + $0x60] sm:$0xff]
    %v426 = vld [vmem:[#allocation5 + $0x68] sm:$0xff]
    %v427 = vld [vmem:[#allocation5 + $0x70] sm:$0xff]
    %v428 = vld [vmem:[#allocation5 + $0x78] sm:$0xff]
    %v429 = vld [vmem:[#allocation5 + $0x80] sm:$0xff]
    %v430 = vld [vmem:[#allocation5 + $0x88] sm:$0xff]
    %v431 = vld [vmem:[#allocation5 + $0x90] sm:$0xff]
    %v432 = vld [vmem:[#allocation5 + $0x98] sm:$0xff]
    %v433 = vld [vmem:[#allocation5 + $0xa0] sm:$0xff]
    %v434 = vld [vmem:[#allocation5 + $0xa8] sm:$0xff]
    %v435 = vld [vmem:[#allocation5 + $0xb0] sm:$0xff]
    %v436 = vld [vmem:[#allocation5 + $0xb8] sm:$0xff]
    %v437 = vld [vmem:[#allocation5 + $0xc0] sm:$0xff]
    %v438 = vld [vmem:[#allocation5 + $0xc8] sm:$0xff]
    %v439 = vld [vmem:[#allocation5 + $0xd0] sm:$0xff]
    %v440 = vld [vmem:[#allocation5 + $0xd8] sm:$0xff]
    %v441 = vld [vmem:[#allocation5 + $0xe0] sm:$0xff]
    %v442 = vld [vmem:[#allocation5 + $0xe8] sm:$0xff]
    %v443 = vld [vmem:[#allocation5 + $0xf0] sm:$0xff]
    %v444 = vld [vmem:[#allocation5 + $0xf8] sm:$0xff]
    %v445 = vld [vmem:[#allocation5 + $0x100] sm:$0xff]
    %v446 = vld [vmem:[#allocation5 + $0x108] sm:$0xff]
    %v447 = vld [vmem:[#allocation5 + $0x110] sm:$0xff]
    %v448 = vld [vmem:[#allocation5 + $0x118] sm:$0xff]
    %v449 = vld [vmem:[#allocation5 + $0x120] sm:$0xff]
    %v450 = vld [vmem:[#allocation5 + $0x128] sm:$0xff]
    %v451 = vld [vmem:[#allocation5 + $0x130] sm:$0xff]
    %v452 = vld [vmem:[#allocation5 + $0x138] sm:$0xff]
    %v453 = vld [vmem:[#allocation5 + $0x140] sm:$0xff]
    %v454 = vld [vmem:[#allocation5 + $0x148] sm:$0xff]
    %v455 = vld [vmem:[#allocation5 + $0x150] sm:$0xff]
    %v456 = vld [vmem:[#allocation5 + $0x158] sm:$0xff]
    %v457 = vld [vmem:[#allocation5 + $0x160] sm:$0xff]
    %v458 = vld [vmem:[#allocation5 + $0x168] sm:$0xff]
    %v459 = vld [vmem:[#allocation5 + $0x170] sm:$0xff]
    %v460 = vld [vmem:[#allocation5 + $0x178] sm:$0xff]
    %v461 = vld [vmem:[#allocation5 + $0x180] sm:$0xff]
    %v462 = vld [vmem:[#allocation5 + $0x188] sm:$0xff]
    %v463 = vld [vmem:[#allocation5 + $0x190] sm:$0xff]
    %v464 = vld [vmem:[#allocation5 + $0x198] sm:$0xff]
    %v465 = vld [vmem:[#allocation5 + $0x1a0] sm:$0xff]
    %v466 = vld [vmem:[#allocation5 + $0x1a8] sm:$0xff]
    %v467 = vld [vmem:[#allocation5 + $0x1b0] sm:$0xff]
    %v468 = vld [vmem:[#allocation5 + $0x1b8] sm:$0xff]
    %v469 = vld [vmem:[#allocation5 + $0x1c0] sm:$0xff]
    %v470 = vld [vmem:[#allocation5 + $0x1c8] sm:$0xff]
    %v471 = vld [vmem:[#allocation5 + $0x1d0] sm:$0xff]
    %v472 = vld [vmem:[#allocation5 + $0x1d8] sm:$0xff]
    %v473 = vld [vmem:[#allocation5 + $0x1e0] sm:$0xff]
    %v474 = vld [vmem:[#allocation5 + $0x1e8] sm:$0xff]
    %v475 = vld [vmem:[#allocation5 + $0x1f0] sm:$0xff]
    %v476 = vld [vmem:[#allocation5 + $0x1f8] sm:$0xff]
    %v477 = vld [vmem:[#allocation5 + $0x200] sm:$0xff]
    %v478 = vld [vmem:[#allocation5 + $0x208] sm:$0xff]
    %v479 = vld [vmem:[#allocation5 + $0x210] sm:$0xff]
    %v480 = vld [vmem:[#allocation5 + $0x218] sm:$0xff]
    %v481 = vld [vmem:[#allocation5 + $0x220] sm:$0xff]
    %v482 = vld [vmem:[#allocation5 + $0x228] sm:$0xff]
    %v483 = vld [vmem:[#allocation5 + $0x230] sm:$0xff]
    %v484 = vld [vmem:[#allocation5 + $0x238] sm:$0xff]
    %v485 = vld [vmem:[#allocation5 + $0x240] sm:$0xff]
    %v486 = vld [vmem:[#allocation5 + $0x248] sm:$0xff]
    %v487 = vld [vmem:[#allocation5 + $0x250] sm:$0xff]
    %v488 = vld [vmem:[#allocation5 + $0x258] sm:$0xff]
    %v489 = vld [vmem:[#allocation5 + $0x260] sm:$0xff]
    %v490 = vld [vmem:[#allocation5 + $0x268] sm:$0xff]
    %v491 = vld [vmem:[#allocation5 + $0x270] sm:$0xff]
    %v492 = vld [vmem:[#allocation5 + $0x278] sm:$0xff]
    %v493 = vld [vmem:[#allocation5 + $0x280] sm:$0xff]
    %v494 = vld [vmem:[#allocation5 + $0x288] sm:$0xff]
    %v495 = vld [vmem:[#allocation5 + $0x290] sm:$0xff]
    %v496 = vld [vmem:[#allocation5 + $0x298] sm:$0xff]
    %v497 = vld [vmem:[#allocation5 + $0x2a0] sm:$0xff]
    %v498 = vld [vmem:[#allocation5 + $0x2a8] sm:$0xff]
    %v499 = vld [vmem:[#allocation5 + $0x2b0] sm:$0xff]
    %v500 = vld [vmem:[#allocation5 + $0x2b8] sm:$0xff]
    %v501 = vld [vmem:[#allocation5 + $0x2c0] sm:$0xff]
    %v502 = vld [vmem:[#allocation5 + $0x2c8] sm:$0xff]
    %v503 = vld [vmem:[#allocation5 + $0x2d0] sm:$0xff]
    %v504 = vld [vmem:[#allocation5 + $0x2d8] sm:$0xff]
    %v505 = vld [vmem:[#allocation5 + $0x2e0] sm:$0xff]
    %v506 = vld [vmem:[#allocation5 + $0x2e8] sm:$0xff]
    %v507 = vld [vmem:[#allocation5 + $0x2f0] sm:$0xff]
    %v508 = vld [vmem:[#allocation5 + $0x2f8] sm:$0xff]
    %v509 = vld [vmem:[#allocation5 + $0x300] sm:$0xff]
    %v510 = vld [vmem:[#allocation5 + $0x308] sm:$0xff]
    %v511 = vld [vmem:[#allocation5 + $0x310] sm:$0xff]
    %v512 = vld [vmem:[#allocation5 + $0x318] sm:$0xff]
    %v513 = vld [vmem:[#allocation5 + $0x320] sm:$0xff]
    %v514 = vld [vmem:[#allocation5 + $0x328] sm:$0xff]
    %v515 = vld [vmem:[#allocation5 + $0x330] sm:$0xff]
    %v516 = vld [vmem:[#allocation5 + $0x338] sm:$0xff]
    %v517 = vld [vmem:[#allocation5 + $0x340] sm:$0xff]
    %v518 = vld [vmem:[#allocation5 + $0x348] sm:$0xff]
    %v519 = vld [vmem:[#allocation5 + $0x350] sm:$0xff]
    %v520 = vld [vmem:[#allocation5 + $0x358] sm:$0xff]
    %v521 = vld [vmem:[#allocation5 + $0x360] sm:$0xff]
    %v522 = vld [vmem:[#allocation5 + $0x368] sm:$0xff]
    %v523 = vld [vmem:[#allocation5 + $0x370] sm:$0xff]
    %v524 = vld [vmem:[#allocation5 + $0x378] sm:$0xff]
    %v525 = vld [vmem:[#allocation5 + $0x380] sm:$0xff]
    %v526 = vld [vmem:[#allocation5 + $0x388] sm:$0xff]
    %v527 = vld [vmem:[#allocation5 + $0x390] sm:$0xff]
    %v528 = vld [vmem:[#allocation5 + $0x398] sm:$0xff]
    %v529 = vld [vmem:[#allocation5 + $0x3a0] sm:$0xff]
    %v530 = vld [vmem:[#allocation5 + $0x3a8] sm:$0xff]
    %v531 = vld [vmem:[#allocation5 + $0x3b0] sm:$0xff]
    %v532 = vld [vmem:[#allocation5 + $0x3b8] sm:$0xff]
    %v533 = vld [vmem:[#allocation5 + $0x3c0] sm:$0xff]
    %v534 = vld [vmem:[#allocation5 + $0x3c8] sm:$0xff]
    %v535 = vld [vmem:[#allocation5 + $0x3d0] sm:$0xff]
    %v536 = vld [vmem:[#allocation5 + $0x3d8] sm:$0xff]
    %v537 = vld [vmem:[#allocation5 + $0x3e0] sm:$0xff]
    %v538 = vld [vmem:[#allocation5 + $0x3e8] sm:$0xff]
    %v539 = vld [vmem:[#allocation5 + $0x3f0] sm:$0xff]
    %v540 = vld [vmem:[#allocation5 + $0x3f8] sm:$0xff]
    %v541 = vpack.c.bf16 %v81, %v80
    %v543 = vlaneseq
    %v544 = vshrl.u32 %v543, 7
    %v545 = vsub.s32 0, %v544
    %v546 = vrot.slane %v82, %v545
    %v547 = vlaneseq
    %v548 = vshrl.u32 %v547, 7
    %v549 = vsub.s32 2, %v548
    %v550 = vrot.slane %v82, %v549
    %v551 = vlaneseq
    %v552 = vshrl.u32 %v551, 7
    %v553 = vsub.s32 4, %v552
    %v554 = vrot.slane %v82, %v553
    %v558 = vlaneseq
    %v559 = vshrl.u32 %v558, 7
    %v560 = vsub.s32 0, %v559
    %v561 = vrot.slane %v546, %v560
    %v562 = vlaneseq
    %v563 = vshrl.u32 %v562, 7
    %v564 = vsub.s32 0, %v563
    %v565 = vrot.slane %v550, %v564
    %v566 = vlaneseq
    %v567 = vshrl.u32 %v566, 7
    %v568 = vsub.s32 0, %v567
    %v569 = vrot.slane %v554, %v568
    %v618 = vunpack.c.l.b16 %v93
    %v619 = vunpack.c.l.b16 %v94
    %v620 = vunpack.c.l.b16 %v95
    %v621 = vunpack.c.l.b16 %v96
    %v622 = vunpack.c.l.b16 %v97
    %v623 = vunpack.c.l.b16 %v98
    %v624 = vunpack.c.l.b16 %v99
    %v625 = vunpack.c.l.b16 %v100
    %v626 = vunpack.c.l.b16 %v101
    %v627 = vunpack.c.l.b16 %v102
    %v628 = vunpack.c.l.b16 %v103
    %v629 = vunpack.c.l.b16 %v104
    %v630 = vunpack.c.l.b16 %v105
    %v631 = vunpack.c.l.b16 %v106
    %v632 = vunpack.c.l.b16 %v107
    %v633 = vunpack.c.l.b16 %v108
    %v634 = vunpack.c.l.b16 %v109
    %v635 = vunpack.c.l.b16 %v110
    %v636 = vunpack.c.l.b16 %v111
    %v637 = vunpack.c.l.b16 %v112
    %v638 = vunpack.c.l.b16 %v113
    %v639 = vunpack.c.l.b16 %v114
    %v640 = vunpack.c.l.b16 %v115
    %v641 = vunpack.c.l.b16 %v116
    %v642 = vunpack.c.l.b16 %v117
    %v643 = vunpack.c.l.b16 %v118
    %v644 = vunpack.c.l.b16 %v119
    %v645 = vunpack.c.l.b16 %v120
    %v646 = vunpack.c.l.b16 %v121
    %v647 = vunpack.c.l.b16 %v122
    %v648 = vunpack.c.l.b16 %v123
    %v649 = vunpack.c.l.b16 %v124
    %v650 = vunpack.c.l.b16 %v125
    %v651 = vunpack.c.l.b16 %v126
    %v652 = vunpack.c.l.b16 %v127
    %v653 = vunpack.c.l.b16 %v128
    %v654 = vunpack.c.l.b16 %v129
    %v655 = vunpack.c.l.b16 %v130
    %v656 = vunpack.c.l.b16 %v131
    %v657 = vunpack.c.l.b16 %v132
    %v658 = vunpack.c.l.b16 %v133
    %v659 = vunpack.c.l.b16 %v134
    %v660 = vunpack.c.l.b16 %v135
    %v661 = vunpack.c.l.b16 %v136
    %v662 = vunpack.c.l.b16 %v137
    %v663 = vunpack.c.l.b16 %v138
    %v664 = vunpack.c.l.b16 %v139
    %v665 = vunpack.c.l.b16 %v140
    %v666 = vpack.c.b16 %v619, %v618
    %v667 = vpack.c.b16 %v621, %v620
    %v668 = vpack.c.b16 %v623, %v622
    %v669 = vpack.c.b16 %v625, %v624
    %v670 = vpack.c.b16 %v627, %v626
    %v671 = vpack.c.b16 %v629, %v628
    %v672 = vpack.c.b16 %v631, %v630
    %v673 = vpack.c.b16 %v633, %v632
    %v674 = vpack.c.b16 %v635, %v634
    %v675 = vpack.c.b16 %v637, %v636
    %v676 = vpack.c.b16 %v639, %v638
    %v677 = vpack.c.b16 %v641, %v640
    %v678 = vpack.c.b16 %v643, %v642
    %v679 = vpack.c.b16 %v645, %v644
    %v680 = vpack.c.b16 %v647, %v646
    %v681 = vpack.c.b16 %v649, %v648
    %v682 = vpack.c.b16 %v651, %v650
    %v683 = vpack.c.b16 %v653, %v652
    %v684 = vpack.c.b16 %v655, %v654
    %v685 = vpack.c.b16 %v657, %v656
    %v686 = vpack.c.b16 %v659, %v658
    %v687 = vpack.c.b16 %v661, %v660
    %v688 = vpack.c.b16 %v663, %v662
    %v689 = vpack.c.b16 %v665, %v664
    %714 = vmatprep.subr.bf16.mxu0 0
    %715 = vmatpush1.bf16.xpose.msra.mxu0 %v666
    %716 = vmatprep.subr.bf16.mxu0 0
    %717 = vmatpush1.bf16.xpose.msra.mxu0 %v667
    %718 = vmatprep.subr.bf16.mxu0 0
    %719 = vmatpush1.bf16.xpose.msra.mxu0 %v668
    %720 = vmatprep.subr.bf16.mxu0 0
    %721 = vmatpush1.bf16.xpose.msra.mxu0 %v669
    %722 = vmatprep.subr.bf16.mxu0 0
    %723 = vmatpush1.bf16.xpose.msra.mxu0 %v670
    %724 = vmatprep.subr.bf16.mxu0 0
    %725 = vmatpush1.bf16.xpose.msra.mxu0 %v671
    %726 = vmatprep.subr.bf16.mxu0 0
    %727 = vmatpush1.bf16.xpose.msra.mxu0 %v672
    %728 = vmatprep.subr.bf16.mxu0 0
    %729 = vmatpush1.bf16.xpose.msra.mxu0 %v673
    %730 = vmatprep.subr.bf16.mxu0 0
    %731 = vmatpush1.bf16.xpose.msra.mxu0 %v674
    %732 = vmatprep.subr.bf16.mxu0 0
    %733 = vmatpush1.bf16.xpose.msra.mxu0 %v675
    %734 = vmatprep.subr.bf16.mxu0 0
    %735 = vmatpush1.bf16.xpose.msra.mxu0 %v676
    %736 = vmatprep.subr.bf16.mxu0 0
    %737 = vmatpush1.bf16.xpose.msra.mxu0 %v677
    %738 = vmatprep.subr.bf16.mxu0 0
    %739 = vmatpush1.bf16.xpose.msra.mxu0 %v678
    %740 = vmatprep.subr.bf16.mxu0 0
    %741 = vmatpush1.bf16.xpose.msra.mxu0 %v679
    %742 = vmatprep.subr.bf16.mxu0 0
    %743 = vmatpush1.bf16.xpose.msra.mxu0 %v680
    %744 = vmatprep.subr.bf16.mxu0 0
    %745 = vmatpush1.bf16.xpose.msra.mxu0 %v681
    %746 = vmatprep.mubr.bf16.mxu0 0
    %747 = vmatmul.mubr.bf16.gmra.mrb[0].mxu0 %v541
    %v748 = vpop.f32.mrb[0].mxu0
    %v749 = vadd.f32 %v561, %v748
    %v750 = vpop.f32.mrb[0].mxu0
    %v751 = vadd.f32 %v565, %v750
    %v752 = vpop.f32.mrb[0].mxu0
    %v753 = vadd.f32 %v561, %v752
    %v754 = vpop.f32.mrb[0].mxu0
    %v755 = vadd.f32 %v565, %v754
    %756 = vdwg.mxu0
    %757 = vmatprep.subr.bf16.mxu0 0
    %758 = vmatpush1.bf16.xpose.msra.mxu0 %v682
    %759 = vmatprep.subr.bf16.mxu0 0
    %760 = vmatpush1.bf16.xpose.msra.mxu0 %v683
    %761 = vmatprep.subr.bf16.mxu0 0
    %762 = vmatpush1.bf16.xpose.msra.mxu0 %v684
    %763 = vmatprep.subr.bf16.mxu0 0
    %764 = vmatpush1.bf16.xpose.msra.mxu0 %v685
    %765 = vmatprep.subr.bf16.mxu0 0
    %766 = vmatpush1.bf16.xpose.msra.mxu0 %v686
    %767 = vmatprep.subr.bf16.mxu0 0
    %768 = vmatpush1.bf16.xpose.msra.mxu0 %v687
    %769 = vmatprep.subr.bf16.mxu0 0
    %770 = vmatpush1.bf16.xpose.msra.mxu0 %v688
    %771 = vmatprep.subr.bf16.mxu0 0
    %772 = vmatpush1.bf16.xpose.msra.mxu0 %v689
    %773 = vmatprep.subr.bf16.mxu0 0
    %774 = vmatpush1.bf16.xpose.msra.mxu0 0
    %775 = vmatprep.subr.bf16.mxu0 0
    %776 = vmatpush1.bf16.xpose.msra.mxu0 0
    %777 = vmatprep.subr.bf16.mxu0 0
    %778 = vmatpush1.bf16.xpose.msra.mxu0 0
    %779 = vmatprep.subr.bf16.mxu0 0
    %780 = vmatpush1.bf16.xpose.msra.mxu0 0
    %781 = vmatprep.subr.bf16.mxu0 0
    %782 = vmatpush1.bf16.xpose.msra.mxu0 0
    %783 = vmatprep.subr.bf16.mxu0 0
    %784 = vmatpush1.bf16.xpose.msra.mxu0 0
    %785 = vmatprep.subr.bf16.mxu0 0
    %786 = vmatpush1.bf16.xpose.msra.mxu0 0
    %787 = vmatprep.subr.bf16.mxu0 0
    %788 = vmatpush1.bf16.xpose.msra.mxu0 0
    %789 = vmatprep.mubr.bf16.mxu0 0
    %790 = vmatmul.mubr.bf16.gmra.mrb[0].mxu0 %v541
    %v791 = vpop.f32.mrb[0].mxu0
    %v792 = vadd.f32 %v569, %v791
    %v793 = vpop.f32.mrb[0].mxu0
    %v794 = vpop.f32.mrb[0].mxu0
    %v795 = vadd.f32 %v569, %v794
    %v796 = vpop.f32.mrb[0].mxu0
    %797 = vdwg.mxu0
    %v798 = vpack.c.bf16 %v753, %v749
    %v799 = vpack.c.bf16 %v755, %v751
    %v800 = vpack.c.bf16 %v795, %v792
    %v802 = vunpack.c.l.b16 %v798
    %v803 = vunpack.c.h.b16 %v798
    %v804 = vpack.c.b16 %v802, %v802
    %v805 = vpack.c.b16 %v803, %v803
    %v807 = vunpack.c.l.b16 %v799
    %v808 = vunpack.c.h.b16 %v799
    %v809 = vpack.c.b16 %v807, %v807
    %v810 = vpack.c.b16 %v808, %v808
    %v812 = vunpack.c.l.b16 %v800
    %v813 = vunpack.c.h.b16 %v800
    %v814 = vpack.c.b16 %v812, %v812
    %v815 = vpack.c.b16 %v813, %v813
    %vm816 = vcmask 130048
    %v818 = vsel %vm816, %v804, 0
    %v821 = vsel %vm816, %v809, 0
    %823 = vmatprep.subr.bf16.mxu0 0
    %824 = vmatpush1.bf16.xpose.msra.mxu0 %v821
    %825 = vmatprep.subr.bf16.mxu0 0
    %826 = vmatpush1.bf16.xpose.msra.mxu0 0
    %827 = vmatprep.subr.bf16.mxu0 0
    %828 = vmatpush1.bf16.xpose.msra.mxu0 0
    %829 = vmatprep.subr.bf16.mxu0 0
    %830 = vmatpush1.bf16.xpose.msra.mxu0 0
    %831 = vmatprep.subr.bf16.mxu0 0
    %832 = vmatpush1.bf16.xpose.msra.mxu0 0
    %833 = vmatprep.subr.bf16.mxu0 0
    %834 = vmatpush1.bf16.xpose.msra.mxu0 0
    %835 = vmatprep.subr.bf16.mxu0 0
    %836 = vmatpush1.bf16.xpose.msra.mxu0 0
    %837 = vmatprep.subr.bf16.mxu0 0
    %838 = vmatpush1.bf16.xpose.msra.mxu0 0
    %839 = vmatprep.subr.bf16.mxu0 0
    %840 = vmatpush1.bf16.xpose.msra.mxu0 0
    %841 = vmatprep.subr.bf16.mxu0 0
    %842 = vmatpush1.bf16.xpose.msra.mxu0 0
    %843 = vmatprep.subr.bf16.mxu0 0
    %844 = vmatpush1.bf16.xpose.msra.mxu0 0
    %845 = vmatprep.subr.bf16.mxu0 0
    %846 = vmatpush1.bf16.xpose.msra.mxu0 0
    %847 = vmatprep.subr.bf16.mxu0 0
    %848 = vmatpush1.bf16.xpose.msra.mxu0 0
    %849 = vmatprep.subr.bf16.mxu0 0
    %850 = vmatpush1.bf16.xpose.msra.mxu0 0
    %851 = vmatprep.subr.bf16.mxu0 0
    %852 = vmatpush1.bf16.xpose.msra.mxu0 0
    %853 = vmatprep.subr.bf16.mxu0 0
    %854 = vmatpush1.bf16.xpose.msra.mxu0 0
    %855 = vmatprep.mubr.bf16.mxu0 0
    %856 = vmatmul.mubr.bf16.gmra.mrb[0].mxu0 %v818
    %v857 = vpop.f32.mrb[0].mxu0
    %v858 = vadd.f32 0.0, %v857
    %v859 = vpop.f32.mrb[0].mxu0
    %v860 = vpop.f32.mrb[0].mxu0
    %v861 = vpop.f32.mrb[0].mxu0
    %862 = vdwg.mxu0
    %v864 = vsel %vm816, %v805, 0
    %v867 = vsel %vm816, %v810, 0
    %869 = vmatprep.subr.bf16.mxu0 0
    %870 = vmatpush1.bf16.xpose.msra.mxu0 %v867
    %871 = vmatprep.subr.bf16.mxu0 0
    %872 = vmatpush1.bf16.xpose.msra.mxu0 0
    %873 = vmatprep.subr.bf16.mxu0 0
    %874 = vmatpush1.bf16.xpose.msra.mxu0 0
    %875 = vmatprep.subr.bf16.mxu0 0
    %876 = vmatpush1.bf16.xpose.msra.mxu0 0
    %877 = vmatprep.subr.bf16.mxu0 0
    %878 = vmatpush1.bf16.xpose.msra.mxu0 0
    %879 = vmatprep.subr.bf16.mxu0 0
    %880 = vmatpush1.bf16.xpose.msra.mxu0 0
    %881 = vmatprep.subr.bf16.mxu0 0
    %882 = vmatpush1.bf16.xpose.msra.mxu0 0
    %883 = vmatprep.subr.bf16.mxu0 0
    %884 = vmatpush1.bf16.xpose.msra.mxu0 0
    %885 = vmatprep.subr.bf16.mxu0 0
    %886 = vmatpush1.bf16.xpose.msra.mxu0 0
    %887 = vmatprep.subr.bf16.mxu0 0
    %888 = vmatpush1.bf16.xpose.msra.mxu0 0
    %889 = vmatprep.subr.bf16.mxu0 0
    %890 = vmatpush1.bf16.xpose.msra.mxu0 0
    %891 = vmatprep.subr.bf16.mxu0 0
    %892 = vmatpush1.bf16.xpose.msra.mxu0 0
    %893 = vmatprep.subr.bf16.mxu0 0
    %894 = vmatpush1.bf16.xpose.msra.mxu0 0
    %895 = vmatprep.subr.bf16.mxu0 0
    %896 = vmatpush1.bf16.xpose.msra.mxu0 0
    %897 = vmatprep.subr.bf16.mxu0 0
    %898 = vmatpush1.bf16.xpose.msra.mxu0 0
    %899 = vmatprep.subr.bf16.mxu0 0
    %900 = vmatpush1.bf16.xpose.msra.mxu0 0
    %901 = vmatprep.mubr.bf16.mxu0 0
    %902 = vmatmul.mubr.bf16.gmra.mrb[0].mxu0 %v864
    %v903 = vpop.f32.mrb[0].mxu0
    %v904 = vadd.f32 0.0, %v903
    %v905 = vpop.f32.mrb[0].mxu0
    %v906 = vpop.f32.mrb[0].mxu0
    %v907 = vpop.f32.mrb[0].mxu0
    %908 = vdwg.mxu0
    %vm909 = vcmask 64512
    %v910 = vsel %vm909, %v858, -inf
    %911 = vmax.xlane.f32.xlu0 %v910
    %v912 = vpop.xlane.xlu0 %911
    %v913 = vsel %vm909, %v904, -inf
    %914 = vmax.xlane.f32.xlu0 %v913
    %v915 = vpop.xlane.xlu0 %914
    %v916 = vsub.f32 %v858, %v912
    %v917 = vsub.f32 %v904, %v915
    %v918 = vmul.f32 %v916, 1.442695
    %v919 = vpow.pop %v918
    %v920 = vmul.f32 %v917, 1.442695
    %v921 = vpow.pop %v920
    %v922 = vsel %vm909, %v919, 0.0
    %923 = vadd.xlane.f32.xlu0 %v922
    %v924 = vpop.xlane.xlu0 %923
    %v925 = vsel %vm909, %v921, 0.0
    %926 = vadd.xlane.f32.xlu0 %v925
    %v927 = vpop.xlane.xlu0 %926
    %v928 = vrcp.pop %v924
    %v929 = vrcp.pop %v927
    %v930 = vmul.f32 %v919, %v928
    %v931 = vmul.f32 %v921, %v929
    %v932 = vpack.c.bf16 %v930, %v930
    %v933 = vpack.c.bf16 %v931, %v931
    %v935 = vsel %vm909, %v932, 0
    %vm937 = vcmask 1043456
    %v939 = vsel %vm937, %v814, 0
    %941 = vmatprep.subr.bf16.mxu0 0
    %942 = vmatpush1.bf16.msra.mxu0 %v939
    %943 = vmatprep.subr.bf16.mxu0 0
    %944 = vmatpush1.bf16.msra.mxu0 0
    %945 = vmatprep.subr.bf16.mxu0 0
    %946 = vmatpush1.bf16.msra.mxu0 0
    %947 = vmatprep.subr.bf16.mxu0 0
    %948 = vmatpush1.bf16.msra.mxu0 0
    %949 = vmatprep.subr.bf16.mxu0 0
    %950 = vmatpush1.bf16.msra.mxu0 0
    %951 = vmatprep.subr.bf16.mxu0 0
    %952 = vmatpush1.bf16.msra.mxu0 0
    %953 = vmatprep.subr.bf16.mxu0 0
    %954 = vmatpush1.bf16.msra.mxu0 0
    %955 = vmatprep.subr.bf16.mxu0 0
    %956 = vmatpush1.bf16.msra.mxu0 0
    %957 = vmatprep.subr.bf16.mxu0 0
    %958 = vmatpush1.bf16.msra.mxu0 0
    %959 = vmatprep.subr.bf16.mxu0 0
    %960 = vmatpush1.bf16.msra.mxu0 0
    %961 = vmatprep.subr.bf16.mxu0 0
    %962 = vmatpush1.bf16.msra.mxu0 0
    %963 = vmatprep.subr.bf16.mxu0 0
    %964 = vmatpush1.bf16.msra.mxu0 0
    %965 = vmatprep.subr.bf16.mxu0 0
    %966 = vmatpush1.bf16.msra.mxu0 0
    %967 = vmatprep.subr.bf16.mxu0 0
    %968 = vmatpush1.bf16.msra.mxu0 0
    %969 = vmatprep.subr.bf16.mxu0 0
    %970 = vmatpush1.bf16.msra.mxu0 0
    %971 = vmatprep.subr.bf16.mxu0 0
    %972 = vmatpush1.bf16.msra.mxu0 0
    %973 = vmatprep.mubr.bf16.mxu0 0
    %974 = vmatmul.mubr.bf16.gmra.mrb[0].mxu0 %v935
    %v975 = vpop.f32.mrb[0].mxu0
    %v976 = vadd.f32 0.0, %v975
    %v977 = vpop.f32.mrb[0].mxu0
    %v978 = vpop.f32.mrb[0].mxu0
    %v979 = vpop.f32.mrb[0].mxu0
    %980 = vdwg.mxu0
    %v982 = vsel %vm909, %v933, 0
    %v985 = vsel %vm937, %v815, 0
    %987 = vmatprep.subr.bf16.mxu0 0
    %988 = vmatpush1.bf16.msra.mxu0 %v985
    %989 = vmatprep.subr.bf16.mxu0 0
    %990 = vmatpush1.bf16.msra.mxu0 0
    %991 = vmatprep.subr.bf16.mxu0 0
    %992 = vmatpush1.bf16.msra.mxu0 0
    %993 = vmatprep.subr.bf16.mxu0 0
    %994 = vmatpush1.bf16.msra.mxu0 0
    %995 = vmatprep.subr.bf16.mxu0 0
    %996 = vmatpush1.bf16.msra.mxu0 0
    %997 = vmatprep.subr.bf16.mxu0 0
    %998 = vmatpush1.bf16.msra.mxu0 0
    %999 = vmatprep.subr.bf16.mxu0 0
    %1000 = vmatpush1.bf16.msra.mxu0 0
    %1001 = vmatprep.subr.bf16.mxu0 0
    %1002 = vmatpush1.bf16.msra.mxu0 0
    %1003 = vmatprep.subr.bf16.mxu0 0
    %1004 = vmatpush1.bf16.msra.mxu0 0
    %1005 = vmatprep.subr.bf16.mxu0 0
    %1006 = vmatpush1.bf16.msra.mxu0 0
    %1007 = vmatprep.subr.bf16.mxu0 0
    %1008 = vmatpush1.bf16.msra.mxu0 0
    %1009 = vmatprep.subr.bf16.mxu0 0
    %1010 = vmatpush1.bf16.msra.mxu0 0
    %1011 = vmatprep.subr.bf16.mxu0 0
    %1012 = vmatpush1.bf16.msra.mxu0 0
    %1013 = vmatprep.subr.bf16.mxu0 0
    %1014 = vmatpush1.bf16.msra.mxu0 0
    %1015 = vmatprep.subr.bf16.mxu0 0
    %1016 = vmatpush1.bf16.msra.mxu0 0
    %1017 = vmatprep.subr.bf16.mxu0 0
    %1018 = vmatpush1.bf16.msra.mxu0 0
    %1019 = vmatprep.mubr.bf16.mxu0 0
    %1020 = vmatmul.mubr.bf16.gmra.mrb[0].mxu0 %v982
    %v1021 = vpop.f32.mrb[0].mxu0
    %v1022 = vadd.f32 0.0, %v1021
    %v1023 = vpop.f32.mrb[0].mxu0
    %v1024 = vpop.f32.mrb[0].mxu0
    %v1025 = vpop.f32.mrb[0].mxu0
    %1026 = vdwg.mxu0
    %v1027 = vpack.c.bf16 %v1022, %v976
    %1028 = vrot.lane.b32.xlu0 %v804, 112
    %v1029 = vpop.permute.xlu0 %1028
    %1030 = vrot.lane.b32.xlu0 %v809, 112
    %v1031 = vpop.permute.xlu0 %1030
    %v1033 = vsel %vm816, %v1029, 0
    %v1036 = vsel %vm816, %v1031, 0
    %1038 = vmatprep.subr.bf16.mxu0 0
    %1039 = vmatpush1.bf16.xpose.msra.mxu0 %v1036
    %1040 = vmatprep.subr.bf16.mxu0 0
    %1041 = vmatpush1.bf16.xpose.msra.mxu0 0
    %1042 = vmatprep.subr.bf16.mxu0 0
    %1043 = vmatpush1.bf16.xpose.msra.mxu0 0
    %1044 = vmatprep.subr.bf16.mxu0 0
    %1045 = vmatpush1.bf16.xpose.msra.mxu0 0
    %1046 = vmatprep.subr.bf16.mxu0 0
    %1047 = vmatpush1.bf16.xpose.msra.mxu0 0
    %1048 = vmatprep.subr.bf16.mxu0 0
    %1049 = vmatpush1.bf16.xpose.msra.mxu0 0
    %1050 = vmatprep.subr.bf16.mxu0 0
    %1051 = vmatpush1.bf16.xpose.msra.mxu0 0
    %1052 = vmatprep.subr.bf16.mxu0 0
    %1053 = vmatpush1.bf16.xpose.msra.mxu0 0
    %1054 = vmatprep.subr.bf16.mxu0 0
    %1055 = vmatpush1.bf16.xpose.msra.mxu0 0
    %1056 = vmatprep.subr.bf16.mxu0 0
    %1057 = vmatpush1.bf16.xpose.msra.mxu0 0
    %1058 = vmatprep.subr.bf16.mxu0 0
    %1059 = vmatpush1.bf16.xpose.msra.mxu0 0
    %1060 = vmatprep.subr.bf16.mxu0 0
    %1061 = vmatpush1.bf16.xpose.msra.mxu0 0
    %1062 = vmatprep.subr.bf16.mxu0 0
    %1063 = vmatpush1.bf16.xpose.msra.mxu0 0
    %1064 = vmatprep.subr.bf16.mxu0 0
    %1065 = vmatpush1.bf16.xpose.msra.mxu0 0
    %1066 = vmatprep.subr.bf16.mxu0 0
    %1067 = vmatpush1.bf16.xpose.msra.mxu0 0
    %1068 = vmatprep.subr.bf16.mxu0 0
    %1069 = vmatpush1.bf16.xpose.msra.mxu0 0
    %1070 = vmatprep.mubr.bf16.mxu0 0
    %1071 = vmatmul.mubr.bf16.gmra.mrb[0].mxu0 %v1033
    %v1072 = vpop.f32.mrb[0].mxu0
    %v1073 = vadd.f32 0.0, %v1072
    %v1074 = vpop.f32.mrb[0].mxu0
    %v1075 = vpop.f32.mrb[0].mxu0
    %v1076 = vpop.f32.mrb[0].mxu0
    %1077 = vdwg.mxu0
    %1078 = vrot.lane.b32.xlu0 %v805, 112
    %v1079 = vpop.permute.xlu0 %1078
    %1080 = vrot.lane.b32.xlu0 %v810, 112
    %v1081 = vpop.permute.xlu0 %1080
    %v1083 = vsel %vm816, %v1079, 0
    %v1086 = vsel %vm816, %v1081, 0
    %1088 = vmatprep.subr.bf16.mxu0 0
    %1089 = vmatpush1.bf16.xpose.msra.mxu0 %v1086
    %1090 = vmatprep.subr.bf16.mxu0 0
    %1091 = vmatpush1.bf16.xpose.msra.mxu0 0
    %1092 = vmatprep.subr.bf16.mxu0 0
    %1093 = vmatpush1.bf16.xpose.msra.mxu0 0
    %1094 = vmatprep.subr.bf16.mxu0 0
    %1095 = vmatpush1.bf16.xpose.msra.mxu0 0
    %1096 = vmatprep.subr.bf16.mxu0 0
    %1097 = vmatpush1.bf16.xpose.msra.mxu0 0
    %1098 = vmatprep.subr.bf16.mxu0 0
    %1099 = vmatpush1.bf16.xpose.msra.mxu0 0
    %1100 = vmatprep.subr.bf16.mxu0 0
    %1101 = vmatpush1.bf16.xpose.msra.mxu0 0
    %1102 = vmatprep.subr.bf16.mxu0 0
    %1103 = vmatpush1.bf16.xpose.msra.mxu0 0
    %1104 = vmatprep.subr.bf16.mxu0 0
    %1105 = vmatpush1.bf16.xpose.msra.mxu0 0
    %1106 = vmatprep.subr.bf16.mxu0 0
    %1107 = vmatpush1.bf16.xpose.msra.mxu0 0
    %1108 = vmatprep.subr.bf16.mxu0 0
    %1109 = vmatpush1.bf16.xpose.msra.mxu0 0
    %1110 = vmatprep.subr.bf16.mxu0 0
    %1111 = vmatpush1.bf16.xpose.msra.mxu0 0
    %1112 = vmatprep.subr.bf16.mxu0 0
    %1113 = vmatpush1.bf16.xpose.msra.mxu0 0
    %1114 = vmatprep.subr.bf16.mxu0 0
    %1115 = vmatpush1.bf16.xpose.msra.mxu0 0
    %1116 = vmatprep.subr.bf16.mxu0 0
    %1117 = vmatpush1.bf16.xpose.msra.mxu0 0
    %1118 = vmatprep.subr.bf16.mxu0 0
    %1119 = vmatpush1.bf16.xpose.msra.mxu0 0
    %1120 = vmatprep.mubr.bf16.mxu0 0
    %1121 = vmatmul.mubr.bf16.gmra.mrb[0].mxu0 %v1083
    %v1122 = vpop.f32.mrb[0].mxu0
    %v1123 = vadd.f32 0.0, %v1122
    %v1124 = vpop.f32.mrb[0].mxu0
    %v1125 = vpop.f32.mrb[0].mxu0
    %v1126 = vpop.f32.mrb[0].mxu0
    %1127 = vdwg.mxu0
    %v1128 = vsel %vm909, %v1073, -inf
    %1129 = vmax.xlane.f32.xlu0 %v1128
    %v1130 = vpop.xlane.xlu0 %1129
    %v1131 = vsel %vm909, %v1123, -inf
    %1132 = vmax.xlane.f32.xlu0 %v1131
    %v1133 = vpop.xlane.xlu0 %1132
    %v1134 = vsub.f32 %v1073, %v1130
    %v1135 = vsub.f32 %v1123, %v1133
    %v1136 = vmul.f32 %v1134, 1.442695
    %v1137 = vpow.pop %v1136
    %v1138 = vmul.f32 %v1135, 1.442695
    %v1139 = vpow.pop %v1138
    %v1140 = vsel %vm909, %v1137, 0.0
    %1141 = vadd.xlane.f32.xlu0 %v1140
    %v1142 = vpop.xlane.xlu0 %1141
    %v1143 = vsel %vm909, %v1139, 0.0
    %1144 = vadd.xlane.f32.xlu0 %v1143
    %v1145 = vpop.xlane.xlu0 %1144
    %v1146 = vrcp.pop %v1142
    %v1147 = vrcp.pop %v1145
    %v1148 = vmul.f32 %v1137, %v1146
    %v1149 = vmul.f32 %v1139, %v1147
    %v1150 = vpack.c.bf16 %v1148, %v1148
    %v1151 = vpack.c.bf16 %v1149, %v1149
    %1152 = vrot.lane.b32.xlu0 %v814, 112
    %v1153 = vpop.permute.xlu0 %1152
    %v1155 = vsel %vm909, %v1150, 0
    %v1158 = vsel %vm937, %v1153, 0
    %1160 = vmatprep.subr.bf16.mxu0 0
    %1161 = vmatpush1.bf16.msra.mxu0 %v1158
    %1162 = vmatprep.subr.bf16.mxu0 0
    %1163 = vmatpush1.bf16.msra.mxu0 0
    %1164 = vmatprep.subr.bf16.mxu0 0
    %1165 = vmatpush1.bf16.msra.mxu0 0
    %1166 = vmatprep.subr.bf16.mxu0 0
    %1167 = vmatpush1.bf16.msra.mxu0 0
    %1168 = vmatprep.subr.bf16.mxu0 0
    %1169 = vmatpush1.bf16.msra.mxu0 0
    %1170 = vmatprep.subr.bf16.mxu0 0
    %1171 = vmatpush1.bf16.msra.mxu0 0
    %1172 = vmatprep.subr.bf16.mxu0 0
    %1173 = vmatpush1.bf16.msra.mxu0 0
    %1174 = vmatprep.subr.bf16.mxu0 0
    %1175 = vmatpush1.bf16.msra.mxu0 0
    %1176 = vmatprep.subr.bf16.mxu0 0
    %1177 = vmatpush1.bf16.msra.mxu0 0
    %1178 = vmatprep.subr.bf16.mxu0 0
    %1179 = vmatpush1.bf16.msra.mxu0 0
    %1180 = vmatprep.subr.bf16.mxu0 0
    %1181 = vmatpush1.bf16.msra.mxu0 0
    %1182 = vmatprep.subr.bf16.mxu0 0
    %1183 = vmatpush1.bf16.msra.mxu0 0
    %1184 = vmatprep.subr.bf16.mxu0 0
    %1185 = vmatpush1.bf16.msra.mxu0 0
    %1186 = vmatprep.subr.bf16.mxu0 0
    %1187 = vmatpush1.bf16.msra.mxu0 0
    %1188 = vmatprep.subr.bf16.mxu0 0
    %1189 = vmatpush1.bf16.msra.mxu0 0
    %1190 = vmatprep.subr.bf16.mxu0 0
    %1191 = vmatpush1.bf16.msra.mxu0 0
    %1192 = vmatprep.mubr.bf16.mxu0 0
    %1193 = vmatmul.mubr.bf16.gmra.mrb[0].mxu0 %v1155
    %v1194 = vpop.f32.mrb[0].mxu0
    %v1195 = vadd.f32 0.0, %v1194
    %v1196 = vpop.f32.mrb[0].mxu0
    %v1197 = vpop.f32.mrb[0].mxu0
    %v1198 = vpop.f32.mrb[0].mxu0
    %1199 = vdwg.mxu0
    %1200 = vrot.lane.b32.xlu0 %v815, 112
    %v1201 = vpop.permute.xlu0 %1200
    %v1203 = vsel %vm909, %v1151, 0
    %v1206 = vsel %vm937, %v1201, 0
    %1208 = vmatprep.subr.bf16.mxu0 0
    %1209 = vmatpush1.bf16.msra.mxu0 %v1206
    %1210 = vmatprep.subr.bf16.mxu0 0
    %1211 = vmatpush1.bf16.msra.mxu0 0
    %1212 = vmatprep.subr.bf16.mxu0 0
    %1213 = vmatpush1.bf16.msra.mxu0 0
    %1214 = vmatprep.subr.bf16.mxu0 0
    %1215 = vmatpush1.bf16.msra.mxu0 0
    %1216 = vmatprep.subr.bf16.mxu0 0
    %1217 = vmatpush1.bf16.msra.mxu0 0
    %1218 = vmatprep.subr.bf16.mxu0 0
    %1219 = vmatpush1.bf16.msra.mxu0 0
    %1220 = vmatprep.subr.bf16.mxu0 0
    %1221 = vmatpush1.bf16.msra.mxu0 0
    %1222 = vmatprep.subr.bf16.mxu0 0
    %1223 = vmatpush1.bf16.msra.mxu0 0
    %1224 = vmatprep.subr.bf16.mxu0 0
    %1225 = vmatpush1.bf16.msra.mxu0 0
    %1226 = vmatprep.subr.bf16.mxu0 0
    %1227 = vmatpush1.bf16.msra.mxu0 0
    %1228 = vmatprep.subr.bf16.mxu0 0
    %1229 = vmatpush1.bf16.msra.mxu0 0
    %1230 = vmatprep.subr.bf16.mxu0 0
    %1231 = vmatpush1.bf16.msra.mxu0 0
    %1232 = vmatprep.subr.bf16.mxu0 0
    %1233 = vmatpush1.bf16.msra.mxu0 0
    %1234 = vmatprep.subr.bf16.mxu0 0
    %1235 = vmatpush1.bf16.msra.mxu0 0
    %1236 = vmatprep.subr.bf16.mxu0 0
    %1237 = vmatpush1.bf16.msra.mxu0 0
    %1238 = vmatprep.subr.bf16.mxu0 0
    %1239 = vmatpush1.bf16.msra.mxu0 0
    %1240 = vmatprep.mubr.bf16.mxu0 0
    %1241 = vmatmul.mubr.bf16.gmra.mrb[0].mxu0 %v1203
    %v1242 = vpop.f32.mrb[0].mxu0
    %v1243 = vadd.f32 0.0, %v1242
    %v1244 = vpop.f32.mrb[0].mxu0
    %v1245 = vpop.f32.mrb[0].mxu0
    %v1246 = vpop.f32.mrb[0].mxu0
    %1247 = vdwg.mxu0
    %v1248 = vpack.c.bf16 %v1243, %v1195
    %v1265 = vunpack.c.l.b16 %v141
    %v1266 = vunpack.c.l.b16 %v142
    %v1267 = vunpack.c.l.b16 %v143
    %v1268 = vunpack.c.l.b16 %v144
    %v1269 = vunpack.c.l.b16 %v145
    %v1270 = vunpack.c.l.b16 %v146
    %v1271 = vunpack.c.l.b16 %v147
    %v1272 = vunpack.c.l.b16 %v148
    %v1273 = vunpack.c.l.b16 %v149
    %v1274 = vunpack.c.l.b16 %v150
    %v1275 = vunpack.c.l.b16 %v151
    %v1276 = vunpack.c.l.b16 %v152
    %v1277 = vunpack.c.l.b16 %v153
    %v1278 = vunpack.c.l.b16 %v154
    %v1279 = vunpack.c.l.b16 %v155
    %v1280 = vunpack.c.l.b16 %v156
    %v1281 = vpack.c.b16 %v1266, %v1265
    %v1282 = vpack.c.b16 %v1268, %v1267
    %v1283 = vpack.c.b16 %v1270, %v1269
    %v1284 = vpack.c.b16 %v1272, %v1271
    %v1285 = vpack.c.b16 %v1274, %v1273
    %v1286 = vpack.c.b16 %v1276, %v1275
    %v1287 = vpack.c.b16 %v1278, %v1277
    %v1288 = vpack.c.b16 %v1280, %v1279
    %1289 = vrot.lane.b32.xlu0 %v1281, 112
    %v1290 = vpop.permute.xlu0 %1289
    %1291 = vrot.lane.b32.xlu0 %v1282, 112
    %v1292 = vpop.permute.xlu0 %1291
    %1293 = vrot.lane.b32.xlu0 %v1283, 112
    %v1294 = vpop.permute.xlu0 %1293
    %1295 = vrot.lane.b32.xlu0 %v1284, 112
    %v1296 = vpop.permute.xlu0 %1295
    %1297 = vrot.lane.b32.xlu0 %v1285, 112
    %v1298 = vpop.permute.xlu0 %1297
    %1299 = vrot.lane.b32.xlu0 %v1286, 112
    %v1300 = vpop.permute.xlu0 %1299
    %1301 = vrot.lane.b32.xlu0 %v1287, 112
    %v1302 = vpop.permute.xlu0 %1301
    %1303 = vrot.lane.b32.xlu0 %v1288, 112
    %v1304 = vpop.permute.xlu0 %1303
    %v1306 = vsel %vm816, %v1248, 0
    %v1309 = vsel %vm816, %v1290, 0
    %v1312 = vsel %vm816, %v1292, 0
    %v1315 = vsel %vm816, %v1294, 0
    %v1318 = vsel %vm816, %v1296, 0
    %v1321 = vsel %vm816, %v1298, 0
    %v1324 = vsel %vm816, %v1300, 0
    %v1327 = vsel %vm816, %v1302, 0
    %v1330 = vsel %vm816, %v1304, 0
    %1332 = vmatprep.subr.bf16.mxu0 0
    %1333 = vmatpush1.bf16.xpose.msra.mxu0 %v1309
    %1334 = vmatprep.subr.bf16.mxu0 0
    %1335 = vmatpush1.bf16.xpose.msra.mxu0 %v1312
    %1336 = vmatprep.subr.bf16.mxu0 0
    %1337 = vmatpush1.bf16.xpose.msra.mxu0 %v1315
    %1338 = vmatprep.subr.bf16.mxu0 0
    %1339 = vmatpush1.bf16.xpose.msra.mxu0 %v1318
    %1340 = vmatprep.subr.bf16.mxu0 0
    %1341 = vmatpush1.bf16.xpose.msra.mxu0 %v1321
    %1342 = vmatprep.subr.bf16.mxu0 0
    %1343 = vmatpush1.bf16.xpose.msra.mxu0 %v1324
    %1344 = vmatprep.subr.bf16.mxu0 0
    %1345 = vmatpush1.bf16.xpose.msra.mxu0 %v1327
    %1346 = vmatprep.subr.bf16.mxu0 0
    %1347 = vmatpush1.bf16.xpose.msra.mxu0 %v1330
    %1348 = vmatprep.subr.bf16.mxu0 0
    %1349 = vmatpush1.bf16.xpose.msra.mxu0 0
    %1350 = vmatprep.subr.bf16.mxu0 0
    %1351 = vmatpush1.bf16.xpose.msra.mxu0 0
    %1352 = vmatprep.subr.bf16.mxu0 0
    %1353 = vmatpush1.bf16.xpose.msra.mxu0 0
    %1354 = vmatprep.subr.bf16.mxu0 0
    %1355 = vmatpush1.bf16.xpose.msra.mxu0 0
    %1356 = vmatprep.subr.bf16.mxu0 0
    %1357 = vmatpush1.bf16.xpose.msra.mxu0 0
    %1358 = vmatprep.subr.bf16.mxu0 0
    %1359 = vmatpush1.bf16.xpose.msra.mxu0 0
    %1360 = vmatprep.subr.bf16.mxu0 0
    %1361 = vmatpush1.bf16.xpose.msra.mxu0 0
    %1362 = vmatprep.subr.bf16.mxu0 0
    %1363 = vmatpush1.bf16.xpose.msra.mxu0 0
    %1364 = vmatprep.mubr.bf16.mxu0 0
    %1365 = vmatmul.mubr.bf16.gmra.mrb[0].mxu0 %v1306
    %v1366 = vpop.f32.mrb[0].mxu0
    %v1367 = vadd.f32 0.0, %v1366
    %v1368 = vpop.f32.mrb[0].mxu0
    %v1369 = vpop.f32.mrb[0].mxu0
    %v1370 = vadd.f32 0.0, %v1369
    %v1371 = vpop.f32.mrb[0].mxu0
    %1372 = vdwg.mxu0
    %v1374 = vsel %vm816, %v1027, 0
    %v1377 = vsel %vm816, %v1281, 0
    %v1380 = vsel %vm816, %v1282, 0
    %v1383 = vsel %vm816, %v1283, 0
    %v1386 = vsel %vm816, %v1284, 0
    %v1389 = vsel %vm816, %v1285, 0
    %v1392 = vsel %vm816, %v1286, 0
    %v1395 = vsel %vm816, %v1287, 0
    %v1398 = vsel %vm816, %v1288, 0
    %1400 = vmatprep.subr.bf16.mxu0 0
    %1401 = vmatpush1.bf16.xpose.msra.mxu0 %v1377
    %1402 = vmatprep.subr.bf16.mxu0 0
    %1403 = vmatpush1.bf16.xpose.msra.mxu0 %v1380
    %1404 = vmatprep.subr.bf16.mxu0 0
    %1405 = vmatpush1.bf16.xpose.msra.mxu0 %v1383
    %1406 = vmatprep.subr.bf16.mxu0 0
    %1407 = vmatpush1.bf16.xpose.msra.mxu0 %v1386
    %1408 = vmatprep.subr.bf16.mxu0 0
    %1409 = vmatpush1.bf16.xpose.msra.mxu0 %v1389
    %1410 = vmatprep.subr.bf16.mxu0 0
    %1411 = vmatpush1.bf16.xpose.msra.mxu0 %v1392
    %1412 = vmatprep.subr.bf16.mxu0 0
    %1413 = vmatpush1.bf16.xpose.msra.mxu0 %v1395
    %1414 = vmatprep.subr.bf16.mxu0 0
    %1415 = vmatpush1.bf16.xpose.msra.mxu0 %v1398
    %1416 = vmatprep.subr.bf16.mxu0 0
    %1417 = vmatpush1.bf16.xpose.msra.mxu0 0
    %1418 = vmatprep.subr.bf16.mxu0 0
    %1419 = vmatpush1.bf16.xpose.msra.mxu0 0
    %1420 = vmatprep.subr.bf16.mxu0 0
    %1421 = vmatpush1.bf16.xpose.msra.mxu0 0
    %1422 = vmatprep.subr.bf16.mxu0 0
    %1423 = vmatpush1.bf16.xpose.msra.mxu0 0
    %1424 = vmatprep.subr.bf16.mxu0 0
    %1425 = vmatpush1.bf16.xpose.msra.mxu0 0
    %1426 = vmatprep.subr.bf16.mxu0 0
    %1427 = vmatpush1.bf16.xpose.msra.mxu0 0
    %1428 = vmatprep.subr.bf16.mxu0 0
    %1429 = vmatpush1.bf16.xpose.msra.mxu0 0
    %1430 = vmatprep.subr.bf16.mxu0 0
    %1431 = vmatpush1.bf16.xpose.msra.mxu0 0
    %1432 = vmatprep.mubr.bf16.mxu0 0
    %1433 = vmatmul.mubr.bf16.gmra.mrb[0].mxu0 %v1374
    %v1434 = vpop.f32.mrb[0].mxu0
    %v1435 = vadd.f32 %v1367, %v1434
    %v1436 = vpop.f32.mrb[0].mxu0
    %v1437 = vpop.f32.mrb[0].mxu0
    %v1438 = vadd.f32 %v1370, %v1437
    %v1439 = vpop.f32.mrb[0].mxu0
    %1440 = vdwg.mxu0
    %1441 = vrot.lane.b32.xlu0 %v804, 96
    %v1442 = vpop.permute.xlu0 %1441
    %1443 = vrot.lane.b32.xlu0 %v809, 96
    %v1444 = vpop.permute.xlu0 %1443
    %v1446 = vsel %vm816, %v1442, 0
    %v1449 = vsel %vm816, %v1444, 0
    %1451 = vmatprep.subr.bf16.mxu0 0
    %1452 = vmatpush1.bf16.xpose.msra.mxu0 %v1449
    %1453 = vmatprep.subr.bf16.mxu0 0
    %1454 = vmatpush1.bf16.xpose.msra.mxu0 0
    %1455 = vmatprep.subr.bf16.mxu0 0
    %1456 = vmatpush1.bf16.xpose.msra.mxu0 0
    %1457 = vmatprep.subr.bf16.mxu0 0
    %1458 = vmatpush1.bf16.xpose.msra.mxu0 0
    %1459 = vmatprep.subr.bf16.mxu0 0
    %1460 = vmatpush1.bf16.xpose.msra.mxu0 0
    %1461 = vmatprep.subr.bf16.mxu0 0
    %1462 = vmatpush1.bf16.xpose.msra.mxu0 0
    %1463 = vmatprep.subr.bf16.mxu0 0
    %1464 = vmatpush1.bf16.xpose.msra.mxu0 0
    %1465 = vmatprep.subr.bf16.mxu0 0
    %1466 = vmatpush1.bf16.xpose.msra.mxu0 0
    %1467 = vmatprep.subr.bf16.mxu0 0
    %1468 = vmatpush1.bf16.xpose.msra.mxu0 0
    %1469 = vmatprep.subr.bf16.mxu0 0
    %1470 = vmatpush1.bf16.xpose.msra.mxu0 0
    %1471 = vmatprep.subr.bf16.mxu0 0
    %1472 = vmatpush1.bf16.xpose.msra.mxu0 0
    %1473 = vmatprep.subr.bf16.mxu0 0
    %1474 = vmatpush1.bf16.xpose.msra.mxu0 0
    %1475 = vmatprep.subr.bf16.mxu0 0
    %1476 = vmatpush1.bf16.xpose.msra.mxu0 0
    %1477 = vmatprep.subr.bf16.mxu0 0
    %1478 = vmatpush1.bf16.xpose.msra.mxu0 0
    %1479 = vmatprep.subr.bf16.mxu0 0
    %1480 = vmatpush1.bf16.xpose.msra.mxu0 0
    %1481 = vmatprep.subr.bf16.mxu0 0
    %1482 = vmatpush1.bf16.xpose.msra.mxu0 0
    %1483 = vmatprep.mubr.bf16.mxu0 0
    %1484 = vmatmul.mubr.bf16.gmra.mrb[0].mxu0 %v1446
    %v1485 = vpop.f32.mrb[0].mxu0
    %v1486 = vadd.f32 0.0, %v1485
    %v1487 = vpop.f32.mrb[0].mxu0
    %v1488 = vpop.f32.mrb[0].mxu0
    %v1489 = vpop.f32.mrb[0].mxu0
    %1490 = vdwg.mxu0
    %1491 = vrot.lane.b32.xlu0 %v805, 96
    %v1492 = vpop.permute.xlu0 %1491
    %1493 = vrot.lane.b32.xlu0 %v810, 96
    %v1494 = vpop.permute.xlu0 %1493
    %v1496 = vsel %vm816, %v1492, 0
    %v1499 = vsel %vm816, %v1494, 0
    %1501 = vmatprep.subr.bf16.mxu0 0
    %1502 = vmatpush1.bf16.xpose.msra.mxu0 %v1499
    %1503 = vmatprep.subr.bf16.mxu0 0
    %1504 = vmatpush1.bf16.xpose.msra.mxu0 0
    %1505 = vmatprep.subr.bf16.mxu0 0
    %1506 = vmatpush1.bf16.xpose.msra.mxu0 0
    %1507 = vmatprep.subr.bf16.mxu0 0
    %1508 = vmatpush1.bf16.xpose.msra.mxu0 0
    %1509 = vmatprep.subr.bf16.mxu0 0
    %1510 = vmatpush1.bf16.xpose.msra.mxu0 0
    %1511 = vmatprep.subr.bf16.mxu0 0
    %1512 = vmatpush1.bf16.xpose.msra.mxu0 0
    %1513 = vmatprep.subr.bf16.mxu0 0
    %1514 = vmatpush1.bf16.xpose.msra.mxu0 0
    %1515 = vmatprep.subr.bf16.mxu0 0
    %1516 = vmatpush1.bf16.xpose.msra.mxu0 0
    %1517 = vmatprep.subr.bf16.mxu0 0
    %1518 = vmatpush1.bf16.xpose.msra.mxu0 0
    %1519 = vmatprep.subr.bf16.mxu0 0
    %1520 = vmatpush1.bf16.xpose.msra.mxu0 0
    %1521 = vmatprep.subr.bf16.mxu0 0
    %1522 = vmatpush1.bf16.xpose.msra.mxu0 0
    %1523 = vmatprep.subr.bf16.mxu0 0
    %1524 = vmatpush1.bf16.xpose.msra.mxu0 0
    %1525 = vmatprep.subr.bf16.mxu0 0
    %1526 = vmatpush1.bf16.xpose.msra.mxu0 0
    %1527 = vmatprep.subr.bf16.mxu0 0
    %1528 = vmatpush1.bf16.xpose.msra.mxu0 0
    %1529 = vmatprep.subr.bf16.mxu0 0
    %1530 = vmatpush1.bf16.xpose.msra.mxu0 0
    %1531 = vmatprep.subr.bf16.mxu0 0
    %1532 = vmatpush1.bf16.xpose.msra.mxu0 0
    %1533 = vmatprep.mubr.bf16.mxu0 0
    %1534 = vmatmul.mubr.bf16.gmra.mrb[0].mxu0 %v1496
    %v1535 = vpop.f32.mrb[0].mxu0
    %v1536 = vadd.f32 0.0, %v1535
    %v1537 = vpop.f32.mrb[0].mxu0
    %v1538 = vpop.f32.mrb[0].mxu0
    %v1539 = vpop.f32.mrb[0].mxu0
    %1540 = vdwg.mxu0
    %v1541 = vsel %vm909, %v1486, -inf
    %1542 = vmax.xlane.f32.xlu0 %v1541
    %v1543 = vpop.xlane.xlu0 %1542
    %v1544 = vsel %vm909, %v1536, -inf
    %1545 = vmax.xlane.f32.xlu0 %v1544
    %v1546 = vpop.xlane.xlu0 %1545
    %v1547 = vsub.f32 %v1486, %v1543
    %v1548 = vsub.f32 %v1536, %v1546
    %v1549 = vmul.f32 %v1547, 1.442695
    %v1550 = vpow.pop %v1549
    %v1551 = vmul.f32 %v1548, 1.442695
    %v1552 = vpow.pop %v1551
    %v1553 = vsel %vm909, %v1550, 0.0
    %1554 = vadd.xlane.f32.xlu0 %v1553
    %v1555 = vpop.xlane.xlu0 %1554
    %v1556 = vsel %vm909, %v1552, 0.0
    %1557 = vadd.xlane.f32.xlu0 %v1556
    %v1558 = vpop.xlane.xlu0 %1557
    %v1559 = vrcp.pop %v1555
    %v1560 = vrcp.pop %v1558
    %v1561 = vmul.f32 %v1550, %v1559
    %v1562 = vmul.f32 %v1552, %v1560
    %v1563 = vpack.c.bf16 %v1561, %v1561
    %v1564 = vpack.c.bf16 %v1562, %v1562
    %1565 = vrot.lane.b32.xlu0 %v814, 96
    %v1566 = vpop.permute.xlu0 %1565
    %v1568 = vsel %vm909, %v1563, 0
    %v1571 = vsel %vm937, %v1566, 0
    %1573 = vmatprep.subr.bf16.mxu0 0
    %1574 = vmatpush1.bf16.msra.mxu0 %v1571
    %1575 = vmatprep.subr.bf16.mxu0 0
    %1576 = vmatpush1.bf16.msra.mxu0 0
    %1577 = vmatprep.subr.bf16.mxu0 0
    %1578 = vmatpush1.bf16.msra.mxu0 0
    %1579 = vmatprep.subr.bf16.mxu0 0
    %1580 = vmatpush1.bf16.msra.mxu0 0
    %1581 = vmatprep.subr.bf16.mxu0 0
    %1582 = vmatpush1.bf16.msra.mxu0 0
    %1583 = vmatprep.subr.bf16.mxu0 0
    %1584 = vmatpush1.bf16.msra.mxu0 0
    %1585 = vmatprep.subr.bf16.mxu0 0
    %1586 = vmatpush1.bf16.msra.mxu0 0
    %1587 = vmatprep.subr.bf16.mxu0 0
    %1588 = vmatpush1.bf16.msra.mxu0 0
    %1589 = vmatprep.subr.bf16.mxu0 0
    %1590 = vmatpush1.bf16.msra.mxu0 0
    %1591 = vmatprep.subr.bf16.mxu0 0
    %1592 = vmatpush1.bf16.msra.mxu0 0
    %1593 = vmatprep.subr.bf16.mxu0 0
    %1594 = vmatpush1.bf16.msra.mxu0 0
    %1595 = vmatprep.subr.bf16.mxu0 0
    %1596 = vmatpush1.bf16.msra.mxu0 0
    %1597 = vmatprep.subr.bf16.mxu0 0
    %1598 = vmatpush1.bf16.msra.mxu0 0
    %1599 = vmatprep.subr.bf16.mxu0 0
    %1600 = vmatpush1.bf16.msra.mxu0 0
    %1601 = vmatprep.subr.bf16.mxu0 0
    %1602 = vmatpush1.bf16.msra.mxu0 0
    %1603 = vmatprep.subr.bf16.mxu0 0
    %1604 = vmatpush1.bf16.msra.mxu0 0
    %1605 = vmatprep.mubr.bf16.mxu0 0
    %1606 = vmatmul.mubr.bf16.gmra.mrb[0].mxu0 %v1568
    %v1607 = vpop.f32.mrb[0].mxu0
    %v1608 = vadd.f32 0.0, %v1607
    %v1609 = vpop.f32.mrb[0].mxu0
    %v1610 = vpop.f32.mrb[0].mxu0
    %v1611 = vpop.f32.mrb[0].mxu0
    %1612 = vdwg.mxu0
    %1613 = vrot.lane.b32.xlu0 %v815, 96
    %v1614 = vpop.permute.xlu0 %1613
    %v1616 = vsel %vm909, %v1564, 0
    %v1619 = vsel %vm937, %v1614, 0
    %1621 = vmatprep.subr.bf16.mxu0 0
    %1622 = vmatpush1.bf16.msra.mxu0 %v1619
    %1623 = vmatprep.subr.bf16.mxu0 0
    %1624 = vmatpush1.bf16.msra.mxu0 0
    %1625 = vmatprep.subr.bf16.mxu0 0
    %1626 = vmatpush1.bf16.msra.mxu0 0
    %1627 = vmatprep.subr.bf16.mxu0 0
    %1628 = vmatpush1.bf16.msra.mxu0 0
    %1629 = vmatprep.subr.bf16.mxu0 0
    %1630 = vmatpush1.bf16.msra.mxu0 0
    %1631 = vmatprep.subr.bf16.mxu0 0
    %1632 = vmatpush1.bf16.msra.mxu0 0
    %1633 = vmatprep.subr.bf16.mxu0 0
    %1634 = vmatpush1.bf16.msra.mxu0 0
    %1635 = vmatprep.subr.bf16.mxu0 0
    %1636 = vmatpush1.bf16.msra.mxu0 0
    %1637 = vmatprep.subr.bf16.mxu0 0
    %1638 = vmatpush1.bf16.msra.mxu0 0
    %1639 = vmatprep.subr.bf16.mxu0 0
    %1640 = vmatpush1.bf16.msra.mxu0 0
    %1641 = vmatprep.subr.bf16.mxu0 0
    %1642 = vmatpush1.bf16.msra.mxu0 0
    %1643 = vmatprep.subr.bf16.mxu0 0
    %1644 = vmatpush1.bf16.msra.mxu0 0
    %1645 = vmatprep.subr.bf16.mxu0 0
    %1646 = vmatpush1.bf16.msra.mxu0 0
    %1647 = vmatprep.subr.bf16.mxu0 0
    %1648 = vmatpush1.bf16.msra.mxu0 0
    %1649 = vmatprep.subr.bf16.mxu0 0
    %1650 = vmatpush1.bf16.msra.mxu0 0
    %1651 = vmatprep.subr.bf16.mxu0 0
    %1652 = vmatpush1.bf16.msra.mxu0 0
    %1653 = vmatprep.mubr.bf16.mxu0 0
    %1654 = vmatmul.mubr.bf16.gmra.mrb[0].mxu0 %v1616
    %v1655 = vpop.f32.mrb[0].mxu0
    %v1656 = vadd.f32 0.0, %v1655
    %v1657 = vpop.f32.mrb[0].mxu0
    %v1658 = vpop.f32.mrb[0].mxu0
    %v1659 = vpop.f32.mrb[0].mxu0
    %1660 = vdwg.mxu0
    %v1661 = vpack.c.bf16 %v1656, %v1608
    %1662 = vrot.lane.b32.xlu0 %v1281, 96
    %v1663 = vpop.permute.xlu0 %1662
    %1664 = vrot.lane.b32.xlu0 %v1282, 96
    %v1665 = vpop.permute.xlu0 %1664
    %1666 = vrot.lane.b32.xlu0 %v1283, 96
    %v1667 = vpop.permute.xlu0 %1666
    %1668 = vrot.lane.b32.xlu0 %v1284, 96
    %v1669 = vpop.permute.xlu0 %1668
    %1670 = vrot.lane.b32.xlu0 %v1285, 96
    %v1671 = vpop.permute.xlu0 %1670
    %1672 = vrot.lane.b32.xlu0 %v1286, 96
    %v1673 = vpop.permute.xlu0 %1672
    %1674 = vrot.lane.b32.xlu0 %v1287, 96
    %v1675 = vpop.permute.xlu0 %1674
    %1676 = vrot.lane.b32.xlu0 %v1288, 96
    %v1677 = vpop.permute.xlu0 %1676
    %v1679 = vsel %vm816, %v1661, 0
    %v1682 = vsel %vm816, %v1663, 0
    %v1685 = vsel %vm816, %v1665, 0
    %v1688 = vsel %vm816, %v1667, 0
    %v1691 = vsel %vm816, %v1669, 0
    %v1694 = vsel %vm816, %v1671, 0
    %v1697 = vsel %vm816, %v1673, 0
    %v1700 = vsel %vm816, %v1675, 0
    %v1703 = vsel %vm816, %v1677, 0
    %1705 = vmatprep.subr.bf16.mxu0 0
    %1706 = vmatpush1.bf16.xpose.msra.mxu0 %v1682
    %1707 = vmatprep.subr.bf16.mxu0 0
    %1708 = vmatpush1.bf16.xpose.msra.mxu0 %v1685
    %1709 = vmatprep.subr.bf16.mxu0 0
    %1710 = vmatpush1.bf16.xpose.msra.mxu0 %v1688
    %1711 = vmatprep.subr.bf16.mxu0 0
    %1712 = vmatpush1.bf16.xpose.msra.mxu0 %v1691
    %1713 = vmatprep.subr.bf16.mxu0 0
    %1714 = vmatpush1.bf16.xpose.msra.mxu0 %v1694
    %1715 = vmatprep.subr.bf16.mxu0 0
    %1716 = vmatpush1.bf16.xpose.msra.mxu0 %v1697
    %1717 = vmatprep.subr.bf16.mxu0 0
    %1718 = vmatpush1.bf16.xpose.msra.mxu0 %v1700
    %1719 = vmatprep.subr.bf16.mxu0 0
    %1720 = vmatpush1.bf16.xpose.msra.mxu0 %v1703
    %1721 = vmatprep.subr.bf16.mxu0 0
    %1722 = vmatpush1.bf16.xpose.msra.mxu0 0
    %1723 = vmatprep.subr.bf16.mxu0 0
    %1724 = vmatpush1.bf16.xpose.msra.mxu0 0
    %1725 = vmatprep.subr.bf16.mxu0 0
    %1726 = vmatpush1.bf16.xpose.msra.mxu0 0
    %1727 = vmatprep.subr.bf16.mxu0 0
    %1728 = vmatpush1.bf16.xpose.msra.mxu0 0
    %1729 = vmatprep.subr.bf16.mxu0 0
    %1730 = vmatpush1.bf16.xpose.msra.mxu0 0
    %1731 = vmatprep.subr.bf16.mxu0 0
    %1732 = vmatpush1.bf16.xpose.msra.mxu0 0
    %1733 = vmatprep.subr.bf16.mxu0 0
    %1734 = vmatpush1.bf16.xpose.msra.mxu0 0
    %1735 = vmatprep.subr.bf16.mxu0 0
    %1736 = vmatpush1.bf16.xpose.msra.mxu0 0
    %1737 = vmatprep.mubr.bf16.mxu0 0
    %1738 = vmatmul.mubr.bf16.gmra.mrb[0].mxu0 %v1679
    %v1739 = vpop.f32.mrb[0].mxu0
    %v1740 = vadd.f32 0.0, %v1739
    %v1741 = vpop.f32.mrb[0].mxu0
    %v1742 = vpop.f32.mrb[0].mxu0
    %v1743 = vadd.f32 0.0, %v1742
    %v1744 = vpop.f32.mrb[0].mxu0
    %1745 = vdwg.mxu0
    %v1746 = vadd.f32 %v1435, %v1740
    %v1747 = vadd.f32 %v1438, %v1743
    %1748 = vrot.lane.b32.xlu0 %v804, 80
    %v1749 = vpop.permute.xlu0 %1748
    %1750 = vrot.lane.b32.xlu0 %v809, 80
    %v1751 = vpop.permute.xlu0 %1750
    %v1753 = vsel %vm816, %v1749, 0
    %v1756 = vsel %vm816, %v1751, 0
    %1758 = vmatprep.subr.bf16.mxu0 0
    %1759 = vmatpush1.bf16.xpose.msra.mxu0 %v1756
    %1760 = vmatprep.subr.bf16.mxu0 0
    %1761 = vmatpush1.bf16.xpose.msra.mxu0 0
    %1762 = vmatprep.subr.bf16.mxu0 0
    %1763 = vmatpush1.bf16.xpose.msra.mxu0 0
    %1764 = vmatprep.subr.bf16.mxu0 0
    %1765 = vmatpush1.bf16.xpose.msra.mxu0 0
    %1766 = vmatprep.subr.bf16.mxu0 0
    %1767 = vmatpush1.bf16.xpose.msra.mxu0 0
    %1768 = vmatprep.subr.bf16.mxu0 0
    %1769 = vmatpush1.bf16.xpose.msra.mxu0 0
    %1770 = vmatprep.subr.bf16.mxu0 0
    %1771 = vmatpush1.bf16.xpose.msra.mxu0 0
    %1772 = vmatprep.subr.bf16.mxu0 0
    %1773 = vmatpush1.bf16.xpose.msra.mxu0 0
    %1774 = vmatprep.subr.bf16.mxu0 0
    %1775 = vmatpush1.bf16.xpose.msra.mxu0 0
    %1776 = vmatprep.subr.bf16.mxu0 0
    %1777 = vmatpush1.bf16.xpose.msra.mxu0 0
    %1778 = vmatprep.subr.bf16.mxu0 0
    %1779 = vmatpush1.bf16.xpose.msra.mxu0 0
    %1780 = vmatprep.subr.bf16.mxu0 0
    %1781 = vmatpush1.bf16.xpose.msra.mxu0 0
    %1782 = vmatprep.subr.bf16.mxu0 0
    %1783 = vmatpush1.bf16.xpose.msra.mxu0 0
    %1784 = vmatprep.subr.bf16.mxu0 0
    %1785 = vmatpush1.bf16.xpose.msra.mxu0 0
    %1786 = vmatprep.subr.bf16.mxu0 0
    %1787 = vmatpush1.bf16.xpose.msra.mxu0 0
    %1788 = vmatprep.subr.bf16.mxu0 0
    %1789 = vmatpush1.bf16.xpose.msra.mxu0 0
    %1790 = vmatprep.mubr.bf16.mxu0 0
    %1791 = vmatmul.mubr.bf16.gmra.mrb[0].mxu0 %v1753
    %v1792 = vpop.f32.mrb[0].mxu0
    %v1793 = vadd.f32 0.0, %v1792
    %v1794 = vpop.f32.mrb[0].mxu0
    %v1795 = vpop.f32.mrb[0].mxu0
    %v1796 = vpop.f32.mrb[0].mxu0
    %1797 = vdwg.mxu0
    %1798 = vrot.lane.b32.xlu0 %v805, 80
    %v1799 = vpop.permute.xlu0 %1798
    %1800 = vrot.lane.b32.xlu0 %v810, 80
    %v1801 = vpop.permute.xlu0 %1800
    %v1803 = vsel %vm816, %v1799, 0
    %v1806 = vsel %vm816, %v1801, 0
    %1808 = vmatprep.subr.bf16.mxu0 0
    %1809 = vmatpush1.bf16.xpose.msra.mxu0 %v1806
    %1810 = vmatprep.subr.bf16.mxu0 0
    %1811 = vmatpush1.bf16.xpose.msra.mxu0 0
    %1812 = vmatprep.subr.bf16.mxu0 0
    %1813 = vmatpush1.bf16.xpose.msra.mxu0 0
    %1814 = vmatprep.subr.bf16.mxu0 0
    %1815 = vmatpush1.bf16.xpose.msra.mxu0 0
    %1816 = vmatprep.subr.bf16.mxu0 0
    %1817 = vmatpush1.bf16.xpose.msra.mxu0 0
    %1818 = vmatprep.subr.bf16.mxu0 0
    %1819 = vmatpush1.bf16.xpose.msra.mxu0 0
    %1820 = vmatprep.subr.bf16.mxu0 0
    %1821 = vmatpush1.bf16.xpose.msra.mxu0 0
    %1822 = vmatprep.subr.bf16.mxu0 0
    %1823 = vmatpush1.bf16.xpose.msra.mxu0 0
    %1824 = vmatprep.subr.bf16.mxu0 0
    %1825 = vmatpush1.bf16.xpose.msra.mxu0 0
    %1826 = vmatprep.subr.bf16.mxu0 0
    %1827 = vmatpush1.bf16.xpose.msra.mxu0 0
    %1828 = vmatprep.subr.bf16.mxu0 0
    %1829 = vmatpush1.bf16.xpose.msra.mxu0 0
    %1830 = vmatprep.subr.bf16.mxu0 0
    %1831 = vmatpush1.bf16.xpose.msra.mxu0 0
    %1832 = vmatprep.subr.bf16.mxu0 0
    %1833 = vmatpush1.bf16.xpose.msra.mxu0 0
    %1834 = vmatprep.subr.bf16.mxu0 0
    %1835 = vmatpush1.bf16.xpose.msra.mxu0 0
    %1836 = vmatprep.subr.bf16.mxu0 0
    %1837 = vmatpush1.bf16.xpose.msra.mxu0 0
    %1838 = vmatprep.subr.bf16.mxu0 0
    %1839 = vmatpush1.bf16.xpose.msra.mxu0 0
    %1840 = vmatprep.mubr.bf16.mxu0 0
    %1841 = vmatmul.mubr.bf16.gmra.mrb[0].mxu0 %v1803
    %v1842 = vpop.f32.mrb[0].mxu0
    %v1843 = vadd.f32 0.0, %v1842
    %v1844 = vpop.f32.mrb[0].mxu0
    %v1845 = vpop.f32.mrb[0].mxu0
    %v1846 = vpop.f32.mrb[0].mxu0
    %1847 = vdwg.mxu0
    %v1848 = vsel %vm909, %v1793, -inf
    %1849 = vmax.xlane.f32.xlu0 %v1848
    %v1850 = vpop.xlane.xlu0 %1849
    %v1851 = vsel %vm909, %v1843, -inf
    %1852 = vmax.xlane.f32.xlu0 %v1851
    %v1853 = vpop.xlane.xlu0 %1852
    %v1854 = vsub.f32 %v1793, %v1850
    %v1855 = vsub.f32 %v1843, %v1853
    %v1856 = vmul.f32 %v1854, 1.442695
    %v1857 = vpow.pop %v1856
    %v1858 = vmul.f32 %v1855, 1.442695
    %v1859 = vpow.pop %v1858
    %v1860 = vsel %vm909, %v1857, 0.0
    %1861 = vadd.xlane.f32.xlu0 %v1860
    %v1862 = vpop.xlane.xlu0 %1861
    %v1863 = vsel %vm909, %v1859, 0.0
    %1864 = vadd.xlane.f32.xlu0 %v1863
    %v1865 = vpop.xlane.xlu0 %1864
    %v1866 = vrcp.pop %v1862
    %v1867 = vrcp.pop %v1865
    %v1868 = vmul.f32 %v1857, %v1866
    %v1869 = vmul.f32 %v1859, %v1867
    %v1870 = vpack.c.bf16 %v1868, %v1868
    %v1871 = vpack.c.bf16 %v1869, %v1869
    %1872 = vrot.lane.b32.xlu0 %v814, 80
    %v1873 = vpop.permute.xlu0 %1872
    %v1875 = vsel %vm909, %v1870, 0
    %v1878 = vsel %vm937, %v1873, 0
    %1880 = vmatprep.subr.bf16.mxu0 0
    %1881 = vmatpush1.bf16.msra.mxu0 %v1878
    %1882 = vmatprep.subr.bf16.mxu0 0
    %1883 = vmatpush1.bf16.msra.mxu0 0
    %1884 = vmatprep.subr.bf16.mxu0 0
    %1885 = vmatpush1.bf16.msra.mxu0 0
    %1886 = vmatprep.subr.bf16.mxu0 0
    %1887 = vmatpush1.bf16.msra.mxu0 0
    %1888 = vmatprep.subr.bf16.mxu0 0
    %1889 = vmatpush1.bf16.msra.mxu0 0
    %1890 = vmatprep.subr.bf16.mxu0 0
    %1891 = vmatpush1.bf16.msra.mxu0 0
    %1892 = vmatprep.subr.bf16.mxu0 0
    %1893 = vmatpush1.bf16.msra.mxu0 0
    %1894 = vmatprep.subr.bf16.mxu0 0
    %1895 = vmatpush1.bf16.msra.mxu0 0
    %1896 = vmatprep.subr.bf16.mxu0 0
    %1897 = vmatpush1.bf16.msra.mxu0 0
    %1898 = vmatprep.subr.bf16.mxu0 0
    %1899 = vmatpush1.bf16.msra.mxu0 0
    %1900 = vmatprep.subr.bf16.mxu0 0
    %1901 = vmatpush1.bf16.msra.mxu0 0
    %1902 = vmatprep.subr.bf16.mxu0 0
    %1903 = vmatpush1.bf16.msra.mxu0 0
    %1904 = vmatprep.subr.bf16.mxu0 0
    %1905 = vmatpush1.bf16.msra.mxu0 0
    %1906 = vmatprep.subr.bf16.mxu0 0
    %1907 = vmatpush1.bf16.msra.mxu0 0
    %1908 = vmatprep.subr.bf16.mxu0 0
    %1909 = vmatpush1.bf16.msra.mxu0 0
    %1910 = vmatprep.subr.bf16.mxu0 0
    %1911 = vmatpush1.bf16.msra.mxu0 0
    %1912 = vmatprep.mubr.bf16.mxu0 0
    %1913 = vmatmul.mubr.bf16.gmra.mrb[0].mxu0 %v1875
    %v1914 = vpop.f32.mrb[0].mxu0
    %v1915 = vadd.f32 0.0, %v1914
    %v1916 = vpop.f32.mrb[0].mxu0
    %v1917 = vpop.f32.mrb[0].mxu0
    %v1918 = vpop.f32.mrb[0].mxu0
    %1919 = vdwg.mxu0
    %1920 = vrot.lane.b32.xlu0 %v815, 80
    %v1921 = vpop.permute.xlu0 %1920
    %v1923 = vsel %vm909, %v1871, 0
    %v1926 = vsel %vm937, %v1921, 0
    %1928 = vmatprep.subr.bf16.mxu0 0
    %1929 = vmatpush1.bf16.msra.mxu0 %v1926
    %1930 = vmatprep.subr.bf16.mxu0 0
    %1931 = vmatpush1.bf16.msra.mxu0 0
    %1932 = vmatprep.subr.bf16.mxu0 0
    %1933 = vmatpush1.bf16.msra.mxu0 0
    %1934 = vmatprep.subr.bf16.mxu0 0
    %1935 = vmatpush1.bf16.msra.mxu0 0
    %1936 = vmatprep.subr.bf16.mxu0 0
    %1937 = vmatpush1.bf16.msra.mxu0 0
    %1938 = vmatprep.subr.bf16.mxu0 0
    %1939 = vmatpush1.bf16.msra.mxu0 0
    %1940 = vmatprep.subr.bf16.mxu0 0
    %1941 = vmatpush1.bf16.msra.mxu0 0
    %1942 = vmatprep.subr.bf16.mxu0 0
    %1943 = vmatpush1.bf16.msra.mxu0 0
    %1944 = vmatprep.subr.bf16.mxu0 0
    %1945 = vmatpush1.bf16.msra.mxu0 0
    %1946 = vmatprep.subr.bf16.mxu0 0
    %1947 = vmatpush1.bf16.msra.mxu0 0
    %1948 = vmatprep.subr.bf16.mxu0 0
    %1949 = vmatpush1.bf16.msra.mxu0 0
    %1950 = vmatprep.subr.bf16.mxu0 0
    %1951 = vmatpush1.bf16.msra.mxu0 0
    %1952 = vmatprep.subr.bf16.mxu0 0
    %1953 = vmatpush1.bf16.msra.mxu0 0
    %1954 = vmatprep.subr.bf16.mxu0 0
    %1955 = vmatpush1.bf16.msra.mxu0 0
    %1956 = vmatprep.subr.bf16.mxu0 0
    %1957 = vmatpush1.bf16.msra.mxu0 0
    %1958 = vmatprep.subr.bf16.mxu0 0
    %1959 = vmatpush1.bf16.msra.mxu0 0
    %1960 = vmatprep.mubr.bf16.mxu0 0
    %1961 = vmatmul.mubr.bf16.gmra.mrb[0].mxu0 %v1923
    %v1962 = vpop.f32.mrb[0].mxu0
    %v1963 = vadd.f32 0.0, %v1962
    %v1964 = vpop.f32.mrb[0].mxu0
    %v1965 = vpop.f32.mrb[0].mxu0
    %v1966 = vpop.f32.mrb[0].mxu0
    %1967 = vdwg.mxu0
    %v1968 = vpack.c.bf16 %v1963, %v1915
    %1969 = vrot.lane.b32.xlu0 %v1281, 80
    %v1970 = vpop.permute.xlu0 %1969
    %1971 = vrot.lane.b32.xlu0 %v1282, 80
    %v1972 = vpop.permute.xlu0 %1971
    %1973 = vrot.lane.b32.xlu0 %v1283, 80
    %v1974 = vpop.permute.xlu0 %1973
    %1975 = vrot.lane.b32.xlu0 %v1284, 80
    %v1976 = vpop.permute.xlu0 %1975
    %1977 = vrot.lane.b32.xlu0 %v1285, 80
    %v1978 = vpop.permute.xlu0 %1977
    %1979 = vrot.lane.b32.xlu0 %v1286, 80
    %v1980 = vpop.permute.xlu0 %1979
    %1981 = vrot.lane.b32.xlu0 %v1287, 80
    %v1982 = vpop.permute.xlu0 %1981
    %1983 = vrot.lane.b32.xlu0 %v1288, 80
    %v1984 = vpop.permute.xlu0 %1983
    %v1986 = vsel %vm816, %v1968, 0
    %v1989 = vsel %vm816, %v1970, 0
    %v1992 = vsel %vm816, %v1972, 0
    %v1995 = vsel %vm816, %v1974, 0
    %v1998 = vsel %vm816, %v1976, 0
    %v2001 = vsel %vm816, %v1978, 0
    %v2004 = vsel %vm816, %v1980, 0
    %v2007 = vsel %vm816, %v1982, 0
    %v2010 = vsel %vm816, %v1984, 0
    %2012 = vmatprep.subr.bf16.mxu0 0
    %2013 = vmatpush1.bf16.xpose.msra.mxu0 %v1989
    %2014 = vmatprep.subr.bf16.mxu0 0
    %2015 = vmatpush1.bf16.xpose.msra.mxu0 %v1992
    %2016 = vmatprep.subr.bf16.mxu0 0
    %2017 = vmatpush1.bf16.xpose.msra.mxu0 %v1995
    %2018 = vmatprep.subr.bf16.mxu0 0
    %2019 = vmatpush1.bf16.xpose.msra.mxu0 %v1998
    %2020 = vmatprep.subr.bf16.mxu0 0
    %2021 = vmatpush1.bf16.xpose.msra.mxu0 %v2001
    %2022 = vmatprep.subr.bf16.mxu0 0
    %2023 = vmatpush1.bf16.xpose.msra.mxu0 %v2004
    %2024 = vmatprep.subr.bf16.mxu0 0
    %2025 = vmatpush1.bf16.xpose.msra.mxu0 %v2007
    %2026 = vmatprep.subr.bf16.mxu0 0
    %2027 = vmatpush1.bf16.xpose.msra.mxu0 %v2010
    %2028 = vmatprep.subr.bf16.mxu0 0
    %2029 = vmatpush1.bf16.xpose.msra.mxu0 0
    %2030 = vmatprep.subr.bf16.mxu0 0
    %2031 = vmatpush1.bf16.xpose.msra.mxu0 0
    %2032 = vmatprep.subr.bf16.mxu0 0
    %2033 = vmatpush1.bf16.xpose.msra.mxu0 0
    %2034 = vmatprep.subr.bf16.mxu0 0
    %2035 = vmatpush1.bf16.xpose.msra.mxu0 0
    %2036 = vmatprep.subr.bf16.mxu0 0
    %2037 = vmatpush1.bf16.xpose.msra.mxu0 0
    %2038 = vmatprep.subr.bf16.mxu0 0
    %2039 = vmatpush1.bf16.xpose.msra.mxu0 0
    %2040 = vmatprep.subr.bf16.mxu0 0
    %2041 = vmatpush1.bf16.xpose.msra.mxu0 0
    %2042 = vmatprep.subr.bf16.mxu0 0
    %2043 = vmatpush1.bf16.xpose.msra.mxu0 0
    %2044 = vmatprep.mubr.bf16.mxu0 0
    %2045 = vmatmul.mubr.bf16.gmra.mrb[0].mxu0 %v1986
    %v2046 = vpop.f32.mrb[0].mxu0
    %v2047 = vadd.f32 0.0, %v2046
    %v2048 = vpop.f32.mrb[0].mxu0
    %v2049 = vpop.f32.mrb[0].mxu0
    %v2050 = vadd.f32 0.0, %v2049
    %v2051 = vpop.f32.mrb[0].mxu0
    %2052 = vdwg.mxu0
    %v2053 = vadd.f32 %v1746, %v2047
    %v2054 = vadd.f32 %v1747, %v2050
    %2055 = vrot.lane.b32.xlu0 %v804, 64
    %v2056 = vpop.permute.xlu0 %2055
    %2057 = vrot.lane.b32.xlu0 %v809, 64
    %v2058 = vpop.permute.xlu0 %2057
    %v2060 = vsel %vm816, %v2056, 0
    %v2063 = vsel %vm816, %v2058, 0
    %2065 = vmatprep.subr.bf16.mxu0 0
    %2066 = vmatpush1.bf16.xpose.msra.mxu0 %v2063
    %2067 = vmatprep.subr.bf16.mxu0 0
    %2068 = vmatpush1.bf16.xpose.msra.mxu0 0
    %2069 = vmatprep.subr.bf16.mxu0 0
    %2070 = vmatpush1.bf16.xpose.msra.mxu0 0
    %2071 = vmatprep.subr.bf16.mxu0 0
    %2072 = vmatpush1.bf16.xpose.msra.mxu0 0
    %2073 = vmatprep.subr.bf16.mxu0 0
    %2074 = vmatpush1.bf16.xpose.msra.mxu0 0
    %2075 = vmatprep.subr.bf16.mxu0 0
    %2076 = vmatpush1.bf16.xpose.msra.mxu0 0
    %2077 = vmatprep.subr.bf16.mxu0 0
    %2078 = vmatpush1.bf16.xpose.msra.mxu0 0
    %2079 = vmatprep.subr.bf16.mxu0 0
    %2080 = vmatpush1.bf16.xpose.msra.mxu0 0
    %2081 = vmatprep.subr.bf16.mxu0 0
    %2082 = vmatpush1.bf16.xpose.msra.mxu0 0
    %2083 = vmatprep.subr.bf16.mxu0 0
    %2084 = vmatpush1.bf16.xpose.msra.mxu0 0
    %2085 = vmatprep.subr.bf16.mxu0 0
    %2086 = vmatpush1.bf16.xpose.msra.mxu0 0
    %2087 = vmatprep.subr.bf16.mxu0 0
    %2088 = vmatpush1.bf16.xpose.msra.mxu0 0
    %2089 = vmatprep.subr.bf16.mxu0 0
    %2090 = vmatpush1.bf16.xpose.msra.mxu0 0
    %2091 = vmatprep.subr.bf16.mxu0 0
    %2092 = vmatpush1.bf16.xpose.msra.mxu0 0
    %2093 = vmatprep.subr.bf16.mxu0 0
    %2094 = vmatpush1.bf16.xpose.msra.mxu0 0
    %2095 = vmatprep.subr.bf16.mxu0 0
    %2096 = vmatpush1.bf16.xpose.msra.mxu0 0
    %2097 = vmatprep.mubr.bf16.mxu0 0
    %2098 = vmatmul.mubr.bf16.gmra.mrb[0].mxu0 %v2060
    %v2099 = vpop.f32.mrb[0].mxu0
    %v2100 = vadd.f32 0.0, %v2099
    %v2101 = vpop.f32.mrb[0].mxu0
    %v2102 = vpop.f32.mrb[0].mxu0
    %v2103 = vpop.f32.mrb[0].mxu0
    %2104 = vdwg.mxu0
    %2105 = vrot.lane.b32.xlu0 %v805, 64
    %v2106 = vpop.permute.xlu0 %2105
    %2107 = vrot.lane.b32.xlu0 %v810, 64
    %v2108 = vpop.permute.xlu0 %2107
    %v2110 = vsel %vm816, %v2106, 0
    %v2113 = vsel %vm816, %v2108, 0
    %2115 = vmatprep.subr.bf16.mxu0 0
    %2116 = vmatpush1.bf16.xpose.msra.mxu0 %v2113
    %2117 = vmatprep.subr.bf16.mxu0 0
    %2118 = vmatpush1.bf16.xpose.msra.mxu0 0
    %2119 = vmatprep.subr.bf16.mxu0 0
    %2120 = vmatpush1.bf16.xpose.msra.mxu0 0
    %2121 = vmatprep.subr.bf16.mxu0 0
    %2122 = vmatpush1.bf16.xpose.msra.mxu0 0
    %2123 = vmatprep.subr.bf16.mxu0 0
    %2124 = vmatpush1.bf16.xpose.msra.mxu0 0
    %2125 = vmatprep.subr.bf16.mxu0 0
    %2126 = vmatpush1.bf16.xpose.msra.mxu0 0
    %2127 = vmatprep.subr.bf16.mxu0 0
    %2128 = vmatpush1.bf16.xpose.msra.mxu0 0
    %2129 = vmatprep.subr.bf16.mxu0 0
    %2130 = vmatpush1.bf16.xpose.msra.mxu0 0
    %2131 = vmatprep.subr.bf16.mxu0 0
    %2132 = vmatpush1.bf16.xpose.msra.mxu0 0
    %2133 = vmatprep.subr.bf16.mxu0 0
    %2134 = vmatpush1.bf16.xpose.msra.mxu0 0
    %2135 = vmatprep.subr.bf16.mxu0 0
    %2136 = vmatpush1.bf16.xpose.msra.mxu0 0
    %2137 = vmatprep.subr.bf16.mxu0 0
    %2138 = vmatpush1.bf16.xpose.msra.mxu0 0
    %2139 = vmatprep.subr.bf16.mxu0 0
    %2140 = vmatpush1.bf16.xpose.msra.mxu0 0
    %2141 = vmatprep.subr.bf16.mxu0 0
    %2142 = vmatpush1.bf16.xpose.msra.mxu0 0
    %2143 = vmatprep.subr.bf16.mxu0 0
    %2144 = vmatpush1.bf16.xpose.msra.mxu0 0
    %2145 = vmatprep.subr.bf16.mxu0 0
    %2146 = vmatpush1.bf16.xpose.msra.mxu0 0
    %2147 = vmatprep.mubr.bf16.mxu0 0
    %2148 = vmatmul.mubr.bf16.gmra.mrb[0].mxu0 %v2110
    %v2149 = vpop.f32.mrb[0].mxu0
    %v2150 = vadd.f32 0.0, %v2149
    %v2151 = vpop.f32.mrb[0].mxu0
    %v2152 = vpop.f32.mrb[0].mxu0
    %v2153 = vpop.f32.mrb[0].mxu0
    %2154 = vdwg.mxu0
    %v2155 = vsel %vm909, %v2100, -inf
    %2156 = vmax.xlane.f32.xlu0 %v2155
    %v2157 = vpop.xlane.xlu0 %2156
    %v2158 = vsel %vm909, %v2150, -inf
    %2159 = vmax.xlane.f32.xlu0 %v2158
    %v2160 = vpop.xlane.xlu0 %2159
    %v2161 = vsub.f32 %v2100, %v2157
    %v2162 = vsub.f32 %v2150, %v2160
    %v2163 = vmul.f32 %v2161, 1.442695
    %v2164 = vpow.pop %v2163
    %v2165 = vmul.f32 %v2162, 1.442695
    %v2166 = vpow.pop %v2165
    %v2167 = vsel %vm909, %v2164, 0.0
    %2168 = vadd.xlane.f32.xlu0 %v2167
    %v2169 = vpop.xlane.xlu0 %2168
    %v2170 = vsel %vm909, %v2166, 0.0
    %2171 = vadd.xlane.f32.xlu0 %v2170
    %v2172 = vpop.xlane.xlu0 %2171
    %v2173 = vrcp.pop %v2169
    %v2174 = vrcp.pop %v2172
    %v2175 = vmul.f32 %v2164, %v2173
    %v2176 = vmul.f32 %v2166, %v2174
    %v2177 = vpack.c.bf16 %v2175, %v2175
    %v2178 = vpack.c.bf16 %v2176, %v2176
    %2179 = vrot.lane.b32.xlu0 %v814, 64
    %v2180 = vpop.permute.xlu0 %2179
    %v2182 = vsel %vm909, %v2177, 0
    %v2185 = vsel %vm937, %v2180, 0
    %2187 = vmatprep.subr.bf16.mxu0 0
    %2188 = vmatpush1.bf16.msra.mxu0 %v2185
    %2189 = vmatprep.subr.bf16.mxu0 0
    %2190 = vmatpush1.bf16.msra.mxu0 0
    %2191 = vmatprep.subr.bf16.mxu0 0
    %2192 = vmatpush1.bf16.msra.mxu0 0
    %2193 = vmatprep.subr.bf16.mxu0 0
    %2194 = vmatpush1.bf16.msra.mxu0 0
    %2195 = vmatprep.subr.bf16.mxu0 0
    %2196 = vmatpush1.bf16.msra.mxu0 0
    %2197 = vmatprep.subr.bf16.mxu0 0
    %2198 = vmatpush1.bf16.msra.mxu0 0
    %2199 = vmatprep.subr.bf16.mxu0 0
    %2200 = vmatpush1.bf16.msra.mxu0 0
    %2201 = vmatprep.subr.bf16.mxu0 0
    %2202 = vmatpush1.bf16.msra.mxu0 0
    %2203 = vmatprep.subr.bf16.mxu0 0
    %2204 = vmatpush1.bf16.msra.mxu0 0
    %2205 = vmatprep.subr.bf16.mxu0 0
    %2206 = vmatpush1.bf16.msra.mxu0 0
    %2207 = vmatprep.subr.bf16.mxu0 0
    %2208 = vmatpush1.bf16.msra.mxu0 0
    %2209 = vmatprep.subr.bf16.mxu0 0
    %2210 = vmatpush1.bf16.msra.mxu0 0
    %2211 = vmatprep.subr.bf16.mxu0 0
    %2212 = vmatpush1.bf16.msra.mxu0 0
    %2213 = vmatprep.subr.bf16.mxu0 0
    %2214 = vmatpush1.bf16.msra.mxu0 0
    %2215 = vmatprep.subr.bf16.mxu0 0
    %2216 = vmatpush1.bf16.msra.mxu0 0
    %2217 = vmatprep.subr.bf16.mxu0 0
    %2218 = vmatpush1.bf16.msra.mxu0 0
    %2219 = vmatprep.mubr.bf16.mxu0 0
    %2220 = vmatmul.mubr.bf16.gmra.mrb[0].mxu0 %v2182
    %v2221 = vpop.f32.mrb[0].mxu0
    %v2222 = vadd.f32 0.0, %v2221
    %v2223 = vpop.f32.mrb[0].mxu0
    %v2224 = vpop.f32.mrb[0].mxu0
    %v2225 = vpop.f32.mrb[0].mxu0
    %2226 = vdwg.mxu0
    %2227 = vrot.lane.b32.xlu0 %v815, 64
    %v2228 = vpop.permute.xlu0 %2227
    %v2230 = vsel %vm909, %v2178, 0
    %v2233 = vsel %vm937, %v2228, 0
    %2235 = vmatprep.subr.bf16.mxu0 0
    %2236 = vmatpush1.bf16.msra.mxu0 %v2233
    %2237 = vmatprep.subr.bf16.mxu0 0
    %2238 = vmatpush1.bf16.msra.mxu0 0
    %2239 = vmatprep.subr.bf16.mxu0 0
    %2240 = vmatpush1.bf16.msra.mxu0 0
    %2241 = vmatprep.subr.bf16.mxu0 0
    %2242 = vmatpush1.bf16.msra.mxu0 0
    %2243 = vmatprep.subr.bf16.mxu0 0
    %2244 = vmatpush1.bf16.msra.mxu0 0
    %2245 = vmatprep.subr.bf16.mxu0 0
    %2246 = vmatpush1.bf16.msra.mxu0 0
    %2247 = vmatprep.subr.bf16.mxu0 0
    %2248 = vmatpush1.bf16.msra.mxu0 0
    %2249 = vmatprep.subr.bf16.mxu0 0
    %2250 = vmatpush1.bf16.msra.mxu0 0
    %2251 = vmatprep.subr.bf16.mxu0 0
    %2252 = vmatpush1.bf16.msra.mxu0 0
    %2253 = vmatprep.subr.bf16.mxu0 0
    %2254 = vmatpush1.bf16.msra.mxu0 0
    %2255 = vmatprep.subr.bf16.mxu0 0
    %2256 = vmatpush1.bf16.msra.mxu0 0
    %2257 = vmatprep.subr.bf16.mxu0 0
    %2258 = vmatpush1.bf16.msra.mxu0 0
    %2259 = vmatprep.subr.bf16.mxu0 0
    %2260 = vmatpush1.bf16.msra.mxu0 0
    %2261 = vmatprep.subr.bf16.mxu0 0
    %2262 = vmatpush1.bf16.msra.mxu0 0
    %2263 = vmatprep.subr.bf16.mxu0 0
    %2264 = vmatpush1.bf16.msra.mxu0 0
    %2265 = vmatprep.subr.bf16.mxu0 0
    %2266 = vmatpush1.bf16.msra.mxu0 0
    %2267 = vmatprep.mubr.bf16.mxu0 0
    %2268 = vmatmul.mubr.bf16.gmra.mrb[0].mxu0 %v2230
    %v2269 = vpop.f32.mrb[0].mxu0
    %v2270 = vadd.f32 0.0, %v2269
    %v2271 = vpop.f32.mrb[0].mxu0
    %v2272 = vpop.f32.mrb[0].mxu0
    %v2273 = vpop.f32.mrb[0].mxu0
    %2274 = vdwg.mxu0
    %v2275 = vpack.c.bf16 %v2270, %v2222
    %2276 = vrot.lane.b32.xlu0 %v1281, 64
    %v2277 = vpop.permute.xlu0 %2276
    %2278 = vrot.lane.b32.xlu0 %v1282, 64
    %v2279 = vpop.permute.xlu0 %2278
    %2280 = vrot.lane.b32.xlu0 %v1283, 64
    %v2281 = vpop.permute.xlu0 %2280
    %2282 = vrot.lane.b32.xlu0 %v1284, 64
    %v2283 = vpop.permute.xlu0 %2282
    %2284 = vrot.lane.b32.xlu0 %v1285, 64
    %v2285 = vpop.permute.xlu0 %2284
    %2286 = vrot.lane.b32.xlu0 %v1286, 64
    %v2287 = vpop.permute.xlu0 %2286
    %2288 = vrot.lane.b32.xlu0 %v1287, 64
    %v2289 = vpop.permute.xlu0 %2288
    %2290 = vrot.lane.b32.xlu0 %v1288, 64
    %v2291 = vpop.permute.xlu0 %2290
    %v2293 = vsel %vm816, %v2275, 0
    %v2296 = vsel %vm816, %v2277, 0
    %v2299 = vsel %vm816, %v2279, 0
    %v2302 = vsel %vm816, %v2281, 0
    %v2305 = vsel %vm816, %v2283, 0
    %v2308 = vsel %vm816, %v2285, 0
    %v2311 = vsel %vm816, %v2287, 0
    %v2314 = vsel %vm816, %v2289, 0
    %v2317 = vsel %vm816, %v2291, 0
    %2319 = vmatprep.subr.bf16.mxu0 0
    %2320 = vmatpush1.bf16.xpose.msra.mxu0 %v2296
    %2321 = vmatprep.subr.bf16.mxu0 0
    %2322 = vmatpush1.bf16.xpose.msra.mxu0 %v2299
    %2323 = vmatprep.subr.bf16.mxu0 0
    %2324 = vmatpush1.bf16.xpose.msra.mxu0 %v2302
    %2325 = vmatprep.subr.bf16.mxu0 0
    %2326 = vmatpush1.bf16.xpose.msra.mxu0 %v2305
    %2327 = vmatprep.subr.bf16.mxu0 0
    %2328 = vmatpush1.bf16.xpose.msra.mxu0 %v2308
    %2329 = vmatprep.subr.bf16.mxu0 0
    %2330 = vmatpush1.bf16.xpose.msra.mxu0 %v2311
    %2331 = vmatprep.subr.bf16.mxu0 0
    %2332 = vmatpush1.bf16.xpose.msra.mxu0 %v2314
    %2333 = vmatprep.subr.bf16.mxu0 0
    %2334 = vmatpush1.bf16.xpose.msra.mxu0 %v2317
    %2335 = vmatprep.subr.bf16.mxu0 0
    %2336 = vmatpush1.bf16.xpose.msra.mxu0 0
    %2337 = vmatprep.subr.bf16.mxu0 0
    %2338 = vmatpush1.bf16.xpose.msra.mxu0 0
    %2339 = vmatprep.subr.bf16.mxu0 0
    %2340 = vmatpush1.bf16.xpose.msra.mxu0 0
    %2341 = vmatprep.subr.bf16.mxu0 0
    %2342 = vmatpush1.bf16.xpose.msra.mxu0 0
    %2343 = vmatprep.subr.bf16.mxu0 0
    %2344 = vmatpush1.bf16.xpose.msra.mxu0 0
    %2345 = vmatprep.subr.bf16.mxu0 0
    %2346 = vmatpush1.bf16.xpose.msra.mxu0 0
    %2347 = vmatprep.subr.bf16.mxu0 0
    %2348 = vmatpush1.bf16.xpose.msra.mxu0 0
    %2349 = vmatprep.subr.bf16.mxu0 0
    %2350 = vmatpush1.bf16.xpose.msra.mxu0 0
    %2351 = vmatprep.mubr.bf16.mxu0 0
    %2352 = vmatmul.mubr.bf16.gmra.mrb[0].mxu0 %v2293
    %v2353 = vpop.f32.mrb[0].mxu0
    %v2354 = vadd.f32 0.0, %v2353
    %v2355 = vpop.f32.mrb[0].mxu0
    %v2356 = vpop.f32.mrb[0].mxu0
    %v2357 = vadd.f32 0.0, %v2356
    %v2358 = vpop.f32.mrb[0].mxu0
    %2359 = vdwg.mxu0
    %v2360 = vadd.f32 %v2053, %v2354
    %v2361 = vadd.f32 %v2054, %v2357
    %2362 = vrot.lane.b32.xlu0 %v804, 48
    %v2363 = vpop.permute.xlu0 %2362
    %2364 = vrot.lane.b32.xlu0 %v809, 48
    %v2365 = vpop.permute.xlu0 %2364
    %v2367 = vsel %vm816, %v2363, 0
    %v2370 = vsel %vm816, %v2365, 0
    %2372 = vmatprep.subr.bf16.mxu0 0
    %2373 = vmatpush1.bf16.xpose.msra.mxu0 %v2370
    %2374 = vmatprep.subr.bf16.mxu0 0
    %2375 = vmatpush1.bf16.xpose.msra.mxu0 0
    %2376 = vmatprep.subr.bf16.mxu0 0
    %2377 = vmatpush1.bf16.xpose.msra.mxu0 0
    %2378 = vmatprep.subr.bf16.mxu0 0
    %2379 = vmatpush1.bf16.xpose.msra.mxu0 0
    %2380 = vmatprep.subr.bf16.mxu0 0
    %2381 = vmatpush1.bf16.xpose.msra.mxu0 0
    %2382 = vmatprep.subr.bf16.mxu0 0
    %2383 = vmatpush1.bf16.xpose.msra.mxu0 0
    %2384 = vmatprep.subr.bf16.mxu0 0
    %2385 = vmatpush1.bf16.xpose.msra.mxu0 0
    %2386 = vmatprep.subr.bf16.mxu0 0
    %2387 = vmatpush1.bf16.xpose.msra.mxu0 0
    %2388 = vmatprep.subr.bf16.mxu0 0
    %2389 = vmatpush1.bf16.xpose.msra.mxu0 0
    %2390 = vmatprep.subr.bf16.mxu0 0
    %2391 = vmatpush1.bf16.xpose.msra.mxu0 0
    %2392 = vmatprep.subr.bf16.mxu0 0
    %2393 = vmatpush1.bf16.xpose.msra.mxu0 0
    %2394 = vmatprep.subr.bf16.mxu0 0
    %2395 = vmatpush1.bf16.xpose.msra.mxu0 0
    %2396 = vmatprep.subr.bf16.mxu0 0
    %2397 = vmatpush1.bf16.xpose.msra.mxu0 0
    %2398 = vmatprep.subr.bf16.mxu0 0
    %2399 = vmatpush1.bf16.xpose.msra.mxu0 0
    %2400 = vmatprep.subr.bf16.mxu0 0
    %2401 = vmatpush1.bf16.xpose.msra.mxu0 0
    %2402 = vmatprep.subr.bf16.mxu0 0
    %2403 = vmatpush1.bf16.xpose.msra.mxu0 0
    %2404 = vmatprep.mubr.bf16.mxu0 0
    %2405 = vmatmul.mubr.bf16.gmra.mrb[0].mxu0 %v2367
    %v2406 = vpop.f32.mrb[0].mxu0
    %v2407 = vadd.f32 0.0, %v2406
    %v2408 = vpop.f32.mrb[0].mxu0
    %v2409 = vpop.f32.mrb[0].mxu0
    %v2410 = vpop.f32.mrb[0].mxu0
    %2411 = vdwg.mxu0
    %2412 = vrot.lane.b32.xlu0 %v805, 48
    %v2413 = vpop.permute.xlu0 %2412
    %2414 = vrot.lane.b32.xlu0 %v810, 48
    %v2415 = vpop.permute.xlu0 %2414
    %v2417 = vsel %vm816, %v2413, 0
    %v2420 = vsel %vm816, %v2415, 0
    %2422 = vmatprep.subr.bf16.mxu0 0
    %2423 = vmatpush1.bf16.xpose.msra.mxu0 %v2420
    %2424 = vmatprep.subr.bf16.mxu0 0
    %2425 = vmatpush1.bf16.xpose.msra.mxu0 0
    %2426 = vmatprep.subr.bf16.mxu0 0
    %2427 = vmatpush1.bf16.xpose.msra.mxu0 0
    %2428 = vmatprep.subr.bf16.mxu0 0
    %2429 = vmatpush1.bf16.xpose.msra.mxu0 0
    %2430 = vmatprep.subr.bf16.mxu0 0
    %2431 = vmatpush1.bf16.xpose.msra.mxu0 0
    %2432 = vmatprep.subr.bf16.mxu0 0
    %2433 = vmatpush1.bf16.xpose.msra.mxu0 0
    %2434 = vmatprep.subr.bf16.mxu0 0
    %2435 = vmatpush1.bf16.xpose.msra.mxu0 0
    %2436 = vmatprep.subr.bf16.mxu0 0
    %2437 = vmatpush1.bf16.xpose.msra.mxu0 0
    %2438 = vmatprep.subr.bf16.mxu0 0
    %2439 = vmatpush1.bf16.xpose.msra.mxu0 0
    %2440 = vmatprep.subr.bf16.mxu0 0
    %2441 = vmatpush1.bf16.xpose.msra.mxu0 0
    %2442 = vmatprep.subr.bf16.mxu0 0
    %2443 = vmatpush1.bf16.xpose.msra.mxu0 0
    %2444 = vmatprep.subr.bf16.mxu0 0
    %2445 = vmatpush1.bf16.xpose.msra.mxu0 0
    %2446 = vmatprep.subr.bf16.mxu0 0
    %2447 = vmatpush1.bf16.xpose.msra.mxu0 0
    %2448 = vmatprep.subr.bf16.mxu0 0
    %2449 = vmatpush1.bf16.xpose.msra.mxu0 0
    %2450 = vmatprep.subr.bf16.mxu0 0
    %2451 = vmatpush1.bf16.xpose.msra.mxu0 0
    %2452 = vmatprep.subr.bf16.mxu0 0
    %2453 = vmatpush1.bf16.xpose.msra.mxu0 0
    %2454 = vmatprep.mubr.bf16.mxu0 0
    %2455 = vmatmul.mubr.bf16.gmra.mrb[0].mxu0 %v2417
    %v2456 = vpop.f32.mrb[0].mxu0
    %v2457 = vadd.f32 0.0, %v2456
    %v2458 = vpop.f32.mrb[0].mxu0
    %v2459 = vpop.f32.mrb[0].mxu0
    %v2460 = vpop.f32.mrb[0].mxu0
    %2461 = vdwg.mxu0
    %v2462 = vsel %vm909, %v2407, -inf
    %2463 = vmax.xlane.f32.xlu0 %v2462
    %v2464 = vpop.xlane.xlu0 %2463
    %v2465 = vsel %vm909, %v2457, -inf
    %2466 = vmax.xlane.f32.xlu0 %v2465
    %v2467 = vpop.xlane.xlu0 %2466
    %v2468 = vsub.f32 %v2407, %v2464
    %v2469 = vsub.f32 %v2457, %v2467
    %v2470 = vmul.f32 %v2468, 1.442695
    %v2471 = vpow.pop %v2470
    %v2472 = vmul.f32 %v2469, 1.442695
    %v2473 = vpow.pop %v2472
    %v2474 = vsel %vm909, %v2471, 0.0
    %2475 = vadd.xlane.f32.xlu0 %v2474
    %v2476 = vpop.xlane.xlu0 %2475
    %v2477 = vsel %vm909, %v2473, 0.0
    %2478 = vadd.xlane.f32.xlu0 %v2477
    %v2479 = vpop.xlane.xlu0 %2478
    %v2480 = vrcp.pop %v2476
    %v2481 = vrcp.pop %v2479
    %v2482 = vmul.f32 %v2471, %v2480
    %v2483 = vmul.f32 %v2473, %v2481
    %v2484 = vpack.c.bf16 %v2482, %v2482
    %v2485 = vpack.c.bf16 %v2483, %v2483
    %2486 = vrot.lane.b32.xlu0 %v814, 48
    %v2487 = vpop.permute.xlu0 %2486
    %v2489 = vsel %vm909, %v2484, 0
    %v2492 = vsel %vm937, %v2487, 0
    %2494 = vmatprep.subr.bf16.mxu0 0
    %2495 = vmatpush1.bf16.msra.mxu0 %v2492
    %2496 = vmatprep.subr.bf16.mxu0 0
    %2497 = vmatpush1.bf16.msra.mxu0 0
    %2498 = vmatprep.subr.bf16.mxu0 0
    %2499 = vmatpush1.bf16.msra.mxu0 0
    %2500 = vmatprep.subr.bf16.mxu0 0
    %2501 = vmatpush1.bf16.msra.mxu0 0
    %2502 = vmatprep.subr.bf16.mxu0 0
    %2503 = vmatpush1.bf16.msra.mxu0 0
    %2504 = vmatprep.subr.bf16.mxu0 0
    %2505 = vmatpush1.bf16.msra.mxu0 0
    %2506 = vmatprep.subr.bf16.mxu0 0
    %2507 = vmatpush1.bf16.msra.mxu0 0
    %2508 = vmatprep.subr.bf16.mxu0 0
    %2509 = vmatpush1.bf16.msra.mxu0 0
    %2510 = vmatprep.subr.bf16.mxu0 0
    %2511 = vmatpush1.bf16.msra.mxu0 0
    %2512 = vmatprep.subr.bf16.mxu0 0
    %2513 = vmatpush1.bf16.msra.mxu0 0
    %2514 = vmatprep.subr.bf16.mxu0 0
    %2515 = vmatpush1.bf16.msra.mxu0 0
    %2516 = vmatprep.subr.bf16.mxu0 0
    %2517 = vmatpush1.bf16.msra.mxu0 0
    %2518 = vmatprep.subr.bf16.mxu0 0
    %2519 = vmatpush1.bf16.msra.mxu0 0
    %2520 = vmatprep.subr.bf16.mxu0 0
    %2521 = vmatpush1.bf16.msra.mxu0 0
    %2522 = vmatprep.subr.bf16.mxu0 0
    %2523 = vmatpush1.bf16.msra.mxu0 0
    %2524 = vmatprep.subr.bf16.mxu0 0
    %2525 = vmatpush1.bf16.msra.mxu0 0
    %2526 = vmatprep.mubr.bf16.mxu0 0
    %2527 = vmatmul.mubr.bf16.gmra.mrb[0].mxu0 %v2489
    %v2528 = vpop.f32.mrb[0].mxu0
    %v2529 = vadd.f32 0.0, %v2528
    %v2530 = vpop.f32.mrb[0].mxu0
    %v2531 = vpop.f32.mrb[0].mxu0
    %v2532 = vpop.f32.mrb[0].mxu0
    %2533 = vdwg.mxu0
    %2534 = vrot.lane.b32.xlu0 %v815, 48
    %v2535 = vpop.permute.xlu0 %2534
    %v2537 = vsel %vm909, %v2485, 0
    %v2540 = vsel %vm937, %v2535, 0
    %2542 = vmatprep.subr.bf16.mxu0 0
    %2543 = vmatpush1.bf16.msra.mxu0 %v2540
    %2544 = vmatprep.subr.bf16.mxu0 0
    %2545 = vmatpush1.bf16.msra.mxu0 0
    %2546 = vmatprep.subr.bf16.mxu0 0
    %2547 = vmatpush1.bf16.msra.mxu0 0
    %2548 = vmatprep.subr.bf16.mxu0 0
    %2549 = vmatpush1.bf16.msra.mxu0 0
    %2550 = vmatprep.subr.bf16.mxu0 0
    %2551 = vmatpush1.bf16.msra.mxu0 0
    %2552 = vmatprep.subr.bf16.mxu0 0
    %2553 = vmatpush1.bf16.msra.mxu0 0
    %2554 = vmatprep.subr.bf16.mxu0 0
    %2555 = vmatpush1.bf16.msra.mxu0 0
    %2556 = vmatprep.subr.bf16.mxu0 0
    %2557 = vmatpush1.bf16.msra.mxu0 0
    %2558 = vmatprep.subr.bf16.mxu0 0
    %2559 = vmatpush1.bf16.msra.mxu0 0
    %2560 = vmatprep.subr.bf16.mxu0 0
    %2561 = vmatpush1.bf16.msra.mxu0 0
    %2562 = vmatprep.subr.bf16.mxu0 0
    %2563 = vmatpush1.bf16.msra.mxu0 0
    %2564 = vmatprep.subr.bf16.mxu0 0
    %2565 = vmatpush1.bf16.msra.mxu0 0
    %2566 = vmatprep.subr.bf16.mxu0 0
    %2567 = vmatpush1.bf16.msra.mxu0 0
    %2568 = vmatprep.subr.bf16.mxu0 0
    %2569 = vmatpush1.bf16.msra.mxu0 0
    %2570 = vmatprep.subr.bf16.mxu0 0
    %2571 = vmatpush1.bf16.msra.mxu0 0
    %2572 = vmatprep.subr.bf16.mxu0 0
    %2573 = vmatpush1.bf16.msra.mxu0 0
    %2574 = vmatprep.mubr.bf16.mxu0 0
    %2575 = vmatmul.mubr.bf16.gmra.mrb[0].mxu0 %v2537
    %v2576 = vpop.f32.mrb[0].mxu0
    %v2577 = vadd.f32 0.0, %v2576
    %v2578 = vpop.f32.mrb[0].mxu0
    %v2579 = vpop.f32.mrb[0].mxu0
    %v2580 = vpop.f32.mrb[0].mxu0
    %2581 = vdwg.mxu0
    %v2582 = vpack.c.bf16 %v2577, %v2529
    %2583 = vrot.lane.b32.xlu0 %v1281, 48
    %v2584 = vpop.permute.xlu0 %2583
    %2585 = vrot.lane.b32.xlu0 %v1282, 48
    %v2586 = vpop.permute.xlu0 %2585
    %2587 = vrot.lane.b32.xlu0 %v1283, 48
    %v2588 = vpop.permute.xlu0 %2587
    %2589 = vrot.lane.b32.xlu0 %v1284, 48
    %v2590 = vpop.permute.xlu0 %2589
    %2591 = vrot.lane.b32.xlu0 %v1285, 48
    %v2592 = vpop.permute.xlu0 %2591
    %2593 = vrot.lane.b32.xlu0 %v1286, 48
    %v2594 = vpop.permute.xlu0 %2593
    %2595 = vrot.lane.b32.xlu0 %v1287, 48
    %v2596 = vpop.permute.xlu0 %2595
    %2597 = vrot.lane.b32.xlu0 %v1288, 48
    %v2598 = vpop.permute.xlu0 %2597
    %v2600 = vsel %vm816, %v2582, 0
    %v2603 = vsel %vm816, %v2584, 0
    %v2606 = vsel %vm816, %v2586, 0
    %v2609 = vsel %vm816, %v2588, 0
    %v2612 = vsel %vm816, %v2590, 0
    %v2615 = vsel %vm816, %v2592, 0
    %v2618 = vsel %vm816, %v2594, 0
    %v2621 = vsel %vm816, %v2596, 0
    %v2624 = vsel %vm816, %v2598, 0
    %2626 = vmatprep.subr.bf16.mxu0 0
    %2627 = vmatpush1.bf16.xpose.msra.mxu0 %v2603
    %2628 = vmatprep.subr.bf16.mxu0 0
    %2629 = vmatpush1.bf16.xpose.msra.mxu0 %v2606
    %2630 = vmatprep.subr.bf16.mxu0 0
    %2631 = vmatpush1.bf16.xpose.msra.mxu0 %v2609
    %2632 = vmatprep.subr.bf16.mxu0 0
    %2633 = vmatpush1.bf16.xpose.msra.mxu0 %v2612
    %2634 = vmatprep.subr.bf16.mxu0 0
    %2635 = vmatpush1.bf16.xpose.msra.mxu0 %v2615
    %2636 = vmatprep.subr.bf16.mxu0 0
    %2637 = vmatpush1.bf16.xpose.msra.mxu0 %v2618
    %2638 = vmatprep.subr.bf16.mxu0 0
    %2639 = vmatpush1.bf16.xpose.msra.mxu0 %v2621
    %2640 = vmatprep.subr.bf16.mxu0 0
    %2641 = vmatpush1.bf16.xpose.msra.mxu0 %v2624
    %2642 = vmatprep.subr.bf16.mxu0 0
    %2643 = vmatpush1.bf16.xpose.msra.mxu0 0
    %2644 = vmatprep.subr.bf16.mxu0 0
    %2645 = vmatpush1.bf16.xpose.msra.mxu0 0
    %2646 = vmatprep.subr.bf16.mxu0 0
    %2647 = vmatpush1.bf16.xpose.msra.mxu0 0
    %2648 = vmatprep.subr.bf16.mxu0 0
    %2649 = vmatpush1.bf16.xpose.msra.mxu0 0
    %2650 = vmatprep.subr.bf16.mxu0 0
    %2651 = vmatpush1.bf16.xpose.msra.mxu0 0
    %2652 = vmatprep.subr.bf16.mxu0 0
    %2653 = vmatpush1.bf16.xpose.msra.mxu0 0
    %2654 = vmatprep.subr.bf16.mxu0 0
    %2655 = vmatpush1.bf16.xpose.msra.mxu0 0
    %2656 = vmatprep.subr.bf16.mxu0 0
    %2657 = vmatpush1.bf16.xpose.msra.mxu0 0
    %2658 = vmatprep.mubr.bf16.mxu0 0
    %2659 = vmatmul.mubr.bf16.gmra.mrb[0].mxu0 %v2600
    %v2660 = vpop.f32.mrb[0].mxu0
    %v2661 = vadd.f32 0.0, %v2660
    %v2662 = vpop.f32.mrb[0].mxu0
    %v2663 = vpop.f32.mrb[0].mxu0
    %v2664 = vadd.f32 0.0, %v2663
    %v2665 = vpop.f32.mrb[0].mxu0
    %2666 = vdwg.mxu0
    %v2667 = vadd.f32 %v2360, %v2661
    %v2668 = vadd.f32 %v2361, %v2664
    %2669 = vrot.lane.b32.xlu0 %v804, 32
    %v2670 = vpop.permute.xlu0 %2669
    %2671 = vrot.lane.b32.xlu0 %v809, 32
    %v2672 = vpop.permute.xlu0 %2671
    %v2674 = vsel %vm816, %v2670, 0
    %v2677 = vsel %vm816, %v2672, 0
    %2679 = vmatprep.subr.bf16.mxu0 0
    %2680 = vmatpush1.bf16.xpose.msra.mxu0 %v2677
    %2681 = vmatprep.subr.bf16.mxu0 0
    %2682 = vmatpush1.bf16.xpose.msra.mxu0 0
    %2683 = vmatprep.subr.bf16.mxu0 0
    %2684 = vmatpush1.bf16.xpose.msra.mxu0 0
    %2685 = vmatprep.subr.bf16.mxu0 0
    %2686 = vmatpush1.bf16.xpose.msra.mxu0 0
    %2687 = vmatprep.subr.bf16.mxu0 0
    %2688 = vmatpush1.bf16.xpose.msra.mxu0 0
    %2689 = vmatprep.subr.bf16.mxu0 0
    %2690 = vmatpush1.bf16.xpose.msra.mxu0 0
    %2691 = vmatprep.subr.bf16.mxu0 0
    %2692 = vmatpush1.bf16.xpose.msra.mxu0 0
    %2693 = vmatprep.subr.bf16.mxu0 0
    %2694 = vmatpush1.bf16.xpose.msra.mxu0 0
    %2695 = vmatprep.subr.bf16.mxu0 0
    %2696 = vmatpush1.bf16.xpose.msra.mxu0 0
    %2697 = vmatprep.subr.bf16.mxu0 0
    %2698 = vmatpush1.bf16.xpose.msra.mxu0 0
    %2699 = vmatprep.subr.bf16.mxu0 0
    %2700 = vmatpush1.bf16.xpose.msra.mxu0 0
    %2701 = vmatprep.subr.bf16.mxu0 0
    %2702 = vmatpush1.bf16.xpose.msra.mxu0 0
    %2703 = vmatprep.subr.bf16.mxu0 0
    %2704 = vmatpush1.bf16.xpose.msra.mxu0 0
    %2705 = vmatprep.subr.bf16.mxu0 0
    %2706 = vmatpush1.bf16.xpose.msra.mxu0 0
    %2707 = vmatprep.subr.bf16.mxu0 0
    %2708 = vmatpush1.bf16.xpose.msra.mxu0 0
    %2709 = vmatprep.subr.bf16.mxu0 0
    %2710 = vmatpush1.bf16.xpose.msra.mxu0 0
    %2711 = vmatprep.mubr.bf16.mxu0 0
    %2712 = vmatmul.mubr.bf16.gmra.mrb[0].mxu0 %v2674
    %v2713 = vpop.f32.mrb[0].mxu0
    %v2714 = vadd.f32 0.0, %v2713
    %v2715 = vpop.f32.mrb[0].mxu0
    %v2716 = vpop.f32.mrb[0].mxu0
    %v2717 = vpop.f32.mrb[0].mxu0
    %2718 = vdwg.mxu0
    %2719 = vrot.lane.b32.xlu0 %v805, 32
    %v2720 = vpop.permute.xlu0 %2719
    %2721 = vrot.lane.b32.xlu0 %v810, 32
    %v2722 = vpop.permute.xlu0 %2721
    %v2724 = vsel %vm816, %v2720, 0
    %v2727 = vsel %vm816, %v2722, 0
    %2729 = vmatprep.subr.bf16.mxu0 0
    %2730 = vmatpush1.bf16.xpose.msra.mxu0 %v2727
    %2731 = vmatprep.subr.bf16.mxu0 0
    %2732 = vmatpush1.bf16.xpose.msra.mxu0 0
    %2733 = vmatprep.subr.bf16.mxu0 0
    %2734 = vmatpush1.bf16.xpose.msra.mxu0 0
    %2735 = vmatprep.subr.bf16.mxu0 0
    %2736 = vmatpush1.bf16.xpose.msra.mxu0 0
    %2737 = vmatprep.subr.bf16.mxu0 0
    %2738 = vmatpush1.bf16.xpose.msra.mxu0 0
    %2739 = vmatprep.subr.bf16.mxu0 0
    %2740 = vmatpush1.bf16.xpose.msra.mxu0 0
    %2741 = vmatprep.subr.bf16.mxu0 0
    %2742 = vmatpush1.bf16.xpose.msra.mxu0 0
    %2743 = vmatprep.subr.bf16.mxu0 0
    %2744 = vmatpush1.bf16.xpose.msra.mxu0 0
    %2745 = vmatprep.subr.bf16.mxu0 0
    %2746 = vmatpush1.bf16.xpose.msra.mxu0 0
    %2747 = vmatprep.subr.bf16.mxu0 0
    %2748 = vmatpush1.bf16.xpose.msra.mxu0 0
    %2749 = vmatprep.subr.bf16.mxu0 0
    %2750 = vmatpush1.bf16.xpose.msra.mxu0 0
    %2751 = vmatprep.subr.bf16.mxu0 0
    %2752 = vmatpush1.bf16.xpose.msra.mxu0 0
    %2753 = vmatprep.subr.bf16.mxu0 0
    %2754 = vmatpush1.bf16.xpose.msra.mxu0 0
    %2755 = vmatprep.subr.bf16.mxu0 0
    %2756 = vmatpush1.bf16.xpose.msra.mxu0 0
    %2757 = vmatprep.subr.bf16.mxu0 0
    %2758 = vmatpush1.bf16.xpose.msra.mxu0 0
    %2759 = vmatprep.subr.bf16.mxu0 0
    %2760 = vmatpush1.bf16.xpose.msra.mxu0 0
    %2761 = vmatprep.mubr.bf16.mxu0 0
    %2762 = vmatmul.mubr.bf16.gmra.mrb[0].mxu0 %v2724
    %v2763 = vpop.f32.mrb[0].mxu0
    %v2764 = vadd.f32 0.0, %v2763
    %v2765 = vpop.f32.mrb[0].mxu0
    %v2766 = vpop.f32.mrb[0].mxu0
    %v2767 = vpop.f32.mrb[0].mxu0
    %2768 = vdwg.mxu0
    %v2769 = vsel %vm909, %v2714, -inf
    %2770 = vmax.xlane.f32.xlu0 %v2769
    %v2771 = vpop.xlane.xlu0 %2770
    %v2772 = vsel %vm909, %v2764, -inf
    %2773 = vmax.xlane.f32.xlu0 %v2772
    %v2774 = vpop.xlane.xlu0 %2773
    %v2775 = vsub.f32 %v2714, %v2771
    %v2776 = vsub.f32 %v2764, %v2774
    %v2777 = vmul.f32 %v2775, 1.442695
    %v2778 = vpow.pop %v2777
    %v2779 = vmul.f32 %v2776, 1.442695
    %v2780 = vpow.pop %v2779
    %v2781 = vsel %vm909, %v2778, 0.0
    %2782 = vadd.xlane.f32.xlu0 %v2781
    %v2783 = vpop.xlane.xlu0 %2782
    %v2784 = vsel %vm909, %v2780, 0.0
    %2785 = vadd.xlane.f32.xlu0 %v2784
    %v2786 = vpop.xlane.xlu0 %2785
    %v2787 = vrcp.pop %v2783
    %v2788 = vrcp.pop %v2786
    %v2789 = vmul.f32 %v2778, %v2787
    %v2790 = vmul.f32 %v2780, %v2788
    %v2791 = vpack.c.bf16 %v2789, %v2789
    %v2792 = vpack.c.bf16 %v2790, %v2790
    %2793 = vrot.lane.b32.xlu0 %v814, 32
    %v2794 = vpop.permute.xlu0 %2793
    %v2796 = vsel %vm909, %v2791, 0
    %v2799 = vsel %vm937, %v2794, 0
    %2801 = vmatprep.subr.bf16.mxu0 0
    %2802 = vmatpush1.bf16.msra.mxu0 %v2799
    %2803 = vmatprep.subr.bf16.mxu0 0
    %2804 = vmatpush1.bf16.msra.mxu0 0
    %2805 = vmatprep.subr.bf16.mxu0 0
    %2806 = vmatpush1.bf16.msra.mxu0 0
    %2807 = vmatprep.subr.bf16.mxu0 0
    %2808 = vmatpush1.bf16.msra.mxu0 0
    %2809 = vmatprep.subr.bf16.mxu0 0
    %2810 = vmatpush1.bf16.msra.mxu0 0
    %2811 = vmatprep.subr.bf16.mxu0 0
    %2812 = vmatpush1.bf16.msra.mxu0 0
    %2813 = vmatprep.subr.bf16.mxu0 0
    %2814 = vmatpush1.bf16.msra.mxu0 0
    %2815 = vmatprep.subr.bf16.mxu0 0
    %2816 = vmatpush1.bf16.msra.mxu0 0
    %2817 = vmatprep.subr.bf16.mxu0 0
    %2818 = vmatpush1.bf16.msra.mxu0 0
    %2819 = vmatprep.subr.bf16.mxu0 0
    %2820 = vmatpush1.bf16.msra.mxu0 0
    %2821 = vmatprep.subr.bf16.mxu0 0
    %2822 = vmatpush1.bf16.msra.mxu0 0
    %2823 = vmatprep.subr.bf16.mxu0 0
    %2824 = vmatpush1.bf16.msra.mxu0 0
    %2825 = vmatprep.subr.bf16.mxu0 0
    %2826 = vmatpush1.bf16.msra.mxu0 0
    %2827 = vmatprep.subr.bf16.mxu0 0
    %2828 = vmatpush1.bf16.msra.mxu0 0
    %2829 = vmatprep.subr.bf16.mxu0 0
    %2830 = vmatpush1.bf16.msra.mxu0 0
    %2831 = vmatprep.subr.bf16.mxu0 0
    %2832 = vmatpush1.bf16.msra.mxu0 0
    %2833 = vmatprep.mubr.bf16.mxu0 0
    %2834 = vmatmul.mubr.bf16.gmra.mrb[0].mxu0 %v2796
    %v2835 = vpop.f32.mrb[0].mxu0
    %v2836 = vadd.f32 0.0, %v2835
    %v2837 = vpop.f32.mrb[0].mxu0
    %v2838 = vpop.f32.mrb[0].mxu0
    %v2839 = vpop.f32.mrb[0].mxu0
    %2840 = vdwg.mxu0
    %2841 = vrot.lane.b32.xlu0 %v815, 32
    %v2842 = vpop.permute.xlu0 %2841
    %v2844 = vsel %vm909, %v2792, 0
    %v2847 = vsel %vm937, %v2842, 0
    %2849 = vmatprep.subr.bf16.mxu0 0
    %2850 = vmatpush1.bf16.msra.mxu0 %v2847
    %2851 = vmatprep.subr.bf16.mxu0 0
    %2852 = vmatpush1.bf16.msra.mxu0 0
    %2853 = vmatprep.subr.bf16.mxu0 0
    %2854 = vmatpush1.bf16.msra.mxu0 0
    %2855 = vmatprep.subr.bf16.mxu0 0
    %2856 = vmatpush1.bf16.msra.mxu0 0
    %2857 = vmatprep.subr.bf16.mxu0 0
    %2858 = vmatpush1.bf16.msra.mxu0 0
    %2859 = vmatprep.subr.bf16.mxu0 0
    %2860 = vmatpush1.bf16.msra.mxu0 0
    %2861 = vmatprep.subr.bf16.mxu0 0
    %2862 = vmatpush1.bf16.msra.mxu0 0
    %2863 = vmatprep.subr.bf16.mxu0 0
    %2864 = vmatpush1.bf16.msra.mxu0 0
    %2865 = vmatprep.subr.bf16.mxu0 0
    %2866 = vmatpush1.bf16.msra.mxu0 0
    %2867 = vmatprep.subr.bf16.mxu0 0
    %2868 = vmatpush1.bf16.msra.mxu0 0
    %2869 = vmatprep.subr.bf16.mxu0 0
    %2870 = vmatpush1.bf16.msra.mxu0 0
    %2871 = vmatprep.subr.bf16.mxu0 0
    %2872 = vmatpush1.bf16.msra.mxu0 0
    %2873 = vmatprep.subr.bf16.mxu0 0
    %2874 = vmatpush1.bf16.msra.mxu0 0
    %2875 = vmatprep.subr.bf16.mxu0 0
    %2876 = vmatpush1.bf16.msra.mxu0 0
    %2877 = vmatprep.subr.bf16.mxu0 0
    %2878 = vmatpush1.bf16.msra.mxu0 0
    %2879 = vmatprep.subr.bf16.mxu0 0
    %2880 = vmatpush1.bf16.msra.mxu0 0
    %2881 = vmatprep.mubr.bf16.mxu0 0
    %2882 = vmatmul.mubr.bf16.gmra.mrb[0].mxu0 %v2844
    %v2883 = vpop.f32.mrb[0].mxu0
    %v2884 = vadd.f32 0.0, %v2883
    %v2885 = vpop.f32.mrb[0].mxu0
    %v2886 = vpop.f32.mrb[0].mxu0
    %v2887 = vpop.f32.mrb[0].mxu0
    %2888 = vdwg.mxu0
    %v2889 = vpack.c.bf16 %v2884, %v2836
    %2890 = vrot.lane.b32.xlu0 %v1281, 32
    %v2891 = vpop.permute.xlu0 %2890
    %2892 = vrot.lane.b32.xlu0 %v1282, 32
    %v2893 = vpop.permute.xlu0 %2892
    %2894 = vrot.lane.b32.xlu0 %v1283, 32
    %v2895 = vpop.permute.xlu0 %2894
    %2896 = vrot.lane.b32.xlu0 %v1284, 32
    %v2897 = vpop.permute.xlu0 %2896
    %2898 = vrot.lane.b32.xlu0 %v1285, 32
    %v2899 = vpop.permute.xlu0 %2898
    %2900 = vrot.lane.b32.xlu0 %v1286, 32
    %v2901 = vpop.permute.xlu0 %2900
    %2902 = vrot.lane.b32.xlu0 %v1287, 32
    %v2903 = vpop.permute.xlu0 %2902
    %2904 = vrot.lane.b32.xlu0 %v1288, 32
    %v2905 = vpop.permute.xlu0 %2904
    %v2907 = vsel %vm816, %v2889, 0
    %v2910 = vsel %vm816, %v2891, 0
    %v2913 = vsel %vm816, %v2893, 0
    %v2916 = vsel %vm816, %v2895, 0
    %v2919 = vsel %vm816, %v2897, 0
    %v2922 = vsel %vm816, %v2899, 0
    %v2925 = vsel %vm816, %v2901, 0
    %v2928 = vsel %vm816, %v2903, 0
    %v2931 = vsel %vm816, %v2905, 0
    %2933 = vmatprep.subr.bf16.mxu0 0
    %2934 = vmatpush1.bf16.xpose.msra.mxu0 %v2910
    %2935 = vmatprep.subr.bf16.mxu0 0
    %2936 = vmatpush1.bf16.xpose.msra.mxu0 %v2913
    %2937 = vmatprep.subr.bf16.mxu0 0
    %2938 = vmatpush1.bf16.xpose.msra.mxu0 %v2916
    %2939 = vmatprep.subr.bf16.mxu0 0
    %2940 = vmatpush1.bf16.xpose.msra.mxu0 %v2919
    %2941 = vmatprep.subr.bf16.mxu0 0
    %2942 = vmatpush1.bf16.xpose.msra.mxu0 %v2922
    %2943 = vmatprep.subr.bf16.mxu0 0
    %2944 = vmatpush1.bf16.xpose.msra.mxu0 %v2925
    %2945 = vmatprep.subr.bf16.mxu0 0
    %2946 = vmatpush1.bf16.xpose.msra.mxu0 %v2928
    %2947 = vmatprep.subr.bf16.mxu0 0
    %2948 = vmatpush1.bf16.xpose.msra.mxu0 %v2931
    %2949 = vmatprep.subr.bf16.mxu0 0
    %2950 = vmatpush1.bf16.xpose.msra.mxu0 0
    %2951 = vmatprep.subr.bf16.mxu0 0
    %2952 = vmatpush1.bf16.xpose.msra.mxu0 0
    %2953 = vmatprep.subr.bf16.mxu0 0
    %2954 = vmatpush1.bf16.xpose.msra.mxu0 0
    %2955 = vmatprep.subr.bf16.mxu0 0
    %2956 = vmatpush1.bf16.xpose.msra.mxu0 0
    %2957 = vmatprep.subr.bf16.mxu0 0
    %2958 = vmatpush1.bf16.xpose.msra.mxu0 0
    %2959 = vmatprep.subr.bf16.mxu0 0
    %2960 = vmatpush1.bf16.xpose.msra.mxu0 0
    %2961 = vmatprep.subr.bf16.mxu0 0
    %2962 = vmatpush1.bf16.xpose.msra.mxu0 0
    %2963 = vmatprep.subr.bf16.mxu0 0
    %2964 = vmatpush1.bf16.xpose.msra.mxu0 0
    %2965 = vmatprep.mubr.bf16.mxu0 0
    %2966 = vmatmul.mubr.bf16.gmra.mrb[0].mxu0 %v2907
    %v2967 = vpop.f32.mrb[0].mxu0
    %v2968 = vadd.f32 0.0, %v2967
    %v2969 = vpop.f32.mrb[0].mxu0
    %v2970 = vpop.f32.mrb[0].mxu0
    %v2971 = vadd.f32 0.0, %v2970
    %v2972 = vpop.f32.mrb[0].mxu0
    %2973 = vdwg.mxu0
    %v2974 = vadd.f32 %v2667, %v2968
    %v2975 = vadd.f32 %v2668, %v2971
    %2976 = vrot.lane.b32.xlu0 %v804, 16
    %v2977 = vpop.permute.xlu0 %2976
    %2978 = vrot.lane.b32.xlu0 %v809, 16
    %v2979 = vpop.permute.xlu0 %2978
    %v2981 = vsel %vm816, %v2977, 0
    %v2984 = vsel %vm816, %v2979, 0
    %2986 = vmatprep.subr.bf16.mxu0 0
    %2987 = vmatpush1.bf16.xpose.msra.mxu0 %v2984
    %2988 = vmatprep.subr.bf16.mxu0 0
    %2989 = vmatpush1.bf16.xpose.msra.mxu0 0
    %2990 = vmatprep.subr.bf16.mxu0 0
    %2991 = vmatpush1.bf16.xpose.msra.mxu0 0
    %2992 = vmatprep.subr.bf16.mxu0 0
    %2993 = vmatpush1.bf16.xpose.msra.mxu0 0
    %2994 = vmatprep.subr.bf16.mxu0 0
    %2995 = vmatpush1.bf16.xpose.msra.mxu0 0
    %2996 = vmatprep.subr.bf16.mxu0 0
    %2997 = vmatpush1.bf16.xpose.msra.mxu0 0
    %2998 = vmatprep.subr.bf16.mxu0 0
    %2999 = vmatpush1.bf16.xpose.msra.mxu0 0
    %3000 = vmatprep.subr.bf16.mxu0 0
    %3001 = vmatpush1.bf16.xpose.msra.mxu0 0
    %3002 = vmatprep.subr.bf16.mxu0 0
    %3003 = vmatpush1.bf16.xpose.msra.mxu0 0
    %3004 = vmatprep.subr.bf16.mxu0 0
    %3005 = vmatpush1.bf16.xpose.msra.mxu0 0
    %3006 = vmatprep.subr.bf16.mxu0 0
    %3007 = vmatpush1.bf16.xpose.msra.mxu0 0
    %3008 = vmatprep.subr.bf16.mxu0 0
    %3009 = vmatpush1.bf16.xpose.msra.mxu0 0
    %3010 = vmatprep.subr.bf16.mxu0 0
    %3011 = vmatpush1.bf16.xpose.msra.mxu0 0
    %3012 = vmatprep.subr.bf16.mxu0 0
    %3013 = vmatpush1.bf16.xpose.msra.mxu0 0
    %3014 = vmatprep.subr.bf16.mxu0 0
    %3015 = vmatpush1.bf16.xpose.msra.mxu0 0
    %3016 = vmatprep.subr.bf16.mxu0 0
    %3017 = vmatpush1.bf16.xpose.msra.mxu0 0
    %3018 = vmatprep.mubr.bf16.mxu0 0
    %3019 = vmatmul.mubr.bf16.gmra.mrb[0].mxu0 %v2981
    %v3020 = vpop.f32.mrb[0].mxu0
    %v3021 = vadd.f32 0.0, %v3020
    %v3022 = vpop.f32.mrb[0].mxu0
    %v3023 = vpop.f32.mrb[0].mxu0
    %v3024 = vpop.f32.mrb[0].mxu0
    %3025 = vdwg.mxu0
    %3026 = vrot.lane.b32.xlu0 %v805, 16
    %v3027 = vpop.permute.xlu0 %3026
    %3028 = vrot.lane.b32.xlu0 %v810, 16
    %v3029 = vpop.permute.xlu0 %3028
    %v3031 = vsel %vm816, %v3027, 0
    %v3034 = vsel %vm816, %v3029, 0
    %3036 = vmatprep.subr.bf16.mxu0 0
    %3037 = vmatpush1.bf16.xpose.msra.mxu0 %v3034
    %3038 = vmatprep.subr.bf16.mxu0 0
    %3039 = vmatpush1.bf16.xpose.msra.mxu0 0
    %3040 = vmatprep.subr.bf16.mxu0 0
    %3041 = vmatpush1.bf16.xpose.msra.mxu0 0
    %3042 = vmatprep.subr.bf16.mxu0 0
    %3043 = vmatpush1.bf16.xpose.msra.mxu0 0
    %3044 = vmatprep.subr.bf16.mxu0 0
    %3045 = vmatpush1.bf16.xpose.msra.mxu0 0
    %3046 = vmatprep.subr.bf16.mxu0 0
    %3047 = vmatpush1.bf16.xpose.msra.mxu0 0
    %3048 = vmatprep.subr.bf16.mxu0 0
    %3049 = vmatpush1.bf16.xpose.msra.mxu0 0
    %3050 = vmatprep.subr.bf16.mxu0 0
    %3051 = vmatpush1.bf16.xpose.msra.mxu0 0
    %3052 = vmatprep.subr.bf16.mxu0 0
    %3053 = vmatpush1.bf16.xpose.msra.mxu0 0
    %3054 = vmatprep.subr.bf16.mxu0 0
    %3055 = vmatpush1.bf16.xpose.msra.mxu0 0
    %3056 = vmatprep.subr.bf16.mxu0 0
    %3057 = vmatpush1.bf16.xpose.msra.mxu0 0
    %3058 = vmatprep.subr.bf16.mxu0 0
    %3059 = vmatpush1.bf16.xpose.msra.mxu0 0
    %3060 = vmatprep.subr.bf16.mxu0 0
    %3061 = vmatpush1.bf16.xpose.msra.mxu0 0
    %3062 = vmatprep.subr.bf16.mxu0 0
    %3063 = vmatpush1.bf16.xpose.msra.mxu0 0
    %3064 = vmatprep.subr.bf16.mxu0 0
    %3065 = vmatpush1.bf16.xpose.msra.mxu0 0
    %3066 = vmatprep.subr.bf16.mxu0 0
    %3067 = vmatpush1.bf16.xpose.msra.mxu0 0
    %3068 = vmatprep.mubr.bf16.mxu0 0
    %3069 = vmatmul.mubr.bf16.gmra.mrb[0].mxu0 %v3031
    %v3070 = vpop.f32.mrb[0].mxu0
    %v3071 = vadd.f32 0.0, %v3070
    %v3072 = vpop.f32.mrb[0].mxu0
    %v3073 = vpop.f32.mrb[0].mxu0
    %v3074 = vpop.f32.mrb[0].mxu0
    %3075 = vdwg.mxu0
    %v3076 = vsel %vm909, %v3021, -inf
    %3077 = vmax.xlane.f32.xlu0 %v3076
    %v3078 = vpop.xlane.xlu0 %3077
    %v3079 = vsel %vm909, %v3071, -inf
    %3080 = vmax.xlane.f32.xlu0 %v3079
    %v3081 = vpop.xlane.xlu0 %3080
    %v3082 = vsub.f32 %v3021, %v3078
    %v3083 = vsub.f32 %v3071, %v3081
    %v3084 = vmul.f32 %v3082, 1.442695
    %v3085 = vpow.pop %v3084
    %v3086 = vmul.f32 %v3083, 1.442695
    %v3087 = vpow.pop %v3086
    %v3088 = vsel %vm909, %v3085, 0.0
    %3089 = vadd.xlane.f32.xlu0 %v3088
    %v3090 = vpop.xlane.xlu0 %3089
    %v3091 = vsel %vm909, %v3087, 0.0
    %3092 = vadd.xlane.f32.xlu0 %v3091
    %v3093 = vpop.xlane.xlu0 %3092
    %v3094 = vrcp.pop %v3090
    %v3095 = vrcp.pop %v3093
    %v3096 = vmul.f32 %v3085, %v3094
    %v3097 = vmul.f32 %v3087, %v3095
    %v3098 = vpack.c.bf16 %v3096, %v3096
    %v3099 = vpack.c.bf16 %v3097, %v3097
    %3100 = vrot.lane.b32.xlu0 %v814, 16
    %v3101 = vpop.permute.xlu0 %3100
    %v3103 = vsel %vm909, %v3098, 0
    %v3106 = vsel %vm937, %v3101, 0
    %3108 = vmatprep.subr.bf16.mxu0 0
    %3109 = vmatpush1.bf16.msra.mxu0 %v3106
    %3110 = vmatprep.subr.bf16.mxu0 0
    %3111 = vmatpush1.bf16.msra.mxu0 0
    %3112 = vmatprep.subr.bf16.mxu0 0
    %3113 = vmatpush1.bf16.msra.mxu0 0
    %3114 = vmatprep.subr.bf16.mxu0 0
    %3115 = vmatpush1.bf16.msra.mxu0 0
    %3116 = vmatprep.subr.bf16.mxu0 0
    %3117 = vmatpush1.bf16.msra.mxu0 0
    %3118 = vmatprep.subr.bf16.mxu0 0
    %3119 = vmatpush1.bf16.msra.mxu0 0
    %3120 = vmatprep.subr.bf16.mxu0 0
    %3121 = vmatpush1.bf16.msra.mxu0 0
    %3122 = vmatprep.subr.bf16.mxu0 0
    %3123 = vmatpush1.bf16.msra.mxu0 0
    %3124 = vmatprep.subr.bf16.mxu0 0
    %3125 = vmatpush1.bf16.msra.mxu0 0
    %3126 = vmatprep.subr.bf16.mxu0 0
    %3127 = vmatpush1.bf16.msra.mxu0 0
    %3128 = vmatprep.subr.bf16.mxu0 0
    %3129 = vmatpush1.bf16.msra.mxu0 0
    %3130 = vmatprep.subr.bf16.mxu0 0
    %3131 = vmatpush1.bf16.msra.mxu0 0
    %3132 = vmatprep.subr.bf16.mxu0 0
    %3133 = vmatpush1.bf16.msra.mxu0 0
    %3134 = vmatprep.subr.bf16.mxu0 0
    %3135 = vmatpush1.bf16.msra.mxu0 0
    %3136 = vmatprep.subr.bf16.mxu0 0
    %3137 = vmatpush1.bf16.msra.mxu0 0
    %3138 = vmatprep.subr.bf16.mxu0 0
    %3139 = vmatpush1.bf16.msra.mxu0 0
    %3140 = vmatprep.mubr.bf16.mxu0 0
    %3141 = vmatmul.mubr.bf16.gmra.mrb[0].mxu0 %v3103
    %v3142 = vpop.f32.mrb[0].mxu0
    %v3143 = vadd.f32 0.0, %v3142
    %v3144 = vpop.f32.mrb[0].mxu0
    %v3145 = vpop.f32.mrb[0].mxu0
    %v3146 = vpop.f32.mrb[0].mxu0
    %3147 = vdwg.mxu0
    %3148 = vrot.lane.b32.xlu0 %v815, 16
    %v3149 = vpop.permute.xlu0 %3148
    %v3151 = vsel %vm909, %v3099, 0
    %v3154 = vsel %vm937, %v3149, 0
    %3156 = vmatprep.subr.bf16.mxu0 0
    %3157 = vmatpush1.bf16.msra.mxu0 %v3154
    %3158 = vmatprep.subr.bf16.mxu0 0
    %3159 = vmatpush1.bf16.msra.mxu0 0
    %3160 = vmatprep.subr.bf16.mxu0 0
    %3161 = vmatpush1.bf16.msra.mxu0 0
    %3162 = vmatprep.subr.bf16.mxu0 0
    %3163 = vmatpush1.bf16.msra.mxu0 0
    %3164 = vmatprep.subr.bf16.mxu0 0
    %3165 = vmatpush1.bf16.msra.mxu0 0
    %3166 = vmatprep.subr.bf16.mxu0 0
    %3167 = vmatpush1.bf16.msra.mxu0 0
    %3168 = vmatprep.subr.bf16.mxu0 0
    %3169 = vmatpush1.bf16.msra.mxu0 0
    %3170 = vmatprep.subr.bf16.mxu0 0
    %3171 = vmatpush1.bf16.msra.mxu0 0
    %3172 = vmatprep.subr.bf16.mxu0 0
    %3173 = vmatpush1.bf16.msra.mxu0 0
    %3174 = vmatprep.subr.bf16.mxu0 0
    %3175 = vmatpush1.bf16.msra.mxu0 0
    %3176 = vmatprep.subr.bf16.mxu0 0
    %3177 = vmatpush1.bf16.msra.mxu0 0
    %3178 = vmatprep.subr.bf16.mxu0 0
    %3179 = vmatpush1.bf16.msra.mxu0 0
    %3180 = vmatprep.subr.bf16.mxu0 0
    %3181 = vmatpush1.bf16.msra.mxu0 0
    %3182 = vmatprep.subr.bf16.mxu0 0
    %3183 = vmatpush1.bf16.msra.mxu0 0
    %3184 = vmatprep.subr.bf16.mxu0 0
    %3185 = vmatpush1.bf16.msra.mxu0 0
    %3186 = vmatprep.subr.bf16.mxu0 0
    %3187 = vmatpush1.bf16.msra.mxu0 0
    %3188 = vmatprep.mubr.bf16.mxu0 0
    %3189 = vmatmul.mubr.bf16.gmra.mrb[0].mxu0 %v3151
    %v3190 = vpop.f32.mrb[0].mxu0
    %v3191 = vadd.f32 0.0, %v3190
    %v3192 = vpop.f32.mrb[0].mxu0
    %v3193 = vpop.f32.mrb[0].mxu0
    %v3194 = vpop.f32.mrb[0].mxu0
    %3195 = vdwg.mxu0
    %v3196 = vpack.c.bf16 %v3191, %v3143
    %3197 = vrot.lane.b32.xlu0 %v1281, 16
    %v3198 = vpop.permute.xlu0 %3197
    %3199 = vrot.lane.b32.xlu0 %v1282, 16
    %v3200 = vpop.permute.xlu0 %3199
    %3201 = vrot.lane.b32.xlu0 %v1283, 16
    %v3202 = vpop.permute.xlu0 %3201
    %3203 = vrot.lane.b32.xlu0 %v1284, 16
    %v3204 = vpop.permute.xlu0 %3203
    %3205 = vrot.lane.b32.xlu0 %v1285, 16
    %v3206 = vpop.permute.xlu0 %3205
    %3207 = vrot.lane.b32.xlu0 %v1286, 16
    %v3208 = vpop.permute.xlu0 %3207
    %3209 = vrot.lane.b32.xlu0 %v1287, 16
    %v3210 = vpop.permute.xlu0 %3209
    %3211 = vrot.lane.b32.xlu0 %v1288, 16
    %v3212 = vpop.permute.xlu0 %3211
    %v3214 = vsel %vm816, %v3196, 0
    %v3217 = vsel %vm816, %v3198, 0
    %v3220 = vsel %vm816, %v3200, 0
    %v3223 = vsel %vm816, %v3202, 0
    %v3226 = vsel %vm816, %v3204, 0
    %v3229 = vsel %vm816, %v3206, 0
    %v3232 = vsel %vm816, %v3208, 0
    %v3235 = vsel %vm816, %v3210, 0
    %v3238 = vsel %vm816, %v3212, 0
    %3240 = vmatprep.subr.bf16.mxu0 0
    %3241 = vmatpush1.bf16.xpose.msra.mxu0 %v3217
    %3242 = vmatprep.subr.bf16.mxu0 0
    %3243 = vmatpush1.bf16.xpose.msra.mxu0 %v3220
    %3244 = vmatprep.subr.bf16.mxu0 0
    %3245 = vmatpush1.bf16.xpose.msra.mxu0 %v3223
    %3246 = vmatprep.subr.bf16.mxu0 0
    %3247 = vmatpush1.bf16.xpose.msra.mxu0 %v3226
    %3248 = vmatprep.subr.bf16.mxu0 0
    %3249 = vmatpush1.bf16.xpose.msra.mxu0 %v3229
    %3250 = vmatprep.subr.bf16.mxu0 0
    %3251 = vmatpush1.bf16.xpose.msra.mxu0 %v3232
    %3252 = vmatprep.subr.bf16.mxu0 0
    %3253 = vmatpush1.bf16.xpose.msra.mxu0 %v3235
    %3254 = vmatprep.subr.bf16.mxu0 0
    %3255 = vmatpush1.bf16.xpose.msra.mxu0 %v3238
    %3256 = vmatprep.subr.bf16.mxu0 0
    %3257 = vmatpush1.bf16.xpose.msra.mxu0 0
    %3258 = vmatprep.subr.bf16.mxu0 0
    %3259 = vmatpush1.bf16.xpose.msra.mxu0 0
    %3260 = vmatprep.subr.bf16.mxu0 0
    %3261 = vmatpush1.bf16.xpose.msra.mxu0 0
    %3262 = vmatprep.subr.bf16.mxu0 0
    %3263 = vmatpush1.bf16.xpose.msra.mxu0 0
    %3264 = vmatprep.subr.bf16.mxu0 0
    %3265 = vmatpush1.bf16.xpose.msra.mxu0 0
    %3266 = vmatprep.subr.bf16.mxu0 0
    %3267 = vmatpush1.bf16.xpose.msra.mxu0 0
    %3268 = vmatprep.subr.bf16.mxu0 0
    %3269 = vmatpush1.bf16.xpose.msra.mxu0 0
    %3270 = vmatprep.subr.bf16.mxu0 0
    %3271 = vmatpush1.bf16.xpose.msra.mxu0 0
    %3272 = vmatprep.mubr.bf16.mxu0 0
    %3273 = vmatmul.mubr.bf16.gmra.mrb[0].mxu0 %v3214
    %v3274 = vpop.f32.mrb[0].mxu0
    %v3275 = vadd.f32 0.0, %v3274
    %v3276 = vpop.f32.mrb[0].mxu0
    %v3277 = vpop.f32.mrb[0].mxu0
    %v3278 = vadd.f32 0.0, %v3277
    %v3279 = vpop.f32.mrb[0].mxu0
    %3280 = vdwg.mxu0
    %v3281 = vadd.f32 %v2974, %v3275
    %v3282 = vadd.f32 %v2975, %v3278
    %v3283 = vlaneseq
    %v3284 = vshrl.u32 %v3283, 7
    %v3285 = vsub.s32 0, %v3284
    %v3286 = vrot.slane %v83, %v3285
    %v3287 = vadd.f32 %v3281, %v3286
    %v3288 = vadd.f32 %v3282, %v3286
    %v3289 = vadd.f32 %v80, %v3287
    %v3290 = vadd.f32 %v81, %v3288
    %3291 = vadd.xlane.f32.xlu0 %v3289
    %v3292 = vpop.xlane.xlu0 %3291
    %3293 = vadd.xlane.f32.xlu0 %v3290
    %v3294 = vpop.xlane.xlu0 %3293
    %v3295 = vrcp.pop 128.0
    %v3296 = vmul.f32 %v3292, %v3295
    %v3297 = vmul.f32 %v3294, %v3295
    %v3298 = vsub.f32 %v3289, %v3296
    %v3299 = vsub.f32 %v3290, %v3297
    %v3300 = vmul.f32 %v3298, %v3298
    %v3301 = vmul.f32 %v3299, %v3299
    %3302 = vadd.xlane.f32.xlu0 %v3300
    %v3303 = vpop.xlane.xlu0 %3302
    %3304 = vadd.xlane.f32.xlu0 %v3301
    %v3305 = vpop.xlane.xlu0 %3304
    %v3306 = vmul.f32 %v3303, %v3295
    %v3307 = vmul.f32 %v3305, %v3295
    %v3308 = vadd.f32 %v3306, 1e-05
    %v3309 = vadd.f32 %v3307, 1e-05
    %v3310 = vrsqrt.pop %v3308
    %v3311 = vrsqrt.pop %v3309
    %v3312 = vmul.f32 %v3298, %v3310
    %v3313 = vmul.f32 %v3299, %v3311
    %v3314 = vlaneseq
    %v3315 = vshrl.u32 %v3314, 7
    %v3316 = vsub.s32 0, %v3315
    %v3317 = vrot.slane %v84, %v3316
    %v3318 = vmul.f32 %v3312, %v3317
    %v3319 = vmul.f32 %v3313, %v3317
    %v3320 = vlaneseq
    %v3321 = vshrl.u32 %v3320, 7
    %v3322 = vsub.s32 0, %v3321
    %v3323 = vrot.slane %v85, %v3322
    %v3324 = vadd.f32 %v3318, %v3323
    %v3325 = vadd.f32 %v3319, %v3323
    %v3326 = vpack.c.bf16 %v3325, %v3324
    %v3331 = vlaneseq
    %v3332 = vshrl.u32 %v3331, 7
    %v3333 = vsub.s32 0, %v3332
    %v3334 = vrot.slane %v88, %v3333
    %v3335 = vlaneseq
    %v3336 = vshrl.u32 %v3335, 7
    %v3337 = vsub.s32 2, %v3336
    %v3338 = vrot.slane %v88, %v3337
    %v3339 = vlaneseq
    %v3340 = vshrl.u32 %v3339, 7
    %v3341 = vsub.s32 4, %v3340
    %v3342 = vrot.slane %v88, %v3341
    %v3343 = vlaneseq
    %v3344 = vshrl.u32 %v3343, 7
    %v3345 = vsub.s32 6, %v3344
    %v3346 = vrot.slane %v88, %v3345
    %v3347 = vlaneseq
    %v3348 = vshrl.u32 %v3347, 7
    %v3349 = vsub.s32 0, %v3348
    %v3350 = vrot.slane %v89, %v3349
    %v3351 = vlaneseq
    %v3352 = vshrl.u32 %v3351, 7
    %v3353 = vsub.s32 2, %v3352
    %v3354 = vrot.slane %v89, %v3353
    %v3355 = vlaneseq
    %v3356 = vshrl.u32 %v3355, 7
    %v3357 = vsub.s32 4, %v3356
    %v3358 = vrot.slane %v89, %v3357
    %v3359 = vlaneseq
    %v3360 = vshrl.u32 %v3359, 7
    %v3361 = vsub.s32 6, %v3360
    %v3362 = vrot.slane %v89, %v3361
    %v3363 = vlaneseq
    %v3364 = vshrl.u32 %v3363, 7
    %v3365 = vsub.s32 0, %v3364
    %v3366 = vrot.slane %v90, %v3365
    %v3367 = vlaneseq
    %v3368 = vshrl.u32 %v3367, 7
    %v3369 = vsub.s32 2, %v3368
    %v3370 = vrot.slane %v90, %v3369
    %v3371 = vlaneseq
    %v3372 = vshrl.u32 %v3371, 7
    %v3373 = vsub.s32 4, %v3372
    %v3374 = vrot.slane %v90, %v3373
    %v3375 = vlaneseq
    %v3376 = vshrl.u32 %v3375, 7
    %v3377 = vsub.s32 6, %v3376
    %v3378 = vrot.slane %v90, %v3377
    %v3379 = vlaneseq
    %v3380 = vshrl.u32 %v3379, 7
    %v3381 = vsub.s32 0, %v3380
    %v3382 = vrot.slane %v91, %v3381
    %v3383 = vlaneseq
    %v3384 = vshrl.u32 %v3383, 7
    %v3385 = vsub.s32 2, %v3384
    %v3386 = vrot.slane %v91, %v3385
    %v3387 = vlaneseq
    %v3388 = vshrl.u32 %v3387, 7
    %v3389 = vsub.s32 4, %v3388
    %v3390 = vrot.slane %v91, %v3389
    %v3391 = vlaneseq
    %v3392 = vshrl.u32 %v3391, 7
    %v3393 = vsub.s32 6, %v3392
    %v3394 = vrot.slane %v91, %v3393
    %v3411 = vlaneseq
    %v3412 = vshrl.u32 %v3411, 7
    %v3413 = vsub.s32 0, %v3412
    %v3414 = vrot.slane %v3334, %v3413
    %v3415 = vlaneseq
    %v3416 = vshrl.u32 %v3415, 7
    %v3417 = vsub.s32 0, %v3416
    %v3418 = vrot.slane %v3338, %v3417
    %v3419 = vlaneseq
    %v3420 = vshrl.u32 %v3419, 7
    %v3421 = vsub.s32 0, %v3420
    %v3422 = vrot.slane %v3342, %v3421
    %v3423 = vlaneseq
    %v3424 = vshrl.u32 %v3423, 7
    %v3425 = vsub.s32 0, %v3424
    %v3426 = vrot.slane %v3346, %v3425
    %v3427 = vlaneseq
    %v3428 = vshrl.u32 %v3427, 7
    %v3429 = vsub.s32 0, %v3428
    %v3430 = vrot.slane %v3350, %v3429
    %v3431 = vlaneseq
    %v3432 = vshrl.u32 %v3431, 7
    %v3433 = vsub.s32 0, %v3432
    %v3434 = vrot.slane %v3354, %v3433
    %v3435 = vlaneseq
    %v3436 = vshrl.u32 %v3435, 7
    %v3437 = vsub.s32 0, %v3436
    %v3438 = vrot.slane %v3358, %v3437
    %v3439 = vlaneseq
    %v3440 = vshrl.u32 %v3439, 7
    %v3441 = vsub.s32 0, %v3440
    %v3442 = vrot.slane %v3362, %v3441
    %v3443 = vlaneseq
    %v3444 = vshrl.u32 %v3443, 7
    %v3445 = vsub.s32 0, %v3444
    %v3446 = vrot.slane %v3366, %v3445
    %v3447 = vlaneseq
    %v3448 = vshrl.u32 %v3447, 7
    %v3449 = vsub.s32 0, %v3448
    %v3450 = vrot.slane %v3370, %v3449
    %v3451 = vlaneseq
    %v3452 = vshrl.u32 %v3451, 7
    %v3453 = vsub.s32 0, %v3452
    %v3454 = vrot.slane %v3374, %v3453
    %v3455 = vlaneseq
    %v3456 = vshrl.u32 %v3455, 7
    %v3457 = vsub.s32 0, %v3456
    %v3458 = vrot.slane %v3378, %v3457
    %v3459 = vlaneseq
    %v3460 = vshrl.u32 %v3459, 7
    %v3461 = vsub.s32 0, %v3460
    %v3462 = vrot.slane %v3382, %v3461
    %v3463 = vlaneseq
    %v3464 = vshrl.u32 %v3463, 7
    %v3465 = vsub.s32 0, %v3464
    %v3466 = vrot.slane %v3386, %v3465
    %v3467 = vlaneseq
    %v3468 = vshrl.u32 %v3467, 7
    %v3469 = vsub.s32 0, %v3468
    %v3470 = vrot.slane %v3390, %v3469
    %v3471 = vlaneseq
    %v3472 = vshrl.u32 %v3471, 7
    %v3473 = vsub.s32 0, %v3472
    %v3474 = vrot.slane %v3394, %v3473
    %v3731 = vunpack.c.l.b16 %v157
    %v3732 = vunpack.c.l.b16 %v158
    %v3733 = vunpack.c.l.b16 %v159
    %v3734 = vunpack.c.l.b16 %v160
    %v3735 = vunpack.c.l.b16 %v161
    %v3736 = vunpack.c.l.b16 %v162
    %v3737 = vunpack.c.l.b16 %v163
    %v3738 = vunpack.c.l.b16 %v164
    %v3739 = vunpack.c.l.b16 %v165
    %v3740 = vunpack.c.l.b16 %v166
    %v3741 = vunpack.c.l.b16 %v167
    %v3742 = vunpack.c.l.b16 %v168
    %v3743 = vunpack.c.l.b16 %v169
    %v3744 = vunpack.c.l.b16 %v170
    %v3745 = vunpack.c.l.b16 %v171
    %v3746 = vunpack.c.l.b16 %v172
    %v3747 = vunpack.c.l.b16 %v173
    %v3748 = vunpack.c.l.b16 %v174
    %v3749 = vunpack.c.l.b16 %v175
    %v3750 = vunpack.c.l.b16 %v176
    %v3751 = vunpack.c.l.b16 %v177
    %v3752 = vunpack.c.l.b16 %v178
    %v3753 = vunpack.c.l.b16 %v179
    %v3754 = vunpack.c.l.b16 %v180
    %v3755 = vunpack.c.l.b16 %v181
    %v3756 = vunpack.c.l.b16 %v182
    %v3757 = vunpack.c.l.b16 %v183
    %v3758 = vunpack.c.l.b16 %v184
    %v3759 = vunpack.c.l.b16 %v185
    %v3760 = vunpack.c.l.b16 %v186
    %v3761 = vunpack.c.l.b16 %v187
    %v3762 = vunpack.c.l.b16 %v188
    %v3763 = vunpack.c.l.b16 %v189
    %v3764 = vunpack.c.l.b16 %v190
    %v3765 = vunpack.c.l.b16 %v191
    %v3766 = vunpack.c.l.b16 %v192
    %v3767 = vunpack.c.l.b16 %v193
    %v3768 = vunpack.c.l.b16 %v194
    %v3769 = vunpack.c.l.b16 %v195
    %v3770 = vunpack.c.l.b16 %v196
    %v3771 = vunpack.c.l.b16 %v197
    %v3772 = vunpack.c.l.b16 %v198
    %v3773 = vunpack.c.l.b16 %v199
    %v3774 = vunpack.c.l.b16 %v200
    %v3775 = vunpack.c.l.b16 %v201
    %v3776 = vunpack.c.l.b16 %v202
    %v3777 = vunpack.c.l.b16 %v203
    %v3778 = vunpack.c.l.b16 %v204
    %v3779 = vunpack.c.l.b16 %v205
    %v3780 = vunpack.c.l.b16 %v206
    %v3781 = vunpack.c.l.b16 %v207
    %v3782 = vunpack.c.l.b16 %v208
    %v3783 = vunpack.c.l.b16 %v209
    %v3784 = vunpack.c.l.b16 %v210
    %v3785 = vunpack.c.l.b16 %v211
    %v3786 = vunpack.c.l.b16 %v212
    %v3787 = vunpack.c.l.b16 %v213
    %v3788 = vunpack.c.l.b16 %v214
    %v3789 = vunpack.c.l.b16 %v215
    %v3790 = vunpack.c.l.b16 %v216
    %v3791 = vunpack.c.l.b16 %v217
    %v3792 = vunpack.c.l.b16 %v218
    %v3793 = vunpack.c.l.b16 %v219
    %v3794 = vunpack.c.l.b16 %v220
    %v3795 = vunpack.c.l.b16 %v221
    %v3796 = vunpack.c.l.b16 %v222
    %v3797 = vunpack.c.l.b16 %v223
    %v3798 = vunpack.c.l.b16 %v224
    %v3799 = vunpack.c.l.b16 %v225
    %v3800 = vunpack.c.l.b16 %v226
    %v3801 = vunpack.c.l.b16 %v227
    %v3802 = vunpack.c.l.b16 %v228
    %v3803 = vunpack.c.l.b16 %v229
    %v3804 = vunpack.c.l.b16 %v230
    %v3805 = vunpack.c.l.b16 %v231
    %v3806 = vunpack.c.l.b16 %v232
    %v3807 = vunpack.c.l.b16 %v233
    %v3808 = vunpack.c.l.b16 %v234
    %v3809 = vunpack.c.l.b16 %v235
    %v3810 = vunpack.c.l.b16 %v236
    %v3811 = vunpack.c.l.b16 %v237
    %v3812 = vunpack.c.l.b16 %v238
    %v3813 = vunpack.c.l.b16 %v239
    %v3814 = vunpack.c.l.b16 %v240
    %v3815 = vunpack.c.l.b16 %v241
    %v3816 = vunpack.c.l.b16 %v242
    %v3817 = vunpack.c.l.b16 %v243
    %v3818 = vunpack.c.l.b16 %v244
    %v3819 = vunpack.c.l.b16 %v245
    %v3820 = vunpack.c.l.b16 %v246
    %v3821 = vunpack.c.l.b16 %v247
    %v3822 = vunpack.c.l.b16 %v248
    %v3823 = vunpack.c.l.b16 %v249
    %v3824 = vunpack.c.l.b16 %v250
    %v3825 = vunpack.c.l.b16 %v251
    %v3826 = vunpack.c.l.b16 %v252
    %v3827 = vunpack.c.l.b16 %v253
    %v3828 = vunpack.c.l.b16 %v254
    %v3829 = vunpack.c.l.b16 %v255
    %v3830 = vunpack.c.l.b16 %v256
    %v3831 = vunpack.c.l.b16 %v257
    %v3832 = vunpack.c.l.b16 %v258
    %v3833 = vunpack.c.l.b16 %v259
    %v3834 = vunpack.c.l.b16 %v260
    %v3835 = vunpack.c.l.b16 %v261
    %v3836 = vunpack.c.l.b16 %v262
    %v3837 = vunpack.c.l.b16 %v263
    %v3838 = vunpack.c.l.b16 %v264
    %v3839 = vunpack.c.l.b16 %v265
    %v3840 = vunpack.c.l.b16 %v266
    %v3841 = vunpack.c.l.b16 %v267
    %v3842 = vunpack.c.l.b16 %v268
    %v3843 = vunpack.c.l.b16 %v269
    %v3844 = vunpack.c.l.b16 %v270
    %v3845 = vunpack.c.l.b16 %v271
    %v3846 = vunpack.c.l.b16 %v272
    %v3847 = vunpack.c.l.b16 %v273
    %v3848 = vunpack.c.l.b16 %v274
    %v3849 = vunpack.c.l.b16 %v275
    %v3850 = vunpack.c.l.b16 %v276
    %v3851 = vunpack.c.l.b16 %v277
    %v3852 = vunpack.c.l.b16 %v278
    %v3853 = vunpack.c.l.b16 %v279
    %v3854 = vunpack.c.l.b16 %v280
    %v3855 = vunpack.c.l.b16 %v281
    %v3856 = vunpack.c.l.b16 %v282
    %v3857 = vunpack.c.l.b16 %v283
    %v3858 = vunpack.c.l.b16 %v284
    %v3859 = vunpack.c.l.b16 %v285
    %v3860 = vunpack.c.l.b16 %v286
    %v3861 = vunpack.c.l.b16 %v287
    %v3862 = vunpack.c.l.b16 %v288
    %v3863 = vunpack.c.l.b16 %v289
    %v3864 = vunpack.c.l.b16 %v290
    %v3865 = vunpack.c.l.b16 %v291
    %v3866 = vunpack.c.l.b16 %v292
    %v3867 = vunpack.c.l.b16 %v293
    %v3868 = vunpack.c.l.b16 %v294
    %v3869 = vunpack.c.l.b16 %v295
    %v3870 = vunpack.c.l.b16 %v296
    %v3871 = vunpack.c.l.b16 %v297
    %v3872 = vunpack.c.l.b16 %v298
    %v3873 = vunpack.c.l.b16 %v299
    %v3874 = vunpack.c.l.b16 %v300
    %v3875 = vunpack.c.l.b16 %v301
    %v3876 = vunpack.c.l.b16 %v302
    %v3877 = vunpack.c.l.b16 %v303
    %v3878 = vunpack.c.l.b16 %v304
    %v3879 = vunpack.c.l.b16 %v305
    %v3880 = vunpack.c.l.b16 %v306
    %v3881 = vunpack.c.l.b16 %v307
    %v3882 = vunpack.c.l.b16 %v308
    %v3883 = vunpack.c.l.b16 %v309
    %v3884 = vunpack.c.l.b16 %v310
    %v3885 = vunpack.c.l.b16 %v311
    %v3886 = vunpack.c.l.b16 %v312
    %v3887 = vunpack.c.l.b16 %v313
    %v3888 = vunpack.c.l.b16 %v314
    %v3889 = vunpack.c.l.b16 %v315
    %v3890 = vunpack.c.l.b16 %v316
    %v3891 = vunpack.c.l.b16 %v317
    %v3892 = vunpack.c.l.b16 %v318
    %v3893 = vunpack.c.l.b16 %v319
    %v3894 = vunpack.c.l.b16 %v320
    %v3895 = vunpack.c.l.b16 %v321
    %v3896 = vunpack.c.l.b16 %v322
    %v3897 = vunpack.c.l.b16 %v323
    %v3898 = vunpack.c.l.b16 %v324
    %v3899 = vunpack.c.l.b16 %v325
    %v3900 = vunpack.c.l.b16 %v326
    %v3901 = vunpack.c.l.b16 %v327
    %v3902 = vunpack.c.l.b16 %v328
    %v3903 = vunpack.c.l.b16 %v329
    %v3904 = vunpack.c.l.b16 %v330
    %v3905 = vunpack.c.l.b16 %v331
    %v3906 = vunpack.c.l.b16 %v332
    %v3907 = vunpack.c.l.b16 %v333
    %v3908 = vunpack.c.l.b16 %v334
    %v3909 = vunpack.c.l.b16 %v335
    %v3910 = vunpack.c.l.b16 %v336
    %v3911 = vunpack.c.l.b16 %v337
    %v3912 = vunpack.c.l.b16 %v338
    %v3913 = vunpack.c.l.b16 %v339
    %v3914 = vunpack.c.l.b16 %v340
    %v3915 = vunpack.c.l.b16 %v341
    %v3916 = vunpack.c.l.b16 %v342
    %v3917 = vunpack.c.l.b16 %v343
    %v3918 = vunpack.c.l.b16 %v344
    %v3919 = vunpack.c.l.b16 %v345
    %v3920 = vunpack.c.l.b16 %v346
    %v3921 = vunpack.c.l.b16 %v347
    %v3922 = vunpack.c.l.b16 %v348
    %v3923 = vunpack.c.l.b16 %v349
    %v3924 = vunpack.c.l.b16 %v350
    %v3925 = vunpack.c.l.b16 %v351
    %v3926 = vunpack.c.l.b16 %v352
    %v3927 = vunpack.c.l.b16 %v353
    %v3928 = vunpack.c.l.b16 %v354
    %v3929 = vunpack.c.l.b16 %v355
    %v3930 = vunpack.c.l.b16 %v356
    %v3931 = vunpack.c.l.b16 %v357
    %v3932 = vunpack.c.l.b16 %v358
    %v3933 = vunpack.c.l.b16 %v359
    %v3934 = vunpack.c.l.b16 %v360
    %v3935 = vunpack.c.l.b16 %v361
    %v3936 = vunpack.c.l.b16 %v362
    %v3937 = vunpack.c.l.b16 %v363
    %v3938 = vunpack.c.l.b16 %v364
    %v3939 = vunpack.c.l.b16 %v365
    %v3940 = vunpack.c.l.b16 %v366
    %v3941 = vunpack.c.l.b16 %v367
    %v3942 = vunpack.c.l.b16 %v368
    %v3943 = vunpack.c.l.b16 %v369
    %v3944 = vunpack.c.l.b16 %v370
    %v3945 = vunpack.c.l.b16 %v371
    %v3946 = vunpack.c.l.b16 %v372
    %v3947 = vunpack.c.l.b16 %v373
    %v3948 = vunpack.c.l.b16 %v374
    %v3949 = vunpack.c.l.b16 %v375
    %v3950 = vunpack.c.l.b16 %v376
    %v3951 = vunpack.c.l.b16 %v377
    %v3952 = vunpack.c.l.b16 %v378
    %v3953 = vunpack.c.l.b16 %v379
    %v3954 = vunpack.c.l.b16 %v380
    %v3955 = vunpack.c.l.b16 %v381
    %v3956 = vunpack.c.l.b16 %v382
    %v3957 = vunpack.c.l.b16 %v383
    %v3958 = vunpack.c.l.b16 %v384
    %v3959 = vunpack.c.l.b16 %v385
    %v3960 = vunpack.c.l.b16 %v386
    %v3961 = vunpack.c.l.b16 %v387
    %v3962 = vunpack.c.l.b16 %v388
    %v3963 = vunpack.c.l.b16 %v389
    %v3964 = vunpack.c.l.b16 %v390
    %v3965 = vunpack.c.l.b16 %v391
    %v3966 = vunpack.c.l.b16 %v392
    %v3967 = vunpack.c.l.b16 %v393
    %v3968 = vunpack.c.l.b16 %v394
    %v3969 = vunpack.c.l.b16 %v395
    %v3970 = vunpack.c.l.b16 %v396
    %v3971 = vunpack.c.l.b16 %v397
    %v3972 = vunpack.c.l.b16 %v398
    %v3973 = vunpack.c.l.b16 %v399
    %v3974 = vunpack.c.l.b16 %v400
    %v3975 = vunpack.c.l.b16 %v401
    %v3976 = vunpack.c.l.b16 %v402
    %v3977 = vunpack.c.l.b16 %v403
    %v3978 = vunpack.c.l.b16 %v404
    %v3979 = vunpack.c.l.b16 %v405
    %v3980 = vunpack.c.l.b16 %v406
    %v3981 = vunpack.c.l.b16 %v407
    %v3982 = vunpack.c.l.b16 %v408
    %v3983 = vunpack.c.l.b16 %v409
    %v3984 = vunpack.c.l.b16 %v410
    %v3985 = vunpack.c.l.b16 %v411
    %v3986 = vunpack.c.l.b16 %v412
    %v3987 = vpack.c.b16 %v3732, %v3731
    %v3988 = vpack.c.b16 %v3734, %v3733
    %v3989 = vpack.c.b16 %v3736, %v3735
    %v3990 = vpack.c.b16 %v3738, %v3737
    %v3991 = vpack.c.b16 %v3740, %v3739
    %v3992 = vpack.c.b16 %v3742, %v3741
    %v3993 = vpack.c.b16 %v3744, %v3743
    %v3994 = vpack.c.b16 %v3746, %v3745
    %v3995 = vpack.c.b16 %v3748, %v3747
    %v3996 = vpack.c.b16 %v3750, %v3749
    %v3997 = vpack.c.b16 %v3752, %v3751
    %v3998 = vpack.c.b16 %v3754, %v3753
    %v3999 = vpack.c.b16 %v3756, %v3755
    %v4000 = vpack.c.b16 %v3758, %v3757
    %v4001 = vpack.c.b16 %v3760, %v3759
    %v4002 = vpack.c.b16 %v3762, %v3761
    %v4003 = vpack.c.b16 %v3764, %v3763
    %v4004 = vpack.c.b16 %v3766, %v3765
    %v4005 = vpack.c.b16 %v3768, %v3767
    %v4006 = vpack.c.b16 %v3770, %v3769
    %v4007 = vpack.c.b16 %v3772, %v3771
    %v4008 = vpack.c.b16 %v3774, %v3773
    %v4009 = vpack.c.b16 %v3776, %v3775
    %v4010 = vpack.c.b16 %v3778, %v3777
    %v4011 = vpack.c.b16 %v3780, %v3779
    %v4012 = vpack.c.b16 %v3782, %v3781
    %v4013 = vpack.c.b16 %v3784, %v3783
    %v4014 = vpack.c.b16 %v3786, %v3785
    %v4015 = vpack.c.b16 %v3788, %v3787
    %v4016 = vpack.c.b16 %v3790, %v3789
    %v4017 = vpack.c.b16 %v3792, %v3791
    %v4018 = vpack.c.b16 %v3794, %v3793
    %v4019 = vpack.c.b16 %v3796, %v3795
    %v4020 = vpack.c.b16 %v3798, %v3797
    %v4021 = vpack.c.b16 %v3800, %v3799
    %v4022 = vpack.c.b16 %v3802, %v3801
    %v4023 = vpack.c.b16 %v3804, %v3803
    %v4024 = vpack.c.b16 %v3806, %v3805
    %v4025 = vpack.c.b16 %v3808, %v3807
    %v4026 = vpack.c.b16 %v3810, %v3809
    %v4027 = vpack.c.b16 %v3812, %v3811
    %v4028 = vpack.c.b16 %v3814, %v3813
    %v4029 = vpack.c.b16 %v3816, %v3815
    %v4030 = vpack.c.b16 %v3818, %v3817
    %v4031 = vpack.c.b16 %v3820, %v3819
    %v4032 = vpack.c.b16 %v3822, %v3821
    %v4033 = vpack.c.b16 %v3824, %v3823
    %v4034 = vpack.c.b16 %v3826, %v3825
    %v4035 = vpack.c.b16 %v3828, %v3827
    %v4036 = vpack.c.b16 %v3830, %v3829
    %v4037 = vpack.c.b16 %v3832, %v3831
    %v4038 = vpack.c.b16 %v3834, %v3833
    %v4039 = vpack.c.b16 %v3836, %v3835
    %v4040 = vpack.c.b16 %v3838, %v3837
    %v4041 = vpack.c.b16 %v3840, %v3839
    %v4042 = vpack.c.b16 %v3842, %v3841
    %v4043 = vpack.c.b16 %v3844, %v3843
    %v4044 = vpack.c.b16 %v3846, %v3845
    %v4045 = vpack.c.b16 %v3848, %v3847
    %v4046 = vpack.c.b16 %v3850, %v3849
    %v4047 = vpack.c.b16 %v3852, %v3851
    %v4048 = vpack.c.b16 %v3854, %v3853
    %v4049 = vpack.c.b16 %v3856, %v3855
    %v4050 = vpack.c.b16 %v3858, %v3857
    %v4051 = vpack.c.b16 %v3860, %v3859
    %v4052 = vpack.c.b16 %v3862, %v3861
    %v4053 = vpack.c.b16 %v3864, %v3863
    %v4054 = vpack.c.b16 %v3866, %v3865
    %v4055 = vpack.c.b16 %v3868, %v3867
    %v4056 = vpack.c.b16 %v3870, %v3869
    %v4057 = vpack.c.b16 %v3872, %v3871
    %v4058 = vpack.c.b16 %v3874, %v3873
    %v4059 = vpack.c.b16 %v3876, %v3875
    %v4060 = vpack.c.b16 %v3878, %v3877
    %v4061 = vpack.c.b16 %v3880, %v3879
    %v4062 = vpack.c.b16 %v3882, %v3881
    %v4063 = vpack.c.b16 %v3884, %v3883
    %v4064 = vpack.c.b16 %v3886, %v3885
    %v4065 = vpack.c.b16 %v3888, %v3887
    %v4066 = vpack.c.b16 %v3890, %v3889
    %v4067 = vpack.c.b16 %v3892, %v3891
    %v4068 = vpack.c.b16 %v3894, %v3893
    %v4069 = vpack.c.b16 %v3896, %v3895
    %v4070 = vpack.c.b16 %v3898, %v3897
    %v4071 = vpack.c.b16 %v3900, %v3899
    %v4072 = vpack.c.b16 %v3902, %v3901
    %v4073 = vpack.c.b16 %v3904, %v3903
    %v4074 = vpack.c.b16 %v3906, %v3905
    %v4075 = vpack.c.b16 %v3908, %v3907
    %v4076 = vpack.c.b16 %v3910, %v3909
    %v4077 = vpack.c.b16 %v3912, %v3911
    %v4078 = vpack.c.b16 %v3914, %v3913
    %v4079 = vpack.c.b16 %v3916, %v3915
    %v4080 = vpack.c.b16 %v3918, %v3917
    %v4081 = vpack.c.b16 %v3920, %v3919
    %v4082 = vpack.c.b16 %v3922, %v3921
    %v4083 = vpack.c.b16 %v3924, %v3923
    %v4084 = vpack.c.b16 %v3926, %v3925
    %v4085 = vpack.c.b16 %v3928, %v3927
    %v4086 = vpack.c.b16 %v3930, %v3929
    %v4087 = vpack.c.b16 %v3932, %v3931
    %v4088 = vpack.c.b16 %v3934, %v3933
    %v4089 = vpack.c.b16 %v3936, %v3935
    %v4090 = vpack.c.b16 %v3938, %v3937
    %v4091 = vpack.c.b16 %v3940, %v3939
    %v4092 = vpack.c.b16 %v3942, %v3941
    %v4093 = vpack.c.b16 %v3944, %v3943
    %v4094 = vpack.c.b16 %v3946, %v3945
    %v4095 = vpack.c.b16 %v3948, %v3947
    %v4096 = vpack.c.b16 %v3950, %v3949
    %v4097 = vpack.c.b16 %v3952, %v3951
    %v4098 = vpack.c.b16 %v3954, %v3953
    %v4099 = vpack.c.b16 %v3956, %v3955
    %v4100 = vpack.c.b16 %v3958, %v3957
    %v4101 = vpack.c.b16 %v3960, %v3959
    %v4102 = vpack.c.b16 %v3962, %v3961
    %v4103 = vpack.c.b16 %v3964, %v3963
    %v4104 = vpack.c.b16 %v3966, %v3965
    %v4105 = vpack.c.b16 %v3968, %v3967
    %v4106 = vpack.c.b16 %v3970, %v3969
    %v4107 = vpack.c.b16 %v3972, %v3971
    %v4108 = vpack.c.b16 %v3974, %v3973
    %v4109 = vpack.c.b16 %v3976, %v3975
    %v4110 = vpack.c.b16 %v3978, %v3977
    %v4111 = vpack.c.b16 %v3980, %v3979
    %v4112 = vpack.c.b16 %v3982, %v3981
    %v4113 = vpack.c.b16 %v3984, %v3983
    %v4114 = vpack.c.b16 %v3986, %v3985
    %4243 = vmatprep.subr.bf16.mxu0 0
    %4244 = vmatpush1.bf16.xpose.msra.mxu0 %v3987
    %4245 = vmatprep.subr.bf16.mxu0 0
    %4246 = vmatpush1.bf16.xpose.msra.mxu0 %v3988
    %4247 = vmatprep.subr.bf16.mxu0 0
    %4248 = vmatpush1.bf16.xpose.msra.mxu0 %v3989
    %4249 = vmatprep.subr.bf16.mxu0 0
    %4250 = vmatpush1.bf16.xpose.msra.mxu0 %v3990
    %4251 = vmatprep.subr.bf16.mxu0 0
    %4252 = vmatpush1.bf16.xpose.msra.mxu0 %v3991
    %4253 = vmatprep.subr.bf16.mxu0 0
    %4254 = vmatpush1.bf16.xpose.msra.mxu0 %v3992
    %4255 = vmatprep.subr.bf16.mxu0 0
    %4256 = vmatpush1.bf16.xpose.msra.mxu0 %v3993
    %4257 = vmatprep.subr.bf16.mxu0 0
    %4258 = vmatpush1.bf16.xpose.msra.mxu0 %v3994
    %4259 = vmatprep.subr.bf16.mxu0 0
    %4260 = vmatpush1.bf16.xpose.msra.mxu0 %v3995
    %4261 = vmatprep.subr.bf16.mxu0 0
    %4262 = vmatpush1.bf16.xpose.msra.mxu0 %v3996
    %4263 = vmatprep.subr.bf16.mxu0 0
    %4264 = vmatpush1.bf16.xpose.msra.mxu0 %v3997
    %4265 = vmatprep.subr.bf16.mxu0 0
    %4266 = vmatpush1.bf16.xpose.msra.mxu0 %v3998
    %4267 = vmatprep.subr.bf16.mxu0 0
    %4268 = vmatpush1.bf16.xpose.msra.mxu0 %v3999
    %4269 = vmatprep.subr.bf16.mxu0 0
    %4270 = vmatpush1.bf16.xpose.msra.mxu0 %v4000
    %4271 = vmatprep.subr.bf16.mxu0 0
    %4272 = vmatpush1.bf16.xpose.msra.mxu0 %v4001
    %4273 = vmatprep.subr.bf16.mxu0 0
    %4274 = vmatpush1.bf16.xpose.msra.mxu0 %v4002
    %4275 = vmatprep.mubr.bf16.mxu0 0
    %4276 = vmatmul.mubr.bf16.gmra.mrb[0].mxu0 %v3326
    %v4277 = vpop.f32.mrb[0].mxu0
    %v4278 = vadd.f32 %v3414, %v4277
    %v4279 = vpop.f32.mrb[0].mxu0
    %v4280 = vadd.f32 %v3418, %v4279
    %v4281 = vpop.f32.mrb[0].mxu0
    %v4282 = vadd.f32 %v3414, %v4281
    %v4283 = vpop.f32.mrb[0].mxu0
    %v4284 = vadd.f32 %v3418, %v4283
    %4285 = vdwg.mxu0
    %4286 = vmatprep.subr.bf16.mxu0 0
    %4287 = vmatpush1.bf16.xpose.msra.mxu0 %v4003
    %4288 = vmatprep.subr.bf16.mxu0 0
    %4289 = vmatpush1.bf16.xpose.msra.mxu0 %v4004
    %4290 = vmatprep.subr.bf16.mxu0 0
    %4291 = vmatpush1.bf16.xpose.msra.mxu0 %v4005
    %4292 = vmatprep.subr.bf16.mxu0 0
    %4293 = vmatpush1.bf16.xpose.msra.mxu0 %v4006
    %4294 = vmatprep.subr.bf16.mxu0 0
    %4295 = vmatpush1.bf16.xpose.msra.mxu0 %v4007
    %4296 = vmatprep.subr.bf16.mxu0 0
    %4297 = vmatpush1.bf16.xpose.msra.mxu0 %v4008
    %4298 = vmatprep.subr.bf16.mxu0 0
    %4299 = vmatpush1.bf16.xpose.msra.mxu0 %v4009
    %4300 = vmatprep.subr.bf16.mxu0 0
    %4301 = vmatpush1.bf16.xpose.msra.mxu0 %v4010
    %4302 = vmatprep.subr.bf16.mxu0 0
    %4303 = vmatpush1.bf16.xpose.msra.mxu0 %v4011
    %4304 = vmatprep.subr.bf16.mxu0 0
    %4305 = vmatpush1.bf16.xpose.msra.mxu0 %v4012
    %4306 = vmatprep.subr.bf16.mxu0 0
    %4307 = vmatpush1.bf16.xpose.msra.mxu0 %v4013
    %4308 = vmatprep.subr.bf16.mxu0 0
    %4309 = vmatpush1.bf16.xpose.msra.mxu0 %v4014
    %4310 = vmatprep.subr.bf16.mxu0 0
    %4311 = vmatpush1.bf16.xpose.msra.mxu0 %v4015
    %4312 = vmatprep.subr.bf16.mxu0 0
    %4313 = vmatpush1.bf16.xpose.msra.mxu0 %v4016
    %4314 = vmatprep.subr.bf16.mxu0 0
    %4315 = vmatpush1.bf16.xpose.msra.mxu0 %v4017
    %4316 = vmatprep.subr.bf16.mxu0 0
    %4317 = vmatpush1.bf16.xpose.msra.mxu0 %v4018
    %4318 = vmatprep.mubr.bf16.mxu0 0
    %4319 = vmatmul.mubr.bf16.gmra.mrb[0].mxu0 %v3326
    %v4320 = vpop.f32.mrb[0].mxu0
    %v4321 = vadd.f32 %v3422, %v4320
    %v4322 = vpop.f32.mrb[0].mxu0
    %v4323 = vadd.f32 %v3426, %v4322
    %v4324 = vpop.f32.mrb[0].mxu0
    %v4325 = vadd.f32 %v3422, %v4324
    %v4326 = vpop.f32.mrb[0].mxu0
    %v4327 = vadd.f32 %v3426, %v4326
    %4328 = vdwg.mxu0
    %4329 = vmatprep.subr.bf16.mxu0 0
    %4330 = vmatpush1.bf16.xpose.msra.mxu0 %v4019
    %4331 = vmatprep.subr.bf16.mxu0 0
    %4332 = vmatpush1.bf16.xpose.msra.mxu0 %v4020
    %4333 = vmatprep.subr.bf16.mxu0 0
    %4334 = vmatpush1.bf16.xpose.msra.mxu0 %v4021
    %4335 = vmatprep.subr.bf16.mxu0 0
    %4336 = vmatpush1.bf16.xpose.msra.mxu0 %v4022
    %4337 = vmatprep.subr.bf16.mxu0 0
    %4338 = vmatpush1.bf16.xpose.msra.mxu0 %v4023
    %4339 = vmatprep.subr.bf16.mxu0 0
    %4340 = vmatpush1.bf16.xpose.msra.mxu0 %v4024
    %4341 = vmatprep.subr.bf16.mxu0 0
    %4342 = vmatpush1.bf16.xpose.msra.mxu0 %v4025
    %4343 = vmatprep.subr.bf16.mxu0 0
    %4344 = vmatpush1.bf16.xpose.msra.mxu0 %v4026
    %4345 = vmatprep.subr.bf16.mxu0 0
    %4346 = vmatpush1.bf16.xpose.msra.mxu0 %v4027
    %4347 = vmatprep.subr.bf16.mxu0 0
    %4348 = vmatpush1.bf16.xpose.msra.mxu0 %v4028
    %4349 = vmatprep.subr.bf16.mxu0 0
    %4350 = vmatpush1.bf16.xpose.msra.mxu0 %v4029
    %4351 = vmatprep.subr.bf16.mxu0 0
    %4352 = vmatpush1.bf16.xpose.msra.mxu0 %v4030
    %4353 = vmatprep.subr.bf16.mxu0 0
    %4354 = vmatpush1.bf16.xpose.msra.mxu0 %v4031
    %4355 = vmatprep.subr.bf16.mxu0 0
    %4356 = vmatpush1.bf16.xpose.msra.mxu0 %v4032
    %4357 = vmatprep.subr.bf16.mxu0 0
    %4358 = vmatpush1.bf16.xpose.msra.mxu0 %v4033
    %4359 = vmatprep.subr.bf16.mxu0 0
    %4360 = vmatpush1.bf16.xpose.msra.mxu0 %v4034
    %4361 = vmatprep.mubr.bf16.mxu0 0
    %4362 = vmatmul.mubr.bf16.gmra.mrb[0].mxu0 %v3326
    %v4363 = vpop.f32.mrb[0].mxu0
    %v4364 = vadd.f32 %v3430, %v4363
    %v4365 = vpop.f32.mrb[0].mxu0
    %v4366 = vadd.f32 %v3434, %v4365
    %v4367 = vpop.f32.mrb[0].mxu0
    %v4368 = vadd.f32 %v3430, %v4367
    %v4369 = vpop.f32.mrb[0].mxu0
    %v4370 = vadd.f32 %v3434, %v4369
    %4371 = vdwg.mxu0
    %4372 = vmatprep.subr.bf16.mxu0 0
    %4373 = vmatpush1.bf16.xpose.msra.mxu0 %v4035
    %4374 = vmatprep.subr.bf16.mxu0 0
    %4375 = vmatpush1.bf16.xpose.msra.mxu0 %v4036
    %4376 = vmatprep.subr.bf16.mxu0 0
    %4377 = vmatpush1.bf16.xpose.msra.mxu0 %v4037
    %4378 = vmatprep.subr.bf16.mxu0 0
    %4379 = vmatpush1.bf16.xpose.msra.mxu0 %v4038
    %4380 = vmatprep.subr.bf16.mxu0 0
    %4381 = vmatpush1.bf16.xpose.msra.mxu0 %v4039
    %4382 = vmatprep.subr.bf16.mxu0 0
    %4383 = vmatpush1.bf16.xpose.msra.mxu0 %v4040
    %4384 = vmatprep.subr.bf16.mxu0 0
    %4385 = vmatpush1.bf16.xpose.msra.mxu0 %v4041
    %4386 = vmatprep.subr.bf16.mxu0 0
    %4387 = vmatpush1.bf16.xpose.msra.mxu0 %v4042
    %4388 = vmatprep.subr.bf16.mxu0 0
    %4389 = vmatpush1.bf16.xpose.msra.mxu0 %v4043
    %4390 = vmatprep.subr.bf16.mxu0 0
    %4391 = vmatpush1.bf16.xpose.msra.mxu0 %v4044
    %4392 = vmatprep.subr.bf16.mxu0 0
    %4393 = vmatpush1.bf16.xpose.msra.mxu0 %v4045
    %4394 = vmatprep.subr.bf16.mxu0 0
    %4395 = vmatpush1.bf16.xpose.msra.mxu0 %v4046
    %4396 = vmatprep.subr.bf16.mxu0 0
    %4397 = vmatpush1.bf16.xpose.msra.mxu0 %v4047
    %4398 = vmatprep.subr.bf16.mxu0 0
    %4399 = vmatpush1.bf16.xpose.msra.mxu0 %v4048
    %4400 = vmatprep.subr.bf16.mxu0 0
    %4401 = vmatpush1.bf16.xpose.msra.mxu0 %v4049
    %4402 = vmatprep.subr.bf16.mxu0 0
    %4403 = vmatpush1.bf16.xpose.msra.mxu0 %v4050
    %4404 = vmatprep.mubr.bf16.mxu0 0
    %4405 = vmatmul.mubr.bf16.gmra.mrb[0].mxu0 %v3326
    %v4406 = vpop.f32.mrb[0].mxu0
    %v4407 = vadd.f32 %v3438, %v4406
    %v4408 = vpop.f32.mrb[0].mxu0
    %v4409 = vadd.f32 %v3442, %v4408
    %v4410 = vpop.f32.mrb[0].mxu0
    %v4411 = vadd.f32 %v3438, %v4410
    %v4412 = vpop.f32.mrb[0].mxu0
    %v4413 = vadd.f32 %v3442, %v4412
    %4414 = vdwg.mxu0
    %4415 = vmatprep.subr.bf16.mxu0 0
    %4416 = vmatpush1.bf16.xpose.msra.mxu0 %v4051
    %4417 = vmatprep.subr.bf16.mxu0 0
    %4418 = vmatpush1.bf16.xpose.msra.mxu0 %v4052
    %4419 = vmatprep.subr.bf16.mxu0 0
    %4420 = vmatpush1.bf16.xpose.msra.mxu0 %v4053
    %4421 = vmatprep.subr.bf16.mxu0 0
    %4422 = vmatpush1.bf16.xpose.msra.mxu0 %v4054
    %4423 = vmatprep.subr.bf16.mxu0 0
    %4424 = vmatpush1.bf16.xpose.msra.mxu0 %v4055
    %4425 = vmatprep.subr.bf16.mxu0 0
    %4426 = vmatpush1.bf16.xpose.msra.mxu0 %v4056
    %4427 = vmatprep.subr.bf16.mxu0 0
    %4428 = vmatpush1.bf16.xpose.msra.mxu0 %v4057
    %4429 = vmatprep.subr.bf16.mxu0 0
    %4430 = vmatpush1.bf16.xpose.msra.mxu0 %v4058
    %4431 = vmatprep.subr.bf16.mxu0 0
    %4432 = vmatpush1.bf16.xpose.msra.mxu0 %v4059
    %4433 = vmatprep.subr.bf16.mxu0 0
    %4434 = vmatpush1.bf16.xpose.msra.mxu0 %v4060
    %4435 = vmatprep.subr.bf16.mxu0 0
    %4436 = vmatpush1.bf16.xpose.msra.mxu0 %v4061
    %4437 = vmatprep.subr.bf16.mxu0 0
    %4438 = vmatpush1.bf16.xpose.msra.mxu0 %v4062
    %4439 = vmatprep.subr.bf16.mxu0 0
    %4440 = vmatpush1.bf16.xpose.msra.mxu0 %v4063
    %4441 = vmatprep.subr.bf16.mxu0 0
    %4442 = vmatpush1.bf16.xpose.msra.mxu0 %v4064
    %4443 = vmatprep.subr.bf16.mxu0 0
    %4444 = vmatpush1.bf16.xpose.msra.mxu0 %v4065
    %4445 = vmatprep.subr.bf16.mxu0 0
    %4446 = vmatpush1.bf16.xpose.msra.mxu0 %v4066
    %4447 = vmatprep.mubr.bf16.mxu0 0
    %4448 = vmatmul.mubr.bf16.gmra.mrb[0].mxu0 %v3326
    %v4449 = vpop.f32.mrb[0].mxu0
    %v4450 = vadd.f32 %v3446, %v4449
    %v4451 = vpop.f32.mrb[0].mxu0
    %v4452 = vadd.f32 %v3450, %v4451
    %v4453 = vpop.f32.mrb[0].mxu0
    %v4454 = vadd.f32 %v3446, %v4453
    %v4455 = vpop.f32.mrb[0].mxu0
    %v4456 = vadd.f32 %v3450, %v4455
    %4457 = vdwg.mxu0
    %4458 = vmatprep.subr.bf16.mxu0 0
    %4459 = vmatpush1.bf16.xpose.msra.mxu0 %v4067
    %4460 = vmatprep.subr.bf16.mxu0 0
    %4461 = vmatpush1.bf16.xpose.msra.mxu0 %v4068
    %4462 = vmatprep.subr.bf16.mxu0 0
    %4463 = vmatpush1.bf16.xpose.msra.mxu0 %v4069
    %4464 = vmatprep.subr.bf16.mxu0 0
    %4465 = vmatpush1.bf16.xpose.msra.mxu0 %v4070
    %4466 = vmatprep.subr.bf16.mxu0 0
    %4467 = vmatpush1.bf16.xpose.msra.mxu0 %v4071
    %4468 = vmatprep.subr.bf16.mxu0 0
    %4469 = vmatpush1.bf16.xpose.msra.mxu0 %v4072
    %4470 = vmatprep.subr.bf16.mxu0 0
    %4471 = vmatpush1.bf16.xpose.msra.mxu0 %v4073
    %4472 = vmatprep.subr.bf16.mxu0 0
    %4473 = vmatpush1.bf16.xpose.msra.mxu0 %v4074
    %4474 = vmatprep.subr.bf16.mxu0 0
    %4475 = vmatpush1.bf16.xpose.msra.mxu0 %v4075
    %4476 = vmatprep.subr.bf16.mxu0 0
    %4477 = vmatpush1.bf16.xpose.msra.mxu0 %v4076
    %4478 = vmatprep.subr.bf16.mxu0 0
    %4479 = vmatpush1.bf16.xpose.msra.mxu0 %v4077
    %4480 = vmatprep.subr.bf16.mxu0 0
    %4481 = vmatpush1.bf16.xpose.msra.mxu0 %v4078
    %4482 = vmatprep.subr.bf16.mxu0 0
    %4483 = vmatpush1.bf16.xpose.msra.mxu0 %v4079
    %4484 = vmatprep.subr.bf16.mxu0 0
    %4485 = vmatpush1.bf16.xpose.msra.mxu0 %v4080
    %4486 = vmatprep.subr.bf16.mxu0 0
    %4487 = vmatpush1.bf16.xpose.msra.mxu0 %v4081
    %4488 = vmatprep.subr.bf16.mxu0 0
    %4489 = vmatpush1.bf16.xpose.msra.mxu0 %v4082
    %4490 = vmatprep.mubr.bf16.mxu0 0
    %4491 = vmatmul.mubr.bf16.gmra.mrb[0].mxu0 %v3326
    %v4492 = vpop.f32.mrb[0].mxu0
    %v4493 = vadd.f32 %v3454, %v4492
    %v4494 = vpop.f32.mrb[0].mxu0
    %v4495 = vadd.f32 %v3458, %v4494
    %v4496 = vpop.f32.mrb[0].mxu0
    %v4497 = vadd.f32 %v3454, %v4496
    %v4498 = vpop.f32.mrb[0].mxu0
    %v4499 = vadd.f32 %v3458, %v4498
    %4500 = vdwg.mxu0
    %4501 = vmatprep.subr.bf16.mxu0 0
    %4502 = vmatpush1.bf16.xpose.msra.mxu0 %v4083
    %4503 = vmatprep.subr.bf16.mxu0 0
    %4504 = vmatpush1.bf16.xpose.msra.mxu0 %v4084
    %4505 = vmatprep.subr.bf16.mxu0 0
    %4506 = vmatpush1.bf16.xpose.msra.mxu0 %v4085
    %4507 = vmatprep.subr.bf16.mxu0 0
    %4508 = vmatpush1.bf16.xpose.msra.mxu0 %v4086
    %4509 = vmatprep.subr.bf16.mxu0 0
    %4510 = vmatpush1.bf16.xpose.msra.mxu0 %v4087
    %4511 = vmatprep.subr.bf16.mxu0 0
    %4512 = vmatpush1.bf16.xpose.msra.mxu0 %v4088
    %4513 = vmatprep.subr.bf16.mxu0 0
    %4514 = vmatpush1.bf16.xpose.msra.mxu0 %v4089
    %4515 = vmatprep.subr.bf16.mxu0 0
    %4516 = vmatpush1.bf16.xpose.msra.mxu0 %v4090
    %4517 = vmatprep.subr.bf16.mxu0 0
    %4518 = vmatpush1.bf16.xpose.msra.mxu0 %v4091
    %4519 = vmatprep.subr.bf16.mxu0 0
    %4520 = vmatpush1.bf16.xpose.msra.mxu0 %v4092
    %4521 = vmatprep.subr.bf16.mxu0 0
    %4522 = vmatpush1.bf16.xpose.msra.mxu0 %v4093
    %4523 = vmatprep.subr.bf16.mxu0 0
    %4524 = vmatpush1.bf16.xpose.msra.mxu0 %v4094
    %4525 = vmatprep.subr.bf16.mxu0 0
    %4526 = vmatpush1.bf16.xpose.msra.mxu0 %v4095
    %4527 = vmatprep.subr.bf16.mxu0 0
    %4528 = vmatpush1.bf16.xpose.msra.mxu0 %v4096
    %4529 = vmatprep.subr.bf16.mxu0 0
    %4530 = vmatpush1.bf16.xpose.msra.mxu0 %v4097
    %4531 = vmatprep.subr.bf16.mxu0 0
    %4532 = vmatpush1.bf16.xpose.msra.mxu0 %v4098
    %4533 = vmatprep.mubr.bf16.mxu0 0
    %4534 = vmatmul.mubr.bf16.gmra.mrb[0].mxu0 %v3326
    %v4535 = vpop.f32.mrb[0].mxu0
    %v4536 = vadd.f32 %v3462, %v4535
    %v4537 = vpop.f32.mrb[0].mxu0
    %v4538 = vadd.f32 %v3466, %v4537
    %v4539 = vpop.f32.mrb[0].mxu0
    %v4540 = vadd.f32 %v3462, %v4539
    %v4541 = vpop.f32.mrb[0].mxu0
    %v4542 = vadd.f32 %v3466, %v4541
    %4543 = vdwg.mxu0
    %4544 = vmatprep.subr.bf16.mxu0 0
    %4545 = vmatpush1.bf16.xpose.msra.mxu0 %v4099
    %4546 = vmatprep.subr.bf16.mxu0 0
    %4547 = vmatpush1.bf16.xpose.msra.mxu0 %v4100
    %4548 = vmatprep.subr.bf16.mxu0 0
    %4549 = vmatpush1.bf16.xpose.msra.mxu0 %v4101
    %4550 = vmatprep.subr.bf16.mxu0 0
    %4551 = vmatpush1.bf16.xpose.msra.mxu0 %v4102
    %4552 = vmatprep.subr.bf16.mxu0 0
    %4553 = vmatpush1.bf16.xpose.msra.mxu0 %v4103
    %4554 = vmatprep.subr.bf16.mxu0 0
    %4555 = vmatpush1.bf16.xpose.msra.mxu0 %v4104
    %4556 = vmatprep.subr.bf16.mxu0 0
    %4557 = vmatpush1.bf16.xpose.msra.mxu0 %v4105
    %4558 = vmatprep.subr.bf16.mxu0 0
    %4559 = vmatpush1.bf16.xpose.msra.mxu0 %v4106
    %4560 = vmatprep.subr.bf16.mxu0 0
    %4561 = vmatpush1.bf16.xpose.msra.mxu0 %v4107
    %4562 = vmatprep.subr.bf16.mxu0 0
    %4563 = vmatpush1.bf16.xpose.msra.mxu0 %v4108
    %4564 = vmatprep.subr.bf16.mxu0 0
    %4565 = vmatpush1.bf16.xpose.msra.mxu0 %v4109
    %4566 = vmatprep.subr.bf16.mxu0 0
    %4567 = vmatpush1.bf16.xpose.msra.mxu0 %v4110
    %4568 = vmatprep.subr.bf16.mxu0 0
    %4569 = vmatpush1.bf16.xpose.msra.mxu0 %v4111
    %4570 = vmatprep.subr.bf16.mxu0 0
    %4571 = vmatpush1.bf16.xpose.msra.mxu0 %v4112
    %4572 = vmatprep.subr.bf16.mxu0 0
    %4573 = vmatpush1.bf16.xpose.msra.mxu0 %v4113
    %4574 = vmatprep.subr.bf16.mxu0 0
    %4575 = vmatpush1.bf16.xpose.msra.mxu0 %v4114
    %4576 = vmatprep.mubr.bf16.mxu0 0
    %4577 = vmatmul.mubr.bf16.gmra.mrb[0].mxu0 %v3326
    %v4578 = vpop.f32.mrb[0].mxu0
    %v4579 = vadd.f32 %v3470, %v4578
    %v4580 = vpop.f32.mrb[0].mxu0
    %v4581 = vadd.f32 %v3474, %v4580
    %v4582 = vpop.f32.mrb[0].mxu0
    %v4583 = vadd.f32 %v3470, %v4582
    %v4584 = vpop.f32.mrb[0].mxu0
    %v4585 = vadd.f32 %v3474, %v4584
    %4586 = vdwg.mxu0
    %v4587 = vmax.f32 %v4278, 0.0
    %v4588 = vmax.f32 %v4280, 0.0
    %v4589 = vmax.f32 %v4321, 0.0
    %v4590 = vmax.f32 %v4323, 0.0
    %v4591 = vmax.f32 %v4364, 0.0
    %v4592 = vmax.f32 %v4366, 0.0
    %v4593 = vmax.f32 %v4407, 0.0
    %v4594 = vmax.f32 %v4409, 0.0
    %v4595 = vmax.f32 %v4450, 0.0
    %v4596 = vmax.f32 %v4452, 0.0
    %v4597 = vmax.f32 %v4493, 0.0
    %v4598 = vmax.f32 %v4495, 0.0
    %v4599 = vmax.f32 %v4536, 0.0
    %v4600 = vmax.f32 %v4538, 0.0
    %v4601 = vmax.f32 %v4579, 0.0
    %v4602 = vmax.f32 %v4581, 0.0
    %v4603 = vmax.f32 %v4282, 0.0
    %v4604 = vmax.f32 %v4284, 0.0
    %v4605 = vmax.f32 %v4325, 0.0
    %v4606 = vmax.f32 %v4327, 0.0
    %v4607 = vmax.f32 %v4368, 0.0
    %v4608 = vmax.f32 %v4370, 0.0
    %v4609 = vmax.f32 %v4411, 0.0
    %v4610 = vmax.f32 %v4413, 0.0
    %v4611 = vmax.f32 %v4454, 0.0
    %v4612 = vmax.f32 %v4456, 0.0
    %v4613 = vmax.f32 %v4497, 0.0
    %v4614 = vmax.f32 %v4499, 0.0
    %v4615 = vmax.f32 %v4540, 0.0
    %v4616 = vmax.f32 %v4542, 0.0
    %v4617 = vmax.f32 %v4583, 0.0
    %v4618 = vmax.f32 %v4585, 0.0
    %v4619 = vpack.c.bf16 %v4603, %v4587
    %v4620 = vpack.c.bf16 %v4604, %v4588
    %v4621 = vpack.c.bf16 %v4605, %v4589
    %v4622 = vpack.c.bf16 %v4606, %v4590
    %v4623 = vpack.c.bf16 %v4607, %v4591
    %v4624 = vpack.c.bf16 %v4608, %v4592
    %v4625 = vpack.c.bf16 %v4609, %v4593
    %v4626 = vpack.c.bf16 %v4610, %v4594
    %v4627 = vpack.c.bf16 %v4611, %v4595
    %v4628 = vpack.c.bf16 %v4612, %v4596
    %v4629 = vpack.c.bf16 %v4613, %v4597
    %v4630 = vpack.c.bf16 %v4614, %v4598
    %v4631 = vpack.c.bf16 %v4615, %v4599
    %v4632 = vpack.c.bf16 %v4616, %v4600
    %v4633 = vpack.c.bf16 %v4617, %v4601
    %v4634 = vpack.c.bf16 %v4618, %v4602
    %v4635 = vlaneseq
    %v4636 = vshrl.u32 %v4635, 7
    %v4637 = vsub.s32 0, %v4636
    %v4638 = vrot.slane %v92, %v4637
    %v4767 = vunpack.c.l.b16 %v413
    %v4768 = vunpack.c.h.b16 %v413
    %v4769 = vunpack.c.l.b16 %v414
    %v4770 = vunpack.c.h.b16 %v414
    %v4771 = vunpack.c.l.b16 %v415
    %v4772 = vunpack.c.h.b16 %v415
    %v4773 = vunpack.c.l.b16 %v416
    %v4774 = vunpack.c.h.b16 %v416
    %v4775 = vunpack.c.l.b16 %v417
    %v4776 = vunpack.c.h.b16 %v417
    %v4777 = vunpack.c.l.b16 %v418
    %v4778 = vunpack.c.h.b16 %v418
    %v4779 = vunpack.c.l.b16 %v419
    %v4780 = vunpack.c.h.b16 %v419
    %v4781 = vunpack.c.l.b16 %v420
    %v4782 = vunpack.c.h.b16 %v420
    %v4783 = vunpack.c.l.b16 %v421
    %v4784 = vunpack.c.h.b16 %v421
    %v4785 = vunpack.c.l.b16 %v422
    %v4786 = vunpack.c.h.b16 %v422
    %v4787 = vunpack.c.l.b16 %v423
    %v4788 = vunpack.c.h.b16 %v423
    %v4789 = vunpack.c.l.b16 %v424
    %v4790 = vunpack.c.h.b16 %v424
    %v4791 = vunpack.c.l.b16 %v425
    %v4792 = vunpack.c.h.b16 %v425
    %v4793 = vunpack.c.l.b16 %v426
    %v4794 = vunpack.c.h.b16 %v426
    %v4795 = vunpack.c.l.b16 %v427
    %v4796 = vunpack.c.h.b16 %v427
    %v4797 = vunpack.c.l.b16 %v428
    %v4798 = vunpack.c.h.b16 %v428
    %v4799 = vunpack.c.l.b16 %v429
    %v4800 = vunpack.c.h.b16 %v429
    %v4801 = vunpack.c.l.b16 %v430
    %v4802 = vunpack.c.h.b16 %v430
    %v4803 = vunpack.c.l.b16 %v431
    %v4804 = vunpack.c.h.b16 %v431
    %v4805 = vunpack.c.l.b16 %v432
    %v4806 = vunpack.c.h.b16 %v432
    %v4807 = vunpack.c.l.b16 %v433
    %v4808 = vunpack.c.h.b16 %v433
    %v4809 = vunpack.c.l.b16 %v434
    %v4810 = vunpack.c.h.b16 %v434
    %v4811 = vunpack.c.l.b16 %v435
    %v4812 = vunpack.c.h.b16 %v435
    %v4813 = vunpack.c.l.b16 %v436
    %v4814 = vunpack.c.h.b16 %v436
    %v4815 = vunpack.c.l.b16 %v437
    %v4816 = vunpack.c.h.b16 %v437
    %v4817 = vunpack.c.l.b16 %v438
    %v4818 = vunpack.c.h.b16 %v438
    %v4819 = vunpack.c.l.b16 %v439
    %v4820 = vunpack.c.h.b16 %v439
    %v4821 = vunpack.c.l.b16 %v440
    %v4822 = vunpack.c.h.b16 %v440
    %v4823 = vunpack.c.l.b16 %v441
    %v4824 = vunpack.c.h.b16 %v441
    %v4825 = vunpack.c.l.b16 %v442
    %v4826 = vunpack.c.h.b16 %v442
    %v4827 = vunpack.c.l.b16 %v443
    %v4828 = vunpack.c.h.b16 %v443
    %v4829 = vunpack.c.l.b16 %v444
    %v4830 = vunpack.c.h.b16 %v444
    %v4831 = vunpack.c.l.b16 %v445
    %v4832 = vunpack.c.h.b16 %v445
    %v4833 = vunpack.c.l.b16 %v446
    %v4834 = vunpack.c.h.b16 %v446
    %v4835 = vunpack.c.l.b16 %v447
    %v4836 = vunpack.c.h.b16 %v447
    %v4837 = vunpack.c.l.b16 %v448
    %v4838 = vunpack.c.h.b16 %v448
    %v4839 = vunpack.c.l.b16 %v449
    %v4840 = vunpack.c.h.b16 %v449
    %v4841 = vunpack.c.l.b16 %v450
    %v4842 = vunpack.c.h.b16 %v450
    %v4843 = vunpack.c.l.b16 %v451
    %v4844 = vunpack.c.h.b16 %v451
    %v4845 = vunpack.c.l.b16 %v452
    %v4846 = vunpack.c.h.b16 %v452
    %v4847 = vunpack.c.l.b16 %v453
    %v4848 = vunpack.c.h.b16 %v453
    %v4849 = vunpack.c.l.b16 %v454
    %v4850 = vunpack.c.h.b16 %v454
    %v4851 = vunpack.c.l.b16 %v455
    %v4852 = vunpack.c.h.b16 %v455
    %v4853 = vunpack.c.l.b16 %v456
    %v4854 = vunpack.c.h.b16 %v456
    %v4855 = vunpack.c.l.b16 %v457
    %v4856 = vunpack.c.h.b16 %v457
    %v4857 = vunpack.c.l.b16 %v458
    %v4858 = vunpack.c.h.b16 %v458
    %v4859 = vunpack.c.l.b16 %v459
    %v4860 = vunpack.c.h.b16 %v459
    %v4861 = vunpack.c.l.b16 %v460
    %v4862 = vunpack.c.h.b16 %v460
    %v4863 = vunpack.c.l.b16 %v461
    %v4864 = vunpack.c.h.b16 %v461
    %v4865 = vunpack.c.l.b16 %v462
    %v4866 = vunpack.c.h.b16 %v462
    %v4867 = vunpack.c.l.b16 %v463
    %v4868 = vunpack.c.h.b16 %v463
    %v4869 = vunpack.c.l.b16 %v464
    %v4870 = vunpack.c.h.b16 %v464
    %v4871 = vunpack.c.l.b16 %v465
    %v4872 = vunpack.c.h.b16 %v465
    %v4873 = vunpack.c.l.b16 %v466
    %v4874 = vunpack.c.h.b16 %v466
    %v4875 = vunpack.c.l.b16 %v467
    %v4876 = vunpack.c.h.b16 %v467
    %v4877 = vunpack.c.l.b16 %v468
    %v4878 = vunpack.c.h.b16 %v468
    %v4879 = vunpack.c.l.b16 %v469
    %v4880 = vunpack.c.h.b16 %v469
    %v4881 = vunpack.c.l.b16 %v470
    %v4882 = vunpack.c.h.b16 %v470
    %v4883 = vunpack.c.l.b16 %v471
    %v4884 = vunpack.c.h.b16 %v471
    %v4885 = vunpack.c.l.b16 %v472
    %v4886 = vunpack.c.h.b16 %v472
    %v4887 = vunpack.c.l.b16 %v473
    %v4888 = vunpack.c.h.b16 %v473
    %v4889 = vunpack.c.l.b16 %v474
    %v4890 = vunpack.c.h.b16 %v474
    %v4891 = vunpack.c.l.b16 %v475
    %v4892 = vunpack.c.h.b16 %v475
    %v4893 = vunpack.c.l.b16 %v476
    %v4894 = vunpack.c.h.b16 %v476
    %v4895 = vunpack.c.l.b16 %v477
    %v4896 = vunpack.c.h.b16 %v477
    %v4897 = vunpack.c.l.b16 %v478
    %v4898 = vunpack.c.h.b16 %v478
    %v4899 = vunpack.c.l.b16 %v479
    %v4900 = vunpack.c.h.b16 %v479
    %v4901 = vunpack.c.l.b16 %v480
    %v4902 = vunpack.c.h.b16 %v480
    %v4903 = vunpack.c.l.b16 %v481
    %v4904 = vunpack.c.h.b16 %v481
    %v4905 = vunpack.c.l.b16 %v482
    %v4906 = vunpack.c.h.b16 %v482
    %v4907 = vunpack.c.l.b16 %v483
    %v4908 = vunpack.c.h.b16 %v483
    %v4909 = vunpack.c.l.b16 %v484
    %v4910 = vunpack.c.h.b16 %v484
    %v4911 = vunpack.c.l.b16 %v485
    %v4912 = vunpack.c.h.b16 %v485
    %v4913 = vunpack.c.l.b16 %v486
    %v4914 = vunpack.c.h.b16 %v486
    %v4915 = vunpack.c.l.b16 %v487
    %v4916 = vunpack.c.h.b16 %v487
    %v4917 = vunpack.c.l.b16 %v488
    %v4918 = vunpack.c.h.b16 %v488
    %v4919 = vunpack.c.l.b16 %v489
    %v4920 = vunpack.c.h.b16 %v489
    %v4921 = vunpack.c.l.b16 %v490
    %v4922 = vunpack.c.h.b16 %v490
    %v4923 = vunpack.c.l.b16 %v491
    %v4924 = vunpack.c.h.b16 %v491
    %v4925 = vunpack.c.l.b16 %v492
    %v4926 = vunpack.c.h.b16 %v492
    %v4927 = vunpack.c.l.b16 %v493
    %v4928 = vunpack.c.h.b16 %v493
    %v4929 = vunpack.c.l.b16 %v494
    %v4930 = vunpack.c.h.b16 %v494
    %v4931 = vunpack.c.l.b16 %v495
    %v4932 = vunpack.c.h.b16 %v495
    %v4933 = vunpack.c.l.b16 %v496
    %v4934 = vunpack.c.h.b16 %v496
    %v4935 = vunpack.c.l.b16 %v497
    %v4936 = vunpack.c.h.b16 %v497
    %v4937 = vunpack.c.l.b16 %v498
    %v4938 = vunpack.c.h.b16 %v498
    %v4939 = vunpack.c.l.b16 %v499
    %v4940 = vunpack.c.h.b16 %v499
    %v4941 = vunpack.c.l.b16 %v500
    %v4942 = vunpack.c.h.b16 %v500
    %v4943 = vunpack.c.l.b16 %v501
    %v4944 = vunpack.c.h.b16 %v501
    %v4945 = vunpack.c.l.b16 %v502
    %v4946 = vunpack.c.h.b16 %v502
    %v4947 = vunpack.c.l.b16 %v503
    %v4948 = vunpack.c.h.b16 %v503
    %v4949 = vunpack.c.l.b16 %v504
    %v4950 = vunpack.c.h.b16 %v504
    %v4951 = vunpack.c.l.b16 %v505
    %v4952 = vunpack.c.h.b16 %v505
    %v4953 = vunpack.c.l.b16 %v506
    %v4954 = vunpack.c.h.b16 %v506
    %v4955 = vunpack.c.l.b16 %v507
    %v4956 = vunpack.c.h.b16 %v507
    %v4957 = vunpack.c.l.b16 %v508
    %v4958 = vunpack.c.h.b16 %v508
    %v4959 = vunpack.c.l.b16 %v509
    %v4960 = vunpack.c.h.b16 %v509
    %v4961 = vunpack.c.l.b16 %v510
    %v4962 = vunpack.c.h.b16 %v510
    %v4963 = vunpack.c.l.b16 %v511
    %v4964 = vunpack.c.h.b16 %v511
    %v4965 = vunpack.c.l.b16 %v512
    %v4966 = vunpack.c.h.b16 %v512
    %v4967 = vunpack.c.l.b16 %v513
    %v4968 = vunpack.c.h.b16 %v513
    %v4969 = vunpack.c.l.b16 %v514
    %v4970 = vunpack.c.h.b16 %v514
    %v4971 = vunpack.c.l.b16 %v515
    %v4972 = vunpack.c.h.b16 %v515
    %v4973 = vunpack.c.l.b16 %v516
    %v4974 = vunpack.c.h.b16 %v516
    %v4975 = vunpack.c.l.b16 %v517
    %v4976 = vunpack.c.h.b16 %v517
    %v4977 = vunpack.c.l.b16 %v518
    %v4978 = vunpack.c.h.b16 %v518
    %v4979 = vunpack.c.l.b16 %v519
    %v4980 = vunpack.c.h.b16 %v519
    %v4981 = vunpack.c.l.b16 %v520
    %v4982 = vunpack.c.h.b16 %v520
    %v4983 = vunpack.c.l.b16 %v521
    %v4984 = vunpack.c.h.b16 %v521
    %v4985 = vunpack.c.l.b16 %v522
    %v4986 = vunpack.c.h.b16 %v522
    %v4987 = vunpack.c.l.b16 %v523
    %v4988 = vunpack.c.h.b16 %v523
    %v4989 = vunpack.c.l.b16 %v524
    %v4990 = vunpack.c.h.b16 %v524
    %v4991 = vunpack.c.l.b16 %v525
    %v4992 = vunpack.c.h.b16 %v525
    %v4993 = vunpack.c.l.b16 %v526
    %v4994 = vunpack.c.h.b16 %v526
    %v4995 = vunpack.c.l.b16 %v527
    %v4996 = vunpack.c.h.b16 %v527
    %v4997 = vunpack.c.l.b16 %v528
    %v4998 = vunpack.c.h.b16 %v528
    %v4999 = vunpack.c.l.b16 %v529
    %v5000 = vunpack.c.h.b16 %v529
    %v5001 = vunpack.c.l.b16 %v530
    %v5002 = vunpack.c.h.b16 %v530
    %v5003 = vunpack.c.l.b16 %v531
    %v5004 = vunpack.c.h.b16 %v531
    %v5005 = vunpack.c.l.b16 %v532
    %v5006 = vunpack.c.h.b16 %v532
    %v5007 = vunpack.c.l.b16 %v533
    %v5008 = vunpack.c.h.b16 %v533
    %v5009 = vunpack.c.l.b16 %v534
    %v5010 = vunpack.c.h.b16 %v534
    %v5011 = vunpack.c.l.b16 %v535
    %v5012 = vunpack.c.h.b16 %v535
    %v5013 = vunpack.c.l.b16 %v536
    %v5014 = vunpack.c.h.b16 %v536
    %v5015 = vunpack.c.l.b16 %v537
    %v5016 = vunpack.c.h.b16 %v537
    %v5017 = vunpack.c.l.b16 %v538
    %v5018 = vunpack.c.h.b16 %v538
    %v5019 = vunpack.c.l.b16 %v539
    %v5020 = vunpack.c.h.b16 %v539
    %v5021 = vunpack.c.l.b16 %v540
    %v5022 = vunpack.c.h.b16 %v540
    %v5023 = vpack.c.b16 %v4783, %v4767
    %v5024 = vpack.c.b16 %v4784, %v4768
    %v5025 = vpack.c.b16 %v4785, %v4769
    %v5026 = vpack.c.b16 %v4786, %v4770
    %v5027 = vpack.c.b16 %v4787, %v4771
    %v5028 = vpack.c.b16 %v4788, %v4772
    %v5029 = vpack.c.b16 %v4789, %v4773
    %v5030 = vpack.c.b16 %v4790, %v4774
    %v5031 = vpack.c.b16 %v4791, %v4775
    %v5032 = vpack.c.b16 %v4792, %v4776
    %v5033 = vpack.c.b16 %v4793, %v4777
    %v5034 = vpack.c.b16 %v4794, %v4778
    %v5035 = vpack.c.b16 %v4795, %v4779
    %v5036 = vpack.c.b16 %v4796, %v4780
    %v5037 = vpack.c.b16 %v4797, %v4781
    %v5038 = vpack.c.b16 %v4798, %v4782
    %v5039 = vpack.c.b16 %v4815, %v4799
    %v5040 = vpack.c.b16 %v4816, %v4800
    %v5041 = vpack.c.b16 %v4817, %v4801
    %v5042 = vpack.c.b16 %v4818, %v4802
    %v5043 = vpack.c.b16 %v4819, %v4803
    %v5044 = vpack.c.b16 %v4820, %v4804
    %v5045 = vpack.c.b16 %v4821, %v4805
    %v5046 = vpack.c.b16 %v4822, %v4806
    %v5047 = vpack.c.b16 %v4823, %v4807
    %v5048 = vpack.c.b16 %v4824, %v4808
    %v5049 = vpack.c.b16 %v4825, %v4809
    %v5050 = vpack.c.b16 %v4826, %v4810
    %v5051 = vpack.c.b16 %v4827, %v4811
    %v5052 = vpack.c.b16 %v4828, %v4812
    %v5053 = vpack.c.b16 %v4829, %v4813
    %v5054 = vpack.c.b16 %v4830, %v4814
    %v5055 = vpack.c.b16 %v4847, %v4831
    %v5056 = vpack.c.b16 %v4848, %v4832
    %v5057 = vpack.c.b16 %v4849, %v4833
    %v5058 = vpack.c.b16 %v4850, %v4834
    %v5059 = vpack.c.b16 %v4851, %v4835
    %v5060 = vpack.c.b16 %v4852, %v4836
    %v5061 = vpack.c.b16 %v4853, %v4837
    %v5062 = vpack.c.b16 %v4854, %v4838
    %v5063 = vpack.c.b16 %v4855, %v4839
    %v5064 = vpack.c.b16 %v4856, %v4840
    %v5065 = vpack.c.b16 %v4857, %v4841
    %v5066 = vpack.c.b16 %v4858, %v4842
    %v5067 = vpack.c.b16 %v4859, %v4843
    %v5068 = vpack.c.b16 %v4860, %v4844
    %v5069 = vpack.c.b16 %v4861, %v4845
    %v5070 = vpack.c.b16 %v4862, %v4846
    %v5071 = vpack.c.b16 %v4879, %v4863
    %v5072 = vpack.c.b16 %v4880, %v4864
    %v5073 = vpack.c.b16 %v4881, %v4865
    %v5074 = vpack.c.b16 %v4882, %v4866
    %v5075 = vpack.c.b16 %v4883, %v4867
    %v5076 = vpack.c.b16 %v4884, %v4868
    %v5077 = vpack.c.b16 %v4885, %v4869
    %v5078 = vpack.c.b16 %v4886, %v4870
    %v5079 = vpack.c.b16 %v4887, %v4871
    %v5080 = vpack.c.b16 %v4888, %v4872
    %v5081 = vpack.c.b16 %v4889, %v4873
    %v5082 = vpack.c.b16 %v4890, %v4874
    %v5083 = vpack.c.b16 %v4891, %v4875
    %v5084 = vpack.c.b16 %v4892, %v4876
    %v5085 = vpack.c.b16 %v4893, %v4877
    %v5086 = vpack.c.b16 %v4894, %v4878
    %v5087 = vpack.c.b16 %v4911, %v4895
    %v5088 = vpack.c.b16 %v4912, %v4896
    %v5089 = vpack.c.b16 %v4913, %v4897
    %v5090 = vpack.c.b16 %v4914, %v4898
    %v5091 = vpack.c.b16 %v4915, %v4899
    %v5092 = vpack.c.b16 %v4916, %v4900
    %v5093 = vpack.c.b16 %v4917, %v4901
    %v5094 = vpack.c.b16 %v4918, %v4902
    %v5095 = vpack.c.b16 %v4919, %v4903
    %v5096 = vpack.c.b16 %v4920, %v4904
    %v5097 = vpack.c.b16 %v4921, %v4905
    %v5098 = vpack.c.b16 %v4922, %v4906
    %v5099 = vpack.c.b16 %v4923, %v4907
    %v5100 = vpack.c.b16 %v4924, %v4908
    %v5101 = vpack.c.b16 %v4925, %v4909
    %v5102 = vpack.c.b16 %v4926, %v4910
    %v5103 = vpack.c.b16 %v4943, %v4927
    %v5104 = vpack.c.b16 %v4944, %v4928
    %v5105 = vpack.c.b16 %v4945, %v4929
    %v5106 = vpack.c.b16 %v4946, %v4930
    %v5107 = vpack.c.b16 %v4947, %v4931
    %v5108 = vpack.c.b16 %v4948, %v4932
    %v5109 = vpack.c.b16 %v4949, %v4933
    %v5110 = vpack.c.b16 %v4950, %v4934
    %v5111 = vpack.c.b16 %v4951, %v4935
    %v5112 = vpack.c.b16 %v4952, %v4936
    %v5113 = vpack.c.b16 %v4953, %v4937
    %v5114 = vpack.c.b16 %v4954, %v4938
    %v5115 = vpack.c.b16 %v4955, %v4939
    %v5116 = vpack.c.b16 %v4956, %v4940
    %v5117 = vpack.c.b16 %v4957, %v4941
    %v5118 = vpack.c.b16 %v4958, %v4942
    %v5119 = vpack.c.b16 %v4975, %v4959
    %v5120 = vpack.c.b16 %v4976, %v4960
    %v5121 = vpack.c.b16 %v4977, %v4961
    %v5122 = vpack.c.b16 %v4978, %v4962
    %v5123 = vpack.c.b16 %v4979, %v4963
    %v5124 = vpack.c.b16 %v4980, %v4964
    %v5125 = vpack.c.b16 %v4981, %v4965
    %v5126 = vpack.c.b16 %v4982, %v4966
    %v5127 = vpack.c.b16 %v4983, %v4967
    %v5128 = vpack.c.b16 %v4984, %v4968
    %v5129 = vpack.c.b16 %v4985, %v4969
    %v5130 = vpack.c.b16 %v4986, %v4970
    %v5131 = vpack.c.b16 %v4987, %v4971
    %v5132 = vpack.c.b16 %v4988, %v4972
    %v5133 = vpack.c.b16 %v4989, %v4973
    %v5134 = vpack.c.b16 %v4990, %v4974
    %v5135 = vpack.c.b16 %v5007, %v4991
    %v5136 = vpack.c.b16 %v5008, %v4992
    %v5137 = vpack.c.b16 %v5009, %v4993
    %v5138 = vpack.c.b16 %v5010, %v4994
    %v5139 = vpack.c.b16 %v5011, %v4995
    %v5140 = vpack.c.b16 %v5012, %v4996
    %v5141 = vpack.c.b16 %v5013, %v4997
    %v5142 = vpack.c.b16 %v5014, %v4998
    %v5143 = vpack.c.b16 %v5015, %v4999
    %v5144 = vpack.c.b16 %v5016, %v5000
    %v5145 = vpack.c.b16 %v5017, %v5001
    %v5146 = vpack.c.b16 %v5018, %v5002
    %v5147 = vpack.c.b16 %v5019, %v5003
    %v5148 = vpack.c.b16 %v5020, %v5004
    %v5149 = vpack.c.b16 %v5021, %v5005
    %v5150 = vpack.c.b16 %v5022, %v5006
    %5279 = vmatprep.subr.bf16.mxu0 %v5024
    %5280 = vmatpush1.bf16.xpose.msra.mxu0 %v5023
    %5281 = vmatprep.subr.bf16.mxu0 %v5040
    %5282 = vmatpush1.bf16.xpose.msra.mxu0 %v5039
    %5283 = vmatprep.subr.bf16.mxu0 %v5056
    %5284 = vmatpush1.bf16.xpose.msra.mxu0 %v5055
    %5285 = vmatprep.subr.bf16.mxu0 %v5072
    %5286 = vmatpush1.bf16.xpose.msra.mxu0 %v5071
    %5287 = vmatprep.subr.bf16.mxu0 %v5088
    %5288 = vmatpush1.bf16.xpose.msra.mxu0 %v5087
    %5289 = vmatprep.subr.bf16.mxu0 %v5104
    %5290 = vmatpush1.bf16.xpose.msra.mxu0 %v5103
    %5291 = vmatprep.subr.bf16.mxu0 %v5120
    %5292 = vmatpush1.bf16.xpose.msra.mxu0 %v5119
    %5293 = vmatprep.subr.bf16.mxu0 %v5136
    %5294 = vmatpush1.bf16.xpose.msra.mxu0 %v5135
    %5295 = vmatprep.subr.bf16.mxu0 0
    %5296 = vmatpush1.bf16.xpose.msra.mxu0 0
    %5297 = vmatprep.subr.bf16.mxu0 0
    %5298 = vmatpush1.bf16.xpose.msra.mxu0 0
    %5299 = vmatprep.subr.bf16.mxu0 0
    %5300 = vmatpush1.bf16.xpose.msra.mxu0 0
    %5301 = vmatprep.subr.bf16.mxu0 0
    %5302 = vmatpush1.bf16.xpose.msra.mxu0 0
    %5303 = vmatprep.subr.bf16.mxu0 0
    %5304 = vmatpush1.bf16.xpose.msra.mxu0 0
    %5305 = vmatprep.subr.bf16.mxu0 0
    %5306 = vmatpush1.bf16.xpose.msra.mxu0 0
    %5307 = vmatprep.subr.bf16.mxu0 0
    %5308 = vmatpush1.bf16.xpose.msra.mxu0 0
    %5309 = vmatprep.subr.bf16.mxu0 0
    %5310 = vmatpush1.bf16.xpose.msra.mxu0 0
    %5311 = vmatprep.mubr.bf16.mxu0 %v4620
    %5312 = vmatmul.mubr.bf16.gmra.mrb[0].mxu0 %v4619
    %v5313 = vpop.f32.mrb[0].mxu0
    %v5314 = vadd.f32 %v4638, %v5313
    %v5315 = vpop.f32.mrb[0].mxu0
    %v5316 = vpop.f32.mrb[0].mxu0
    %v5317 = vadd.f32 %v4638, %v5316
    %v5318 = vpop.f32.mrb[0].mxu0
    %5319 = vdwg.mxu0
    %5320 = vmatprep.subr.bf16.mxu0 %v5026
    %5321 = vmatpush1.bf16.xpose.msra.mxu0 %v5025
    %5322 = vmatprep.subr.bf16.mxu0 %v5042
    %5323 = vmatpush1.bf16.xpose.msra.mxu0 %v5041
    %5324 = vmatprep.subr.bf16.mxu0 %v5058
    %5325 = vmatpush1.bf16.xpose.msra.mxu0 %v5057
    %5326 = vmatprep.subr.bf16.mxu0 %v5074
    %5327 = vmatpush1.bf16.xpose.msra.mxu0 %v5073
    %5328 = vmatprep.subr.bf16.mxu0 %v5090
    %5329 = vmatpush1.bf16.xpose.msra.mxu0 %v5089
    %5330 = vmatprep.subr.bf16.mxu0 %v5106
    %5331 = vmatpush1.bf16.xpose.msra.mxu0 %v5105
    %5332 = vmatprep.subr.bf16.mxu0 %v5122
    %5333 = vmatpush1.bf16.xpose.msra.mxu0 %v5121
    %5334 = vmatprep.subr.bf16.mxu0 %v5138
    %5335 = vmatpush1.bf16.xpose.msra.mxu0 %v5137
    %5336 = vmatprep.subr.bf16.mxu0 0
    %5337 = vmatpush1.bf16.xpose.msra.mxu0 0
    %5338 = vmatprep.subr.bf16.mxu0 0
    %5339 = vmatpush1.bf16.xpose.msra.mxu0 0
    %5340 = vmatprep.subr.bf16.mxu0 0
    %5341 = vmatpush1.bf16.xpose.msra.mxu0 0
    %5342 = vmatprep.subr.bf16.mxu0 0
    %5343 = vmatpush1.bf16.xpose.msra.mxu0 0
    %5344 = vmatprep.subr.bf16.mxu0 0
    %5345 = vmatpush1.bf16.xpose.msra.mxu0 0
    %5346 = vmatprep.subr.bf16.mxu0 0
    %5347 = vmatpush1.bf16.xpose.msra.mxu0 0
    %5348 = vmatprep.subr.bf16.mxu0 0
    %5349 = vmatpush1.bf16.xpose.msra.mxu0 0
    %5350 = vmatprep.subr.bf16.mxu0 0
    %5351 = vmatpush1.bf16.xpose.msra.mxu0 0
    %5352 = vmatprep.mubr.bf16.mxu0 %v4622
    %5353 = vmatmul.mubr.bf16.gmra.mrb[0].mxu0 %v4621
    %v5354 = vpop.f32.mrb[0].mxu0
    %v5355 = vadd.f32 %v5314, %v5354
    %v5356 = vpop.f32.mrb[0].mxu0
    %v5357 = vpop.f32.mrb[0].mxu0
    %v5358 = vadd.f32 %v5317, %v5357
    %v5359 = vpop.f32.mrb[0].mxu0
    %5360 = vdwg.mxu0
    %5361 = vmatprep.subr.bf16.mxu0 %v5028
    %5362 = vmatpush1.bf16.xpose.msra.mxu0 %v5027
    %5363 = vmatprep.subr.bf16.mxu0 %v5044
    %5364 = vmatpush1.bf16.xpose.msra.mxu0 %v5043
    %5365 = vmatprep.subr.bf16.mxu0 %v5060
    %5366 = vmatpush1.bf16.xpose.msra.mxu0 %v5059
    %5367 = vmatprep.subr.bf16.mxu0 %v5076
    %5368 = vmatpush1.bf16.xpose.msra.mxu0 %v5075
    %5369 = vmatprep.subr.bf16.mxu0 %v5092
    %5370 = vmatpush1.bf16.xpose.msra.mxu0 %v5091
    %5371 = vmatprep.subr.bf16.mxu0 %v5108
    %5372 = vmatpush1.bf16.xpose.msra.mxu0 %v5107
    %5373 = vmatprep.subr.bf16.mxu0 %v5124
    %5374 = vmatpush1.bf16.xpose.msra.mxu0 %v5123
    %5375 = vmatprep.subr.bf16.mxu0 %v5140
    %5376 = vmatpush1.bf16.xpose.msra.mxu0 %v5139
    %5377 = vmatprep.subr.bf16.mxu0 0
    %5378 = vmatpush1.bf16.xpose.msra.mxu0 0
    %5379 = vmatprep.subr.bf16.mxu0 0
    %5380 = vmatpush1.bf16.xpose.msra.mxu0 0
    %5381 = vmatprep.subr.bf16.mxu0 0
    %5382 = vmatpush1.bf16.xpose.msra.mxu0 0
    %5383 = vmatprep.subr.bf16.mxu0 0
    %5384 = vmatpush1.bf16.xpose.msra.mxu0 0
    %5385 = vmatprep.subr.bf16.mxu0 0
    %5386 = vmatpush1.bf16.xpose.msra.mxu0 0
    %5387 = vmatprep.subr.bf16.mxu0 0
    %5388 = vmatpush1.bf16.xpose.msra.mxu0 0
    %5389 = vmatprep.subr.bf16.mxu0 0
    %5390 = vmatpush1.bf16.xpose.msra.mxu0 0
    %5391 = vmatprep.subr.bf16.mxu0 0
    %5392 = vmatpush1.bf16.xpose.msra.mxu0 0
    %5393 = vmatprep.mubr.bf16.mxu0 %v4624
    %5394 = vmatmul.mubr.bf16.gmra.mrb[0].mxu0 %v4623
    %v5395 = vpop.f32.mrb[0].mxu0
    %v5396 = vadd.f32 %v5355, %v5395
    %v5397 = vpop.f32.mrb[0].mxu0
    %v5398 = vpop.f32.mrb[0].mxu0
    %v5399 = vadd.f32 %v5358, %v5398
    %v5400 = vpop.f32.mrb[0].mxu0
    %5401 = vdwg.mxu0
    %5402 = vmatprep.subr.bf16.mxu0 %v5030
    %5403 = vmatpush1.bf16.xpose.msra.mxu0 %v5029
    %5404 = vmatprep.subr.bf16.mxu0 %v5046
    %5405 = vmatpush1.bf16.xpose.msra.mxu0 %v5045
    %5406 = vmatprep.subr.bf16.mxu0 %v5062
    %5407 = vmatpush1.bf16.xpose.msra.mxu0 %v5061
    %5408 = vmatprep.subr.bf16.mxu0 %v5078
    %5409 = vmatpush1.bf16.xpose.msra.mxu0 %v5077
    %5410 = vmatprep.subr.bf16.mxu0 %v5094
    %5411 = vmatpush1.bf16.xpose.msra.mxu0 %v5093
    %5412 = vmatprep.subr.bf16.mxu0 %v5110
    %5413 = vmatpush1.bf16.xpose.msra.mxu0 %v5109
    %5414 = vmatprep.subr.bf16.mxu0 %v5126
    %5415 = vmatpush1.bf16.xpose.msra.mxu0 %v5125
    %5416 = vmatprep.subr.bf16.mxu0 %v5142
    %5417 = vmatpush1.bf16.xpose.msra.mxu0 %v5141
    %5418 = vmatprep.subr.bf16.mxu0 0
    %5419 = vmatpush1.bf16.xpose.msra.mxu0 0
    %5420 = vmatprep.subr.bf16.mxu0 0
    %5421 = vmatpush1.bf16.xpose.msra.mxu0 0
    %5422 = vmatprep.subr.bf16.mxu0 0
    %5423 = vmatpush1.bf16.xpose.msra.mxu0 0
    %5424 = vmatprep.subr.bf16.mxu0 0
    %5425 = vmatpush1.bf16.xpose.msra.mxu0 0
    %5426 = vmatprep.subr.bf16.mxu0 0
    %5427 = vmatpush1.bf16.xpose.msra.mxu0 0
    %5428 = vmatprep.subr.bf16.mxu0 0
    %5429 = vmatpush1.bf16.xpose.msra.mxu0 0
    %5430 = vmatprep.subr.bf16.mxu0 0
    %5431 = vmatpush1.bf16.xpose.msra.mxu0 0
    %5432 = vmatprep.subr.bf16.mxu0 0
    %5433 = vmatpush1.bf16.xpose.msra.mxu0 0
    %5434 = vmatprep.mubr.bf16.mxu0 %v4626
    %5435 = vmatmul.mubr.bf16.gmra.mrb[0].mxu0 %v4625
    %v5436 = vpop.f32.mrb[0].mxu0
    %v5437 = vadd.f32 %v5396, %v5436
    %v5438 = vpop.f32.mrb[0].mxu0
    %v5439 = vpop.f32.mrb[0].mxu0
    %v5440 = vadd.f32 %v5399, %v5439
    %v5441 = vpop.f32.mrb[0].mxu0
    %5442 = vdwg.mxu0
    %5443 = vmatprep.subr.bf16.mxu0 %v5032
    %5444 = vmatpush1.bf16.xpose.msra.mxu0 %v5031
    %5445 = vmatprep.subr.bf16.mxu0 %v5048
    %5446 = vmatpush1.bf16.xpose.msra.mxu0 %v5047
    %5447 = vmatprep.subr.bf16.mxu0 %v5064
    %5448 = vmatpush1.bf16.xpose.msra.mxu0 %v5063
    %5449 = vmatprep.subr.bf16.mxu0 %v5080
    %5450 = vmatpush1.bf16.xpose.msra.mxu0 %v5079
    %5451 = vmatprep.subr.bf16.mxu0 %v5096
    %5452 = vmatpush1.bf16.xpose.msra.mxu0 %v5095
    %5453 = vmatprep.subr.bf16.mxu0 %v5112
    %5454 = vmatpush1.bf16.xpose.msra.mxu0 %v5111
    %5455 = vmatprep.subr.bf16.mxu0 %v5128
    %5456 = vmatpush1.bf16.xpose.msra.mxu0 %v5127
    %5457 = vmatprep.subr.bf16.mxu0 %v5144
    %5458 = vmatpush1.bf16.xpose.msra.mxu0 %v5143
    %5459 = vmatprep.subr.bf16.mxu0 0
    %5460 = vmatpush1.bf16.xpose.msra.mxu0 0
    %5461 = vmatprep.subr.bf16.mxu0 0
    %5462 = vmatpush1.bf16.xpose.msra.mxu0 0
    %5463 = vmatprep.subr.bf16.mxu0 0
    %5464 = vmatpush1.bf16.xpose.msra.mxu0 0
    %5465 = vmatprep.subr.bf16.mxu0 0
    %5466 = vmatpush1.bf16.xpose.msra.mxu0 0
    %5467 = vmatprep.subr.bf16.mxu0 0
    %5468 = vmatpush1.bf16.xpose.msra.mxu0 0
    %5469 = vmatprep.subr.bf16.mxu0 0
    %5470 = vmatpush1.bf16.xpose.msra.mxu0 0
    %5471 = vmatprep.subr.bf16.mxu0 0
    %5472 = vmatpush1.bf16.xpose.msra.mxu0 0
    %5473 = vmatprep.subr.bf16.mxu0 0
    %5474 = vmatpush1.bf16.xpose.msra.mxu0 0
    %5475 = vmatprep.mubr.bf16.mxu0 %v4628
    %5476 = vmatmul.mubr.bf16.gmra.mrb[0].mxu0 %v4627
    %v5477 = vpop.f32.mrb[0].mxu0
    %v5478 = vadd.f32 %v5437, %v5477
    %v5479 = vpop.f32.mrb[0].mxu0
    %v5480 = vpop.f32.mrb[0].mxu0
    %v5481 = vadd.f32 %v5440, %v5480
    %v5482 = vpop.f32.mrb[0].mxu0
    %5483 = vdwg.mxu0
    %5484 = vmatprep.subr.bf16.mxu0 %v5034
    %5485 = vmatpush1.bf16.xpose.msra.mxu0 %v5033
    %5486 = vmatprep.subr.bf16.mxu0 %v5050
    %5487 = vmatpush1.bf16.xpose.msra.mxu0 %v5049
    %5488 = vmatprep.subr.bf16.mxu0 %v5066
    %5489 = vmatpush1.bf16.xpose.msra.mxu0 %v5065
    %5490 = vmatprep.subr.bf16.mxu0 %v5082
    %5491 = vmatpush1.bf16.xpose.msra.mxu0 %v5081
    %5492 = vmatprep.subr.bf16.mxu0 %v5098
    %5493 = vmatpush1.bf16.xpose.msra.mxu0 %v5097
    %5494 = vmatprep.subr.bf16.mxu0 %v5114
    %5495 = vmatpush1.bf16.xpose.msra.mxu0 %v5113
    %5496 = vmatprep.subr.bf16.mxu0 %v5130
    %5497 = vmatpush1.bf16.xpose.msra.mxu0 %v5129
    %5498 = vmatprep.subr.bf16.mxu0 %v5146
    %5499 = vmatpush1.bf16.xpose.msra.mxu0 %v5145
    %5500 = vmatprep.subr.bf16.mxu0 0
    %5501 = vmatpush1.bf16.xpose.msra.mxu0 0
    %5502 = vmatprep.subr.bf16.mxu0 0
    %5503 = vmatpush1.bf16.xpose.msra.mxu0 0
    %5504 = vmatprep.subr.bf16.mxu0 0
    %5505 = vmatpush1.bf16.xpose.msra.mxu0 0
    %5506 = vmatprep.subr.bf16.mxu0 0
    %5507 = vmatpush1.bf16.xpose.msra.mxu0 0
    %5508 = vmatprep.subr.bf16.mxu0 0
    %5509 = vmatpush1.bf16.xpose.msra.mxu0 0
    %5510 = vmatprep.subr.bf16.mxu0 0
    %5511 = vmatpush1.bf16.xpose.msra.mxu0 0
    %5512 = vmatprep.subr.bf16.mxu0 0
    %5513 = vmatpush1.bf16.xpose.msra.mxu0 0
    %5514 = vmatprep.subr.bf16.mxu0 0
    %5515 = vmatpush1.bf16.xpose.msra.mxu0 0
    %5516 = vmatprep.mubr.bf16.mxu0 %v4630
    %5517 = vmatmul.mubr.bf16.gmra.mrb[0].mxu0 %v4629
    %v5518 = vpop.f32.mrb[0].mxu0
    %v5519 = vadd.f32 %v5478, %v5518
    %v5520 = vpop.f32.mrb[0].mxu0
    %v5521 = vpop.f32.mrb[0].mxu0
    %v5522 = vadd.f32 %v5481, %v5521
    %v5523 = vpop.f32.mrb[0].mxu0
    %5524 = vdwg.mxu0
    %5525 = vmatprep.subr.bf16.mxu0 %v5036
    %5526 = vmatpush1.bf16.xpose.msra.mxu0 %v5035
    %5527 = vmatprep.subr.bf16.mxu0 %v5052
    %5528 = vmatpush1.bf16.xpose.msra.mxu0 %v5051
    %5529 = vmatprep.subr.bf16.mxu0 %v5068
    %5530 = vmatpush1.bf16.xpose.msra.mxu0 %v5067
    %5531 = vmatprep.subr.bf16.mxu0 %v5084
    %5532 = vmatpush1.bf16.xpose.msra.mxu0 %v5083
    %5533 = vmatprep.subr.bf16.mxu0 %v5100
    %5534 = vmatpush1.bf16.xpose.msra.mxu0 %v5099
    %5535 = vmatprep.subr.bf16.mxu0 %v5116
    %5536 = vmatpush1.bf16.xpose.msra.mxu0 %v5115
    %5537 = vmatprep.subr.bf16.mxu0 %v5132
    %5538 = vmatpush1.bf16.xpose.msra.mxu0 %v5131
    %5539 = vmatprep.subr.bf16.mxu0 %v5148
    %5540 = vmatpush1.bf16.xpose.msra.mxu0 %v5147
    %5541 = vmatprep.subr.bf16.mxu0 0
    %5542 = vmatpush1.bf16.xpose.msra.mxu0 0
    %5543 = vmatprep.subr.bf16.mxu0 0
    %5544 = vmatpush1.bf16.xpose.msra.mxu0 0
    %5545 = vmatprep.subr.bf16.mxu0 0
    %5546 = vmatpush1.bf16.xpose.msra.mxu0 0
    %5547 = vmatprep.subr.bf16.mxu0 0
    %5548 = vmatpush1.bf16.xpose.msra.mxu0 0
    %5549 = vmatprep.subr.bf16.mxu0 0
    %5550 = vmatpush1.bf16.xpose.msra.mxu0 0
    %5551 = vmatprep.subr.bf16.mxu0 0
    %5552 = vmatpush1.bf16.xpose.msra.mxu0 0
    %5553 = vmatprep.subr.bf16.mxu0 0
    %5554 = vmatpush1.bf16.xpose.msra.mxu0 0
    %5555 = vmatprep.subr.bf16.mxu0 0
    %5556 = vmatpush1.bf16.xpose.msra.mxu0 0
    %5557 = vmatprep.mubr.bf16.mxu0 %v4632
    %5558 = vmatmul.mubr.bf16.gmra.mrb[0].mxu0 %v4631
    %v5559 = vpop.f32.mrb[0].mxu0
    %v5560 = vadd.f32 %v5519, %v5559
    %v5561 = vpop.f32.mrb[0].mxu0
    %v5562 = vpop.f32.mrb[0].mxu0
    %v5563 = vadd.f32 %v5522, %v5562
    %v5564 = vpop.f32.mrb[0].mxu0
    %5565 = vdwg.mxu0
    %5566 = vmatprep.subr.bf16.mxu0 %v5038
    %5567 = vmatpush1.bf16.xpose.msra.mxu0 %v5037
    %5568 = vmatprep.subr.bf16.mxu0 %v5054
    %5569 = vmatpush1.bf16.xpose.msra.mxu0 %v5053
    %5570 = vmatprep.subr.bf16.mxu0 %v5070
    %5571 = vmatpush1.bf16.xpose.msra.mxu0 %v5069
    %5572 = vmatprep.subr.bf16.mxu0 %v5086
    %5573 = vmatpush1.bf16.xpose.msra.mxu0 %v5085
    %5574 = vmatprep.subr.bf16.mxu0 %v5102
    %5575 = vmatpush1.bf16.xpose.msra.mxu0 %v5101
    %5576 = vmatprep.subr.bf16.mxu0 %v5118
    %5577 = vmatpush1.bf16.xpose.msra.mxu0 %v5117
    %5578 = vmatprep.subr.bf16.mxu0 %v5134
    %5579 = vmatpush1.bf16.xpose.msra.mxu0 %v5133
    %5580 = vmatprep.subr.bf16.mxu0 %v5150
    %5581 = vmatpush1.bf16.xpose.msra.mxu0 %v5149
    %5582 = vmatprep.subr.bf16.mxu0 0
    %5583 = vmatpush1.bf16.xpose.msra.mxu0 0
    %5584 = vmatprep.subr.bf16.mxu0 0
    %5585 = vmatpush1.bf16.xpose.msra.mxu0 0
    %5586 = vmatprep.subr.bf16.mxu0 0
    %5587 = vmatpush1.bf16.xpose.msra.mxu0 0
    %5588 = vmatprep.subr.bf16.mxu0 0
    %5589 = vmatpush1.bf16.xpose.msra.mxu0 0
    %5590 = vmatprep.subr.bf16.mxu0 0
    %5591 = vmatpush1.bf16.xpose.msra.mxu0 0
    %5592 = vmatprep.subr.bf16.mxu0 0
    %5593 = vmatpush1.bf16.xpose.msra.mxu0 0
    %5594 = vmatprep.subr.bf16.mxu0 0
    %5595 = vmatpush1.bf16.xpose.msra.mxu0 0
    %5596 = vmatprep.subr.bf16.mxu0 0
    %5597 = vmatpush1.bf16.xpose.msra.mxu0 0
    %5598 = vmatprep.mubr.bf16.mxu0 %v4634
    %5599 = vmatmul.mubr.bf16.gmra.mrb[0].mxu0 %v4633
    %v5600 = vpop.f32.mrb[0].mxu0
    %v5601 = vadd.f32 %v5560, %v5600
    %v5602 = vpop.f32.mrb[0].mxu0
    %v5603 = vpop.f32.mrb[0].mxu0
    %v5604 = vadd.f32 %v5563, %v5603
    %v5605 = vpop.f32.mrb[0].mxu0
    %5606 = vdwg.mxu0
    %v5607 = vadd.f32 %v3324, %v5601
    %v5608 = vadd.f32 %v3325, %v5604
    %5609 = vadd.xlane.f32.xlu0 %v5607
    %v5610 = vpop.xlane.xlu0 %5609
    %5611 = vadd.xlane.f32.xlu0 %v5608
    %v5612 = vpop.xlane.xlu0 %5611
    %v5613 = vmul.f32 %v5610, %v3295
    %v5614 = vmul.f32 %v5612, %v3295
    %v5615 = vsub.f32 %v5607, %v5613
    %v5616 = vsub.f32 %v5608, %v5614
    %v5617 = vmul.f32 %v5615, %v5615
    %v5618 = vmul.f32 %v5616, %v5616
    %5619 = vadd.xlane.f32.xlu0 %v5617
    %v5620 = vpop.xlane.xlu0 %5619
    %5621 = vadd.xlane.f32.xlu0 %v5618
    %v5622 = vpop.xlane.xlu0 %5621
    %v5623 = vmul.f32 %v5620, %v3295
    %v5624 = vmul.f32 %v5622, %v3295
    %v5625 = vadd.f32 %v5623, 1e-05
    %v5626 = vadd.f32 %v5624, 1e-05
    %v5627 = vrsqrt.pop %v5625
    %v5628 = vrsqrt.pop %v5626
    %v5629 = vmul.f32 %v5615, %v5627
    %v5630 = vmul.f32 %v5616, %v5628
    %v5631 = vlaneseq
    %v5632 = vshrl.u32 %v5631, 7
    %v5633 = vsub.s32 0, %v5632
    %v5634 = vrot.slane %v86, %v5633
    %v5635 = vmul.f32 %v5629, %v5634
    %v5636 = vmul.f32 %v5630, %v5634
    %v5637 = vlaneseq
    %v5638 = vshrl.u32 %v5637, 7
    %v5639 = vsub.s32 0, %v5638
    %v5640 = vrot.slane %v87, %v5639
    %v5641 = vadd.f32 %v5635, %v5640
    %v5642 = vadd.f32 %v5636, %v5640
    %s5643 = scalar_lea.vmem %s1, 192
    %v5644 = vld [vmem:[%s5643] sm:$0xf]
    %v5645 = vld [vmem:[%s5643 + $0x4] sm:$0xf]
    %v5646 = vld [vmem:[%s5643 + $0x8] sm:$0xf]
    %v5647 = vld [vmem:[%s5643 + $0xc] sm:$0xf]
    %v5648 = vld [vmem:[%s5643 + $0x10] sm:$0xf]
    %v5649 = vld [vmem:[%s5643 + $0x14] sm:$0xf]
    %v5650 = vld [vmem:[%s5643 + $0x18] sm:$0xf]
    %v5651 = vld [vmem:[%s5643 + $0x1c] sm:$0xf]
    %v5652 = vld [vmem:[%s5643 + $0x20] sm:$0xf]
    %v5653 = vld [vmem:[%s5643 + $0x24] sm:$0xf]
    %v5654 = vld [vmem:[%s5643 + $0x28] sm:$0xf]
    %v5655 = vld [vmem:[%s5643 + $0x2c] sm:$0xf]
    %v5656 = vld [vmem:[%s5643 + $0x30] sm:$0xf]
    %v5657 = vld [vmem:[%s5643 + $0x34] sm:$0xf]
    %v5658 = vld [vmem:[%s5643 + $0x38] sm:$0xf]
    %v5659 = vld [vmem:[%s5643 + $0x3c] sm:$0xf]
    %v5660 = vld [vmem:[%s5643 + $0x40] sm:$0xf]
    %v5661 = vld [vmem:[%s5643 + $0x44] sm:$0xf]
    %v5662 = vld [vmem:[%s5643 + $0x48] sm:$0xf]
    %v5663 = vld [vmem:[%s5643 + $0x4c] sm:$0xf]
    %v5664 = vld [vmem:[%s5643 + $0x50] sm:$0xf]
    %v5665 = vld [vmem:[%s5643 + $0x54] sm:$0xf]
    %v5666 = vld [vmem:[%s5643 + $0x58] sm:$0xf]
    %v5667 = vld [vmem:[%s5643 + $0x5c] sm:$0xf]
    %v5668 = vld [vmem:[%s5643 + $0x60] sm:$0xf]
    %v5669 = vld [vmem:[%s5643 + $0x64] sm:$0xf]
    %v5670 = vld [vmem:[%s5643 + $0x68] sm:$0xf]
    %v5671 = vld [vmem:[%s5643 + $0x6c] sm:$0xf]
    %v5672 = vld [vmem:[%s5643 + $0x70] sm:$0xf]
    %v5673 = vld [vmem:[%s5643 + $0x74] sm:$0xf]
    %v5674 = vld [vmem:[%s5643 + $0x78] sm:$0xf]
    %v5675 = vld [vmem:[%s5643 + $0x7c] sm:$0xf]
    %v5676 = vld [vmem:[%s5643 + $0x80] sm:$0xf]
    %v5677 = vld [vmem:[%s5643 + $0x84] sm:$0xf]
    %v5678 = vld [vmem:[%s5643 + $0x88] sm:$0xf]
    %v5679 = vld [vmem:[%s5643 + $0x8c] sm:$0xf]
    %v5680 = vld [vmem:[%s5643 + $0x90] sm:$0xf]
    %v5681 = vld [vmem:[%s5643 + $0x94] sm:$0xf]
    %v5682 = vld [vmem:[%s5643 + $0x98] sm:$0xf]
    %v5683 = vld [vmem:[%s5643 + $0x9c] sm:$0xf]
    %v5684 = vld [vmem:[%s5643 + $0xa0] sm:$0xf]
    %v5685 = vld [vmem:[%s5643 + $0xa4] sm:$0xf]
    %v5686 = vld [vmem:[%s5643 + $0xa8] sm:$0xf]
    %v5687 = vld [vmem:[%s5643 + $0xac] sm:$0xf]
    %v5688 = vld [vmem:[%s5643 + $0xb0] sm:$0xf]
    %v5689 = vld [vmem:[%s5643 + $0xb4] sm:$0xf]
    %v5690 = vld [vmem:[%s5643 + $0xb8] sm:$0xf]
    %v5691 = vld [vmem:[%s5643 + $0xbc] sm:$0xf]
    %s5692 = scalar_lea.vmem %s3, 64
    %v5693 = vld [vmem:[%s5692] sm:$0xf]
    %v5694 = vld [vmem:[%s5692 + $0x4] sm:$0xf]
    %v5695 = vld [vmem:[%s5692 + $0x8] sm:$0xf]
    %v5696 = vld [vmem:[%s5692 + $0xc] sm:$0xf]
    %v5697 = vld [vmem:[%s5692 + $0x10] sm:$0xf]
    %v5698 = vld [vmem:[%s5692 + $0x14] sm:$0xf]
    %v5699 = vld [vmem:[%s5692 + $0x18] sm:$0xf]
    %v5700 = vld [vmem:[%s5692 + $0x1c] sm:$0xf]
    %v5701 = vld [vmem:[%s5692 + $0x20] sm:$0xf]
    %v5702 = vld [vmem:[%s5692 + $0x24] sm:$0xf]
    %v5703 = vld [vmem:[%s5692 + $0x28] sm:$0xf]
    %v5704 = vld [vmem:[%s5692 + $0x2c] sm:$0xf]
    %v5705 = vld [vmem:[%s5692 + $0x30] sm:$0xf]
    %v5706 = vld [vmem:[%s5692 + $0x34] sm:$0xf]
    %v5707 = vld [vmem:[%s5692 + $0x38] sm:$0xf]
    %v5708 = vld [vmem:[%s5692 + $0x3c] sm:$0xf]
    %s5709 = scalar_lea.vmem [#allocation2], 1024
    %v5710 = vld [vmem:[%s5709] sm:$0xf]
    %v5711 = vld [vmem:[%s5709 + $0x4] sm:$0xf]
    %v5712 = vld [vmem:[%s5709 + $0x8] sm:$0xf]
    %v5713 = vld [vmem:[%s5709 + $0xc] sm:$0xf]
    %v5714 = vld [vmem:[%s5709 + $0x10] sm:$0xf]
    %v5715 = vld [vmem:[%s5709 + $0x14] sm:$0xf]
    %v5716 = vld [vmem:[%s5709 + $0x18] sm:$0xf]
    %v5717 = vld [vmem:[%s5709 + $0x1c] sm:$0xf]
    %v5718 = vld [vmem:[%s5709 + $0x20] sm:$0xf]
    %v5719 = vld [vmem:[%s5709 + $0x24] sm:$0xf]
    %v5720 = vld [vmem:[%s5709 + $0x28] sm:$0xf]
    %v5721 = vld [vmem:[%s5709 + $0x2c] sm:$0xf]
    %v5722 = vld [vmem:[%s5709 + $0x30] sm:$0xf]
    %v5723 = vld [vmem:[%s5709 + $0x34] sm:$0xf]
    %v5724 = vld [vmem:[%s5709 + $0x38] sm:$0xf]
    %v5725 = vld [vmem:[%s5709 + $0x3c] sm:$0xf]
    %v5726 = vld [vmem:[%s5709 + $0x40] sm:$0xf]
    %v5727 = vld [vmem:[%s5709 + $0x44] sm:$0xf]
    %v5728 = vld [vmem:[%s5709 + $0x48] sm:$0xf]
    %v5729 = vld [vmem:[%s5709 + $0x4c] sm:$0xf]
    %v5730 = vld [vmem:[%s5709 + $0x50] sm:$0xf]
    %v5731 = vld [vmem:[%s5709 + $0x54] sm:$0xf]
    %v5732 = vld [vmem:[%s5709 + $0x58] sm:$0xf]
    %v5733 = vld [vmem:[%s5709 + $0x5c] sm:$0xf]
    %v5734 = vld [vmem:[%s5709 + $0x60] sm:$0xf]
    %v5735 = vld [vmem:[%s5709 + $0x64] sm:$0xf]
    %v5736 = vld [vmem:[%s5709 + $0x68] sm:$0xf]
    %v5737 = vld [vmem:[%s5709 + $0x6c] sm:$0xf]
    %v5738 = vld [vmem:[%s5709 + $0x70] sm:$0xf]
    %v5739 = vld [vmem:[%s5709 + $0x74] sm:$0xf]
    %v5740 = vld [vmem:[%s5709 + $0x78] sm:$0xf]
    %v5741 = vld [vmem:[%s5709 + $0x7c] sm:$0xf]
    %v5742 = vld [vmem:[%s5709 + $0x80] sm:$0xf]
    %v5743 = vld [vmem:[%s5709 + $0x84] sm:$0xf]
    %v5744 = vld [vmem:[%s5709 + $0x88] sm:$0xf]
    %v5745 = vld [vmem:[%s5709 + $0x8c] sm:$0xf]
    %v5746 = vld [vmem:[%s5709 + $0x90] sm:$0xf]
    %v5747 = vld [vmem:[%s5709 + $0x94] sm:$0xf]
    %v5748 = vld [vmem:[%s5709 + $0x98] sm:$0xf]
    %v5749 = vld [vmem:[%s5709 + $0x9c] sm:$0xf]
    %v5750 = vld [vmem:[%s5709 + $0xa0] sm:$0xf]
    %v5751 = vld [vmem:[%s5709 + $0xa4] sm:$0xf]
    %v5752 = vld [vmem:[%s5709 + $0xa8] sm:$0xf]
    %v5753 = vld [vmem:[%s5709 + $0xac] sm:$0xf]
    %v5754 = vld [vmem:[%s5709 + $0xb0] sm:$0xf]
    %v5755 = vld [vmem:[%s5709 + $0xb4] sm:$0xf]
    %v5756 = vld [vmem:[%s5709 + $0xb8] sm:$0xf]
    %v5757 = vld [vmem:[%s5709 + $0xbc] sm:$0xf]
    %v5758 = vld [vmem:[%s5709 + $0xc0] sm:$0xf]
    %v5759 = vld [vmem:[%s5709 + $0xc4] sm:$0xf]
    %v5760 = vld [vmem:[%s5709 + $0xc8] sm:$0xf]
    %v5761 = vld [vmem:[%s5709 + $0xcc] sm:$0xf]
    %v5762 = vld [vmem:[%s5709 + $0xd0] sm:$0xf]
    %v5763 = vld [vmem:[%s5709 + $0xd4] sm:$0xf]
    %v5764 = vld [vmem:[%s5709 + $0xd8] sm:$0xf]
    %v5765 = vld [vmem:[%s5709 + $0xdc] sm:$0xf]
    %v5766 = vld [vmem:[%s5709 + $0xe0] sm:$0xf]
    %v5767 = vld [vmem:[%s5709 + $0xe4] sm:$0xf]
    %v5768 = vld [vmem:[%s5709 + $0xe8] sm:$0xf]
    %v5769 = vld [vmem:[%s5709 + $0xec] sm:$0xf]
    %v5770 = vld [vmem:[%s5709 + $0xf0] sm:$0xf]
    %v5771 = vld [vmem:[%s5709 + $0xf4] sm:$0xf]
    %v5772 = vld [vmem:[%s5709 + $0xf8] sm:$0xf]
    %v5773 = vld [vmem:[%s5709 + $0xfc] sm:$0xf]
    %v5774 = vld [vmem:[%s5709 + $0x100] sm:$0xf]
    %v5775 = vld [vmem:[%s5709 + $0x104] sm:$0xf]
    %v5776 = vld [vmem:[%s5709 + $0x108] sm:$0xf]
    %v5777 = vld [vmem:[%s5709 + $0x10c] sm:$0xf]
    %v5778 = vld [vmem:[%s5709 + $0x110] sm:$0xf]
    %v5779 = vld [vmem:[%s5709 + $0x114] sm:$0xf]
    %v5780 = vld [vmem:[%s5709 + $0x118] sm:$0xf]
    %v5781 = vld [vmem:[%s5709 + $0x11c] sm:$0xf]
    %v5782 = vld [vmem:[%s5709 + $0x120] sm:$0xf]
    %v5783 = vld [vmem:[%s5709 + $0x124] sm:$0xf]
    %v5784 = vld [vmem:[%s5709 + $0x128] sm:$0xf]
    %v5785 = vld [vmem:[%s5709 + $0x12c] sm:$0xf]
    %v5786 = vld [vmem:[%s5709 + $0x130] sm:$0xf]
    %v5787 = vld [vmem:[%s5709 + $0x134] sm:$0xf]
    %v5788 = vld [vmem:[%s5709 + $0x138] sm:$0xf]
    %v5789 = vld [vmem:[%s5709 + $0x13c] sm:$0xf]
    %v5790 = vld [vmem:[%s5709 + $0x140] sm:$0xf]
    %v5791 = vld [vmem:[%s5709 + $0x144] sm:$0xf]
    %v5792 = vld [vmem:[%s5709 + $0x148] sm:$0xf]
    %v5793 = vld [vmem:[%s5709 + $0x14c] sm:$0xf]
    %v5794 = vld [vmem:[%s5709 + $0x150] sm:$0xf]
    %v5795 = vld [vmem:[%s5709 + $0x154] sm:$0xf]
    %v5796 = vld [vmem:[%s5709 + $0x158] sm:$0xf]
    %v5797 = vld [vmem:[%s5709 + $0x15c] sm:$0xf]
    %v5798 = vld [vmem:[%s5709 + $0x160] sm:$0xf]
    %v5799 = vld [vmem:[%s5709 + $0x164] sm:$0xf]
    %v5800 = vld [vmem:[%s5709 + $0x168] sm:$0xf]
    %v5801 = vld [vmem:[%s5709 + $0x16c] sm:$0xf]
    %v5802 = vld [vmem:[%s5709 + $0x170] sm:$0xf]
    %v5803 = vld [vmem:[%s5709 + $0x174] sm:$0xf]
    %v5804 = vld [vmem:[%s5709 + $0x178] sm:$0xf]
    %v5805 = vld [vmem:[%s5709 + $0x17c] sm:$0xf]
    %v5806 = vld [vmem:[%s5709 + $0x180] sm:$0xf]
    %v5807 = vld [vmem:[%s5709 + $0x184] sm:$0xf]
    %v5808 = vld [vmem:[%s5709 + $0x188] sm:$0xf]
    %v5809 = vld [vmem:[%s5709 + $0x18c] sm:$0xf]
    %v5810 = vld [vmem:[%s5709 + $0x190] sm:$0xf]
    %v5811 = vld [vmem:[%s5709 + $0x194] sm:$0xf]
    %v5812 = vld [vmem:[%s5709 + $0x198] sm:$0xf]
    %v5813 = vld [vmem:[%s5709 + $0x19c] sm:$0xf]
    %v5814 = vld [vmem:[%s5709 + $0x1a0] sm:$0xf]
    %v5815 = vld [vmem:[%s5709 + $0x1a4] sm:$0xf]
    %v5816 = vld [vmem:[%s5709 + $0x1a8] sm:$0xf]
    %v5817 = vld [vmem:[%s5709 + $0x1ac] sm:$0xf]
    %v5818 = vld [vmem:[%s5709 + $0x1b0] sm:$0xf]
    %v5819 = vld [vmem:[%s5709 + $0x1b4] sm:$0xf]
    %v5820 = vld [vmem:[%s5709 + $0x1b8] sm:$0xf]
    %v5821 = vld [vmem:[%s5709 + $0x1bc] sm:$0xf]
    %v5822 = vld [vmem:[%s5709 + $0x1c0] sm:$0xf]
    %v5823 = vld [vmem:[%s5709 + $0x1c4] sm:$0xf]
    %v5824 = vld [vmem:[%s5709 + $0x1c8] sm:$0xf]
    %v5825 = vld [vmem:[%s5709 + $0x1cc] sm:$0xf]
    %v5826 = vld [vmem:[%s5709 + $0x1d0] sm:$0xf]
    %v5827 = vld [vmem:[%s5709 + $0x1d4] sm:$0xf]
    %v5828 = vld [vmem:[%s5709 + $0x1d8] sm:$0xf]
    %v5829 = vld [vmem:[%s5709 + $0x1dc] sm:$0xf]
    %v5830 = vld [vmem:[%s5709 + $0x1e0] sm:$0xf]
    %v5831 = vld [vmem:[%s5709 + $0x1e4] sm:$0xf]
    %v5832 = vld [vmem:[%s5709 + $0x1e8] sm:$0xf]
    %v5833 = vld [vmem:[%s5709 + $0x1ec] sm:$0xf]
    %v5834 = vld [vmem:[%s5709 + $0x1f0] sm:$0xf]
    %v5835 = vld [vmem:[%s5709 + $0x1f4] sm:$0xf]
    %v5836 = vld [vmem:[%s5709 + $0x1f8] sm:$0xf]
    %v5837 = vld [vmem:[%s5709 + $0x1fc] sm:$0xf]
    %v5838 = vld [vmem:[%s5709 + $0x200] sm:$0xf]
    %v5839 = vld [vmem:[%s5709 + $0x204] sm:$0xf]
    %v5840 = vld [vmem:[%s5709 + $0x208] sm:$0xf]
    %v5841 = vld [vmem:[%s5709 + $0x20c] sm:$0xf]
    %v5842 = vld [vmem:[%s5709 + $0x210] sm:$0xf]
    %v5843 = vld [vmem:[%s5709 + $0x214] sm:$0xf]
    %v5844 = vld [vmem:[%s5709 + $0x218] sm:$0xf]
    %v5845 = vld [vmem:[%s5709 + $0x21c] sm:$0xf]
    %v5846 = vld [vmem:[%s5709 + $0x220] sm:$0xf]
    %v5847 = vld [vmem:[%s5709 + $0x224] sm:$0xf]
    %v5848 = vld [vmem:[%s5709 + $0x228] sm:$0xf]
    %v5849 = vld [vmem:[%s5709 + $0x22c] sm:$0xf]
    %v5850 = vld [vmem:[%s5709 + $0x230] sm:$0xf]
    %v5851 = vld [vmem:[%s5709 + $0x234] sm:$0xf]
    %v5852 = vld [vmem:[%s5709 + $0x238] sm:$0xf]
    %v5853 = vld [vmem:[%s5709 + $0x23c] sm:$0xf]
    %v5854 = vld [vmem:[%s5709 + $0x240] sm:$0xf]
    %v5855 = vld [vmem:[%s5709 + $0x244] sm:$0xf]
    %v5856 = vld [vmem:[%s5709 + $0x248] sm:$0xf]
    %v5857 = vld [vmem:[%s5709 + $0x24c] sm:$0xf]
    %v5858 = vld [vmem:[%s5709 + $0x250] sm:$0xf]
    %v5859 = vld [vmem:[%s5709 + $0x254] sm:$0xf]
    %v5860 = vld [vmem:[%s5709 + $0x258] sm:$0xf]
    %v5861 = vld [vmem:[%s5709 + $0x25c] sm:$0xf]
    %v5862 = vld [vmem:[%s5709 + $0x260] sm:$0xf]
    %v5863 = vld [vmem:[%s5709 + $0x264] sm:$0xf]
    %v5864 = vld [vmem:[%s5709 + $0x268] sm:$0xf]
    %v5865 = vld [vmem:[%s5709 + $0x26c] sm:$0xf]
    %v5866 = vld [vmem:[%s5709 + $0x270] sm:$0xf]
    %v5867 = vld [vmem:[%s5709 + $0x274] sm:$0xf]
    %v5868 = vld [vmem:[%s5709 + $0x278] sm:$0xf]
    %v5869 = vld [vmem:[%s5709 + $0x27c] sm:$0xf]
    %v5870 = vld [vmem:[%s5709 + $0x280] sm:$0xf]
    %v5871 = vld [vmem:[%s5709 + $0x284] sm:$0xf]
    %v5872 = vld [vmem:[%s5709 + $0x288] sm:$0xf]
    %v5873 = vld [vmem:[%s5709 + $0x28c] sm:$0xf]
    %v5874 = vld [vmem:[%s5709 + $0x290] sm:$0xf]
    %v5875 = vld [vmem:[%s5709 + $0x294] sm:$0xf]
    %v5876 = vld [vmem:[%s5709 + $0x298] sm:$0xf]
    %v5877 = vld [vmem:[%s5709 + $0x29c] sm:$0xf]
    %v5878 = vld [vmem:[%s5709 + $0x2a0] sm:$0xf]
    %v5879 = vld [vmem:[%s5709 + $0x2a4] sm:$0xf]
    %v5880 = vld [vmem:[%s5709 + $0x2a8] sm:$0xf]
    %v5881 = vld [vmem:[%s5709 + $0x2ac] sm:$0xf]
    %v5882 = vld [vmem:[%s5709 + $0x2b0] sm:$0xf]
    %v5883 = vld [vmem:[%s5709 + $0x2b4] sm:$0xf]
    %v5884 = vld [vmem:[%s5709 + $0x2b8] sm:$0xf]
    %v5885 = vld [vmem:[%s5709 + $0x2bc] sm:$0xf]
    %v5886 = vld [vmem:[%s5709 + $0x2c0] sm:$0xf]
    %v5887 = vld [vmem:[%s5709 + $0x2c4] sm:$0xf]
    %v5888 = vld [vmem:[%s5709 + $0x2c8] sm:$0xf]
    %v5889 = vld [vmem:[%s5709 + $0x2cc] sm:$0xf]
    %v5890 = vld [vmem:[%s5709 + $0x2d0] sm:$0xf]
    %v5891 = vld [vmem:[%s5709 + $0x2d4] sm:$0xf]
    %v5892 = vld [vmem:[%s5709 + $0x2d8] sm:$0xf]
    %v5893 = vld [vmem:[%s5709 + $0x2dc] sm:$0xf]
    %v5894 = vld [vmem:[%s5709 + $0x2e0] sm:$0xf]
    %v5895 = vld [vmem:[%s5709 + $0x2e4] sm:$0xf]
    %v5896 = vld [vmem:[%s5709 + $0x2e8] sm:$0xf]
    %v5897 = vld [vmem:[%s5709 + $0x2ec] sm:$0xf]
    %v5898 = vld [vmem:[%s5709 + $0x2f0] sm:$0xf]
    %v5899 = vld [vmem:[%s5709 + $0x2f4] sm:$0xf]
    %v5900 = vld [vmem:[%s5709 + $0x2f8] sm:$0xf]
    %v5901 = vld [vmem:[%s5709 + $0x2fc] sm:$0xf]
    %v5902 = vld [vmem:[%s5709 + $0x300] sm:$0xf]
    %v5903 = vld [vmem:[%s5709 + $0x304] sm:$0xf]
    %v5904 = vld [vmem:[%s5709 + $0x308] sm:$0xf]
    %v5905 = vld [vmem:[%s5709 + $0x30c] sm:$0xf]
    %v5906 = vld [vmem:[%s5709 + $0x310] sm:$0xf]
    %v5907 = vld [vmem:[%s5709 + $0x314] sm:$0xf]
    %v5908 = vld [vmem:[%s5709 + $0x318] sm:$0xf]
    %v5909 = vld [vmem:[%s5709 + $0x31c] sm:$0xf]
    %v5910 = vld [vmem:[%s5709 + $0x320] sm:$0xf]
    %v5911 = vld [vmem:[%s5709 + $0x324] sm:$0xf]
    %v5912 = vld [vmem:[%s5709 + $0x328] sm:$0xf]
    %v5913 = vld [vmem:[%s5709 + $0x32c] sm:$0xf]
    %v5914 = vld [vmem:[%s5709 + $0x330] sm:$0xf]
    %v5915 = vld [vmem:[%s5709 + $0x334] sm:$0xf]
    %v5916 = vld [vmem:[%s5709 + $0x338] sm:$0xf]
    %v5917 = vld [vmem:[%s5709 + $0x33c] sm:$0xf]
    %v5918 = vld [vmem:[%s5709 + $0x340] sm:$0xf]
    %v5919 = vld [vmem:[%s5709 + $0x344] sm:$0xf]
    %v5920 = vld [vmem:[%s5709 + $0x348] sm:$0xf]
    %v5921 = vld [vmem:[%s5709 + $0x34c] sm:$0xf]
    %v5922 = vld [vmem:[%s5709 + $0x350] sm:$0xf]
    %v5923 = vld [vmem:[%s5709 + $0x354] sm:$0xf]
    %v5924 = vld [vmem:[%s5709 + $0x358] sm:$0xf]
    %v5925 = vld [vmem:[%s5709 + $0x35c] sm:$0xf]
    %v5926 = vld [vmem:[%s5709 + $0x360] sm:$0xf]
    %v5927 = vld [vmem:[%s5709 + $0x364] sm:$0xf]
    %v5928 = vld [vmem:[%s5709 + $0x368] sm:$0xf]
    %v5929 = vld [vmem:[%s5709 + $0x36c] sm:$0xf]
    %v5930 = vld [vmem:[%s5709 + $0x370] sm:$0xf]
    %v5931 = vld [vmem:[%s5709 + $0x374] sm:$0xf]
    %v5932 = vld [vmem:[%s5709 + $0x378] sm:$0xf]
    %v5933 = vld [vmem:[%s5709 + $0x37c] sm:$0xf]
    %v5934 = vld [vmem:[%s5709 + $0x380] sm:$0xf]
    %v5935 = vld [vmem:[%s5709 + $0x384] sm:$0xf]
    %v5936 = vld [vmem:[%s5709 + $0x388] sm:$0xf]
    %v5937 = vld [vmem:[%s5709 + $0x38c] sm:$0xf]
    %v5938 = vld [vmem:[%s5709 + $0x390] sm:$0xf]
    %v5939 = vld [vmem:[%s5709 + $0x394] sm:$0xf]
    %v5940 = vld [vmem:[%s5709 + $0x398] sm:$0xf]
    %v5941 = vld [vmem:[%s5709 + $0x39c] sm:$0xf]
    %v5942 = vld [vmem:[%s5709 + $0x3a0] sm:$0xf]
    %v5943 = vld [vmem:[%s5709 + $0x3a4] sm:$0xf]
    %v5944 = vld [vmem:[%s5709 + $0x3a8] sm:$0xf]
    %v5945 = vld [vmem:[%s5709 + $0x3ac] sm:$0xf]
    %v5946 = vld [vmem:[%s5709 + $0x3b0] sm:$0xf]
    %v5947 = vld [vmem:[%s5709 + $0x3b4] sm:$0xf]
    %v5948 = vld [vmem:[%s5709 + $0x3b8] sm:$0xf]
    %v5949 = vld [vmem:[%s5709 + $0x3bc] sm:$0xf]
    %v5950 = vld [vmem:[%s5709 + $0x3c0] sm:$0xf]
    %v5951 = vld [vmem:[%s5709 + $0x3c4] sm:$0xf]
    %v5952 = vld [vmem:[%s5709 + $0x3c8] sm:$0xf]
    %v5953 = vld [vmem:[%s5709 + $0x3cc] sm:$0xf]
    %v5954 = vld [vmem:[%s5709 + $0x3d0] sm:$0xf]
    %v5955 = vld [vmem:[%s5709 + $0x3d4] sm:$0xf]
    %v5956 = vld [vmem:[%s5709 + $0x3d8] sm:$0xf]
    %v5957 = vld [vmem:[%s5709 + $0x3dc] sm:$0xf]
    %v5958 = vld [vmem:[%s5709 + $0x3e0] sm:$0xf]
    %v5959 = vld [vmem:[%s5709 + $0x3e4] sm:$0xf]
    %v5960 = vld [vmem:[%s5709 + $0x3e8] sm:$0xf]
    %v5961 = vld [vmem:[%s5709 + $0x3ec] sm:$0xf]
    %v5962 = vld [vmem:[%s5709 + $0x3f0] sm:$0xf]
    %v5963 = vld [vmem:[%s5709 + $0x3f4] sm:$0xf]
    %v5964 = vld [vmem:[%s5709 + $0x3f8] sm:$0xf]
    %v5965 = vld [vmem:[%s5709 + $0x3fc] sm:$0xf]
    %s5966 = scalar_lea.vmem [#allocation5], 1024
    %v5967 = vld [vmem:[%s5966] sm:$0xff]
    %v5968 = vld [vmem:[%s5966 + $0x8] sm:$0xff]
    %v5969 = vld [vmem:[%s5966 + $0x10] sm:$0xff]
    %v5970 = vld [vmem:[%s5966 + $0x18] sm:$0xff]
    %v5971 = vld [vmem:[%s5966 + $0x20] sm:$0xff]
    %v5972 = vld [vmem:[%s5966 + $0x28] sm:$0xff]
    %v5973 = vld [vmem:[%s5966 + $0x30] sm:$0xff]
    %v5974 = vld [vmem:[%s5966 + $0x38] sm:$0xff]
    %v5975 = vld [vmem:[%s5966 + $0x40] sm:$0xff]
    %v5976 = vld [vmem:[%s5966 + $0x48] sm:$0xff]
    %v5977 = vld [vmem:[%s5966 + $0x50] sm:$0xff]
    %v5978 = vld [vmem:[%s5966 + $0x58] sm:$0xff]
    %v5979 = vld [vmem:[%s5966 + $0x60] sm:$0xff]
    %v5980 = vld [vmem:[%s5966 + $0x68] sm:$0xff]
    %v5981 = vld [vmem:[%s5966 + $0x70] sm:$0xff]
    %v5982 = vld [vmem:[%s5966 + $0x78] sm:$0xff]
    %v5983 = vld [vmem:[%s5966 + $0x80] sm:$0xff]
    %v5984 = vld [vmem:[%s5966 + $0x88] sm:$0xff]
    %v5985 = vld [vmem:[%s5966 + $0x90] sm:$0xff]
    %v5986 = vld [vmem:[%s5966 + $0x98] sm:$0xff]
    %v5987 = vld [vmem:[%s5966 + $0xa0] sm:$0xff]
    %v5988 = vld [vmem:[%s5966 + $0xa8] sm:$0xff]
    %v5989 = vld [vmem:[%s5966 + $0xb0] sm:$0xff]
    %v5990 = vld [vmem:[%s5966 + $0xb8] sm:$0xff]
    %v5991 = vld [vmem:[%s5966 + $0xc0] sm:$0xff]
    %v5992 = vld [vmem:[%s5966 + $0xc8] sm:$0xff]
    %v5993 = vld [vmem:[%s5966 + $0xd0] sm:$0xff]
    %v5994 = vld [vmem:[%s5966 + $0xd8] sm:$0xff]
    %v5995 = vld [vmem:[%s5966 + $0xe0] sm:$0xff]
    %v5996 = vld [vmem:[%s5966 + $0xe8] sm:$0xff]
    %v5997 = vld [vmem:[%s5966 + $0xf0] sm:$0xff]
    %v5998 = vld [vmem:[%s5966 + $0xf8] sm:$0xff]
    %v5999 = vld [vmem:[%s5966 + $0x100] sm:$0xff]
    %v6000 = vld [vmem:[%s5966 + $0x108] sm:$0xff]
    %v6001 = vld [vmem:[%s5966 + $0x110] sm:$0xff]
    %v6002 = vld [vmem:[%s5966 + $0x118] sm:$0xff]
    %v6003 = vld [vmem:[%s5966 + $0x120] sm:$0xff]
    %v6004 = vld [vmem:[%s5966 + $0x128] sm:$0xff]
    %v6005 = vld [vmem:[%s5966 + $0x130] sm:$0xff]
    %v6006 = vld [vmem:[%s5966 + $0x138] sm:$0xff]
    %v6007 = vld [vmem:[%s5966 + $0x140] sm:$0xff]
    %v6008 = vld [vmem:[%s5966 + $0x148] sm:$0xff]
    %v6009 = vld [vmem:[%s5966 + $0x150] sm:$0xff]
    %v6010 = vld [vmem:[%s5966 + $0x158] sm:$0xff]
    %v6011 = vld [vmem:[%s5966 + $0x160] sm:$0xff]
    %v6012 = vld [vmem:[%s5966 + $0x168] sm:$0xff]
    %v6013 = vld [vmem:[%s5966 + $0x170] sm:$0xff]
    %v6014 = vld [vmem:[%s5966 + $0x178] sm:$0xff]
    %v6015 = vld [vmem:[%s5966 + $0x180] sm:$0xff]
    %v6016 = vld [vmem:[%s5966 + $0x188] sm:$0xff]
    %v6017 = vld [vmem:[%s5966 + $0x190] sm:$0xff]
    %v6018 = vld [vmem:[%s5966 + $0x198] sm:$0xff]
    %v6019 = vld [vmem:[%s5966 + $0x1a0] sm:$0xff]
    %v6020 = vld [vmem:[%s5966 + $0x1a8] sm:$0xff]
    %v6021 = vld [vmem:[%s5966 + $0x1b0] sm:$0xff]
    %v6022 = vld [vmem:[%s5966 + $0x1b8] sm:$0xff]
    %v6023 = vld [vmem:[%s5966 + $0x1c0] sm:$0xff]
    %v6024 = vld [vmem:[%s5966 + $0x1c8] sm:$0xff]
    %v6025 = vld [vmem:[%s5966 + $0x1d0] sm:$0xff]
    %v6026 = vld [vmem:[%s5966 + $0x1d8] sm:$0xff]
    %v6027 = vld [vmem:[%s5966 + $0x1e0] sm:$0xff]
    %v6028 = vld [vmem:[%s5966 + $0x1e8] sm:$0xff]
    %v6029 = vld [vmem:[%s5966 + $0x1f0] sm:$0xff]
    %v6030 = vld [vmem:[%s5966 + $0x1f8] sm:$0xff]
    %v6031 = vld [vmem:[%s5966 + $0x200] sm:$0xff]
    %v6032 = vld [vmem:[%s5966 + $0x208] sm:$0xff]
    %v6033 = vld [vmem:[%s5966 + $0x210] sm:$0xff]
    %v6034 = vld [vmem:[%s5966 + $0x218] sm:$0xff]
    %v6035 = vld [vmem:[%s5966 + $0x220] sm:$0xff]
    %v6036 = vld [vmem:[%s5966 + $0x228] sm:$0xff]
    %v6037 = vld [vmem:[%s5966 + $0x230] sm:$0xff]
    %v6038 = vld [vmem:[%s5966 + $0x238] sm:$0xff]
    %v6039 = vld [vmem:[%s5966 + $0x240] sm:$0xff]
    %v6040 = vld [vmem:[%s5966 + $0x248] sm:$0xff]
    %v6041 = vld [vmem:[%s5966 + $0x250] sm:$0xff]
    %v6042 = vld [vmem:[%s5966 + $0x258] sm:$0xff]
    %v6043 = vld [vmem:[%s5966 + $0x260] sm:$0xff]
    %v6044 = vld [vmem:[%s5966 + $0x268] sm:$0xff]
    %v6045 = vld [vmem:[%s5966 + $0x270] sm:$0xff]
    %v6046 = vld [vmem:[%s5966 + $0x278] sm:$0xff]
    %v6047 = vld [vmem:[%s5966 + $0x280] sm:$0xff]
    %v6048 = vld [vmem:[%s5966 + $0x288] sm:$0xff]
    %v6049 = vld [vmem:[%s5966 + $0x290] sm:$0xff]
    %v6050 = vld [vmem:[%s5966 + $0x298] sm:$0xff]
    %v6051 = vld [vmem:[%s5966 + $0x2a0] sm:$0xff]
    %v6052 = vld [vmem:[%s5966 + $0x2a8] sm:$0xff]
    %v6053 = vld [vmem:[%s5966 + $0x2b0] sm:$0xff]
    %v6054 = vld [vmem:[%s5966 + $0x2b8] sm:$0xff]
    %v6055 = vld [vmem:[%s5966 + $0x2c0] sm:$0xff]
    %v6056 = vld [vmem:[%s5966 + $0x2c8] sm:$0xff]
    %v6057 = vld [vmem:[%s5966 + $0x2d0] sm:$0xff]
    %v6058 = vld [vmem:[%s5966 + $0x2d8] sm:$0xff]
    %v6059 = vld [vmem:[%s5966 + $0x2e0] sm:$0xff]
    %v6060 = vld [vmem:[%s5966 + $0x2e8] sm:$0xff]
    %v6061 = vld [vmem:[%s5966 + $0x2f0] sm:$0xff]
    %v6062 = vld [vmem:[%s5966 + $0x2f8] sm:$0xff]
    %v6063 = vld [vmem:[%s5966 + $0x300] sm:$0xff]
    %v6064 = vld [vmem:[%s5966 + $0x308] sm:$0xff]
    %v6065 = vld [vmem:[%s5966 + $0x310] sm:$0xff]
    %v6066 = vld [vmem:[%s5966 + $0x318] sm:$0xff]
    %v6067 = vld [vmem:[%s5966 + $0x320] sm:$0xff]
    %v6068 = vld [vmem:[%s5966 + $0x328] sm:$0xff]
    %v6069 = vld [vmem:[%s5966 + $0x330] sm:$0xff]
    %v6070 = vld [vmem:[%s5966 + $0x338] sm:$0xff]
    %v6071 = vld [vmem:[%s5966 + $0x340] sm:$0xff]
    %v6072 = vld [vmem:[%s5966 + $0x348] sm:$0xff]
    %v6073 = vld [vmem:[%s5966 + $0x350] sm:$0xff]
    %v6074 = vld [vmem:[%s5966 + $0x358] sm:$0xff]
    %v6075 = vld [vmem:[%s5966 + $0x360] sm:$0xff]
    %v6076 = vld [vmem:[%s5966 + $0x368] sm:$0xff]
    %v6077 = vld [vmem:[%s5966 + $0x370] sm:$0xff]
    %v6078 = vld [vmem:[%s5966 + $0x378] sm:$0xff]
    %v6079 = vld [vmem:[%s5966 + $0x380] sm:$0xff]
    %v6080 = vld [vmem:[%s5966 + $0x388] sm:$0xff]
    %v6081 = vld [vmem:[%s5966 + $0x390] sm:$0xff]
    %v6082 = vld [vmem:[%s5966 + $0x398] sm:$0xff]
    %v6083 = vld [vmem:[%s5966 + $0x3a0] sm:$0xff]
    %v6084 = vld [vmem:[%s5966 + $0x3a8] sm:$0xff]
    %v6085 = vld [vmem:[%s5966 + $0x3b0] sm:$0xff]
    %v6086 = vld [vmem:[%s5966 + $0x3b8] sm:$0xff]
    %v6087 = vld [vmem:[%s5966 + $0x3c0] sm:$0xff]
    %v6088 = vld [vmem:[%s5966 + $0x3c8] sm:$0xff]
    %v6089 = vld [vmem:[%s5966 + $0x3d0] sm:$0xff]
    %v6090 = vld [vmem:[%s5966 + $0x3d8] sm:$0xff]
    %v6091 = vld [vmem:[%s5966 + $0x3e0] sm:$0xff]
    %v6092 = vld [vmem:[%s5966 + $0x3e8] sm:$0xff]
    %v6093 = vld [vmem:[%s5966 + $0x3f0] sm:$0xff]
    %v6094 = vld [vmem:[%s5966 + $0x3f8] sm:$0xff]
    %v6095 = vpack.c.bf16 %v5642, %v5641
    %v6096 = vlaneseq
    %v6097 = vshrl.u32 %v6096, 7
    %v6098 = vsub.s32 1, %v6097
    %v6099 = vrot.slane %v82, %v6098
    %v6100 = vlaneseq
    %v6101 = vshrl.u32 %v6100, 7
    %v6102 = vsub.s32 3, %v6101
    %v6103 = vrot.slane %v82, %v6102
    %v6104 = vlaneseq
    %v6105 = vshrl.u32 %v6104, 7
    %v6106 = vsub.s32 5, %v6105
    %v6107 = vrot.slane %v82, %v6106
    %v6111 = vlaneseq
    %v6112 = vshrl.u32 %v6111, 7
    %v6113 = vsub.s32 1, %v6112
    %v6114 = vrot.slane %v6099, %v6113
    %v6115 = vlaneseq
    %v6116 = vshrl.u32 %v6115, 7
    %v6117 = vsub.s32 1, %v6116
    %v6118 = vrot.slane %v6103, %v6117
    %v6119 = vlaneseq
    %v6120 = vshrl.u32 %v6119, 7
    %v6121 = vsub.s32 1, %v6120
    %v6122 = vrot.slane %v6107, %v6121
    %v6171 = vunpack.c.l.b16 %v5644
    %v6172 = vunpack.c.l.b16 %v5645
    %v6173 = vunpack.c.l.b16 %v5646
    %v6174 = vunpack.c.l.b16 %v5647
    %v6175 = vunpack.c.l.b16 %v5648
    %v6176 = vunpack.c.l.b16 %v5649
    %v6177 = vunpack.c.l.b16 %v5650
    %v6178 = vunpack.c.l.b16 %v5651
    %v6179 = vunpack.c.l.b16 %v5652
    %v6180 = vunpack.c.l.b16 %v5653
    %v6181 = vunpack.c.l.b16 %v5654
    %v6182 = vunpack.c.l.b16 %v5655
    %v6183 = vunpack.c.l.b16 %v5656
    %v6184 = vunpack.c.l.b16 %v5657
    %v6185 = vunpack.c.l.b16 %v5658
    %v6186 = vunpack.c.l.b16 %v5659
    %v6187 = vunpack.c.l.b16 %v5660
    %v6188 = vunpack.c.l.b16 %v5661
    %v6189 = vunpack.c.l.b16 %v5662
    %v6190 = vunpack.c.l.b16 %v5663
    %v6191 = vunpack.c.l.b16 %v5664
    %v6192 = vunpack.c.l.b16 %v5665
    %v6193 = vunpack.c.l.b16 %v5666
    %v6194 = vunpack.c.l.b16 %v5667
    %v6195 = vunpack.c.l.b16 %v5668
    %v6196 = vunpack.c.l.b16 %v5669
    %v6197 = vunpack.c.l.b16 %v5670
    %v6198 = vunpack.c.l.b16 %v5671
    %v6199 = vunpack.c.l.b16 %v5672
    %v6200 = vunpack.c.l.b16 %v5673
    %v6201 = vunpack.c.l.b16 %v5674
    %v6202 = vunpack.c.l.b16 %v5675
    %v6203 = vunpack.c.l.b16 %v5676
    %v6204 = vunpack.c.l.b16 %v5677
    %v6205 = vunpack.c.l.b16 %v5678
    %v6206 = vunpack.c.l.b16 %v5679
    %v6207 = vunpack.c.l.b16 %v5680
    %v6208 = vunpack.c.l.b16 %v5681
    %v6209 = vunpack.c.l.b16 %v5682
    %v6210 = vunpack.c.l.b16 %v5683
    %v6211 = vunpack.c.l.b16 %v5684
    %v6212 = vunpack.c.l.b16 %v5685
    %v6213 = vunpack.c.l.b16 %v5686
    %v6214 = vunpack.c.l.b16 %v5687
    %v6215 = vunpack.c.l.b16 %v5688
    %v6216 = vunpack.c.l.b16 %v5689
    %v6217 = vunpack.c.l.b16 %v5690
    %v6218 = vunpack.c.l.b16 %v5691
    %v6219 = vpack.c.b16 %v6172, %v6171
    %v6220 = vpack.c.b16 %v6174, %v6173
    %v6221 = vpack.c.b16 %v6176, %v6175
    %v6222 = vpack.c.b16 %v6178, %v6177
    %v6223 = vpack.c.b16 %v6180, %v6179
    %v6224 = vpack.c.b16 %v6182, %v6181
    %v6225 = vpack.c.b16 %v6184, %v6183
    %v6226 = vpack.c.b16 %v6186, %v6185
    %v6227 = vpack.c.b16 %v6188, %v6187
    %v6228 = vpack.c.b16 %v6190, %v6189
    %v6229 = vpack.c.b16 %v6192, %v6191
    %v6230 = vpack.c.b16 %v6194, %v6193
    %v6231 = vpack.c.b16 %v6196, %v6195
    %v6232 = vpack.c.b16 %v6198, %v6197
    %v6233 = vpack.c.b16 %v6200, %v6199
    %v6234 = vpack.c.b16 %v6202, %v6201
    %v6235 = vpack.c.b16 %v6204, %v6203
    %v6236 = vpack.c.b16 %v6206, %v6205
    %v6237 = vpack.c.b16 %v6208, %v6207
    %v6238 = vpack.c.b16 %v6210, %v6209
    %v6239 = vpack.c.b16 %v6212, %v6211
    %v6240 = vpack.c.b16 %v6214, %v6213
    %v6241 = vpack.c.b16 %v6216, %v6215
    %v6242 = vpack.c.b16 %v6218, %v6217
    %6267 = vmatprep.subr.bf16.mxu0 0
    %6268 = vmatpush1.bf16.xpose.msra.mxu0 %v6219
    %6269 = vmatprep.subr.bf16.mxu0 0
    %6270 = vmatpush1.bf16.xpose.msra.mxu0 %v6220
    %6271 = vmatprep.subr.bf16.mxu0 0
    %6272 = vmatpush1.bf16.xpose.msra.mxu0 %v6221
    %6273 = vmatprep.subr.bf16.mxu0 0
    %6274 = vmatpush1.bf16.xpose.msra.mxu0 %v6222
    %6275 = vmatprep.subr.bf16.mxu0 0
    %6276 = vmatpush1.bf16.xpose.msra.mxu0 %v6223
    %6277 = vmatprep.subr.bf16.mxu0 0
    %6278 = vmatpush1.bf16.xpose.msra.mxu0 %v6224
    %6279 = vmatprep.subr.bf16.mxu0 0
    %6280 = vmatpush1.bf16.xpose.msra.mxu0 %v6225
    %6281 = vmatprep.subr.bf16.mxu0 0
    %6282 = vmatpush1.bf16.xpose.msra.mxu0 %v6226
    %6283 = vmatprep.subr.bf16.mxu0 0
    %6284 = vmatpush1.bf16.xpose.msra.mxu0 %v6227
    %6285 = vmatprep.subr.bf16.mxu0 0
    %6286 = vmatpush1.bf16.xpose.msra.mxu0 %v6228
    %6287 = vmatprep.subr.bf16.mxu0 0
    %6288 = vmatpush1.bf16.xpose.msra.mxu0 %v6229
    %6289 = vmatprep.subr.bf16.mxu0 0
    %6290 = vmatpush1.bf16.xpose.msra.mxu0 %v6230
    %6291 = vmatprep.subr.bf16.mxu0 0
    %6292 = vmatpush1.bf16.xpose.msra.mxu0 %v6231
    %6293 = vmatprep.subr.bf16.mxu0 0
    %6294 = vmatpush1.bf16.xpose.msra.mxu0 %v6232
    %6295 = vmatprep.subr.bf16.mxu0 0
    %6296 = vmatpush1.bf16.xpose.msra.mxu0 %v6233
    %6297 = vmatprep.subr.bf16.mxu0 0
    %6298 = vmatpush1.bf16.xpose.msra.mxu0 %v6234
    %6299 = vmatprep.mubr.bf16.mxu0 0
    %6300 = vmatmul.mubr.bf16.gmra.mrb[0].mxu0 %v6095
    %v6301 = vpop.f32.mrb[0].mxu0
    %v6302 = vadd.f32 %v6114, %v6301
    %v6303 = vpop.f32.mrb[0].mxu0
    %v6304 = vadd.f32 %v6118, %v6303
    %v6305 = vpop.f32.mrb[0].mxu0
    %v6306 = vadd.f32 %v6114, %v6305
    %v6307 = vpop.f32.mrb[0].mxu0
    %v6308 = vadd.f32 %v6118, %v6307
    %6309 = vdwg.mxu0
    %6310 = vmatprep.subr.bf16.mxu0 0
    %6311 = vmatpush1.bf16.xpose.msra.mxu0 %v6235
    %6312 = vmatprep.subr.bf16.mxu0 0
    %6313 = vmatpush1.bf16.xpose.msra.mxu0 %v6236
    %6314 = vmatprep.subr.bf16.mxu0 0
    %6315 = vmatpush1.bf16.xpose.msra.mxu0 %v6237
    %6316 = vmatprep.subr.bf16.mxu0 0
    %6317 = vmatpush1.bf16.xpose.msra.mxu0 %v6238
    %6318 = vmatprep.subr.bf16.mxu0 0
    %6319 = vmatpush1.bf16.xpose.msra.mxu0 %v6239
    %6320 = vmatprep.subr.bf16.mxu0 0
    %6321 = vmatpush1.bf16.xpose.msra.mxu0 %v6240
    %6322 = vmatprep.subr.bf16.mxu0 0
    %6323 = vmatpush1.bf16.xpose.msra.mxu0 %v6241
    %6324 = vmatprep.subr.bf16.mxu0 0
    %6325 = vmatpush1.bf16.xpose.msra.mxu0 %v6242
    %6326 = vmatprep.subr.bf16.mxu0 0
    %6327 = vmatpush1.bf16.xpose.msra.mxu0 0
    %6328 = vmatprep.subr.bf16.mxu0 0
    %6329 = vmatpush1.bf16.xpose.msra.mxu0 0
    %6330 = vmatprep.subr.bf16.mxu0 0
    %6331 = vmatpush1.bf16.xpose.msra.mxu0 0
    %6332 = vmatprep.subr.bf16.mxu0 0
    %6333 = vmatpush1.bf16.xpose.msra.mxu0 0
    %6334 = vmatprep.subr.bf16.mxu0 0
    %6335 = vmatpush1.bf16.xpose.msra.mxu0 0
    %6336 = vmatprep.subr.bf16.mxu0 0
    %6337 = vmatpush1.bf16.xpose.msra.mxu0 0
    %6338 = vmatprep.subr.bf16.mxu0 0
    %6339 = vmatpush1.bf16.xpose.msra.mxu0 0
    %6340 = vmatprep.subr.bf16.mxu0 0
    %6341 = vmatpush1.bf16.xpose.msra.mxu0 0
    %6342 = vmatprep.mubr.bf16.mxu0 0
    %6343 = vmatmul.mubr.bf16.gmra.mrb[0].mxu0 %v6095
    %v6344 = vpop.f32.mrb[0].mxu0
    %v6345 = vadd.f32 %v6122, %v6344
    %v6346 = vpop.f32.mrb[0].mxu0
    %v6347 = vpop.f32.mrb[0].mxu0
    %v6348 = vadd.f32 %v6122, %v6347
    %v6349 = vpop.f32.mrb[0].mxu0
    %6350 = vdwg.mxu0
    %v6351 = vpack.c.bf16 %v6306, %v6302
    %v6352 = vpack.c.bf16 %v6308, %v6304
    %v6353 = vpack.c.bf16 %v6348, %v6345
    %v6355 = vunpack.c.l.b16 %v6351
    %v6356 = vunpack.c.h.b16 %v6351
    %v6357 = vpack.c.b16 %v6355, %v6355
    %v6358 = vpack.c.b16 %v6356, %v6356
    %v6360 = vunpack.c.l.b16 %v6352
    %v6361 = vunpack.c.h.b16 %v6352
    %v6362 = vpack.c.b16 %v6360, %v6360
    %v6363 = vpack.c.b16 %v6361, %v6361
    %v6365 = vunpack.c.l.b16 %v6353
    %v6366 = vunpack.c.h.b16 %v6353
    %v6367 = vpack.c.b16 %v6365, %v6365
    %v6368 = vpack.c.b16 %v6366, %v6366
    %v6370 = vsel %vm816, %v6357, 0
    %v6373 = vsel %vm816, %v6362, 0
    %6375 = vmatprep.subr.bf16.mxu0 0
    %6376 = vmatpush1.bf16.xpose.msra.mxu0 %v6373
    %6377 = vmatprep.subr.bf16.mxu0 0
    %6378 = vmatpush1.bf16.xpose.msra.mxu0 0
    %6379 = vmatprep.subr.bf16.mxu0 0
    %6380 = vmatpush1.bf16.xpose.msra.mxu0 0
    %6381 = vmatprep.subr.bf16.mxu0 0
    %6382 = vmatpush1.bf16.xpose.msra.mxu0 0
    %6383 = vmatprep.subr.bf16.mxu0 0
    %6384 = vmatpush1.bf16.xpose.msra.mxu0 0
    %6385 = vmatprep.subr.bf16.mxu0 0
    %6386 = vmatpush1.bf16.xpose.msra.mxu0 0
    %6387 = vmatprep.subr.bf16.mxu0 0
    %6388 = vmatpush1.bf16.xpose.msra.mxu0 0
    %6389 = vmatprep.subr.bf16.mxu0 0
    %6390 = vmatpush1.bf16.xpose.msra.mxu0 0
    %6391 = vmatprep.subr.bf16.mxu0 0
    %6392 = vmatpush1.bf16.xpose.msra.mxu0 0
    %6393 = vmatprep.subr.bf16.mxu0 0
    %6394 = vmatpush1.bf16.xpose.msra.mxu0 0
    %6395 = vmatprep.subr.bf16.mxu0 0
    %6396 = vmatpush1.bf16.xpose.msra.mxu0 0
    %6397 = vmatprep.subr.bf16.mxu0 0
    %6398 = vmatpush1.bf16.xpose.msra.mxu0 0
    %6399 = vmatprep.subr.bf16.mxu0 0
    %6400 = vmatpush1.bf16.xpose.msra.mxu0 0
    %6401 = vmatprep.subr.bf16.mxu0 0
    %6402 = vmatpush1.bf16.xpose.msra.mxu0 0
    %6403 = vmatprep.subr.bf16.mxu0 0
    %6404 = vmatpush1.bf16.xpose.msra.mxu0 0
    %6405 = vmatprep.subr.bf16.mxu0 0
    %6406 = vmatpush1.bf16.xpose.msra.mxu0 0
    %6407 = vmatprep.mubr.bf16.mxu0 0
    %6408 = vmatmul.mubr.bf16.gmra.mrb[0].mxu0 %v6370
    %v6409 = vpop.f32.mrb[0].mxu0
    %v6410 = vadd.f32 0.0, %v6409
    %v6411 = vpop.f32.mrb[0].mxu0
    %v6412 = vpop.f32.mrb[0].mxu0
    %v6413 = vpop.f32.mrb[0].mxu0
    %6414 = vdwg.mxu0
    %v6416 = vsel %vm816, %v6358, 0
    %v6419 = vsel %vm816, %v6363, 0
    %6421 = vmatprep.subr.bf16.mxu0 0
    %6422 = vmatpush1.bf16.xpose.msra.mxu0 %v6419
    %6423 = vmatprep.subr.bf16.mxu0 0
    %6424 = vmatpush1.bf16.xpose.msra.mxu0 0
    %6425 = vmatprep.subr.bf16.mxu0 0
    %6426 = vmatpush1.bf16.xpose.msra.mxu0 0
    %6427 = vmatprep.subr.bf16.mxu0 0
    %6428 = vmatpush1.bf16.xpose.msra.mxu0 0
    %6429 = vmatprep.subr.bf16.mxu0 0
    %6430 = vmatpush1.bf16.xpose.msra.mxu0 0
    %6431 = vmatprep.subr.bf16.mxu0 0
    %6432 = vmatpush1.bf16.xpose.msra.mxu0 0
    %6433 = vmatprep.subr.bf16.mxu0 0
    %6434 = vmatpush1.bf16.xpose.msra.mxu0 0
    %6435 = vmatprep.subr.bf16.mxu0 0
    %6436 = vmatpush1.bf16.xpose.msra.mxu0 0
    %6437 = vmatprep.subr.bf16.mxu0 0
    %6438 = vmatpush1.bf16.xpose.msra.mxu0 0
    %6439 = vmatprep.subr.bf16.mxu0 0
    %6440 = vmatpush1.bf16.xpose.msra.mxu0 0
    %6441 = vmatprep.subr.bf16.mxu0 0
    %6442 = vmatpush1.bf16.xpose.msra.mxu0 0
    %6443 = vmatprep.subr.bf16.mxu0 0
    %6444 = vmatpush1.bf16.xpose.msra.mxu0 0
    %6445 = vmatprep.subr.bf16.mxu0 0
    %6446 = vmatpush1.bf16.xpose.msra.mxu0 0
    %6447 = vmatprep.subr.bf16.mxu0 0
    %6448 = vmatpush1.bf16.xpose.msra.mxu0 0
    %6449 = vmatprep.subr.bf16.mxu0 0
    %6450 = vmatpush1.bf16.xpose.msra.mxu0 0
    %6451 = vmatprep.subr.bf16.mxu0 0
    %6452 = vmatpush1.bf16.xpose.msra.mxu0 0
    %6453 = vmatprep.mubr.bf16.mxu0 0
    %6454 = vmatmul.mubr.bf16.gmra.mrb[0].mxu0 %v6416
    %v6455 = vpop.f32.mrb[0].mxu0
    %v6456 = vadd.f32 0.0, %v6455
    %v6457 = vpop.f32.mrb[0].mxu0
    %v6458 = vpop.f32.mrb[0].mxu0
    %v6459 = vpop.f32.mrb[0].mxu0
    %6460 = vdwg.mxu0
    %v6461 = vsel %vm909, %v6410, -inf
    %6462 = vmax.xlane.f32.xlu0 %v6461
    %v6463 = vpop.xlane.xlu0 %6462
    %v6464 = vsel %vm909, %v6456, -inf
    %6465 = vmax.xlane.f32.xlu0 %v6464
    %v6466 = vpop.xlane.xlu0 %6465
    %v6467 = vsub.f32 %v6410, %v6463
    %v6468 = vsub.f32 %v6456, %v6466
    %v6469 = vmul.f32 %v6467, 1.442695
    %v6470 = vpow.pop %v6469
    %v6471 = vmul.f32 %v6468, 1.442695
    %v6472 = vpow.pop %v6471
    %v6473 = vsel %vm909, %v6470, 0.0
    %6474 = vadd.xlane.f32.xlu0 %v6473
    %v6475 = vpop.xlane.xlu0 %6474
    %v6476 = vsel %vm909, %v6472, 0.0
    %6477 = vadd.xlane.f32.xlu0 %v6476
    %v6478 = vpop.xlane.xlu0 %6477
    %v6479 = vrcp.pop %v6475
    %v6480 = vrcp.pop %v6478
    %v6481 = vmul.f32 %v6470, %v6479
    %v6482 = vmul.f32 %v6472, %v6480
    %v6483 = vpack.c.bf16 %v6481, %v6481
    %v6484 = vpack.c.bf16 %v6482, %v6482
    %v6486 = vsel %vm909, %v6483, 0
    %v6489 = vsel %vm937, %v6367, 0
    %6491 = vmatprep.subr.bf16.mxu0 0
    %6492 = vmatpush1.bf16.msra.mxu0 %v6489
    %6493 = vmatprep.subr.bf16.mxu0 0
    %6494 = vmatpush1.bf16.msra.mxu0 0
    %6495 = vmatprep.subr.bf16.mxu0 0
    %6496 = vmatpush1.bf16.msra.mxu0 0
    %6497 = vmatprep.subr.bf16.mxu0 0
    %6498 = vmatpush1.bf16.msra.mxu0 0
    %6499 = vmatprep.subr.bf16.mxu0 0
    %6500 = vmatpush1.bf16.msra.mxu0 0
    %6501 = vmatprep.subr.bf16.mxu0 0
    %6502 = vmatpush1.bf16.msra.mxu0 0
    %6503 = vmatprep.subr.bf16.mxu0 0
    %6504 = vmatpush1.bf16.msra.mxu0 0
    %6505 = vmatprep.subr.bf16.mxu0 0
    %6506 = vmatpush1.bf16.msra.mxu0 0
    %6507 = vmatprep.subr.bf16.mxu0 0
    %6508 = vmatpush1.bf16.msra.mxu0 0
    %6509 = vmatprep.subr.bf16.mxu0 0
    %6510 = vmatpush1.bf16.msra.mxu0 0
    %6511 = vmatprep.subr.bf16.mxu0 0
    %6512 = vmatpush1.bf16.msra.mxu0 0
    %6513 = vmatprep.subr.bf16.mxu0 0
    %6514 = vmatpush1.bf16.msra.mxu0 0
    %6515 = vmatprep.subr.bf16.mxu0 0
    %6516 = vmatpush1.bf16.msra.mxu0 0
    %6517 = vmatprep.subr.bf16.mxu0 0
    %6518 = vmatpush1.bf16.msra.mxu0 0
    %6519 = vmatprep.subr.bf16.mxu0 0
    %6520 = vmatpush1.bf16.msra.mxu0 0
    %6521 = vmatprep.subr.bf16.mxu0 0
    %6522 = vmatpush1.bf16.msra.mxu0 0
    %6523 = vmatprep.mubr.bf16.mxu0 0
    %6524 = vmatmul.mubr.bf16.gmra.mrb[0].mxu0 %v6486
    %v6525 = vpop.f32.mrb[0].mxu0
    %v6526 = vadd.f32 0.0, %v6525
    %v6527 = vpop.f32.mrb[0].mxu0
    %v6528 = vpop.f32.mrb[0].mxu0
    %v6529 = vpop.f32.mrb[0].mxu0
    %6530 = vdwg.mxu0
    %v6532 = vsel %vm909, %v6484, 0
    %v6535 = vsel %vm937, %v6368, 0
    %6537 = vmatprep.subr.bf16.mxu0 0
    %6538 = vmatpush1.bf16.msra.mxu0 %v6535
    %6539 = vmatprep.subr.bf16.mxu0 0
    %6540 = vmatpush1.bf16.msra.mxu0 0
    %6541 = vmatprep.subr.bf16.mxu0 0
    %6542 = vmatpush1.bf16.msra.mxu0 0
    %6543 = vmatprep.subr.bf16.mxu0 0
    %6544 = vmatpush1.bf16.msra.mxu0 0
    %6545 = vmatprep.subr.bf16.mxu0 0
    %6546 = vmatpush1.bf16.msra.mxu0 0
    %6547 = vmatprep.subr.bf16.mxu0 0
    %6548 = vmatpush1.bf16.msra.mxu0 0
    %6549 = vmatprep.subr.bf16.mxu0 0
    %6550 = vmatpush1.bf16.msra.mxu0 0
    %6551 = vmatprep.subr.bf16.mxu0 0
    %6552 = vmatpush1.bf16.msra.mxu0 0
    %6553 = vmatprep.subr.bf16.mxu0 0
    %6554 = vmatpush1.bf16.msra.mxu0 0
    %6555 = vmatprep.subr.bf16.mxu0 0
    %6556 = vmatpush1.bf16.msra.mxu0 0
    %6557 = vmatprep.subr.bf16.mxu0 0
    %6558 = vmatpush1.bf16.msra.mxu0 0
    %6559 = vmatprep.subr.bf16.mxu0 0
    %6560 = vmatpush1.bf16.msra.mxu0 0
    %6561 = vmatprep.subr.bf16.mxu0 0
    %6562 = vmatpush1.bf16.msra.mxu0 0
    %6563 = vmatprep.subr.bf16.mxu0 0
    %6564 = vmatpush1.bf16.msra.mxu0 0
    %6565 = vmatprep.subr.bf16.mxu0 0
    %6566 = vmatpush1.bf16.msra.mxu0 0
    %6567 = vmatprep.subr.bf16.mxu0 0
    %6568 = vmatpush1.bf16.msra.mxu0 0
    %6569 = vmatprep.mubr.bf16.mxu0 0
    %6570 = vmatmul.mubr.bf16.gmra.mrb[0].mxu0 %v6532
    %v6571 = vpop.f32.mrb[0].mxu0
    %v6572 = vadd.f32 0.0, %v6571
    %v6573 = vpop.f32.mrb[0].mxu0
    %v6574 = vpop.f32.mrb[0].mxu0
    %v6575 = vpop.f32.mrb[0].mxu0
    %6576 = vdwg.mxu0
    %v6577 = vpack.c.bf16 %v6572, %v6526
    %6578 = vrot.lane.b32.xlu0 %v6357, 112
    %v6579 = vpop.permute.xlu0 %6578
    %6580 = vrot.lane.b32.xlu0 %v6362, 112
    %v6581 = vpop.permute.xlu0 %6580
    %v6583 = vsel %vm816, %v6579, 0
    %v6586 = vsel %vm816, %v6581, 0
    %6588 = vmatprep.subr.bf16.mxu0 0
    %6589 = vmatpush1.bf16.xpose.msra.mxu0 %v6586
    %6590 = vmatprep.subr.bf16.mxu0 0
    %6591 = vmatpush1.bf16.xpose.msra.mxu0 0
    %6592 = vmatprep.subr.bf16.mxu0 0
    %6593 = vmatpush1.bf16.xpose.msra.mxu0 0
    %6594 = vmatprep.subr.bf16.mxu0 0
    %6595 = vmatpush1.bf16.xpose.msra.mxu0 0
    %6596 = vmatprep.subr.bf16.mxu0 0
    %6597 = vmatpush1.bf16.xpose.msra.mxu0 0
    %6598 = vmatprep.subr.bf16.mxu0 0
    %6599 = vmatpush1.bf16.xpose.msra.mxu0 0
    %6600 = vmatprep.subr.bf16.mxu0 0
    %6601 = vmatpush1.bf16.xpose.msra.mxu0 0
    %6602 = vmatprep.subr.bf16.mxu0 0
    %6603 = vmatpush1.bf16.xpose.msra.mxu0 0
    %6604 = vmatprep.subr.bf16.mxu0 0
    %6605 = vmatpush1.bf16.xpose.msra.mxu0 0
    %6606 = vmatprep.subr.bf16.mxu0 0
    %6607 = vmatpush1.bf16.xpose.msra.mxu0 0
    %6608 = vmatprep.subr.bf16.mxu0 0
    %6609 = vmatpush1.bf16.xpose.msra.mxu0 0
    %6610 = vmatprep.subr.bf16.mxu0 0
    %6611 = vmatpush1.bf16.xpose.msra.mxu0 0
    %6612 = vmatprep.subr.bf16.mxu0 0
    %6613 = vmatpush1.bf16.xpose.msra.mxu0 0
    %6614 = vmatprep.subr.bf16.mxu0 0
    %6615 = vmatpush1.bf16.xpose.msra.mxu0 0
    %6616 = vmatprep.subr.bf16.mxu0 0
    %6617 = vmatpush1.bf16.xpose.msra.mxu0 0
    %6618 = vmatprep.subr.bf16.mxu0 0
    %6619 = vmatpush1.bf16.xpose.msra.mxu0 0
    %6620 = vmatprep.mubr.bf16.mxu0 0
    %6621 = vmatmul.mubr.bf16.gmra.mrb[0].mxu0 %v6583
    %v6622 = vpop.f32.mrb[0].mxu0
    %v6623 = vadd.f32 0.0, %v6622
    %v6624 = vpop.f32.mrb[0].mxu0
    %v6625 = vpop.f32.mrb[0].mxu0
    %v6626 = vpop.f32.mrb[0].mxu0
    %6627 = vdwg.mxu0
    %6628 = vrot.lane.b32.xlu0 %v6358, 112
    %v6629 = vpop.permute.xlu0 %6628
    %6630 = vrot.lane.b32.xlu0 %v6363, 112
    %v6631 = vpop.permute.xlu0 %6630
    %v6633 = vsel %vm816, %v6629, 0
    %v6636 = vsel %vm816, %v6631, 0
    %6638 = vmatprep.subr.bf16.mxu0 0
    %6639 = vmatpush1.bf16.xpose.msra.mxu0 %v6636
    %6640 = vmatprep.subr.bf16.mxu0 0
    %6641 = vmatpush1.bf16.xpose.msra.mxu0 0
    %6642 = vmatprep.subr.bf16.mxu0 0
    %6643 = vmatpush1.bf16.xpose.msra.mxu0 0
    %6644 = vmatprep.subr.bf16.mxu0 0
    %6645 = vmatpush1.bf16.xpose.msra.mxu0 0
    %6646 = vmatprep.subr.bf16.mxu0 0
    %6647 = vmatpush1.bf16.xpose.msra.mxu0 0
    %6648 = vmatprep.subr.bf16.mxu0 0
    %6649 = vmatpush1.bf16.xpose.msra.mxu0 0
    %6650 = vmatprep.subr.bf16.mxu0 0
    %6651 = vmatpush1.bf16.xpose.msra.mxu0 0
    %6652 = vmatprep.subr.bf16.mxu0 0
    %6653 = vmatpush1.bf16.xpose.msra.mxu0 0
    %6654 = vmatprep.subr.bf16.mxu0 0
    %6655 = vmatpush1.bf16.xpose.msra.mxu0 0
    %6656 = vmatprep.subr.bf16.mxu0 0
    %6657 = vmatpush1.bf16.xpose.msra.mxu0 0
    %6658 = vmatprep.subr.bf16.mxu0 0
    %6659 = vmatpush1.bf16.xpose.msra.mxu0 0
    %6660 = vmatprep.subr.bf16.mxu0 0
    %6661 = vmatpush1.bf16.xpose.msra.mxu0 0
    %6662 = vmatprep.subr.bf16.mxu0 0
    %6663 = vmatpush1.bf16.xpose.msra.mxu0 0
    %6664 = vmatprep.subr.bf16.mxu0 0
    %6665 = vmatpush1.bf16.xpose.msra.mxu0 0
    %6666 = vmatprep.subr.bf16.mxu0 0
    %6667 = vmatpush1.bf16.xpose.msra.mxu0 0
    %6668 = vmatprep.subr.bf16.mxu0 0
    %6669 = vmatpush1.bf16.xpose.msra.mxu0 0
    %6670 = vmatprep.mubr.bf16.mxu0 0
    %6671 = vmatmul.mubr.bf16.gmra.mrb[0].mxu0 %v6633
    %v6672 = vpop.f32.mrb[0].mxu0
    %v6673 = vadd.f32 0.0, %v6672
    %v6674 = vpop.f32.mrb[0].mxu0
    %v6675 = vpop.f32.mrb[0].mxu0
    %v6676 = vpop.f32.mrb[0].mxu0
    %6677 = vdwg.mxu0
    %v6678 = vsel %vm909, %v6623, -inf
    %6679 = vmax.xlane.f32.xlu0 %v6678
    %v6680 = vpop.xlane.xlu0 %6679
    %v6681 = vsel %vm909, %v6673, -inf
    %6682 = vmax.xlane.f32.xlu0 %v6681
    %v6683 = vpop.xlane.xlu0 %6682
    %v6684 = vsub.f32 %v6623, %v6680
    %v6685 = vsub.f32 %v6673, %v6683
    %v6686 = vmul.f32 %v6684, 1.442695
    %v6687 = vpow.pop %v6686
    %v6688 = vmul.f32 %v6685, 1.442695
    %v6689 = vpow.pop %v6688
    %v6690 = vsel %vm909, %v6687, 0.0
    %6691 = vadd.xlane.f32.xlu0 %v6690
    %v6692 = vpop.xlane.xlu0 %6691
    %v6693 = vsel %vm909, %v6689, 0.0
    %6694 = vadd.xlane.f32.xlu0 %v6693
    %v6695 = vpop.xlane.xlu0 %6694
    %v6696 = vrcp.pop %v6692
    %v6697 = vrcp.pop %v6695
    %v6698 = vmul.f32 %v6687, %v6696
    %v6699 = vmul.f32 %v6689, %v6697
    %v6700 = vpack.c.bf16 %v6698, %v6698
    %v6701 = vpack.c.bf16 %v6699, %v6699
    %6702 = vrot.lane.b32.xlu0 %v6367, 112
    %v6703 = vpop.permute.xlu0 %6702
    %v6705 = vsel %vm909, %v6700, 0
    %v6708 = vsel %vm937, %v6703, 0
    %6710 = vmatprep.subr.bf16.mxu0 0
    %6711 = vmatpush1.bf16.msra.mxu0 %v6708
    %6712 = vmatprep.subr.bf16.mxu0 0
    %6713 = vmatpush1.bf16.msra.mxu0 0
    %6714 = vmatprep.subr.bf16.mxu0 0
    %6715 = vmatpush1.bf16.msra.mxu0 0
    %6716 = vmatprep.subr.bf16.mxu0 0
    %6717 = vmatpush1.bf16.msra.mxu0 0
    %6718 = vmatprep.subr.bf16.mxu0 0
    %6719 = vmatpush1.bf16.msra.mxu0 0
    %6720 = vmatprep.subr.bf16.mxu0 0
    %6721 = vmatpush1.bf16.msra.mxu0 0
    %6722 = vmatprep.subr.bf16.mxu0 0
    %6723 = vmatpush1.bf16.msra.mxu0 0
    %6724 = vmatprep.subr.bf16.mxu0 0
    %6725 = vmatpush1.bf16.msra.mxu0 0
    %6726 = vmatprep.subr.bf16.mxu0 0
    %6727 = vmatpush1.bf16.msra.mxu0 0
    %6728 = vmatprep.subr.bf16.mxu0 0
    %6729 = vmatpush1.bf16.msra.mxu0 0
    %6730 = vmatprep.subr.bf16.mxu0 0
    %6731 = vmatpush1.bf16.msra.mxu0 0
    %6732 = vmatprep.subr.bf16.mxu0 0
    %6733 = vmatpush1.bf16.msra.mxu0 0
    %6734 = vmatprep.subr.bf16.mxu0 0
    %6735 = vmatpush1.bf16.msra.mxu0 0
    %6736 = vmatprep.subr.bf16.mxu0 0
    %6737 = vmatpush1.bf16.msra.mxu0 0
    %6738 = vmatprep.subr.bf16.mxu0 0
    %6739 = vmatpush1.bf16.msra.mxu0 0
    %6740 = vmatprep.subr.bf16.mxu0 0
    %6741 = vmatpush1.bf16.msra.mxu0 0
    %6742 = vmatprep.mubr.bf16.mxu0 0
    %6743 = vmatmul.mubr.bf16.gmra.mrb[0].mxu0 %v6705
    %v6744 = vpop.f32.mrb[0].mxu0
    %v6745 = vadd.f32 0.0, %v6744
    %v6746 = vpop.f32.mrb[0].mxu0
    %v6747 = vpop.f32.mrb[0].mxu0
    %v6748 = vpop.f32.mrb[0].mxu0
    %6749 = vdwg.mxu0
    %6750 = vrot.lane.b32.xlu0 %v6368, 112
    %v6751 = vpop.permute.xlu0 %6750
    %v6753 = vsel %vm909, %v6701, 0
    %v6756 = vsel %vm937, %v6751, 0
    %6758 = vmatprep.subr.bf16.mxu0 0
    %6759 = vmatpush1.bf16.msra.mxu0 %v6756
    %6760 = vmatprep.subr.bf16.mxu0 0
    %6761 = vmatpush1.bf16.msra.mxu0 0
    %6762 = vmatprep.subr.bf16.mxu0 0
    %6763 = vmatpush1.bf16.msra.mxu0 0
    %6764 = vmatprep.subr.bf16.mxu0 0
    %6765 = vmatpush1.bf16.msra.mxu0 0
    %6766 = vmatprep.subr.bf16.mxu0 0
    %6767 = vmatpush1.bf16.msra.mxu0 0
    %6768 = vmatprep.subr.bf16.mxu0 0
    %6769 = vmatpush1.bf16.msra.mxu0 0
    %6770 = vmatprep.subr.bf16.mxu0 0
    %6771 = vmatpush1.bf16.msra.mxu0 0
    %6772 = vmatprep.subr.bf16.mxu0 0
    %6773 = vmatpush1.bf16.msra.mxu0 0
    %6774 = vmatprep.subr.bf16.mxu0 0
    %6775 = vmatpush1.bf16.msra.mxu0 0
    %6776 = vmatprep.subr.bf16.mxu0 0
    %6777 = vmatpush1.bf16.msra.mxu0 0
    %6778 = vmatprep.subr.bf16.mxu0 0
    %6779 = vmatpush1.bf16.msra.mxu0 0
    %6780 = vmatprep.subr.bf16.mxu0 0
    %6781 = vmatpush1.bf16.msra.mxu0 0
    %6782 = vmatprep.subr.bf16.mxu0 0
    %6783 = vmatpush1.bf16.msra.mxu0 0
    %6784 = vmatprep.subr.bf16.mxu0 0
    %6785 = vmatpush1.bf16.msra.mxu0 0
    %6786 = vmatprep.subr.bf16.mxu0 0
    %6787 = vmatpush1.bf16.msra.mxu0 0
    %6788 = vmatprep.subr.bf16.mxu0 0
    %6789 = vmatpush1.bf16.msra.mxu0 0
    %6790 = vmatprep.mubr.bf16.mxu0 0
    %6791 = vmatmul.mubr.bf16.gmra.mrb[0].mxu0 %v6753
    %v6792 = vpop.f32.mrb[0].mxu0
    %v6793 = vadd.f32 0.0, %v6792
    %v6794 = vpop.f32.mrb[0].mxu0
    %v6795 = vpop.f32.mrb[0].mxu0
    %v6796 = vpop.f32.mrb[0].mxu0
    %6797 = vdwg.mxu0
    %v6798 = vpack.c.bf16 %v6793, %v6745
    %v6815 = vunpack.c.l.b16 %v5693
    %v6816 = vunpack.c.l.b16 %v5694
    %v6817 = vunpack.c.l.b16 %v5695
    %v6818 = vunpack.c.l.b16 %v5696
    %v6819 = vunpack.c.l.b16 %v5697
    %v6820 = vunpack.c.l.b16 %v5698
    %v6821 = vunpack.c.l.b16 %v5699
    %v6822 = vunpack.c.l.b16 %v5700
    %v6823 = vunpack.c.l.b16 %v5701
    %v6824 = vunpack.c.l.b16 %v5702
    %v6825 = vunpack.c.l.b16 %v5703
    %v6826 = vunpack.c.l.b16 %v5704
    %v6827 = vunpack.c.l.b16 %v5705
    %v6828 = vunpack.c.l.b16 %v5706
    %v6829 = vunpack.c.l.b16 %v5707
    %v6830 = vunpack.c.l.b16 %v5708
    %v6831 = vpack.c.b16 %v6816, %v6815
    %v6832 = vpack.c.b16 %v6818, %v6817
    %v6833 = vpack.c.b16 %v6820, %v6819
    %v6834 = vpack.c.b16 %v6822, %v6821
    %v6835 = vpack.c.b16 %v6824, %v6823
    %v6836 = vpack.c.b16 %v6826, %v6825
    %v6837 = vpack.c.b16 %v6828, %v6827
    %v6838 = vpack.c.b16 %v6830, %v6829
    %6839 = vrot.lane.b32.xlu0 %v6831, 112
    %v6840 = vpop.permute.xlu0 %6839
    %6841 = vrot.lane.b32.xlu0 %v6832, 112
    %v6842 = vpop.permute.xlu0 %6841
    %6843 = vrot.lane.b32.xlu0 %v6833, 112
    %v6844 = vpop.permute.xlu0 %6843
    %6845 = vrot.lane.b32.xlu0 %v6834, 112
    %v6846 = vpop.permute.xlu0 %6845
    %6847 = vrot.lane.b32.xlu0 %v6835, 112
    %v6848 = vpop.permute.xlu0 %6847
    %6849 = vrot.lane.b32.xlu0 %v6836, 112
    %v6850 = vpop.permute.xlu0 %6849
    %6851 = vrot.lane.b32.xlu0 %v6837, 112
    %v6852 = vpop.permute.xlu0 %6851
    %6853 = vrot.lane.b32.xlu0 %v6838, 112
    %v6854 = vpop.permute.xlu0 %6853
    %v6856 = vsel %vm816, %v6798, 0
    %v6859 = vsel %vm816, %v6840, 0
    %v6862 = vsel %vm816, %v6842, 0
    %v6865 = vsel %vm816, %v6844, 0
    %v6868 = vsel %vm816, %v6846, 0
    %v6871 = vsel %vm816, %v6848, 0
    %v6874 = vsel %vm816, %v6850, 0
    %v6877 = vsel %vm816, %v6852, 0
    %v6880 = vsel %vm816, %v6854, 0
    %6882 = vmatprep.subr.bf16.mxu0 0
    %6883 = vmatpush1.bf16.xpose.msra.mxu0 %v6859
    %6884 = vmatprep.subr.bf16.mxu0 0
    %6885 = vmatpush1.bf16.xpose.msra.mxu0 %v6862
    %6886 = vmatprep.subr.bf16.mxu0 0
    %6887 = vmatpush1.bf16.xpose.msra.mxu0 %v6865
    %6888 = vmatprep.subr.bf16.mxu0 0
    %6889 = vmatpush1.bf16.xpose.msra.mxu0 %v6868
    %6890 = vmatprep.subr.bf16.mxu0 0
    %6891 = vmatpush1.bf16.xpose.msra.mxu0 %v6871
    %6892 = vmatprep.subr.bf16.mxu0 0
    %6893 = vmatpush1.bf16.xpose.msra.mxu0 %v6874
    %6894 = vmatprep.subr.bf16.mxu0 0
    %6895 = vmatpush1.bf16.xpose.msra.mxu0 %v6877
    %6896 = vmatprep.subr.bf16.mxu0 0
    %6897 = vmatpush1.bf16.xpose.msra.mxu0 %v6880
    %6898 = vmatprep.subr.bf16.mxu0 0
    %6899 = vmatpush1.bf16.xpose.msra.mxu0 0
    %6900 = vmatprep.subr.bf16.mxu0 0
    %6901 = vmatpush1.bf16.xpose.msra.mxu0 0
    %6902 = vmatprep.subr.bf16.mxu0 0
    %6903 = vmatpush1.bf16.xpose.msra.mxu0 0
    %6904 = vmatprep.subr.bf16.mxu0 0
    %6905 = vmatpush1.bf16.xpose.msra.mxu0 0
    %6906 = vmatprep.subr.bf16.mxu0 0
    %6907 = vmatpush1.bf16.xpose.msra.mxu0 0
    %6908 = vmatprep.subr.bf16.mxu0 0
    %6909 = vmatpush1.bf16.xpose.msra.mxu0 0
    %6910 = vmatprep.subr.bf16.mxu0 0
    %6911 = vmatpush1.bf16.xpose.msra.mxu0 0
    %6912 = vmatprep.subr.bf16.mxu0 0
    %6913 = vmatpush1.bf16.xpose.msra.mxu0 0
    %6914 = vmatprep.mubr.bf16.mxu0 0
    %6915 = vmatmul.mubr.bf16.gmra.mrb[0].mxu0 %v6856
    %v6916 = vpop.f32.mrb[0].mxu0
    %v6917 = vadd.f32 0.0, %v6916
    %v6918 = vpop.f32.mrb[0].mxu0
    %v6919 = vpop.f32.mrb[0].mxu0
    %v6920 = vadd.f32 0.0, %v6919
    %v6921 = vpop.f32.mrb[0].mxu0
    %6922 = vdwg.mxu0
    %v6924 = vsel %vm816, %v6577, 0
    %v6927 = vsel %vm816, %v6831, 0
    %v6930 = vsel %vm816, %v6832, 0
    %v6933 = vsel %vm816, %v6833, 0
    %v6936 = vsel %vm816, %v6834, 0
    %v6939 = vsel %vm816, %v6835, 0
    %v6942 = vsel %vm816, %v6836, 0
    %v6945 = vsel %vm816, %v6837, 0
    %v6948 = vsel %vm816, %v6838, 0
    %6950 = vmatprep.subr.bf16.mxu0 0
    %6951 = vmatpush1.bf16.xpose.msra.mxu0 %v6927
    %6952 = vmatprep.subr.bf16.mxu0 0
    %6953 = vmatpush1.bf16.xpose.msra.mxu0 %v6930
    %6954 = vmatprep.subr.bf16.mxu0 0
    %6955 = vmatpush1.bf16.xpose.msra.mxu0 %v6933
    %6956 = vmatprep.subr.bf16.mxu0 0
    %6957 = vmatpush1.bf16.xpose.msra.mxu0 %v6936
    %6958 = vmatprep.subr.bf16.mxu0 0
    %6959 = vmatpush1.bf16.xpose.msra.mxu0 %v6939
    %6960 = vmatprep.subr.bf16.mxu0 0
    %6961 = vmatpush1.bf16.xpose.msra.mxu0 %v6942
    %6962 = vmatprep.subr.bf16.mxu0 0
    %6963 = vmatpush1.bf16.xpose.msra.mxu0 %v6945
    %6964 = vmatprep.subr.bf16.mxu0 0
    %6965 = vmatpush1.bf16.xpose.msra.mxu0 %v6948
    %6966 = vmatprep.subr.bf16.mxu0 0
    %6967 = vmatpush1.bf16.xpose.msra.mxu0 0
    %6968 = vmatprep.subr.bf16.mxu0 0
    %6969 = vmatpush1.bf16.xpose.msra.mxu0 0
    %6970 = vmatprep.subr.bf16.mxu0 0
    %6971 = vmatpush1.bf16.xpose.msra.mxu0 0
    %6972 = vmatprep.subr.bf16.mxu0 0
    %6973 = vmatpush1.bf16.xpose.msra.mxu0 0
    %6974 = vmatprep.subr.bf16.mxu0 0
    %6975 = vmatpush1.bf16.xpose.msra.mxu0 0
    %6976 = vmatprep.subr.bf16.mxu0 0
    %6977 = vmatpush1.bf16.xpose.msra.mxu0 0
    %6978 = vmatprep.subr.bf16.mxu0 0
    %6979 = vmatpush1.bf16.xpose.msra.mxu0 0
    %6980 = vmatprep.subr.bf16.mxu0 0
    %6981 = vmatpush1.bf16.xpose.msra.mxu0 0
    %6982 = vmatprep.mubr.bf16.mxu0 0
    %6983 = vmatmul.mubr.bf16.gmra.mrb[0].mxu0 %v6924
    %v6984 = vpop.f32.mrb[0].mxu0
    %v6985 = vadd.f32 %v6917, %v6984
    %v6986 = vpop.f32.mrb[0].mxu0
    %v6987 = vpop.f32.mrb[0].mxu0
    %v6988 = vadd.f32 %v6920, %v6987
    %v6989 = vpop.f32.mrb[0].mxu0
    %6990 = vdwg.mxu0
    %6991 = vrot.lane.b32.xlu0 %v6357, 96
    %v6992 = vpop.permute.xlu0 %6991
    %6993 = vrot.lane.b32.xlu0 %v6362, 96
    %v6994 = vpop.permute.xlu0 %6993
    %v6996 = vsel %vm816, %v6992, 0
    %v6999 = vsel %vm816, %v6994, 0
    %7001 = vmatprep.subr.bf16.mxu0 0
    %7002 = vmatpush1.bf16.xpose.msra.mxu0 %v6999
    %7003 = vmatprep.subr.bf16.mxu0 0
    %7004 = vmatpush1.bf16.xpose.msra.mxu0 0
    %7005 = vmatprep.subr.bf16.mxu0 0
    %7006 = vmatpush1.bf16.xpose.msra.mxu0 0
    %7007 = vmatprep.subr.bf16.mxu0 0
    %7008 = vmatpush1.bf16.xpose.msra.mxu0 0
    %7009 = vmatprep.subr.bf16.mxu0 0
    %7010 = vmatpush1.bf16.xpose.msra.mxu0 0
    %7011 = vmatprep.subr.bf16.mxu0 0
    %7012 = vmatpush1.bf16.xpose.msra.mxu0 0
    %7013 = vmatprep.subr.bf16.mxu0 0
    %7014 = vmatpush1.bf16.xpose.msra.mxu0 0
    %7015 = vmatprep.subr.bf16.mxu0 0
    %7016 = vmatpush1.bf16.xpose.msra.mxu0 0
    %7017 = vmatprep.subr.bf16.mxu0 0
    %7018 = vmatpush1.bf16.xpose.msra.mxu0 0
    %7019 = vmatprep.subr.bf16.mxu0 0
    %7020 = vmatpush1.bf16.xpose.msra.mxu0 0
    %7021 = vmatprep.subr.bf16.mxu0 0
    %7022 = vmatpush1.bf16.xpose.msra.mxu0 0
    %7023 = vmatprep.subr.bf16.mxu0 0
    %7024 = vmatpush1.bf16.xpose.msra.mxu0 0
    %7025 = vmatprep.subr.bf16.mxu0 0
    %7026 = vmatpush1.bf16.xpose.msra.mxu0 0
    %7027 = vmatprep.subr.bf16.mxu0 0
    %7028 = vmatpush1.bf16.xpose.msra.mxu0 0
    %7029 = vmatprep.subr.bf16.mxu0 0
    %7030 = vmatpush1.bf16.xpose.msra.mxu0 0
    %7031 = vmatprep.subr.bf16.mxu0 0
    %7032 = vmatpush1.bf16.xpose.msra.mxu0 0
    %7033 = vmatprep.mubr.bf16.mxu0 0
    %7034 = vmatmul.mubr.bf16.gmra.mrb[0].mxu0 %v6996
    %v7035 = vpop.f32.mrb[0].mxu0
    %v7036 = vadd.f32 0.0, %v7035
    %v7037 = vpop.f32.mrb[0].mxu0
    %v7038 = vpop.f32.mrb[0].mxu0
    %v7039 = vpop.f32.mrb[0].mxu0
    %7040 = vdwg.mxu0
    %7041 = vrot.lane.b32.xlu0 %v6358, 96
    %v7042 = vpop.permute.xlu0 %7041
    %7043 = vrot.lane.b32.xlu0 %v6363, 96
    %v7044 = vpop.permute.xlu0 %7043
    %v7046 = vsel %vm816, %v7042, 0
    %v7049 = vsel %vm816, %v7044, 0
    %7051 = vmatprep.subr.bf16.mxu0 0
    %7052 = vmatpush1.bf16.xpose.msra.mxu0 %v7049
    %7053 = vmatprep.subr.bf16.mxu0 0
    %7054 = vmatpush1.bf16.xpose.msra.mxu0 0
    %7055 = vmatprep.subr.bf16.mxu0 0
    %7056 = vmatpush1.bf16.xpose.msra.mxu0 0
    %7057 = vmatprep.subr.bf16.mxu0 0
    %7058 = vmatpush1.bf16.xpose.msra.mxu0 0
    %7059 = vmatprep.subr.bf16.mxu0 0
    %7060 = vmatpush1.bf16.xpose.msra.mxu0 0
    %7061 = vmatprep.subr.bf16.mxu0 0
    %7062 = vmatpush1.bf16.xpose.msra.mxu0 0
    %7063 = vmatprep.subr.bf16.mxu0 0
    %7064 = vmatpush1.bf16.xpose.msra.mxu0 0
    %7065 = vmatprep.subr.bf16.mxu0 0
    %7066 = vmatpush1.bf16.xpose.msra.mxu0 0
    %7067 = vmatprep.subr.bf16.mxu0 0
    %7068 = vmatpush1.bf16.xpose.msra.mxu0 0
    %7069 = vmatprep.subr.bf16.mxu0 0
    %7070 = vmatpush1.bf16.xpose.msra.mxu0 0
    %7071 = vmatprep.subr.bf16.mxu0 0
    %7072 = vmatpush1.bf16.xpose.msra.mxu0 0
    %7073 = vmatprep.subr.bf16.mxu0 0
    %7074 = vmatpush1.bf16.xpose.msra.mxu0 0
    %7075 = vmatprep.subr.bf16.mxu0 0
    %7076 = vmatpush1.bf16.xpose.msra.mxu0 0
    %7077 = vmatprep.subr.bf16.mxu0 0
    %7078 = vmatpush1.bf16.xpose.msra.mxu0 0
    %7079 = vmatprep.subr.bf16.mxu0 0
    %7080 = vmatpush1.bf16.xpose.msra.mxu0 0
    %7081 = vmatprep.subr.bf16.mxu0 0
    %7082 = vmatpush1.bf16.xpose.msra.mxu0 0
    %7083 = vmatprep.mubr.bf16.mxu0 0
    %7084 = vmatmul.mubr.bf16.gmra.mrb[0].mxu0 %v7046
    %v7085 = vpop.f32.mrb[0].mxu0
    %v7086 = vadd.f32 0.0, %v7085
    %v7087 = vpop.f32.mrb[0].mxu0
    %v7088 = vpop.f32.mrb[0].mxu0
    %v7089 = vpop.f32.mrb[0].mxu0
    %7090 = vdwg.mxu0
    %v7091 = vsel %vm909, %v7036, -inf
    %7092 = vmax.xlane.f32.xlu0 %v7091
    %v7093 = vpop.xlane.xlu0 %7092
    %v7094 = vsel %vm909, %v7086, -inf
    %7095 = vmax.xlane.f32.xlu0 %v7094
    %v7096 = vpop.xlane.xlu0 %7095
    %v7097 = vsub.f32 %v7036, %v7093
    %v7098 = vsub.f32 %v7086, %v7096
    %v7099 = vmul.f32 %v7097, 1.442695
    %v7100 = vpow.pop %v7099
    %v7101 = vmul.f32 %v7098, 1.442695
    %v7102 = vpow.pop %v7101
    %v7103 = vsel %vm909, %v7100, 0.0
    %7104 = vadd.xlane.f32.xlu0 %v7103
    %v7105 = vpop.xlane.xlu0 %7104
    %v7106 = vsel %vm909, %v7102, 0.0
    %7107 = vadd.xlane.f32.xlu0 %v7106
    %v7108 = vpop.xlane.xlu0 %7107
    %v7109 = vrcp.pop %v7105
    %v7110 = vrcp.pop %v7108
    %v7111 = vmul.f32 %v7100, %v7109
    %v7112 = vmul.f32 %v7102, %v7110
    %v7113 = vpack.c.bf16 %v7111, %v7111
    %v7114 = vpack.c.bf16 %v7112, %v7112
    %7115 = vrot.lane.b32.xlu0 %v6367, 96
    %v7116 = vpop.permute.xlu0 %7115
    %v7118 = vsel %vm909, %v7113, 0
    %v7121 = vsel %vm937, %v7116, 0
    %7123 = vmatprep.subr.bf16.mxu0 0
    %7124 = vmatpush1.bf16.msra.mxu0 %v7121
    %7125 = vmatprep.subr.bf16.mxu0 0
    %7126 = vmatpush1.bf16.msra.mxu0 0
    %7127 = vmatprep.subr.bf16.mxu0 0
    %7128 = vmatpush1.bf16.msra.mxu0 0
    %7129 = vmatprep.subr.bf16.mxu0 0
    %7130 = vmatpush1.bf16.msra.mxu0 0
    %7131 = vmatprep.subr.bf16.mxu0 0
    %7132 = vmatpush1.bf16.msra.mxu0 0
    %7133 = vmatprep.subr.bf16.mxu0 0
    %7134 = vmatpush1.bf16.msra.mxu0 0
    %7135 = vmatprep.subr.bf16.mxu0 0
    %7136 = vmatpush1.bf16.msra.mxu0 0
    %7137 = vmatprep.subr.bf16.mxu0 0
    %7138 = vmatpush1.bf16.msra.mxu0 0
    %7139 = vmatprep.subr.bf16.mxu0 0
    %7140 = vmatpush1.bf16.msra.mxu0 0
    %7141 = vmatprep.subr.bf16.mxu0 0
    %7142 = vmatpush1.bf16.msra.mxu0 0
    %7143 = vmatprep.subr.bf16.mxu0 0
    %7144 = vmatpush1.bf16.msra.mxu0 0
    %7145 = vmatprep.subr.bf16.mxu0 0
    %7146 = vmatpush1.bf16.msra.mxu0 0
    %7147 = vmatprep.subr.bf16.mxu0 0
    %7148 = vmatpush1.bf16.msra.mxu0 0
    %7149 = vmatprep.subr.bf16.mxu0 0
    %7150 = vmatpush1.bf16.msra.mxu0 0
    %7151 = vmatprep.subr.bf16.mxu0 0
    %7152 = vmatpush1.bf16.msra.mxu0 0
    %7153 = vmatprep.subr.bf16.mxu0 0
    %7154 = vmatpush1.bf16.msra.mxu0 0
    %7155 = vmatprep.mubr.bf16.mxu0 0
    %7156 = vmatmul.mubr.bf16.gmra.mrb[0].mxu0 %v7118
    %v7157 = vpop.f32.mrb[0].mxu0
    %v7158 = vadd.f32 0.0, %v7157
    %v7159 = vpop.f32.mrb[0].mxu0
    %v7160 = vpop.f32.mrb[0].mxu0
    %v7161 = vpop.f32.mrb[0].mxu0
    %7162 = vdwg.mxu0
    %7163 = vrot.lane.b32.xlu0 %v6368, 96
    %v7164 = vpop.permute.xlu0 %7163
    %v7166 = vsel %vm909, %v7114, 0
    %v7169 = vsel %vm937, %v7164, 0
    %7171 = vmatprep.subr.bf16.mxu0 0
    %7172 = vmatpush1.bf16.msra.mxu0 %v7169
    %7173 = vmatprep.subr.bf16.mxu0 0
    %7174 = vmatpush1.bf16.msra.mxu0 0
    %7175 = vmatprep.subr.bf16.mxu0 0
    %7176 = vmatpush1.bf16.msra.mxu0 0
    %7177 = vmatprep.subr.bf16.mxu0 0
    %7178 = vmatpush1.bf16.msra.mxu0 0
    %7179 = vmatprep.subr.bf16.mxu0 0
    %7180 = vmatpush1.bf16.msra.mxu0 0
    %7181 = vmatprep.subr.bf16.mxu0 0
    %7182 = vmatpush1.bf16.msra.mxu0 0
    %7183 = vmatprep.subr.bf16.mxu0 0
    %7184 = vmatpush1.bf16.msra.mxu0 0
    %7185 = vmatprep.subr.bf16.mxu0 0
    %7186 = vmatpush1.bf16.msra.mxu0 0
    %7187 = vmatprep.subr.bf16.mxu0 0
    %7188 = vmatpush1.bf16.msra.mxu0 0
    %7189 = vmatprep.subr.bf16.mxu0 0
    %7190 = vmatpush1.bf16.msra.mxu0 0
    %7191 = vmatprep.subr.bf16.mxu0 0
    %7192 = vmatpush1.bf16.msra.mxu0 0
    %7193 = vmatprep.subr.bf16.mxu0 0
    %7194 = vmatpush1.bf16.msra.mxu0 0
    %7195 = vmatprep.subr.bf16.mxu0 0
    %7196 = vmatpush1.bf16.msra.mxu0 0
    %7197 = vmatprep.subr.bf16.mxu0 0
    %7198 = vmatpush1.bf16.msra.mxu0 0
    %7199 = vmatprep.subr.bf16.mxu0 0
    %7200 = vmatpush1.bf16.msra.mxu0 0
    %7201 = vmatprep.subr.bf16.mxu0 0
    %7202 = vmatpush1.bf16.msra.mxu0 0
    %7203 = vmatprep.mubr.bf16.mxu0 0
    %7204 = vmatmul.mubr.bf16.gmra.mrb[0].mxu0 %v7166
    %v7205 = vpop.f32.mrb[0].mxu0
    %v7206 = vadd.f32 0.0, %v7205
    %v7207 = vpop.f32.mrb[0].mxu0
    %v7208 = vpop.f32.mrb[0].mxu0
    %v7209 = vpop.f32.mrb[0].mxu0
    %7210 = vdwg.mxu0
    %v7211 = vpack.c.bf16 %v7206, %v7158
    %7212 = vrot.lane.b32.xlu0 %v6831, 96
    %v7213 = vpop.permute.xlu0 %7212
    %7214 = vrot.lane.b32.xlu0 %v6832, 96
    %v7215 = vpop.permute.xlu0 %7214
    %7216 = vrot.lane.b32.xlu0 %v6833, 96
    %v7217 = vpop.permute.xlu0 %7216
    %7218 = vrot.lane.b32.xlu0 %v6834, 96
    %v7219 = vpop.permute.xlu0 %7218
    %7220 = vrot.lane.b32.xlu0 %v6835, 96
    %v7221 = vpop.permute.xlu0 %7220
    %7222 = vrot.lane.b32.xlu0 %v6836, 96
    %v7223 = vpop.permute.xlu0 %7222
    %7224 = vrot.lane.b32.xlu0 %v6837, 96
    %v7225 = vpop.permute.xlu0 %7224
    %7226 = vrot.lane.b32.xlu0 %v6838, 96
    %v7227 = vpop.permute.xlu0 %7226
    %v7229 = vsel %vm816, %v7211, 0
    %v7232 = vsel %vm816, %v7213, 0
    %v7235 = vsel %vm816, %v7215, 0
    %v7238 = vsel %vm816, %v7217, 0
    %v7241 = vsel %vm816, %v7219, 0
    %v7244 = vsel %vm816, %v7221, 0
    %v7247 = vsel %vm816, %v7223, 0
    %v7250 = vsel %vm816, %v7225, 0
    %v7253 = vsel %vm816, %v7227, 0
    %7255 = vmatprep.subr.bf16.mxu0 0
    %7256 = vmatpush1.bf16.xpose.msra.mxu0 %v7232
    %7257 = vmatprep.subr.bf16.mxu0 0
    %7258 = vmatpush1.bf16.xpose.msra.mxu0 %v7235
    %7259 = vmatprep.subr.bf16.mxu0 0
    %7260 = vmatpush1.bf16.xpose.msra.mxu0 %v7238
    %7261 = vmatprep.subr.bf16.mxu0 0
    %7262 = vmatpush1.bf16.xpose.msra.mxu0 %v7241
    %7263 = vmatprep.subr.bf16.mxu0 0
    %7264 = vmatpush1.bf16.xpose.msra.mxu0 %v7244
    %7265 = vmatprep.subr.bf16.mxu0 0
    %7266 = vmatpush1.bf16.xpose.msra.mxu0 %v7247
    %7267 = vmatprep.subr.bf16.mxu0 0
    %7268 = vmatpush1.bf16.xpose.msra.mxu0 %v7250
    %7269 = vmatprep.subr.bf16.mxu0 0
    %7270 = vmatpush1.bf16.xpose.msra.mxu0 %v7253
    %7271 = vmatprep.subr.bf16.mxu0 0
    %7272 = vmatpush1.bf16.xpose.msra.mxu0 0
    %7273 = vmatprep.subr.bf16.mxu0 0
    %7274 = vmatpush1.bf16.xpose.msra.mxu0 0
    %7275 = vmatprep.subr.bf16.mxu0 0
    %7276 = vmatpush1.bf16.xpose.msra.mxu0 0
    %7277 = vmatprep.subr.bf16.mxu0 0
    %7278 = vmatpush1.bf16.xpose.msra.mxu0 0
    %7279 = vmatprep.subr.bf16.mxu0 0
    %7280 = vmatpush1.bf16.xpose.msra.mxu0 0
    %7281 = vmatprep.subr.bf16.mxu0 0
    %7282 = vmatpush1.bf16.xpose.msra.mxu0 0
    %7283 = vmatprep.subr.bf16.mxu0 0
    %7284 = vmatpush1.bf16.xpose.msra.mxu0 0
    %7285 = vmatprep.subr.bf16.mxu0 0
    %7286 = vmatpush1.bf16.xpose.msra.mxu0 0
    %7287 = vmatprep.mubr.bf16.mxu0 0
    %7288 = vmatmul.mubr.bf16.gmra.mrb[0].mxu0 %v7229
    %v7289 = vpop.f32.mrb[0].mxu0
    %v7290 = vadd.f32 0.0, %v7289
    %v7291 = vpop.f32.mrb[0].mxu0
    %v7292 = vpop.f32.mrb[0].mxu0
    %v7293 = vadd.f32 0.0, %v7292
    %v7294 = vpop.f32.mrb[0].mxu0
    %7295 = vdwg.mxu0
    %v7296 = vadd.f32 %v6985, %v7290
    %v7297 = vadd.f32 %v6988, %v7293
    %7298 = vrot.lane.b32.xlu0 %v6357, 80
    %v7299 = vpop.permute.xlu0 %7298
    %7300 = vrot.lane.b32.xlu0 %v6362, 80
    %v7301 = vpop.permute.xlu0 %7300
    %v7303 = vsel %vm816, %v7299, 0
    %v7306 = vsel %vm816, %v7301, 0
    %7308 = vmatprep.subr.bf16.mxu0 0
    %7309 = vmatpush1.bf16.xpose.msra.mxu0 %v7306
    %7310 = vmatprep.subr.bf16.mxu0 0
    %7311 = vmatpush1.bf16.xpose.msra.mxu0 0
    %7312 = vmatprep.subr.bf16.mxu0 0
    %7313 = vmatpush1.bf16.xpose.msra.mxu0 0
    %7314 = vmatprep.subr.bf16.mxu0 0
    %7315 = vmatpush1.bf16.xpose.msra.mxu0 0
    %7316 = vmatprep.subr.bf16.mxu0 0
    %7317 = vmatpush1.bf16.xpose.msra.mxu0 0
    %7318 = vmatprep.subr.bf16.mxu0 0
    %7319 = vmatpush1.bf16.xpose.msra.mxu0 0
    %7320 = vmatprep.subr.bf16.mxu0 0
    %7321 = vmatpush1.bf16.xpose.msra.mxu0 0
    %7322 = vmatprep.subr.bf16.mxu0 0
    %7323 = vmatpush1.bf16.xpose.msra.mxu0 0
    %7324 = vmatprep.subr.bf16.mxu0 0
    %7325 = vmatpush1.bf16.xpose.msra.mxu0 0
    %7326 = vmatprep.subr.bf16.mxu0 0
    %7327 = vmatpush1.bf16.xpose.msra.mxu0 0
    %7328 = vmatprep.subr.bf16.mxu0 0
    %7329 = vmatpush1.bf16.xpose.msra.mxu0 0
    %7330 = vmatprep.subr.bf16.mxu0 0
    %7331 = vmatpush1.bf16.xpose.msra.mxu0 0
    %7332 = vmatprep.subr.bf16.mxu0 0
    %7333 = vmatpush1.bf16.xpose.msra.mxu0 0
    %7334 = vmatprep.subr.bf16.mxu0 0
    %7335 = vmatpush1.bf16.xpose.msra.mxu0 0
    %7336 = vmatprep.subr.bf16.mxu0 0
    %7337 = vmatpush1.bf16.xpose.msra.mxu0 0
    %7338 = vmatprep.subr.bf16.mxu0 0
    %7339 = vmatpush1.bf16.xpose.msra.mxu0 0
    %7340 = vmatprep.mubr.bf16.mxu0 0
    %7341 = vmatmul.mubr.bf16.gmra.mrb[0].mxu0 %v7303
    %v7342 = vpop.f32.mrb[0].mxu0
    %v7343 = vadd.f32 0.0, %v7342
    %v7344 = vpop.f32.mrb[0].mxu0
    %v7345 = vpop.f32.mrb[0].mxu0
    %v7346 = vpop.f32.mrb[0].mxu0
    %7347 = vdwg.mxu0
    %7348 = vrot.lane.b32.xlu0 %v6358, 80
    %v7349 = vpop.permute.xlu0 %7348
    %7350 = vrot.lane.b32.xlu0 %v6363, 80
    %v7351 = vpop.permute.xlu0 %7350
    %v7353 = vsel %vm816, %v7349, 0
    %v7356 = vsel %vm816, %v7351, 0
    %7358 = vmatprep.subr.bf16.mxu0 0
    %7359 = vmatpush1.bf16.xpose.msra.mxu0 %v7356
    %7360 = vmatprep.subr.bf16.mxu0 0
    %7361 = vmatpush1.bf16.xpose.msra.mxu0 0
    %7362 = vmatprep.subr.bf16.mxu0 0
    %7363 = vmatpush1.bf16.xpose.msra.mxu0 0
    %7364 = vmatprep.subr.bf16.mxu0 0
    %7365 = vmatpush1.bf16.xpose.msra.mxu0 0
    %7366 = vmatprep.subr.bf16.mxu0 0
    %7367 = vmatpush1.bf16.xpose.msra.mxu0 0
    %7368 = vmatprep.subr.bf16.mxu0 0
    %7369 = vmatpush1.bf16.xpose.msra.mxu0 0
    %7370 = vmatprep.subr.bf16.mxu0 0
    %7371 = vmatpush1.bf16.xpose.msra.mxu0 0
    %7372 = vmatprep.subr.bf16.mxu0 0
    %7373 = vmatpush1.bf16.xpose.msra.mxu0 0
    %7374 = vmatprep.subr.bf16.mxu0 0
    %7375 = vmatpush1.bf16.xpose.msra.mxu0 0
    %7376 = vmatprep.subr.bf16.mxu0 0
    %7377 = vmatpush1.bf16.xpose.msra.mxu0 0
    %7378 = vmatprep.subr.bf16.mxu0 0
    %7379 = vmatpush1.bf16.xpose.msra.mxu0 0
    %7380 = vmatprep.subr.bf16.mxu0 0
    %7381 = vmatpush1.bf16.xpose.msra.mxu0 0
    %7382 = vmatprep.subr.bf16.mxu0 0
    %7383 = vmatpush1.bf16.xpose.msra.mxu0 0
    %7384 = vmatprep.subr.bf16.mxu0 0
    %7385 = vmatpush1.bf16.xpose.msra.mxu0 0
    %7386 = vmatprep.subr.bf16.mxu0 0
    %7387 = vmatpush1.bf16.xpose.msra.mxu0 0
    %7388 = vmatprep.subr.bf16.mxu0 0
    %7389 = vmatpush1.bf16.xpose.msra.mxu0 0
    %7390 = vmatprep.mubr.bf16.mxu0 0
    %7391 = vmatmul.mubr.bf16.gmra.mrb[0].mxu0 %v7353
    %v7392 = vpop.f32.mrb[0].mxu0
    %v7393 = vadd.f32 0.0, %v7392
    %v7394 = vpop.f32.mrb[0].mxu0
    %v7395 = vpop.f32.mrb[0].mxu0
    %v7396 = vpop.f32.mrb[0].mxu0
    %7397 = vdwg.mxu0
    %v7398 = vsel %vm909, %v7343, -inf
    %7399 = vmax.xlane.f32.xlu0 %v7398
    %v7400 = vpop.xlane.xlu0 %7399
    %v7401 = vsel %vm909, %v7393, -inf
    %7402 = vmax.xlane.f32.xlu0 %v7401
    %v7403 = vpop.xlane.xlu0 %7402
    %v7404 = vsub.f32 %v7343, %v7400
    %v7405 = vsub.f32 %v7393, %v7403
    %v7406 = vmul.f32 %v7404, 1.442695
    %v7407 = vpow.pop %v7406
    %v7408 = vmul.f32 %v7405, 1.442695
    %v7409 = vpow.pop %v7408
    %v7410 = vsel %vm909, %v7407, 0.0
    %7411 = vadd.xlane.f32.xlu0 %v7410
    %v7412 = vpop.xlane.xlu0 %7411
    %v7413 = vsel %vm909, %v7409, 0.0
    %7414 = vadd.xlane.f32.xlu0 %v7413
    %v7415 = vpop.xlane.xlu0 %7414
    %v7416 = vrcp.pop %v7412
    %v7417 = vrcp.pop %v7415
    %v7418 = vmul.f32 %v7407, %v7416
    %v7419 = vmul.f32 %v7409, %v7417
    %v7420 = vpack.c.bf16 %v7418, %v7418
    %v7421 = vpack.c.bf16 %v7419, %v7419
    %7422 = vrot.lane.b32.xlu0 %v6367, 80
    %v7423 = vpop.permute.xlu0 %7422
    %v7425 = vsel %vm909, %v7420, 0
    %v7428 = vsel %vm937, %v7423, 0
    %7430 = vmatprep.subr.bf16.mxu0 0
    %7431 = vmatpush1.bf16.msra.mxu0 %v7428
    %7432 = vmatprep.subr.bf16.mxu0 0
    %7433 = vmatpush1.bf16.msra.mxu0 0
    %7434 = vmatprep.subr.bf16.mxu0 0
    %7435 = vmatpush1.bf16.msra.mxu0 0
    %7436 = vmatprep.subr.bf16.mxu0 0
    %7437 = vmatpush1.bf16.msra.mxu0 0
    %7438 = vmatprep.subr.bf16.mxu0 0
    %7439 = vmatpush1.bf16.msra.mxu0 0
    %7440 = vmatprep.subr.bf16.mxu0 0
    %7441 = vmatpush1.bf16.msra.mxu0 0
    %7442 = vmatprep.subr.bf16.mxu0 0
    %7443 = vmatpush1.bf16.msra.mxu0 0
    %7444 = vmatprep.subr.bf16.mxu0 0
    %7445 = vmatpush1.bf16.msra.mxu0 0
    %7446 = vmatprep.subr.bf16.mxu0 0
    %7447 = vmatpush1.bf16.msra.mxu0 0
    %7448 = vmatprep.subr.bf16.mxu0 0
    %7449 = vmatpush1.bf16.msra.mxu0 0
    %7450 = vmatprep.subr.bf16.mxu0 0
    %7451 = vmatpush1.bf16.msra.mxu0 0
    %7452 = vmatprep.subr.bf16.mxu0 0
    %7453 = vmatpush1.bf16.msra.mxu0 0
    %7454 = vmatprep.subr.bf16.mxu0 0
    %7455 = vmatpush1.bf16.msra.mxu0 0
    %7456 = vmatprep.subr.bf16.mxu0 0
    %7457 = vmatpush1.bf16.msra.mxu0 0
    %7458 = vmatprep.subr.bf16.mxu0 0
    %7459 = vmatpush1.bf16.msra.mxu0 0
    %7460 = vmatprep.subr.bf16.mxu0 0
    %7461 = vmatpush1.bf16.msra.mxu0 0
    %7462 = vmatprep.mubr.bf16.mxu0 0
    %7463 = vmatmul.mubr.bf16.gmra.mrb[0].mxu0 %v7425
    %v7464 = vpop.f32.mrb[0].mxu0
    %v7465 = vadd.f32 0.0, %v7464
    %v7466 = vpop.f32.mrb[0].mxu0
    %v7467 = vpop.f32.mrb[0].mxu0
    %v7468 = vpop.f32.mrb[0].mxu0
    %7469 = vdwg.mxu0
    %7470 = vrot.lane.b32.xlu0 %v6368, 80
    %v7471 = vpop.permute.xlu0 %7470
    %v7473 = vsel %vm909, %v7421, 0
    %v7476 = vsel %vm937, %v7471, 0
    %7478 = vmatprep.subr.bf16.mxu0 0
    %7479 = vmatpush1.bf16.msra.mxu0 %v7476
    %7480 = vmatprep.subr.bf16.mxu0 0
    %7481 = vmatpush1.bf16.msra.mxu0 0
    %7482 = vmatprep.subr.bf16.mxu0 0
    %7483 = vmatpush1.bf16.msra.mxu0 0
    %7484 = vmatprep.subr.bf16.mxu0 0
    %7485 = vmatpush1.bf16.msra.mxu0 0
    %7486 = vmatprep.subr.bf16.mxu0 0
    %7487 = vmatpush1.bf16.msra.mxu0 0
    %7488 = vmatprep.subr.bf16.mxu0 0
    %7489 = vmatpush1.bf16.msra.mxu0 0
    %7490 = vmatprep.subr.bf16.mxu0 0
    %7491 = vmatpush1.bf16.msra.mxu0 0
    %7492 = vmatprep.subr.bf16.mxu0 0
    %7493 = vmatpush1.bf16.msra.mxu0 0
    %7494 = vmatprep.subr.bf16.mxu0 0
    %7495 = vmatpush1.bf16.msra.mxu0 0
    %7496 = vmatprep.subr.bf16.mxu0 0
    %7497 = vmatpush1.bf16.msra.mxu0 0
    %7498 = vmatprep.subr.bf16.mxu0 0
    %7499 = vmatpush1.bf16.msra.mxu0 0
    %7500 = vmatprep.subr.bf16.mxu0 0
    %7501 = vmatpush1.bf16.msra.mxu0 0
    %7502 = vmatprep.subr.bf16.mxu0 0
    %7503 = vmatpush1.bf16.msra.mxu0 0
    %7504 = vmatprep.subr.bf16.mxu0 0
    %7505 = vmatpush1.bf16.msra.mxu0 0
    %7506 = vmatprep.subr.bf16.mxu0 0
    %7507 = vmatpush1.bf16.msra.mxu0 0
    %7508 = vmatprep.subr.bf16.mxu0 0
    %7509 = vmatpush1.bf16.msra.mxu0 0
    %7510 = vmatprep.mubr.bf16.mxu0 0
    %7511 = vmatmul.mubr.bf16.gmra.mrb[0].mxu0 %v7473
    %v7512 = vpop.f32.mrb[0].mxu0
    %v7513 = vadd.f32 0.0, %v7512
    %v7514 = vpop.f32.mrb[0].mxu0
    %v7515 = vpop.f32.mrb[0].mxu0
    %v7516 = vpop.f32.mrb[0].mxu0
    %7517 = vdwg.mxu0
    %v7518 = vpack.c.bf16 %v7513, %v7465
    %7519 = vrot.lane.b32.xlu0 %v6831, 80
    %v7520 = vpop.permute.xlu0 %7519
    %7521 = vrot.lane.b32.xlu0 %v6832, 80
    %v7522 = vpop.permute.xlu0 %7521
    %7523 = vrot.lane.b32.xlu0 %v6833, 80
    %v7524 = vpop.permute.xlu0 %7523
    %7525 = vrot.lane.b32.xlu0 %v6834, 80
    %v7526 = vpop.permute.xlu0 %7525
    %7527 = vrot.lane.b32.xlu0 %v6835, 80
    %v7528 = vpop.permute.xlu0 %7527
    %7529 = vrot.lane.b32.xlu0 %v6836, 80
    %v7530 = vpop.permute.xlu0 %7529
    %7531 = vrot.lane.b32.xlu0 %v6837, 80
    %v7532 = vpop.permute.xlu0 %7531
    %7533 = vrot.lane.b32.xlu0 %v6838, 80
    %v7534 = vpop.permute.xlu0 %7533
    %v7536 = vsel %vm816, %v7518, 0
    %v7539 = vsel %vm816, %v7520, 0
    %v7542 = vsel %vm816, %v7522, 0
    %v7545 = vsel %vm816, %v7524, 0
    %v7548 = vsel %vm816, %v7526, 0
    %v7551 = vsel %vm816, %v7528, 0
    %v7554 = vsel %vm816, %v7530, 0
    %v7557 = vsel %vm816, %v7532, 0
    %v7560 = vsel %vm816, %v7534, 0
    %7562 = vmatprep.subr.bf16.mxu0 0
    %7563 = vmatpush1.bf16.xpose.msra.mxu0 %v7539
    %7564 = vmatprep.subr.bf16.mxu0 0
    %7565 = vmatpush1.bf16.xpose.msra.mxu0 %v7542
    %7566 = vmatprep.subr.bf16.mxu0 0
    %7567 = vmatpush1.bf16.xpose.msra.mxu0 %v7545
    %7568 = vmatprep.subr.bf16.mxu0 0
    %7569 = vmatpush1.bf16.xpose.msra.mxu0 %v7548
    %7570 = vmatprep.subr.bf16.mxu0 0
    %7571 = vmatpush1.bf16.xpose.msra.mxu0 %v7551
    %7572 = vmatprep.subr.bf16.mxu0 0
    %7573 = vmatpush1.bf16.xpose.msra.mxu0 %v7554
    %7574 = vmatprep.subr.bf16.mxu0 0
    %7575 = vmatpush1.bf16.xpose.msra.mxu0 %v7557
    %7576 = vmatprep.subr.bf16.mxu0 0
    %7577 = vmatpush1.bf16.xpose.msra.mxu0 %v7560
    %7578 = vmatprep.subr.bf16.mxu0 0
    %7579 = vmatpush1.bf16.xpose.msra.mxu0 0
    %7580 = vmatprep.subr.bf16.mxu0 0
    %7581 = vmatpush1.bf16.xpose.msra.mxu0 0
    %7582 = vmatprep.subr.bf16.mxu0 0
    %7583 = vmatpush1.bf16.xpose.msra.mxu0 0
    %7584 = vmatprep.subr.bf16.mxu0 0
    %7585 = vmatpush1.bf16.xpose.msra.mxu0 0
    %7586 = vmatprep.subr.bf16.mxu0 0
    %7587 = vmatpush1.bf16.xpose.msra.mxu0 0
    %7588 = vmatprep.subr.bf16.mxu0 0
    %7589 = vmatpush1.bf16.xpose.msra.mxu0 0
    %7590 = vmatprep.subr.bf16.mxu0 0
    %7591 = vmatpush1.bf16.xpose.msra.mxu0 0
    %7592 = vmatprep.subr.bf16.mxu0 0
    %7593 = vmatpush1.bf16.xpose.msra.mxu0 0
    %7594 = vmatprep.mubr.bf16.mxu0 0
    %7595 = vmatmul.mubr.bf16.gmra.mrb[0].mxu0 %v7536
    %v7596 = vpop.f32.mrb[0].mxu0
    %v7597 = vadd.f32 0.0, %v7596
    %v7598 = vpop.f32.mrb[0].mxu0
    %v7599 = vpop.f32.mrb[0].mxu0
    %v7600 = vadd.f32 0.0, %v7599
    %v7601 = vpop.f32.mrb[0].mxu0
    %7602 = vdwg.mxu0
    %v7603 = vadd.f32 %v7296, %v7597
    %v7604 = vadd.f32 %v7297, %v7600
    %7605 = vrot.lane.b32.xlu0 %v6357, 64
    %v7606 = vpop.permute.xlu0 %7605
    %7607 = vrot.lane.b32.xlu0 %v6362, 64
    %v7608 = vpop.permute.xlu0 %7607
    %v7610 = vsel %vm816, %v7606, 0
    %v7613 = vsel %vm816, %v7608, 0
    %7615 = vmatprep.subr.bf16.mxu0 0
    %7616 = vmatpush1.bf16.xpose.msra.mxu0 %v7613
    %7617 = vmatprep.subr.bf16.mxu0 0
    %7618 = vmatpush1.bf16.xpose.msra.mxu0 0
    %7619 = vmatprep.subr.bf16.mxu0 0
    %7620 = vmatpush1.bf16.xpose.msra.mxu0 0
    %7621 = vmatprep.subr.bf16.mxu0 0
    %7622 = vmatpush1.bf16.xpose.msra.mxu0 0
    %7623 = vmatprep.subr.bf16.mxu0 0
    %7624 = vmatpush1.bf16.xpose.msra.mxu0 0
    %7625 = vmatprep.subr.bf16.mxu0 0
    %7626 = vmatpush1.bf16.xpose.msra.mxu0 0
    %7627 = vmatprep.subr.bf16.mxu0 0
    %7628 = vmatpush1.bf16.xpose.msra.mxu0 0
    %7629 = vmatprep.subr.bf16.mxu0 0
    %7630 = vmatpush1.bf16.xpose.msra.mxu0 0
    %7631 = vmatprep.subr.bf16.mxu0 0
    %7632 = vmatpush1.bf16.xpose.msra.mxu0 0
    %7633 = vmatprep.subr.bf16.mxu0 0
    %7634 = vmatpush1.bf16.xpose.msra.mxu0 0
    %7635 = vmatprep.subr.bf16.mxu0 0
    %7636 = vmatpush1.bf16.xpose.msra.mxu0 0
    %7637 = vmatprep.subr.bf16.mxu0 0
    %7638 = vmatpush1.bf16.xpose.msra.mxu0 0
    %7639 = vmatprep.subr.bf16.mxu0 0
    %7640 = vmatpush1.bf16.xpose.msra.mxu0 0
    %7641 = vmatprep.subr.bf16.mxu0 0
    %7642 = vmatpush1.bf16.xpose.msra.mxu0 0
    %7643 = vmatprep.subr.bf16.mxu0 0
    %7644 = vmatpush1.bf16.xpose.msra.mxu0 0
    %7645 = vmatprep.subr.bf16.mxu0 0
    %7646 = vmatpush1.bf16.xpose.msra.mxu0 0
    %7647 = vmatprep.mubr.bf16.mxu0 0
    %7648 = vmatmul.mubr.bf16.gmra.mrb[0].mxu0 %v7610
    %v7649 = vpop.f32.mrb[0].mxu0
    %v7650 = vadd.f32 0.0, %v7649
    %v7651 = vpop.f32.mrb[0].mxu0
    %v7652 = vpop.f32.mrb[0].mxu0
    %v7653 = vpop.f32.mrb[0].mxu0
    %7654 = vdwg.mxu0
    %7655 = vrot.lane.b32.xlu0 %v6358, 64
    %v7656 = vpop.permute.xlu0 %7655
    %7657 = vrot.lane.b32.xlu0 %v6363, 64
    %v7658 = vpop.permute.xlu0 %7657
    %v7660 = vsel %vm816, %v7656, 0
    %v7663 = vsel %vm816, %v7658, 0
    %7665 = vmatprep.subr.bf16.mxu0 0
    %7666 = vmatpush1.bf16.xpose.msra.mxu0 %v7663
    %7667 = vmatprep.subr.bf16.mxu0 0
    %7668 = vmatpush1.bf16.xpose.msra.mxu0 0
    %7669 = vmatprep.subr.bf16.mxu0 0
    %7670 = vmatpush1.bf16.xpose.msra.mxu0 0
    %7671 = vmatprep.subr.bf16.mxu0 0
    %7672 = vmatpush1.bf16.xpose.msra.mxu0 0
    %7673 = vmatprep.subr.bf16.mxu0 0
    %7674 = vmatpush1.bf16.xpose.msra.mxu0 0
    %7675 = vmatprep.subr.bf16.mxu0 0
    %7676 = vmatpush1.bf16.xpose.msra.mxu0 0
    %7677 = vmatprep.subr.bf16.mxu0 0
    %7678 = vmatpush1.bf16.xpose.msra.mxu0 0
    %7679 = vmatprep.subr.bf16.mxu0 0
    %7680 = vmatpush1.bf16.xpose.msra.mxu0 0
    %7681 = vmatprep.subr.bf16.mxu0 0
    %7682 = vmatpush1.bf16.xpose.msra.mxu0 0
    %7683 = vmatprep.subr.bf16.mxu0 0
    %7684 = vmatpush1.bf16.xpose.msra.mxu0 0
    %7685 = vmatprep.subr.bf16.mxu0 0
    %7686 = vmatpush1.bf16.xpose.msra.mxu0 0
    %7687 = vmatprep.subr.bf16.mxu0 0
    %7688 = vmatpush1.bf16.xpose.msra.mxu0 0
    %7689 = vmatprep.subr.bf16.mxu0 0
    %7690 = vmatpush1.bf16.xpose.msra.mxu0 0
    %7691 = vmatprep.subr.bf16.mxu0 0
    %7692 = vmatpush1.bf16.xpose.msra.mxu0 0
    %7693 = vmatprep.subr.bf16.mxu0 0
    %7694 = vmatpush1.bf16.xpose.msra.mxu0 0
    %7695 = vmatprep.subr.bf16.mxu0 0
    %7696 = vmatpush1.bf16.xpose.msra.mxu0 0
    %7697 = vmatprep.mubr.bf16.mxu0 0
    %7698 = vmatmul.mubr.bf16.gmra.mrb[0].mxu0 %v7660
    %v7699 = vpop.f32.mrb[0].mxu0
    %v7700 = vadd.f32 0.0, %v7699
    %v7701 = vpop.f32.mrb[0].mxu0
    %v7702 = vpop.f32.mrb[0].mxu0
    %v7703 = vpop.f32.mrb[0].mxu0
    %7704 = vdwg.mxu0
    %v7705 = vsel %vm909, %v7650, -inf
    %7706 = vmax.xlane.f32.xlu0 %v7705
    %v7707 = vpop.xlane.xlu0 %7706
    %v7708 = vsel %vm909, %v7700, -inf
    %7709 = vmax.xlane.f32.xlu0 %v7708
    %v7710 = vpop.xlane.xlu0 %7709
    %v7711 = vsub.f32 %v7650, %v7707
    %v7712 = vsub.f32 %v7700, %v7710
    %v7713 = vmul.f32 %v7711, 1.442695
    %v7714 = vpow.pop %v7713
    %v7715 = vmul.f32 %v7712, 1.442695
    %v7716 = vpow.pop %v7715
    %v7717 = vsel %vm909, %v7714, 0.0
    %7718 = vadd.xlane.f32.xlu0 %v7717
    %v7719 = vpop.xlane.xlu0 %7718
    %v7720 = vsel %vm909, %v7716, 0.0
    %7721 = vadd.xlane.f32.xlu0 %v7720
    %v7722 = vpop.xlane.xlu0 %7721
    %v7723 = vrcp.pop %v7719
    %v7724 = vrcp.pop %v7722
    %v7725 = vmul.f32 %v7714, %v7723
    %v7726 = vmul.f32 %v7716, %v7724
    %v7727 = vpack.c.bf16 %v7725, %v7725
    %v7728 = vpack.c.bf16 %v7726, %v7726
    %7729 = vrot.lane.b32.xlu0 %v6367, 64
    %v7730 = vpop.permute.xlu0 %7729
    %v7732 = vsel %vm909, %v7727, 0
    %v7735 = vsel %vm937, %v7730, 0
    %7737 = vmatprep.subr.bf16.mxu0 0
    %7738 = vmatpush1.bf16.msra.mxu0 %v7735
    %7739 = vmatprep.subr.bf16.mxu0 0
    %7740 = vmatpush1.bf16.msra.mxu0 0
    %7741 = vmatprep.subr.bf16.mxu0 0
    %7742 = vmatpush1.bf16.msra.mxu0 0
    %7743 = vmatprep.subr.bf16.mxu0 0
    %7744 = vmatpush1.bf16.msra.mxu0 0
    %7745 = vmatprep.subr.bf16.mxu0 0
    %7746 = vmatpush1.bf16.msra.mxu0 0
    %7747 = vmatprep.subr.bf16.mxu0 0
    %7748 = vmatpush1.bf16.msra.mxu0 0
    %7749 = vmatprep.subr.bf16.mxu0 0
    %7750 = vmatpush1.bf16.msra.mxu0 0
    %7751 = vmatprep.subr.bf16.mxu0 0
    %7752 = vmatpush1.bf16.msra.mxu0 0
    %7753 = vmatprep.subr.bf16.mxu0 0
    %7754 = vmatpush1.bf16.msra.mxu0 0
    %7755 = vmatprep.subr.bf16.mxu0 0
    %7756 = vmatpush1.bf16.msra.mxu0 0
    %7757 = vmatprep.subr.bf16.mxu0 0
    %7758 = vmatpush1.bf16.msra.mxu0 0
    %7759 = vmatprep.subr.bf16.mxu0 0
    %7760 = vmatpush1.bf16.msra.mxu0 0
    %7761 = vmatprep.subr.bf16.mxu0 0
    %7762 = vmatpush1.bf16.msra.mxu0 0
    %7763 = vmatprep.subr.bf16.mxu0 0
    %7764 = vmatpush1.bf16.msra.mxu0 0
    %7765 = vmatprep.subr.bf16.mxu0 0
    %7766 = vmatpush1.bf16.msra.mxu0 0
    %7767 = vmatprep.subr.bf16.mxu0 0
    %7768 = vmatpush1.bf16.msra.mxu0 0
    %7769 = vmatprep.mubr.bf16.mxu0 0
    %7770 = vmatmul.mubr.bf16.gmra.mrb[0].mxu0 %v7732
    %v7771 = vpop.f32.mrb[0].mxu0
    %v7772 = vadd.f32 0.0, %v7771
    %v7773 = vpop.f32.mrb[0].mxu0
    %v7774 = vpop.f32.mrb[0].mxu0
    %v7775 = vpop.f32.mrb[0].mxu0
    %7776 = vdwg.mxu0
    %7777 = vrot.lane.b32.xlu0 %v6368, 64
    %v7778 = vpop.permute.xlu0 %7777
    %v7780 = vsel %vm909, %v7728, 0
    %v7783 = vsel %vm937, %v7778, 0
    %7785 = vmatprep.subr.bf16.mxu0 0
    %7786 = vmatpush1.bf16.msra.mxu0 %v7783
    %7787 = vmatprep.subr.bf16.mxu0 0
    %7788 = vmatpush1.bf16.msra.mxu0 0
    %7789 = vmatprep.subr.bf16.mxu0 0
    %7790 = vmatpush1.bf16.msra.mxu0 0
    %7791 = vmatprep.subr.bf16.mxu0 0
    %7792 = vmatpush1.bf16.msra.mxu0 0
    %7793 = vmatprep.subr.bf16.mxu0 0
    %7794 = vmatpush1.bf16.msra.mxu0 0
    %7795 = vmatprep.subr.bf16.mxu0 0
    %7796 = vmatpush1.bf16.msra.mxu0 0
    %7797 = vmatprep.subr.bf16.mxu0 0
    %7798 = vmatpush1.bf16.msra.mxu0 0
    %7799 = vmatprep.subr.bf16.mxu0 0
    %7800 = vmatpush1.bf16.msra.mxu0 0
    %7801 = vmatprep.subr.bf16.mxu0 0
    %7802 = vmatpush1.bf16.msra.mxu0 0
    %7803 = vmatprep.subr.bf16.mxu0 0
    %7804 = vmatpush1.bf16.msra.mxu0 0
    %7805 = vmatprep.subr.bf16.mxu0 0
    %7806 = vmatpush1.bf16.msra.mxu0 0
    %7807 = vmatprep.subr.bf16.mxu0 0
    %7808 = vmatpush1.bf16.msra.mxu0 0
    %7809 = vmatprep.subr.bf16.mxu0 0
    %7810 = vmatpush1.bf16.msra.mxu0 0
    %7811 = vmatprep.subr.bf16.mxu0 0
    %7812 = vmatpush1.bf16.msra.mxu0 0
    %7813 = vmatprep.subr.bf16.mxu0 0
    %7814 = vmatpush1.bf16.msra.mxu0 0
    %7815 = vmatprep.subr.bf16.mxu0 0
    %7816 = vmatpush1.bf16.msra.mxu0 0
    %7817 = vmatprep.mubr.bf16.mxu0 0
    %7818 = vmatmul.mubr.bf16.gmra.mrb[0].mxu0 %v7780
    %v7819 = vpop.f32.mrb[0].mxu0
    %v7820 = vadd.f32 0.0, %v7819
    %v7821 = vpop.f32.mrb[0].mxu0
    %v7822 = vpop.f32.mrb[0].mxu0
    %v7823 = vpop.f32.mrb[0].mxu0
    %7824 = vdwg.mxu0
    %v7825 = vpack.c.bf16 %v7820, %v7772
    %7826 = vrot.lane.b32.xlu0 %v6831, 64
    %v7827 = vpop.permute.xlu0 %7826
    %7828 = vrot.lane.b32.xlu0 %v6832, 64
    %v7829 = vpop.permute.xlu0 %7828
    %7830 = vrot.lane.b32.xlu0 %v6833, 64
    %v7831 = vpop.permute.xlu0 %7830
    %7832 = vrot.lane.b32.xlu0 %v6834, 64
    %v7833 = vpop.permute.xlu0 %7832
    %7834 = vrot.lane.b32.xlu0 %v6835, 64
    %v7835 = vpop.permute.xlu0 %7834
    %7836 = vrot.lane.b32.xlu0 %v6836, 64
    %v7837 = vpop.permute.xlu0 %7836
    %7838 = vrot.lane.b32.xlu0 %v6837, 64
    %v7839 = vpop.permute.xlu0 %7838
    %7840 = vrot.lane.b32.xlu0 %v6838, 64
    %v7841 = vpop.permute.xlu0 %7840
    %v7843 = vsel %vm816, %v7825, 0
    %v7846 = vsel %vm816, %v7827, 0
    %v7849 = vsel %vm816, %v7829, 0
    %v7852 = vsel %vm816, %v7831, 0
    %v7855 = vsel %vm816, %v7833, 0
    %v7858 = vsel %vm816, %v7835, 0
    %v7861 = vsel %vm816, %v7837, 0
    %v7864 = vsel %vm816, %v7839, 0
    %v7867 = vsel %vm816, %v7841, 0
    %7869 = vmatprep.subr.bf16.mxu0 0
    %7870 = vmatpush1.bf16.xpose.msra.mxu0 %v7846
    %7871 = vmatprep.subr.bf16.mxu0 0
    %7872 = vmatpush1.bf16.xpose.msra.mxu0 %v7849
    %7873 = vmatprep.subr.bf16.mxu0 0
    %7874 = vmatpush1.bf16.xpose.msra.mxu0 %v7852
    %7875 = vmatprep.subr.bf16.mxu0 0
    %7876 = vmatpush1.bf16.xpose.msra.mxu0 %v7855
    %7877 = vmatprep.subr.bf16.mxu0 0
    %7878 = vmatpush1.bf16.xpose.msra.mxu0 %v7858
    %7879 = vmatprep.subr.bf16.mxu0 0
    %7880 = vmatpush1.bf16.xpose.msra.mxu0 %v7861
    %7881 = vmatprep.subr.bf16.mxu0 0
    %7882 = vmatpush1.bf16.xpose.msra.mxu0 %v7864
    %7883 = vmatprep.subr.bf16.mxu0 0
    %7884 = vmatpush1.bf16.xpose.msra.mxu0 %v7867
    %7885 = vmatprep.subr.bf16.mxu0 0
    %7886 = vmatpush1.bf16.xpose.msra.mxu0 0
    %7887 = vmatprep.subr.bf16.mxu0 0
    %7888 = vmatpush1.bf16.xpose.msra.mxu0 0
    %7889 = vmatprep.subr.bf16.mxu0 0
    %7890 = vmatpush1.bf16.xpose.msra.mxu0 0
    %7891 = vmatprep.subr.bf16.mxu0 0
    %7892 = vmatpush1.bf16.xpose.msra.mxu0 0
    %7893 = vmatprep.subr.bf16.mxu0 0
    %7894 = vmatpush1.bf16.xpose.msra.mxu0 0
    %7895 = vmatprep.subr.bf16.mxu0 0
    %7896 = vmatpush1.bf16.xpose.msra.mxu0 0
    %7897 = vmatprep.subr.bf16.mxu0 0
    %7898 = vmatpush1.bf16.xpose.msra.mxu0 0
    %7899 = vmatprep.subr.bf16.mxu0 0
    %7900 = vmatpush1.bf16.xpose.msra.mxu0 0
    %7901 = vmatprep.mubr.bf16.mxu0 0
    %7902 = vmatmul.mubr.bf16.gmra.mrb[0].mxu0 %v7843
    %v7903 = vpop.f32.mrb[0].mxu0
    %v7904 = vadd.f32 0.0, %v7903
    %v7905 = vpop.f32.mrb[0].mxu0
    %v7906 = vpop.f32.mrb[0].mxu0
    %v7907 = vadd.f32 0.0, %v7906
    %v7908 = vpop.f32.mrb[0].mxu0
    %7909 = vdwg.mxu0
    %v7910 = vadd.f32 %v7603, %v7904
    %v7911 = vadd.f32 %v7604, %v7907
    %7912 = vrot.lane.b32.xlu0 %v6357, 48
    %v7913 = vpop.permute.xlu0 %7912
    %7914 = vrot.lane.b32.xlu0 %v6362, 48
    %v7915 = vpop.permute.xlu0 %7914
    %v7917 = vsel %vm816, %v7913, 0
    %v7920 = vsel %vm816, %v7915, 0
    %7922 = vmatprep.subr.bf16.mxu0 0
    %7923 = vmatpush1.bf16.xpose.msra.mxu0 %v7920
    %7924 = vmatprep.subr.bf16.mxu0 0
    %7925 = vmatpush1.bf16.xpose.msra.mxu0 0
    %7926 = vmatprep.subr.bf16.mxu0 0
    %7927 = vmatpush1.bf16.xpose.msra.mxu0 0
    %7928 = vmatprep.subr.bf16.mxu0 0
    %7929 = vmatpush1.bf16.xpose.msra.mxu0 0
    %7930 = vmatprep.subr.bf16.mxu0 0
    %7931 = vmatpush1.bf16.xpose.msra.mxu0 0
    %7932 = vmatprep.subr.bf16.mxu0 0
    %7933 = vmatpush1.bf16.xpose.msra.mxu0 0
    %7934 = vmatprep.subr.bf16.mxu0 0
    %7935 = vmatpush1.bf16.xpose.msra.mxu0 0
    %7936 = vmatprep.subr.bf16.mxu0 0
    %7937 = vmatpush1.bf16.xpose.msra.mxu0 0
    %7938 = vmatprep.subr.bf16.mxu0 0
    %7939 = vmatpush1.bf16.xpose.msra.mxu0 0
    %7940 = vmatprep.subr.bf16.mxu0 0
    %7941 = vmatpush1.bf16.xpose.msra.mxu0 0
    %7942 = vmatprep.subr.bf16.mxu0 0
    %7943 = vmatpush1.bf16.xpose.msra.mxu0 0
    %7944 = vmatprep.subr.bf16.mxu0 0
    %7945 = vmatpush1.bf16.xpose.msra.mxu0 0
    %7946 = vmatprep.subr.bf16.mxu0 0
    %7947 = vmatpush1.bf16.xpose.msra.mxu0 0
    %7948 = vmatprep.subr.bf16.mxu0 0
    %7949 = vmatpush1.bf16.xpose.msra.mxu0 0
    %7950 = vmatprep.subr.bf16.mxu0 0
    %7951 = vmatpush1.bf16.xpose.msra.mxu0 0
    %7952 = vmatprep.subr.bf16.mxu0 0
    %7953 = vmatpush1.bf16.xpose.msra.mxu0 0
    %7954 = vmatprep.mubr.bf16.mxu0 0
    %7955 = vmatmul.mubr.bf16.gmra.mrb[0].mxu0 %v7917
    %v7956 = vpop.f32.mrb[0].mxu0
    %v7957 = vadd.f32 0.0, %v7956
    %v7958 = vpop.f32.mrb[0].mxu0
    %v7959 = vpop.f32.mrb[0].mxu0
    %v7960 = vpop.f32.mrb[0].mxu0
    %7961 = vdwg.mxu0
    %7962 = vrot.lane.b32.xlu0 %v6358, 48
    %v7963 = vpop.permute.xlu0 %7962
    %7964 = vrot.lane.b32.xlu0 %v6363, 48
    %v7965 = vpop.permute.xlu0 %7964
    %v7967 = vsel %vm816, %v7963, 0
    %v7970 = vsel %vm816, %v7965, 0
    %7972 = vmatprep.subr.bf16.mxu0 0
    %7973 = vmatpush1.bf16.xpose.msra.mxu0 %v7970
    %7974 = vmatprep.subr.bf16.mxu0 0
    %7975 = vmatpush1.bf16.xpose.msra.mxu0 0
    %7976 = vmatprep.subr.bf16.mxu0 0
    %7977 = vmatpush1.bf16.xpose.msra.mxu0 0
    %7978 = vmatprep.subr.bf16.mxu0 0
    %7979 = vmatpush1.bf16.xpose.msra.mxu0 0
    %7980 = vmatprep.subr.bf16.mxu0 0
    %7981 = vmatpush1.bf16.xpose.msra.mxu0 0
    %7982 = vmatprep.subr.bf16.mxu0 0
    %7983 = vmatpush1.bf16.xpose.msra.mxu0 0
    %7984 = vmatprep.subr.bf16.mxu0 0
    %7985 = vmatpush1.bf16.xpose.msra.mxu0 0
    %7986 = vmatprep.subr.bf16.mxu0 0
    %7987 = vmatpush1.bf16.xpose.msra.mxu0 0
    %7988 = vmatprep.subr.bf16.mxu0 0
    %7989 = vmatpush1.bf16.xpose.msra.mxu0 0
    %7990 = vmatprep.subr.bf16.mxu0 0
    %7991 = vmatpush1.bf16.xpose.msra.mxu0 0
    %7992 = vmatprep.subr.bf16.mxu0 0
    %7993 = vmatpush1.bf16.xpose.msra.mxu0 0
    %7994 = vmatprep.subr.bf16.mxu0 0
    %7995 = vmatpush1.bf16.xpose.msra.mxu0 0
    %7996 = vmatprep.subr.bf16.mxu0 0
    %7997 = vmatpush1.bf16.xpose.msra.mxu0 0
    %7998 = vmatprep.subr.bf16.mxu0 0
    %7999 = vmatpush1.bf16.xpose.msra.mxu0 0
    %8000 = vmatprep.subr.bf16.mxu0 0
    %8001 = vmatpush1.bf16.xpose.msra.mxu0 0
    %8002 = vmatprep.subr.bf16.mxu0 0
    %8003 = vmatpush1.bf16.xpose.msra.mxu0 0
    %8004 = vmatprep.mubr.bf16.mxu0 0
    %8005 = vmatmul.mubr.bf16.gmra.mrb[0].mxu0 %v7967
    %v8006 = vpop.f32.mrb[0].mxu0
    %v8007 = vadd.f32 0.0, %v8006
    %v8008 = vpop.f32.mrb[0].mxu0
    %v8009 = vpop.f32.mrb[0].mxu0
    %v8010 = vpop.f32.mrb[0].mxu0
    %8011 = vdwg.mxu0
    %v8012 = vsel %vm909, %v7957, -inf
    %8013 = vmax.xlane.f32.xlu0 %v8012
    %v8014 = vpop.xlane.xlu0 %8013
    %v8015 = vsel %vm909, %v8007, -inf
    %8016 = vmax.xlane.f32.xlu0 %v8015
    %v8017 = vpop.xlane.xlu0 %8016
    %v8018 = vsub.f32 %v7957, %v8014
    %v8019 = vsub.f32 %v8007, %v8017
    %v8020 = vmul.f32 %v8018, 1.442695
    %v8021 = vpow.pop %v8020
    %v8022 = vmul.f32 %v8019, 1.442695
    %v8023 = vpow.pop %v8022
    %v8024 = vsel %vm909, %v8021, 0.0
    %8025 = vadd.xlane.f32.xlu0 %v8024
    %v8026 = vpop.xlane.xlu0 %8025
    %v8027 = vsel %vm909, %v8023, 0.0
    %8028 = vadd.xlane.f32.xlu0 %v8027
    %v8029 = vpop.xlane.xlu0 %8028
    %v8030 = vrcp.pop %v8026
    %v8031 = vrcp.pop %v8029
    %v8032 = vmul.f32 %v8021, %v8030
    %v8033 = vmul.f32 %v8023, %v8031
    %v8034 = vpack.c.bf16 %v8032, %v8032
    %v8035 = vpack.c.bf16 %v8033, %v8033
    %8036 = vrot.lane.b32.xlu0 %v6367, 48
    %v8037 = vpop.permute.xlu0 %8036
    %v8039 = vsel %vm909, %v8034, 0
    %v8042 = vsel %vm937, %v8037, 0
    %8044 = vmatprep.subr.bf16.mxu0 0
    %8045 = vmatpush1.bf16.msra.mxu0 %v8042
    %8046 = vmatprep.subr.bf16.mxu0 0
    %8047 = vmatpush1.bf16.msra.mxu0 0
    %8048 = vmatprep.subr.bf16.mxu0 0
    %8049 = vmatpush1.bf16.msra.mxu0 0
    %8050 = vmatprep.subr.bf16.mxu0 0
    %8051 = vmatpush1.bf16.msra.mxu0 0
    %8052 = vmatprep.subr.bf16.mxu0 0
    %8053 = vmatpush1.bf16.msra.mxu0 0
    %8054 = vmatprep.subr.bf16.mxu0 0
    %8055 = vmatpush1.bf16.msra.mxu0 0
    %8056 = vmatprep.subr.bf16.mxu0 0
    %8057 = vmatpush1.bf16.msra.mxu0 0
    %8058 = vmatprep.subr.bf16.mxu0 0
    %8059 = vmatpush1.bf16.msra.mxu0 0
    %8060 = vmatprep.subr.bf16.mxu0 0
    %8061 = vmatpush1.bf16.msra.mxu0 0
    %8062 = vmatprep.subr.bf16.mxu0 0
    %8063 = vmatpush1.bf16.msra.mxu0 0
    %8064 = vmatprep.subr.bf16.mxu0 0
    %8065 = vmatpush1.bf16.msra.mxu0 0
    %8066 = vmatprep.subr.bf16.mxu0 0
    %8067 = vmatpush1.bf16.msra.mxu0 0
    %8068 = vmatprep.subr.bf16.mxu0 0
    %8069 = vmatpush1.bf16.msra.mxu0 0
    %8070 = vmatprep.subr.bf16.mxu0 0
    %8071 = vmatpush1.bf16.msra.mxu0 0
    %8072 = vmatprep.subr.bf16.mxu0 0
    %8073 = vmatpush1.bf16.msra.mxu0 0
    %8074 = vmatprep.subr.bf16.mxu0 0
    %8075 = vmatpush1.bf16.msra.mxu0 0
    %8076 = vmatprep.mubr.bf16.mxu0 0
    %8077 = vmatmul.mubr.bf16.gmra.mrb[0].mxu0 %v8039
    %v8078 = vpop.f32.mrb[0].mxu0
    %v8079 = vadd.f32 0.0, %v8078
    %v8080 = vpop.f32.mrb[0].mxu0
    %v8081 = vpop.f32.mrb[0].mxu0
    %v8082 = vpop.f32.mrb[0].mxu0
    %8083 = vdwg.mxu0
    %8084 = vrot.lane.b32.xlu0 %v6368, 48
    %v8085 = vpop.permute.xlu0 %8084
    %v8087 = vsel %vm909, %v8035, 0
    %v8090 = vsel %vm937, %v8085, 0
    %8092 = vmatprep.subr.bf16.mxu0 0
    %8093 = vmatpush1.bf16.msra.mxu0 %v8090
    %8094 = vmatprep.subr.bf16.mxu0 0
    %8095 = vmatpush1.bf16.msra.mxu0 0
    %8096 = vmatprep.subr.bf16.mxu0 0
    %8097 = vmatpush1.bf16.msra.mxu0 0
    %8098 = vmatprep.subr.bf16.mxu0 0
    %8099 = vmatpush1.bf16.msra.mxu0 0
    %8100 = vmatprep.subr.bf16.mxu0 0
    %8101 = vmatpush1.bf16.msra.mxu0 0
    %8102 = vmatprep.subr.bf16.mxu0 0
    %8103 = vmatpush1.bf16.msra.mxu0 0
    %8104 = vmatprep.subr.bf16.mxu0 0
    %8105 = vmatpush1.bf16.msra.mxu0 0
    %8106 = vmatprep.subr.bf16.mxu0 0
    %8107 = vmatpush1.bf16.msra.mxu0 0
    %8108 = vmatprep.subr.bf16.mxu0 0
    %8109 = vmatpush1.bf16.msra.mxu0 0
    %8110 = vmatprep.subr.bf16.mxu0 0
    %8111 = vmatpush1.bf16.msra.mxu0 0
    %8112 = vmatprep.subr.bf16.mxu0 0
    %8113 = vmatpush1.bf16.msra.mxu0 0
    %8114 = vmatprep.subr.bf16.mxu0 0
    %8115 = vmatpush1.bf16.msra.mxu0 0
    %8116 = vmatprep.subr.bf16.mxu0 0
    %8117 = vmatpush1.bf16.msra.mxu0 0
    %8118 = vmatprep.subr.bf16.mxu0 0
    %8119 = vmatpush1.bf16.msra.mxu0 0
    %8120 = vmatprep.subr.bf16.mxu0 0
    %8121 = vmatpush1.bf16.msra.mxu0 0
    %8122 = vmatprep.subr.bf16.mxu0 0
    %8123 = vmatpush1.bf16.msra.mxu0 0
    %8124 = vmatprep.mubr.bf16.mxu0 0
    %8125 = vmatmul.mubr.bf16.gmra.mrb[0].mxu0 %v8087
    %v8126 = vpop.f32.mrb[0].mxu0
    %v8127 = vadd.f32 0.0, %v8126
    %v8128 = vpop.f32.mrb[0].mxu0
    %v8129 = vpop.f32.mrb[0].mxu0
    %v8130 = vpop.f32.mrb[0].mxu0
    %8131 = vdwg.mxu0
    %v8132 = vpack.c.bf16 %v8127, %v8079
    %8133 = vrot.lane.b32.xlu0 %v6831, 48
    %v8134 = vpop.permute.xlu0 %8133
    %8135 = vrot.lane.b32.xlu0 %v6832, 48
    %v8136 = vpop.permute.xlu0 %8135
    %8137 = vrot.lane.b32.xlu0 %v6833, 48
    %v8138 = vpop.permute.xlu0 %8137
    %8139 = vrot.lane.b32.xlu0 %v6834, 48
    %v8140 = vpop.permute.xlu0 %8139
    %8141 = vrot.lane.b32.xlu0 %v6835, 48
    %v8142 = vpop.permute.xlu0 %8141
    %8143 = vrot.lane.b32.xlu0 %v6836, 48
    %v8144 = vpop.permute.xlu0 %8143
    %8145 = vrot.lane.b32.xlu0 %v6837, 48
    %v8146 = vpop.permute.xlu0 %8145
    %8147 = vrot.lane.b32.xlu0 %v6838, 48
    %v8148 = vpop.permute.xlu0 %8147
    %v8150 = vsel %vm816, %v8132, 0
    %v8153 = vsel %vm816, %v8134, 0
    %v8156 = vsel %vm816, %v8136, 0
    %v8159 = vsel %vm816, %v8138, 0
    %v8162 = vsel %vm816, %v8140, 0
    %v8165 = vsel %vm816, %v8142, 0
    %v8168 = vsel %vm816, %v8144, 0
    %v8171 = vsel %vm816, %v8146, 0
    %v8174 = vsel %vm816, %v8148, 0
    %8176 = vmatprep.subr.bf16.mxu0 0
    %8177 = vmatpush1.bf16.xpose.msra.mxu0 %v8153
    %8178 = vmatprep.subr.bf16.mxu0 0
    %8179 = vmatpush1.bf16.xpose.msra.mxu0 %v8156
    %8180 = vmatprep.subr.bf16.mxu0 0
    %8181 = vmatpush1.bf16.xpose.msra.mxu0 %v8159
    %8182 = vmatprep.subr.bf16.mxu0 0
    %8183 = vmatpush1.bf16.xpose.msra.mxu0 %v8162
    %8184 = vmatprep.subr.bf16.mxu0 0
    %8185 = vmatpush1.bf16.xpose.msra.mxu0 %v8165
    %8186 = vmatprep.subr.bf16.mxu0 0
    %8187 = vmatpush1.bf16.xpose.msra.mxu0 %v8168
    %8188 = vmatprep.subr.bf16.mxu0 0
    %8189 = vmatpush1.bf16.xpose.msra.mxu0 %v8171
    %8190 = vmatprep.subr.bf16.mxu0 0
    %8191 = vmatpush1.bf16.xpose.msra.mxu0 %v8174
    %8192 = vmatprep.subr.bf16.mxu0 0
    %8193 = vmatpush1.bf16.xpose.msra.mxu0 0
    %8194 = vmatprep.subr.bf16.mxu0 0
    %8195 = vmatpush1.bf16.xpose.msra.mxu0 0
    %8196 = vmatprep.subr.bf16.mxu0 0
    %8197 = vmatpush1.bf16.xpose.msra.mxu0 0
    %8198 = vmatprep.subr.bf16.mxu0 0
    %8199 = vmatpush1.bf16.xpose.msra.mxu0 0
    %8200 = vmatprep.subr.bf16.mxu0 0
    %8201 = vmatpush1.bf16.xpose.msra.mxu0 0
    %8202 = vmatprep.subr.bf16.mxu0 0
    %8203 = vmatpush1.bf16.xpose.msra.mxu0 0
    %8204 = vmatprep.subr.bf16.mxu0 0
    %8205 = vmatpush1.bf16.xpose.msra.mxu0 0
    %8206 = vmatprep.subr.bf16.mxu0 0
    %8207 = vmatpush1.bf16.xpose.msra.mxu0 0
    %8208 = vmatprep.mubr.bf16.mxu0 0
    %8209 = vmatmul.mubr.bf16.gmra.mrb[0].mxu0 %v8150
    %v8210 = vpop.f32.mrb[0].mxu0
    %v8211 = vadd.f32 0.0, %v8210
    %v8212 = vpop.f32.mrb[0].mxu0
    %v8213 = vpop.f32.mrb[0].mxu0
    %v8214 = vadd.f32 0.0, %v8213
    %v8215 = vpop.f32.mrb[0].mxu0
    %8216 = vdwg.mxu0
    %v8217 = vadd.f32 %v7910, %v8211
    %v8218 = vadd.f32 %v7911, %v8214
    %8219 = vrot.lane.b32.xlu0 %v6357, 32
    %v8220 = vpop.permute.xlu0 %8219
    %8221 = vrot.lane.b32.xlu0 %v6362, 32
    %v8222 = vpop.permute.xlu0 %8221
    %v8224 = vsel %vm816, %v8220, 0
    %v8227 = vsel %vm816, %v8222, 0
    %8229 = vmatprep.subr.bf16.mxu0 0
    %8230 = vmatpush1.bf16.xpose.msra.mxu0 %v8227
    %8231 = vmatprep.subr.bf16.mxu0 0
    %8232 = vmatpush1.bf16.xpose.msra.mxu0 0
    %8233 = vmatprep.subr.bf16.mxu0 0
    %8234 = vmatpush1.bf16.xpose.msra.mxu0 0
    %8235 = vmatprep.subr.bf16.mxu0 0
    %8236 = vmatpush1.bf16.xpose.msra.mxu0 0
    %8237 = vmatprep.subr.bf16.mxu0 0
    %8238 = vmatpush1.bf16.xpose.msra.mxu0 0
    %8239 = vmatprep.subr.bf16.mxu0 0
    %8240 = vmatpush1.bf16.xpose.msra.mxu0 0
    %8241 = vmatprep.subr.bf16.mxu0 0
    %8242 = vmatpush1.bf16.xpose.msra.mxu0 0
    %8243 = vmatprep.subr.bf16.mxu0 0
    %8244 = vmatpush1.bf16.xpose.msra.mxu0 0
    %8245 = vmatprep.subr.bf16.mxu0 0
    %8246 = vmatpush1.bf16.xpose.msra.mxu0 0
    %8247 = vmatprep.subr.bf16.mxu0 0
    %8248 = vmatpush1.bf16.xpose.msra.mxu0 0
    %8249 = vmatprep.subr.bf16.mxu0 0
    %8250 = vmatpush1.bf16.xpose.msra.mxu0 0
    %8251 = vmatprep.subr.bf16.mxu0 0
    %8252 = vmatpush1.bf16.xpose.msra.mxu0 0
    %8253 = vmatprep.subr.bf16.mxu0 0
    %8254 = vmatpush1.bf16.xpose.msra.mxu0 0
    %8255 = vmatprep.subr.bf16.mxu0 0
    %8256 = vmatpush1.bf16.xpose.msra.mxu0 0
    %8257 = vmatprep.subr.bf16.mxu0 0
    %8258 = vmatpush1.bf16.xpose.msra.mxu0 0
    %8259 = vmatprep.subr.bf16.mxu0 0
    %8260 = vmatpush1.bf16.xpose.msra.mxu0 0
    %8261 = vmatprep.mubr.bf16.mxu0 0
    %8262 = vmatmul.mubr.bf16.gmra.mrb[0].mxu0 %v8224
    %v8263 = vpop.f32.mrb[0].mxu0
    %v8264 = vadd.f32 0.0, %v8263
    %v8265 = vpop.f32.mrb[0].mxu0
    %v8266 = vpop.f32.mrb[0].mxu0
    %v8267 = vpop.f32.mrb[0].mxu0
    %8268 = vdwg.mxu0
    %8269 = vrot.lane.b32.xlu0 %v6358, 32
    %v8270 = vpop.permute.xlu0 %8269
    %8271 = vrot.lane.b32.xlu0 %v6363, 32
    %v8272 = vpop.permute.xlu0 %8271
    %v8274 = vsel %vm816, %v8270, 0
    %v8277 = vsel %vm816, %v8272, 0
    %8279 = vmatprep.subr.bf16.mxu0 0
    %8280 = vmatpush1.bf16.xpose.msra.mxu0 %v8277
    %8281 = vmatprep.subr.bf16.mxu0 0
    %8282 = vmatpush1.bf16.xpose.msra.mxu0 0
    %8283 = vmatprep.subr.bf16.mxu0 0
    %8284 = vmatpush1.bf16.xpose.msra.mxu0 0
    %8285 = vmatprep.subr.bf16.mxu0 0
    %8286 = vmatpush1.bf16.xpose.msra.mxu0 0
    %8287 = vmatprep.subr.bf16.mxu0 0
    %8288 = vmatpush1.bf16.xpose.msra.mxu0 0
    %8289 = vmatprep.subr.bf16.mxu0 0
    %8290 = vmatpush1.bf16.xpose.msra.mxu0 0
    %8291 = vmatprep.subr.bf16.mxu0 0
    %8292 = vmatpush1.bf16.xpose.msra.mxu0 0
    %8293 = vmatprep.subr.bf16.mxu0 0
    %8294 = vmatpush1.bf16.xpose.msra.mxu0 0
    %8295 = vmatprep.subr.bf16.mxu0 0
    %8296 = vmatpush1.bf16.xpose.msra.mxu0 0
    %8297 = vmatprep.subr.bf16.mxu0 0
    %8298 = vmatpush1.bf16.xpose.msra.mxu0 0
    %8299 = vmatprep.subr.bf16.mxu0 0
    %8300 = vmatpush1.bf16.xpose.msra.mxu0 0
    %8301 = vmatprep.subr.bf16.mxu0 0
    %8302 = vmatpush1.bf16.xpose.msra.mxu0 0
    %8303 = vmatprep.subr.bf16.mxu0 0
    %8304 = vmatpush1.bf16.xpose.msra.mxu0 0
    %8305 = vmatprep.subr.bf16.mxu0 0
    %8306 = vmatpush1.bf16.xpose.msra.mxu0 0
    %8307 = vmatprep.subr.bf16.mxu0 0
    %8308 = vmatpush1.bf16.xpose.msra.mxu0 0
    %8309 = vmatprep.subr.bf16.mxu0 0
    %8310 = vmatpush1.bf16.xpose.msra.mxu0 0
    %8311 = vmatprep.mubr.bf16.mxu0 0
    %8312 = vmatmul.mubr.bf16.gmra.mrb[0].mxu0 %v8274
    %v8313 = vpop.f32.mrb[0].mxu0
    %v8314 = vadd.f32 0.0, %v8313
    %v8315 = vpop.f32.mrb[0].mxu0
    %v8316 = vpop.f32.mrb[0].mxu0
    %v8317 = vpop.f32.mrb[0].mxu0
    %8318 = vdwg.mxu0
    %v8319 = vsel %vm909, %v8264, -inf
    %8320 = vmax.xlane.f32.xlu0 %v8319
    %v8321 = vpop.xlane.xlu0 %8320
    %v8322 = vsel %vm909, %v8314, -inf
    %8323 = vmax.xlane.f32.xlu0 %v8322
    %v8324 = vpop.xlane.xlu0 %8323
    %v8325 = vsub.f32 %v8264, %v8321
    %v8326 = vsub.f32 %v8314, %v8324
    %v8327 = vmul.f32 %v8325, 1.442695
    %v8328 = vpow.pop %v8327
    %v8329 = vmul.f32 %v8326, 1.442695
    %v8330 = vpow.pop %v8329
    %v8331 = vsel %vm909, %v8328, 0.0
    %8332 = vadd.xlane.f32.xlu0 %v8331
    %v8333 = vpop.xlane.xlu0 %8332
    %v8334 = vsel %vm909, %v8330, 0.0
    %8335 = vadd.xlane.f32.xlu0 %v8334
    %v8336 = vpop.xlane.xlu0 %8335
    %v8337 = vrcp.pop %v8333
    %v8338 = vrcp.pop %v8336
    %v8339 = vmul.f32 %v8328, %v8337
    %v8340 = vmul.f32 %v8330, %v8338
    %v8341 = vpack.c.bf16 %v8339, %v8339
    %v8342 = vpack.c.bf16 %v8340, %v8340
    %8343 = vrot.lane.b32.xlu0 %v6367, 32
    %v8344 = vpop.permute.xlu0 %8343
    %v8346 = vsel %vm909, %v8341, 0
    %v8349 = vsel %vm937, %v8344, 0
    %8351 = vmatprep.subr.bf16.mxu0 0
    %8352 = vmatpush1.bf16.msra.mxu0 %v8349
    %8353 = vmatprep.subr.bf16.mxu0 0
    %8354 = vmatpush1.bf16.msra.mxu0 0
    %8355 = vmatprep.subr.bf16.mxu0 0
    %8356 = vmatpush1.bf16.msra.mxu0 0
    %8357 = vmatprep.subr.bf16.mxu0 0
    %8358 = vmatpush1.bf16.msra.mxu0 0
    %8359 = vmatprep.subr.bf16.mxu0 0
    %8360 = vmatpush1.bf16.msra.mxu0 0
    %8361 = vmatprep.subr.bf16.mxu0 0
    %8362 = vmatpush1.bf16.msra.mxu0 0
    %8363 = vmatprep.subr.bf16.mxu0 0
    %8364 = vmatpush1.bf16.msra.mxu0 0
    %8365 = vmatprep.subr.bf16.mxu0 0
    %8366 = vmatpush1.bf16.msra.mxu0 0
    %8367 = vmatprep.subr.bf16.mxu0 0
    %8368 = vmatpush1.bf16.msra.mxu0 0
    %8369 = vmatprep.subr.bf16.mxu0 0
    %8370 = vmatpush1.bf16.msra.mxu0 0
    %8371 = vmatprep.subr.bf16.mxu0 0
    %8372 = vmatpush1.bf16.msra.mxu0 0
    %8373 = vmatprep.subr.bf16.mxu0 0
    %8374 = vmatpush1.bf16.msra.mxu0 0
    %8375 = vmatprep.subr.bf16.mxu0 0
    %8376 = vmatpush1.bf16.msra.mxu0 0
    %8377 = vmatprep.subr.bf16.mxu0 0
    %8378 = vmatpush1.bf16.msra.mxu0 0
    %8379 = vmatprep.subr.bf16.mxu0 0
    %8380 = vmatpush1.bf16.msra.mxu0 0
    %8381 = vmatprep.subr.bf16.mxu0 0
    %8382 = vmatpush1.bf16.msra.mxu0 0
    %8383 = vmatprep.mubr.bf16.mxu0 0
    %8384 = vmatmul.mubr.bf16.gmra.mrb[0].mxu0 %v8346
    %v8385 = vpop.f32.mrb[0].mxu0
    %v8386 = vadd.f32 0.0, %v8385
    %v8387 = vpop.f32.mrb[0].mxu0
    %v8388 = vpop.f32.mrb[0].mxu0
    %v8389 = vpop.f32.mrb[0].mxu0
    %8390 = vdwg.mxu0
    %8391 = vrot.lane.b32.xlu0 %v6368, 32
    %v8392 = vpop.permute.xlu0 %8391
    %v8394 = vsel %vm909, %v8342, 0
    %v8397 = vsel %vm937, %v8392, 0
    %8399 = vmatprep.subr.bf16.mxu0 0
    %8400 = vmatpush1.bf16.msra.mxu0 %v8397
    %8401 = vmatprep.subr.bf16.mxu0 0
    %8402 = vmatpush1.bf16.msra.mxu0 0
    %8403 = vmatprep.subr.bf16.mxu0 0
    %8404 = vmatpush1.bf16.msra.mxu0 0
    %8405 = vmatprep.subr.bf16.mxu0 0
    %8406 = vmatpush1.bf16.msra.mxu0 0
    %8407 = vmatprep.subr.bf16.mxu0 0
    %8408 = vmatpush1.bf16.msra.mxu0 0
    %8409 = vmatprep.subr.bf16.mxu0 0
    %8410 = vmatpush1.bf16.msra.mxu0 0
    %8411 = vmatprep.subr.bf16.mxu0 0
    %8412 = vmatpush1.bf16.msra.mxu0 0
    %8413 = vmatprep.subr.bf16.mxu0 0
    %8414 = vmatpush1.bf16.msra.mxu0 0
    %8415 = vmatprep.subr.bf16.mxu0 0
    %8416 = vmatpush1.bf16.msra.mxu0 0
    %8417 = vmatprep.subr.bf16.mxu0 0
    %8418 = vmatpush1.bf16.msra.mxu0 0
    %8419 = vmatprep.subr.bf16.mxu0 0
    %8420 = vmatpush1.bf16.msra.mxu0 0
    %8421 = vmatprep.subr.bf16.mxu0 0
    %8422 = vmatpush1.bf16.msra.mxu0 0
    %8423 = vmatprep.subr.bf16.mxu0 0
    %8424 = vmatpush1.bf16.msra.mxu0 0
    %8425 = vmatprep.subr.bf16.mxu0 0
    %8426 = vmatpush1.bf16.msra.mxu0 0
    %8427 = vmatprep.subr.bf16.mxu0 0
    %8428 = vmatpush1.bf16.msra.mxu0 0
    %8429 = vmatprep.subr.bf16.mxu0 0
    %8430 = vmatpush1.bf16.msra.mxu0 0
    %8431 = vmatprep.mubr.bf16.mxu0 0
    %8432 = vmatmul.mubr.bf16.gmra.mrb[0].mxu0 %v8394
    %v8433 = vpop.f32.mrb[0].mxu0
    %v8434 = vadd.f32 0.0, %v8433
    %v8435 = vpop.f32.mrb[0].mxu0
    %v8436 = vpop.f32.mrb[0].mxu0
    %v8437 = vpop.f32.mrb[0].mxu0
    %8438 = vdwg.mxu0
    %v8439 = vpack.c.bf16 %v8434, %v8386
    %8440 = vrot.lane.b32.xlu0 %v6831, 32
    %v8441 = vpop.permute.xlu0 %8440
    %8442 = vrot.lane.b32.xlu0 %v6832, 32
    %v8443 = vpop.permute.xlu0 %8442
    %8444 = vrot.lane.b32.xlu0 %v6833, 32
    %v8445 = vpop.permute.xlu0 %8444
    %8446 = vrot.lane.b32.xlu0 %v6834, 32
    %v8447 = vpop.permute.xlu0 %8446
    %8448 = vrot.lane.b32.xlu0 %v6835, 32
    %v8449 = vpop.permute.xlu0 %8448
    %8450 = vrot.lane.b32.xlu0 %v6836, 32
    %v8451 = vpop.permute.xlu0 %8450
    %8452 = vrot.lane.b32.xlu0 %v6837, 32
    %v8453 = vpop.permute.xlu0 %8452
    %8454 = vrot.lane.b32.xlu0 %v6838, 32
    %v8455 = vpop.permute.xlu0 %8454
    %v8457 = vsel %vm816, %v8439, 0
    %v8460 = vsel %vm816, %v8441, 0
    %v8463 = vsel %vm816, %v8443, 0
    %v8466 = vsel %vm816, %v8445, 0
    %v8469 = vsel %vm816, %v8447, 0
    %v8472 = vsel %vm816, %v8449, 0
    %v8475 = vsel %vm816, %v8451, 0
    %v8478 = vsel %vm816, %v8453, 0
    %v8481 = vsel %vm816, %v8455, 0
    %8483 = vmatprep.subr.bf16.mxu0 0
    %8484 = vmatpush1.bf16.xpose.msra.mxu0 %v8460
    %8485 = vmatprep.subr.bf16.mxu0 0
    %8486 = vmatpush1.bf16.xpose.msra.mxu0 %v8463
    %8487 = vmatprep.subr.bf16.mxu0 0
    %8488 = vmatpush1.bf16.xpose.msra.mxu0 %v8466
    %8489 = vmatprep.subr.bf16.mxu0 0
    %8490 = vmatpush1.bf16.xpose.msra.mxu0 %v8469
    %8491 = vmatprep.subr.bf16.mxu0 0
    %8492 = vmatpush1.bf16.xpose.msra.mxu0 %v8472
    %8493 = vmatprep.subr.bf16.mxu0 0
    %8494 = vmatpush1.bf16.xpose.msra.mxu0 %v8475
    %8495 = vmatprep.subr.bf16.mxu0 0
    %8496 = vmatpush1.bf16.xpose.msra.mxu0 %v8478
    %8497 = vmatprep.subr.bf16.mxu0 0
    %8498 = vmatpush1.bf16.xpose.msra.mxu0 %v8481
    %8499 = vmatprep.subr.bf16.mxu0 0
    %8500 = vmatpush1.bf16.xpose.msra.mxu0 0
    %8501 = vmatprep.subr.bf16.mxu0 0
    %8502 = vmatpush1.bf16.xpose.msra.mxu0 0
    %8503 = vmatprep.subr.bf16.mxu0 0
    %8504 = vmatpush1.bf16.xpose.msra.mxu0 0
    %8505 = vmatprep.subr.bf16.mxu0 0
    %8506 = vmatpush1.bf16.xpose.msra.mxu0 0
    %8507 = vmatprep.subr.bf16.mxu0 0
    %8508 = vmatpush1.bf16.xpose.msra.mxu0 0
    %8509 = vmatprep.subr.bf16.mxu0 0
    %8510 = vmatpush1.bf16.xpose.msra.mxu0 0
    %8511 = vmatprep.subr.bf16.mxu0 0
    %8512 = vmatpush1.bf16.xpose.msra.mxu0 0
    %8513 = vmatprep.subr.bf16.mxu0 0
    %8514 = vmatpush1.bf16.xpose.msra.mxu0 0
    %8515 = vmatprep.mubr.bf16.mxu0 0
    %8516 = vmatmul.mubr.bf16.gmra.mrb[0].mxu0 %v8457
    %v8517 = vpop.f32.mrb[0].mxu0
    %v8518 = vadd.f32 0.0, %v8517
    %v8519 = vpop.f32.mrb[0].mxu0
    %v8520 = vpop.f32.mrb[0].mxu0
    %v8521 = vadd.f32 0.0, %v8520
    %v8522 = vpop.f32.mrb[0].mxu0
    %8523 = vdwg.mxu0
    %v8524 = vadd.f32 %v8217, %v8518
    %v8525 = vadd.f32 %v8218, %v8521
    %8526 = vrot.lane.b32.xlu0 %v6357, 16
    %v8527 = vpop.permute.xlu0 %8526
    %8528 = vrot.lane.b32.xlu0 %v6362, 16
    %v8529 = vpop.permute.xlu0 %8528
    %v8531 = vsel %vm816, %v8527, 0
    %v8534 = vsel %vm816, %v8529, 0
    %8536 = vmatprep.subr.bf16.mxu0 0
    %8537 = vmatpush1.bf16.xpose.msra.mxu0 %v8534
    %8538 = vmatprep.subr.bf16.mxu0 0
    %8539 = vmatpush1.bf16.xpose.msra.mxu0 0
    %8540 = vmatprep.subr.bf16.mxu0 0
    %8541 = vmatpush1.bf16.xpose.msra.mxu0 0
    %8542 = vmatprep.subr.bf16.mxu0 0
    %8543 = vmatpush1.bf16.xpose.msra.mxu0 0
    %8544 = vmatprep.subr.bf16.mxu0 0
    %8545 = vmatpush1.bf16.xpose.msra.mxu0 0
    %8546 = vmatprep.subr.bf16.mxu0 0
    %8547 = vmatpush1.bf16.xpose.msra.mxu0 0
    %8548 = vmatprep.subr.bf16.mxu0 0
    %8549 = vmatpush1.bf16.xpose.msra.mxu0 0
    %8550 = vmatprep.subr.bf16.mxu0 0
    %8551 = vmatpush1.bf16.xpose.msra.mxu0 0
    %8552 = vmatprep.subr.bf16.mxu0 0
    %8553 = vmatpush1.bf16.xpose.msra.mxu0 0
    %8554 = vmatprep.subr.bf16.mxu0 0
    %8555 = vmatpush1.bf16.xpose.msra.mxu0 0
    %8556 = vmatprep.subr.bf16.mxu0 0
    %8557 = vmatpush1.bf16.xpose.msra.mxu0 0
    %8558 = vmatprep.subr.bf16.mxu0 0
    %8559 = vmatpush1.bf16.xpose.msra.mxu0 0
    %8560 = vmatprep.subr.bf16.mxu0 0
    %8561 = vmatpush1.bf16.xpose.msra.mxu0 0
    %8562 = vmatprep.subr.bf16.mxu0 0
    %8563 = vmatpush1.bf16.xpose.msra.mxu0 0
    %8564 = vmatprep.subr.bf16.mxu0 0
    %8565 = vmatpush1.bf16.xpose.msra.mxu0 0
    %8566 = vmatprep.subr.bf16.mxu0 0
    %8567 = vmatpush1.bf16.xpose.msra.mxu0 0
    %8568 = vmatprep.mubr.bf16.mxu0 0
    %8569 = vmatmul.mubr.bf16.gmra.mrb[0].mxu0 %v8531
    %v8570 = vpop.f32.mrb[0].mxu0
    %v8571 = vadd.f32 0.0, %v8570
    %v8572 = vpop.f32.mrb[0].mxu0
    %v8573 = vpop.f32.mrb[0].mxu0
    %v8574 = vpop.f32.mrb[0].mxu0
    %8575 = vdwg.mxu0
    %8576 = vrot.lane.b32.xlu0 %v6358, 16
    %v8577 = vpop.permute.xlu0 %8576
    %8578 = vrot.lane.b32.xlu0 %v6363, 16
    %v8579 = vpop.permute.xlu0 %8578
    %v8581 = vsel %vm816, %v8577, 0
    %v8584 = vsel %vm816, %v8579, 0
    %8586 = vmatprep.subr.bf16.mxu0 0
    %8587 = vmatpush1.bf16.xpose.msra.mxu0 %v8584
    %8588 = vmatprep.subr.bf16.mxu0 0
    %8589 = vmatpush1.bf16.xpose.msra.mxu0 0
    %8590 = vmatprep.subr.bf16.mxu0 0
    %8591 = vmatpush1.bf16.xpose.msra.mxu0 0
    %8592 = vmatprep.subr.bf16.mxu0 0
    %8593 = vmatpush1.bf16.xpose.msra.mxu0 0
    %8594 = vmatprep.subr.bf16.mxu0 0
    %8595 = vmatpush1.bf16.xpose.msra.mxu0 0
    %8596 = vmatprep.subr.bf16.mxu0 0
    %8597 = vmatpush1.bf16.xpose.msra.mxu0 0
    %8598 = vmatprep.subr.bf16.mxu0 0
    %8599 = vmatpush1.bf16.xpose.msra.mxu0 0
    %8600 = vmatprep.subr.bf16.mxu0 0
    %8601 = vmatpush1.bf16.xpose.msra.mxu0 0
    %8602 = vmatprep.subr.bf16.mxu0 0
    %8603 = vmatpush1.bf16.xpose.msra.mxu0 0
    %8604 = vmatprep.subr.bf16.mxu0 0
    %8605 = vmatpush1.bf16.xpose.msra.mxu0 0
    %8606 = vmatprep.subr.bf16.mxu0 0
    %8607 = vmatpush1.bf16.xpose.msra.mxu0 0
    %8608 = vmatprep.subr.bf16.mxu0 0
    %8609 = vmatpush1.bf16.xpose.msra.mxu0 0
    %8610 = vmatprep.subr.bf16.mxu0 0
    %8611 = vmatpush1.bf16.xpose.msra.mxu0 0
    %8612 = vmatprep.subr.bf16.mxu0 0
    %8613 = vmatpush1.bf16.xpose.msra.mxu0 0
    %8614 = vmatprep.subr.bf16.mxu0 0
    %8615 = vmatpush1.bf16.xpose.msra.mxu0 0
    %8616 = vmatprep.subr.bf16.mxu0 0
    %8617 = vmatpush1.bf16.xpose.msra.mxu0 0
    %8618 = vmatprep.mubr.bf16.mxu0 0
    %8619 = vmatmul.mubr.bf16.gmra.mrb[0].mxu0 %v8581
    %v8620 = vpop.f32.mrb[0].mxu0
    %v8621 = vadd.f32 0.0, %v8620
    %v8622 = vpop.f32.mrb[0].mxu0
    %v8623 = vpop.f32.mrb[0].mxu0
    %v8624 = vpop.f32.mrb[0].mxu0
    %8625 = vdwg.mxu0
    %v8626 = vsel %vm909, %v8571, -inf
    %8627 = vmax.xlane.f32.xlu0 %v8626
    %v8628 = vpop.xlane.xlu0 %8627
    %v8629 = vsel %vm909, %v8621, -inf
    %8630 = vmax.xlane.f32.xlu0 %v8629
    %v8631 = vpop.xlane.xlu0 %8630
    %v8632 = vsub.f32 %v8571, %v8628
    %v8633 = vsub.f32 %v8621, %v8631
    %v8634 = vmul.f32 %v8632, 1.442695
    %v8635 = vpow.pop %v8634
    %v8636 = vmul.f32 %v8633, 1.442695
    %v8637 = vpow.pop %v8636
    %v8638 = vsel %vm909, %v8635, 0.0
    %8639 = vadd.xlane.f32.xlu0 %v8638
    %v8640 = vpop.xlane.xlu0 %8639
    %v8641 = vsel %vm909, %v8637, 0.0
    %8642 = vadd.xlane.f32.xlu0 %v8641
    %v8643 = vpop.xlane.xlu0 %8642
    %v8644 = vrcp.pop %v8640
    %v8645 = vrcp.pop %v8643
    %v8646 = vmul.f32 %v8635, %v8644
    %v8647 = vmul.f32 %v8637, %v8645
    %v8648 = vpack.c.bf16 %v8646, %v8646
    %v8649 = vpack.c.bf16 %v8647, %v8647
    %8650 = vrot.lane.b32.xlu0 %v6367, 16
    %v8651 = vpop.permute.xlu0 %8650
    %v8653 = vsel %vm909, %v8648, 0
    %v8656 = vsel %vm937, %v8651, 0
    %8658 = vmatprep.subr.bf16.mxu0 0
    %8659 = vmatpush1.bf16.msra.mxu0 %v8656
    %8660 = vmatprep.subr.bf16.mxu0 0
    %8661 = vmatpush1.bf16.msra.mxu0 0
    %8662 = vmatprep.subr.bf16.mxu0 0
    %8663 = vmatpush1.bf16.msra.mxu0 0
    %8664 = vmatprep.subr.bf16.mxu0 0
    %8665 = vmatpush1.bf16.msra.mxu0 0
    %8666 = vmatprep.subr.bf16.mxu0 0
    %8667 = vmatpush1.bf16.msra.mxu0 0
    %8668 = vmatprep.subr.bf16.mxu0 0
    %8669 = vmatpush1.bf16.msra.mxu0 0
    %8670 = vmatprep.subr.bf16.mxu0 0
    %8671 = vmatpush1.bf16.msra.mxu0 0
    %8672 = vmatprep.subr.bf16.mxu0 0
    %8673 = vmatpush1.bf16.msra.mxu0 0
    %8674 = vmatprep.subr.bf16.mxu0 0
    %8675 = vmatpush1.bf16.msra.mxu0 0
    %8676 = vmatprep.subr.bf16.mxu0 0
    %8677 = vmatpush1.bf16.msra.mxu0 0
    %8678 = vmatprep.subr.bf16.mxu0 0
    %8679 = vmatpush1.bf16.msra.mxu0 0
    %8680 = vmatprep.subr.bf16.mxu0 0
    %8681 = vmatpush1.bf16.msra.mxu0 0
    %8682 = vmatprep.subr.bf16.mxu0 0
    %8683 = vmatpush1.bf16.msra.mxu0 0
    %8684 = vmatprep.subr.bf16.mxu0 0
    %8685 = vmatpush1.bf16.msra.mxu0 0
    %8686 = vmatprep.subr.bf16.mxu0 0
    %8687 = vmatpush1.bf16.msra.mxu0 0
    %8688 = vmatprep.subr.bf16.mxu0 0
    %8689 = vmatpush1.bf16.msra.mxu0 0
    %8690 = vmatprep.mubr.bf16.mxu0 0
    %8691 = vmatmul.mubr.bf16.gmra.mrb[0].mxu0 %v8653
    %v8692 = vpop.f32.mrb[0].mxu0
    %v8693 = vadd.f32 0.0, %v8692
    %v8694 = vpop.f32.mrb[0].mxu0
    %v8695 = vpop.f32.mrb[0].mxu0
    %v8696 = vpop.f32.mrb[0].mxu0
    %8697 = vdwg.mxu0
    %8698 = vrot.lane.b32.xlu0 %v6368, 16
    %v8699 = vpop.permute.xlu0 %8698
    %v8701 = vsel %vm909, %v8649, 0
    %v8704 = vsel %vm937, %v8699, 0
    %8706 = vmatprep.subr.bf16.mxu0 0
    %8707 = vmatpush1.bf16.msra.mxu0 %v8704
    %8708 = vmatprep.subr.bf16.mxu0 0
    %8709 = vmatpush1.bf16.msra.mxu0 0
    %8710 = vmatprep.subr.bf16.mxu0 0
    %8711 = vmatpush1.bf16.msra.mxu0 0
    %8712 = vmatprep.subr.bf16.mxu0 0
    %8713 = vmatpush1.bf16.msra.mxu0 0
    %8714 = vmatprep.subr.bf16.mxu0 0
    %8715 = vmatpush1.bf16.msra.mxu0 0
    %8716 = vmatprep.subr.bf16.mxu0 0
    %8717 = vmatpush1.bf16.msra.mxu0 0
    %8718 = vmatprep.subr.bf16.mxu0 0
    %8719 = vmatpush1.bf16.msra.mxu0 0
    %8720 = vmatprep.subr.bf16.mxu0 0
    %8721 = vmatpush1.bf16.msra.mxu0 0
    %8722 = vmatprep.subr.bf16.mxu0 0
    %8723 = vmatpush1.bf16.msra.mxu0 0
    %8724 = vmatprep.subr.bf16.mxu0 0
    %8725 = vmatpush1.bf16.msra.mxu0 0
    %8726 = vmatprep.subr.bf16.mxu0 0
    %8727 = vmatpush1.bf16.msra.mxu0 0
    %8728 = vmatprep.subr.bf16.mxu0 0
    %8729 = vmatpush1.bf16.msra.mxu0 0
    %8730 = vmatprep.subr.bf16.mxu0 0
    %8731 = vmatpush1.bf16.msra.mxu0 0
    %8732 = vmatprep.subr.bf16.mxu0 0
    %8733 = vmatpush1.bf16.msra.mxu0 0
    %8734 = vmatprep.subr.bf16.mxu0 0
    %8735 = vmatpush1.bf16.msra.mxu0 0
    %8736 = vmatprep.subr.bf16.mxu0 0
    %8737 = vmatpush1.bf16.msra.mxu0 0
    %8738 = vmatprep.mubr.bf16.mxu0 0
    %8739 = vmatmul.mubr.bf16.gmra.mrb[0].mxu0 %v8701
    %v8740 = vpop.f32.mrb[0].mxu0
    %v8741 = vadd.f32 0.0, %v8740
    %v8742 = vpop.f32.mrb[0].mxu0
    %v8743 = vpop.f32.mrb[0].mxu0
    %v8744 = vpop.f32.mrb[0].mxu0
    %8745 = vdwg.mxu0
    %v8746 = vpack.c.bf16 %v8741, %v8693
    %8747 = vrot.lane.b32.xlu0 %v6831, 16
    %v8748 = vpop.permute.xlu0 %8747
    %8749 = vrot.lane.b32.xlu0 %v6832, 16
    %v8750 = vpop.permute.xlu0 %8749
    %8751 = vrot.lane.b32.xlu0 %v6833, 16
    %v8752 = vpop.permute.xlu0 %8751
    %8753 = vrot.lane.b32.xlu0 %v6834, 16
    %v8754 = vpop.permute.xlu0 %8753
    %8755 = vrot.lane.b32.xlu0 %v6835, 16
    %v8756 = vpop.permute.xlu0 %8755
    %8757 = vrot.lane.b32.xlu0 %v6836, 16
    %v8758 = vpop.permute.xlu0 %8757
    %8759 = vrot.lane.b32.xlu0 %v6837, 16
    %v8760 = vpop.permute.xlu0 %8759
    %8761 = vrot.lane.b32.xlu0 %v6838, 16
    %v8762 = vpop.permute.xlu0 %8761
    %v8764 = vsel %vm816, %v8746, 0
    %v8767 = vsel %vm816, %v8748, 0
    %v8770 = vsel %vm816, %v8750, 0
    %v8773 = vsel %vm816, %v8752, 0
    %v8776 = vsel %vm816, %v8754, 0
    %v8779 = vsel %vm816, %v8756, 0
    %v8782 = vsel %vm816, %v8758, 0
    %v8785 = vsel %vm816, %v8760, 0
    %v8788 = vsel %vm816, %v8762, 0
    %8790 = vmatprep.subr.bf16.mxu0 0
    %8791 = vmatpush1.bf16.xpose.msra.mxu0 %v8767
    %8792 = vmatprep.subr.bf16.mxu0 0
    %8793 = vmatpush1.bf16.xpose.msra.mxu0 %v8770
    %8794 = vmatprep.subr.bf16.mxu0 0
    %8795 = vmatpush1.bf16.xpose.msra.mxu0 %v8773
    %8796 = vmatprep.subr.bf16.mxu0 0
    %8797 = vmatpush1.bf16.xpose.msra.mxu0 %v8776
    %8798 = vmatprep.subr.bf16.mxu0 0
    %8799 = vmatpush1.bf16.xpose.msra.mxu0 %v8779
    %8800 = vmatprep.subr.bf16.mxu0 0
    %8801 = vmatpush1.bf16.xpose.msra.mxu0 %v8782
    %8802 = vmatprep.subr.bf16.mxu0 0
    %8803 = vmatpush1.bf16.xpose.msra.mxu0 %v8785
    %8804 = vmatprep.subr.bf16.mxu0 0
    %8805 = vmatpush1.bf16.xpose.msra.mxu0 %v8788
    %8806 = vmatprep.subr.bf16.mxu0 0
    %8807 = vmatpush1.bf16.xpose.msra.mxu0 0
    %8808 = vmatprep.subr.bf16.mxu0 0
    %8809 = vmatpush1.bf16.xpose.msra.mxu0 0
    %8810 = vmatprep.subr.bf16.mxu0 0
    %8811 = vmatpush1.bf16.xpose.msra.mxu0 0
    %8812 = vmatprep.subr.bf16.mxu0 0
    %8813 = vmatpush1.bf16.xpose.msra.mxu0 0
    %8814 = vmatprep.subr.bf16.mxu0 0
    %8815 = vmatpush1.bf16.xpose.msra.mxu0 0
    %8816 = vmatprep.subr.bf16.mxu0 0
    %8817 = vmatpush1.bf16.xpose.msra.mxu0 0
    %8818 = vmatprep.subr.bf16.mxu0 0
    %8819 = vmatpush1.bf16.xpose.msra.mxu0 0
    %8820 = vmatprep.subr.bf16.mxu0 0
    %8821 = vmatpush1.bf16.xpose.msra.mxu0 0
    %8822 = vmatprep.mubr.bf16.mxu0 0
    %8823 = vmatmul.mubr.bf16.gmra.mrb[0].mxu0 %v8764
    %v8824 = vpop.f32.mrb[0].mxu0
    %v8825 = vadd.f32 0.0, %v8824
    %v8826 = vpop.f32.mrb[0].mxu0
    %v8827 = vpop.f32.mrb[0].mxu0
    %v8828 = vadd.f32 0.0, %v8827
    %v8829 = vpop.f32.mrb[0].mxu0
    %8830 = vdwg.mxu0
    %v8831 = vadd.f32 %v8524, %v8825
    %v8832 = vadd.f32 %v8525, %v8828
    %v8833 = vlaneseq
    %v8834 = vshrl.u32 %v8833, 7
    %v8835 = vsub.s32 1, %v8834
    %v8836 = vrot.slane %v83, %v8835
    %v8837 = vadd.f32 %v8831, %v8836
    %v8838 = vadd.f32 %v8832, %v8836
    %v8839 = vadd.f32 %v5641, %v8837
    %v8840 = vadd.f32 %v5642, %v8838
    %8841 = vadd.xlane.f32.xlu0 %v8839
    %v8842 = vpop.xlane.xlu0 %8841
    %8843 = vadd.xlane.f32.xlu0 %v8840
    %v8844 = vpop.xlane.xlu0 %8843
    %v8845 = vmul.f32 %v8842, %v3295
    %v8846 = vmul.f32 %v8844, %v3295
    %v8847 = vsub.f32 %v8839, %v8845
    %v8848 = vsub.f32 %v8840, %v8846
    %v8849 = vmul.f32 %v8847, %v8847
    %v8850 = vmul.f32 %v8848, %v8848
    %8851 = vadd.xlane.f32.xlu0 %v8849
    %v8852 = vpop.xlane.xlu0 %8851
    %8853 = vadd.xlane.f32.xlu0 %v8850
    %v8854 = vpop.xlane.xlu0 %8853
    %v8855 = vmul.f32 %v8852, %v3295
    %v8856 = vmul.f32 %v8854, %v3295
    %v8857 = vadd.f32 %v8855, 1e-05
    %v8858 = vadd.f32 %v8856, 1e-05
    %v8859 = vrsqrt.pop %v8857
    %v8860 = vrsqrt.pop %v8858
    %v8861 = vmul.f32 %v8847, %v8859
    %v8862 = vmul.f32 %v8848, %v8860
    %v8863 = vlaneseq
    %v8864 = vshrl.u32 %v8863, 7
    %v8865 = vsub.s32 1, %v8864
    %v8866 = vrot.slane %v84, %v8865
    %v8867 = vmul.f32 %v8861, %v8866
    %v8868 = vmul.f32 %v8862, %v8866
    %v8869 = vlaneseq
    %v8870 = vshrl.u32 %v8869, 7
    %v8871 = vsub.s32 1, %v8870
    %v8872 = vrot.slane %v85, %v8871
    %v8873 = vadd.f32 %v8867, %v8872
    %v8874 = vadd.f32 %v8868, %v8872
    %v8875 = vpack.c.bf16 %v8874, %v8873
    %v8876 = vlaneseq
    %v8877 = vshrl.u32 %v8876, 7
    %v8878 = vsub.s32 1, %v8877
    %v8879 = vrot.slane %v88, %v8878
    %v8880 = vlaneseq
    %v8881 = vshrl.u32 %v8880, 7
    %v8882 = vsub.s32 3, %v8881
    %v8883 = vrot.slane %v88, %v8882
    %v8884 = vlaneseq
    %v8885 = vshrl.u32 %v8884, 7
    %v8886 = vsub.s32 5, %v8885
    %v8887 = vrot.slane %v88, %v8886
    %v8888 = vlaneseq
    %v8889 = vshrl.u32 %v8888, 7
    %v8890 = vsub.s32 7, %v8889
    %v8891 = vrot.slane %v88, %v8890
    %v8892 = vlaneseq
    %v8893 = vshrl.u32 %v8892, 7
    %v8894 = vsub.s32 1, %v8893
    %v8895 = vrot.slane %v89, %v8894
    %v8896 = vlaneseq
    %v8897 = vshrl.u32 %v8896, 7
    %v8898 = vsub.s32 3, %v8897
    %v8899 = vrot.slane %v89, %v8898
    %v8900 = vlaneseq
    %v8901 = vshrl.u32 %v8900, 7
    %v8902 = vsub.s32 5, %v8901
    %v8903 = vrot.slane %v89, %v8902
    %v8904 = vlaneseq
    %v8905 = vshrl.u32 %v8904, 7
    %v8906 = vsub.s32 7, %v8905
    %v8907 = vrot.slane %v89, %v8906
    %v8908 = vlaneseq
    %v8909 = vshrl.u32 %v8908, 7
    %v8910 = vsub.s32 1, %v8909
    %v8911 = vrot.slane %v90, %v8910
    %v8912 = vlaneseq
    %v8913 = vshrl.u32 %v8912, 7
    %v8914 = vsub.s32 3, %v8913
    %v8915 = vrot.slane %v90, %v8914
    %v8916 = vlaneseq
    %v8917 = vshrl.u32 %v8916, 7
    %v8918 = vsub.s32 5, %v8917
    %v8919 = vrot.slane %v90, %v8918
    %v8920 = vlaneseq
    %v8921 = vshrl.u32 %v8920, 7
    %v8922 = vsub.s32 7, %v8921
    %v8923 = vrot.slane %v90, %v8922
    %v8924 = vlaneseq
    %v8925 = vshrl.u32 %v8924, 7
    %v8926 = vsub.s32 1, %v8925
    %v8927 = vrot.slane %v91, %v8926
    %v8928 = vlaneseq
    %v8929 = vshrl.u32 %v8928, 7
    %v8930 = vsub.s32 3, %v8929
    %v8931 = vrot.slane %v91, %v8930
    %v8932 = vlaneseq
    %v8933 = vshrl.u32 %v8932, 7
    %v8934 = vsub.s32 5, %v8933
    %v8935 = vrot.slane %v91, %v8934
    %v8936 = vlaneseq
    %v8937 = vshrl.u32 %v8936, 7
    %v8938 = vsub.s32 7, %v8937
    %v8939 = vrot.slane %v91, %v8938
    %v8956 = vlaneseq
    %v8957 = vshrl.u32 %v8956, 7
    %v8958 = vsub.s32 1, %v8957
    %v8959 = vrot.slane %v8879, %v8958
    %v8960 = vlaneseq
    %v8961 = vshrl.u32 %v8960, 7
    %v8962 = vsub.s32 1, %v8961
    %v8963 = vrot.slane %v8883, %v8962
    %v8964 = vlaneseq
    %v8965 = vshrl.u32 %v8964, 7
    %v8966 = vsub.s32 1, %v8965
    %v8967 = vrot.slane %v8887, %v8966
    %v8968 = vlaneseq
    %v8969 = vshrl.u32 %v8968, 7
    %v8970 = vsub.s32 1, %v8969
    %v8971 = vrot.slane %v8891, %v8970
    %v8972 = vlaneseq
    %v8973 = vshrl.u32 %v8972, 7
    %v8974 = vsub.s32 1, %v8973
    %v8975 = vrot.slane %v8895, %v8974
    %v8976 = vlaneseq
    %v8977 = vshrl.u32 %v8976, 7
    %v8978 = vsub.s32 1, %v8977
    %v8979 = vrot.slane %v8899, %v8978
    %v8980 = vlaneseq
    %v8981 = vshrl.u32 %v8980, 7
    %v8982 = vsub.s32 1, %v8981
    %v8983 = vrot.slane %v8903, %v8982
    %v8984 = vlaneseq
    %v8985 = vshrl.u32 %v8984, 7
    %v8986 = vsub.s32 1, %v8985
    %v8987 = vrot.slane %v8907, %v8986
    %v8988 = vlaneseq
    %v8989 = vshrl.u32 %v8988, 7
    %v8990 = vsub.s32 1, %v8989
    %v8991 = vrot.slane %v8911, %v8990
    %v8992 = vlaneseq
    %v8993 = vshrl.u32 %v8992, 7
    %v8994 = vsub.s32 1, %v8993
    %v8995 = vrot.slane %v8915, %v8994
    %v8996 = vlaneseq
    %v8997 = vshrl.u32 %v8996, 7
    %v8998 = vsub.s32 1, %v8997
    %v8999 = vrot.slane %v8919, %v8998
    %v9000 = vlaneseq
    %v9001 = vshrl.u32 %v9000, 7
    %v9002 = vsub.s32 1, %v9001
    %v9003 = vrot.slane %v8923, %v9002
    %v9004 = vlaneseq
    %v9005 = vshrl.u32 %v9004, 7
    %v9006 = vsub.s32 1, %v9005
    %v9007 = vrot.slane %v8927, %v9006
    %v9008 = vlaneseq
    %v9009 = vshrl.u32 %v9008, 7
    %v9010 = vsub.s32 1, %v9009
    %v9011 = vrot.slane %v8931, %v9010
    %v9012 = vlaneseq
    %v9013 = vshrl.u32 %v9012, 7
    %v9014 = vsub.s32 1, %v9013
    %v9015 = vrot.slane %v8935, %v9014
    %v9016 = vlaneseq
    %v9017 = vshrl.u32 %v9016, 7
    %v9018 = vsub.s32 1, %v9017
    %v9019 = vrot.slane %v8939, %v9018
    %v9276 = vunpack.c.l.b16 %v5710
    %v9277 = vunpack.c.l.b16 %v5711
    %v9278 = vunpack.c.l.b16 %v5712
    %v9279 = vunpack.c.l.b16 %v5713
    %v9280 = vunpack.c.l.b16 %v5714
    %v9281 = vunpack.c.l.b16 %v5715
    %v9282 = vunpack.c.l.b16 %v5716
    %v9283 = vunpack.c.l.b16 %v5717
    %v9284 = vunpack.c.l.b16 %v5718
    %v9285 = vunpack.c.l.b16 %v5719
    %v9286 = vunpack.c.l.b16 %v5720
    %v9287 = vunpack.c.l.b16 %v5721
    %v9288 = vunpack.c.l.b16 %v5722
    %v9289 = vunpack.c.l.b16 %v5723
    %v9290 = vunpack.c.l.b16 %v5724
    %v9291 = vunpack.c.l.b16 %v5725
    %v9292 = vunpack.c.l.b16 %v5726
    %v9293 = vunpack.c.l.b16 %v5727
    %v9294 = vunpack.c.l.b16 %v5728
    %v9295 = vunpack.c.l.b16 %v5729
    %v9296 = vunpack.c.l.b16 %v5730
    %v9297 = vunpack.c.l.b16 %v5731
    %v9298 = vunpack.c.l.b16 %v5732
    %v9299 = vunpack.c.l.b16 %v5733
    %v9300 = vunpack.c.l.b16 %v5734
    %v9301 = vunpack.c.l.b16 %v5735
    %v9302 = vunpack.c.l.b16 %v5736
    %v9303 = vunpack.c.l.b16 %v5737
    %v9304 = vunpack.c.l.b16 %v5738
    %v9305 = vunpack.c.l.b16 %v5739
    %v9306 = vunpack.c.l.b16 %v5740
    %v9307 = vunpack.c.l.b16 %v5741
    %v9308 = vunpack.c.l.b16 %v5742
    %v9309 = vunpack.c.l.b16 %v5743
    %v9310 = vunpack.c.l.b16 %v5744
    %v9311 = vunpack.c.l.b16 %v5745
    %v9312 = vunpack.c.l.b16 %v5746
    %v9313 = vunpack.c.l.b16 %v5747
    %v9314 = vunpack.c.l.b16 %v5748
    %v9315 = vunpack.c.l.b16 %v5749
    %v9316 = vunpack.c.l.b16 %v5750
    %v9317 = vunpack.c.l.b16 %v5751
    %v9318 = vunpack.c.l.b16 %v5752
    %v9319 = vunpack.c.l.b16 %v5753
    %v9320 = vunpack.c.l.b16 %v5754
    %v9321 = vunpack.c.l.b16 %v5755
    %v9322 = vunpack.c.l.b16 %v5756
    %v9323 = vunpack.c.l.b16 %v5757
    %v9324 = vunpack.c.l.b16 %v5758
    %v9325 = vunpack.c.l.b16 %v5759
    %v9326 = vunpack.c.l.b16 %v5760
    %v9327 = vunpack.c.l.b16 %v5761
    %v9328 = vunpack.c.l.b16 %v5762
    %v9329 = vunpack.c.l.b16 %v5763
    %v9330 = vunpack.c.l.b16 %v5764
    %v9331 = vunpack.c.l.b16 %v5765
    %v9332 = vunpack.c.l.b16 %v5766
    %v9333 = vunpack.c.l.b16 %v5767
    %v9334 = vunpack.c.l.b16 %v5768
    %v9335 = vunpack.c.l.b16 %v5769
    %v9336 = vunpack.c.l.b16 %v5770
    %v9337 = vunpack.c.l.b16 %v5771
    %v9338 = vunpack.c.l.b16 %v5772
    %v9339 = vunpack.c.l.b16 %v5773
    %v9340 = vunpack.c.l.b16 %v5774
    %v9341 = vunpack.c.l.b16 %v5775
    %v9342 = vunpack.c.l.b16 %v5776
    %v9343 = vunpack.c.l.b16 %v5777
    %v9344 = vunpack.c.l.b16 %v5778
    %v9345 = vunpack.c.l.b16 %v5779
    %v9346 = vunpack.c.l.b16 %v5780
    %v9347 = vunpack.c.l.b16 %v5781
    %v9348 = vunpack.c.l.b16 %v5782
    %v9349 = vunpack.c.l.b16 %v5783
    %v9350 = vunpack.c.l.b16 %v5784
    %v9351 = vunpack.c.l.b16 %v5785
    %v9352 = vunpack.c.l.b16 %v5786
    %v9353 = vunpack.c.l.b16 %v5787
    %v9354 = vunpack.c.l.b16 %v5788
    %v9355 = vunpack.c.l.b16 %v5789
    %v9356 = vunpack.c.l.b16 %v5790
    %v9357 = vunpack.c.l.b16 %v5791
    %v9358 = vunpack.c.l.b16 %v5792
    %v9359 = vunpack.c.l.b16 %v5793
    %v9360 = vunpack.c.l.b16 %v5794
    %v9361 = vunpack.c.l.b16 %v5795
    %v9362 = vunpack.c.l.b16 %v5796
    %v9363 = vunpack.c.l.b16 %v5797
    %v9364 = vunpack.c.l.b16 %v5798
    %v9365 = vunpack.c.l.b16 %v5799
    %v9366 = vunpack.c.l.b16 %v5800
    %v9367 = vunpack.c.l.b16 %v5801
    %v9368 = vunpack.c.l.b16 %v5802
    %v9369 = vunpack.c.l.b16 %v5803
    %v9370 = vunpack.c.l.b16 %v5804
    %v9371 = vunpack.c.l.b16 %v5805
    %v9372 = vunpack.c.l.b16 %v5806
    %v9373 = vunpack.c.l.b16 %v5807
    %v9374 = vunpack.c.l.b16 %v5808
    %v9375 = vunpack.c.l.b16 %v5809
    %v9376 = vunpack.c.l.b16 %v5810
    %v9377 = vunpack.c.l.b16 %v5811
    %v9378 = vunpack.c.l.b16 %v5812
    %v9379 = vunpack.c.l.b16 %v5813
    %v9380 = vunpack.c.l.b16 %v5814
    %v9381 = vunpack.c.l.b16 %v5815
    %v9382 = vunpack.c.l.b16 %v5816
    %v9383 = vunpack.c.l.b16 %v5817
    %v9384 = vunpack.c.l.b16 %v5818
    %v9385 = vunpack.c.l.b16 %v5819
    %v9386 = vunpack.c.l.b16 %v5820
    %v9387 = vunpack.c.l.b16 %v5821
    %v9388 = vunpack.c.l.b16 %v5822
    %v9389 = vunpack.c.l.b16 %v5823
    %v9390 = vunpack.c.l.b16 %v5824
    %v9391 = vunpack.c.l.b16 %v5825
    %v9392 = vunpack.c.l.b16 %v5826
    %v9393 = vunpack.c.l.b16 %v5827
    %v9394 = vunpack.c.l.b16 %v5828
    %v9395 = vunpack.c.l.b16 %v5829
    %v9396 = vunpack.c.l.b16 %v5830
    %v9397 = vunpack.c.l.b16 %v5831
    %v9398 = vunpack.c.l.b16 %v5832
    %v9399 = vunpack.c.l.b16 %v5833
    %v9400 = vunpack.c.l.b16 %v5834
    %v9401 = vunpack.c.l.b16 %v5835
    %v9402 = vunpack.c.l.b16 %v5836
    %v9403 = vunpack.c.l.b16 %v5837
    %v9404 = vunpack.c.l.b16 %v5838
    %v9405 = vunpack.c.l.b16 %v5839
    %v9406 = vunpack.c.l.b16 %v5840
    %v9407 = vunpack.c.l.b16 %v5841
    %v9408 = vunpack.c.l.b16 %v5842
    %v9409 = vunpack.c.l.b16 %v5843
    %v9410 = vunpack.c.l.b16 %v5844
    %v9411 = vunpack.c.l.b16 %v5845
    %v9412 = vunpack.c.l.b16 %v5846
    %v9413 = vunpack.c.l.b16 %v5847
    %v9414 = vunpack.c.l.b16 %v5848
    %v9415 = vunpack.c.l.b16 %v5849
    %v9416 = vunpack.c.l.b16 %v5850
    %v9417 = vunpack.c.l.b16 %v5851
    %v9418 = vunpack.c.l.b16 %v5852
    %v9419 = vunpack.c.l.b16 %v5853
    %v9420 = vunpack.c.l.b16 %v5854
    %v9421 = vunpack.c.l.b16 %v5855
    %v9422 = vunpack.c.l.b16 %v5856
    %v9423 = vunpack.c.l.b16 %v5857
    %v9424 = vunpack.c.l.b16 %v5858
    %v9425 = vunpack.c.l.b16 %v5859
    %v9426 = vunpack.c.l.b16 %v5860
    %v9427 = vunpack.c.l.b16 %v5861
    %v9428 = vunpack.c.l.b16 %v5862
    %v9429 = vunpack.c.l.b16 %v5863
    %v9430 = vunpack.c.l.b16 %v5864
    %v9431 = vunpack.c.l.b16 %v5865
    %v9432 = vunpack.c.l.b16 %v5866
    %v9433 = vunpack.c.l.b16 %v5867
    %v9434 = vunpack.c.l.b16 %v5868
    %v9435 = vunpack.c.l.b16 %v5869
    %v9436 = vunpack.c.l.b16 %v5870
    %v9437 = vunpack.c.l.b16 %v5871
    %v9438 = vunpack.c.l.b16 %v5872
    %v9439 = vunpack.c.l.b16 %v5873
    %v9440 = vunpack.c.l.b16 %v5874
    %v9441 = vunpack.c.l.b16 %v5875
    %v9442 = vunpack.c.l.b16 %v5876
    %v9443 = vunpack.c.l.b16 %v5877
    %v9444 = vunpack.c.l.b16 %v5878
    %v9445 = vunpack.c.l.b16 %v5879
    %v9446 = vunpack.c.l.b16 %v5880
    %v9447 = vunpack.c.l.b16 %v5881
    %v9448 = vunpack.c.l.b16 %v5882
    %v9449 = vunpack.c.l.b16 %v5883
    %v9450 = vunpack.c.l.b16 %v5884
    %v9451 = vunpack.c.l.b16 %v5885
    %v9452 = vunpack.c.l.b16 %v5886
    %v9453 = vunpack.c.l.b16 %v5887
    %v9454 = vunpack.c.l.b16 %v5888
    %v9455 = vunpack.c.l.b16 %v5889
    %v9456 = vunpack.c.l.b16 %v5890
    %v9457 = vunpack.c.l.b16 %v5891
    %v9458 = vunpack.c.l.b16 %v5892
    %v9459 = vunpack.c.l.b16 %v5893
    %v9460 = vunpack.c.l.b16 %v5894
    %v9461 = vunpack.c.l.b16 %v5895
    %v9462 = vunpack.c.l.b16 %v5896
    %v9463 = vunpack.c.l.b16 %v5897
    %v9464 = vunpack.c.l.b16 %v5898
    %v9465 = vunpack.c.l.b16 %v5899
    %v9466 = vunpack.c.l.b16 %v5900
    %v9467 = vunpack.c.l.b16 %v5901
    %v9468 = vunpack.c.l.b16 %v5902
    %v9469 = vunpack.c.l.b16 %v5903
    %v9470 = vunpack.c.l.b16 %v5904
    %v9471 = vunpack.c.l.b16 %v5905
    %v9472 = vunpack.c.l.b16 %v5906
    %v9473 = vunpack.c.l.b16 %v5907
    %v9474 = vunpack.c.l.b16 %v5908
    %v9475 = vunpack.c.l.b16 %v5909
    %v9476 = vunpack.c.l.b16 %v5910
    %v9477 = vunpack.c.l.b16 %v5911
    %v9478 = vunpack.c.l.b16 %v5912
    %v9479 = vunpack.c.l.b16 %v5913
    %v9480 = vunpack.c.l.b16 %v5914
    %v9481 = vunpack.c.l.b16 %v5915
    %v9482 = vunpack.c.l.b16 %v5916
    %v9483 = vunpack.c.l.b16 %v5917
    %v9484 = vunpack.c.l.b16 %v5918
    %v9485 = vunpack.c.l.b16 %v5919
    %v9486 = vunpack.c.l.b16 %v5920
    %v9487 = vunpack.c.l.b16 %v5921
    %v9488 = vunpack.c.l.b16 %v5922
    %v9489 = vunpack.c.l.b16 %v5923
    %v9490 = vunpack.c.l.b16 %v5924
    %v9491 = vunpack.c.l.b16 %v5925
    %v9492 = vunpack.c.l.b16 %v5926
    %v9493 = vunpack.c.l.b16 %v5927
    %v9494 = vunpack.c.l.b16 %v5928
    %v9495 = vunpack.c.l.b16 %v5929
    %v9496 = vunpack.c.l.b16 %v5930
    %v9497 = vunpack.c.l.b16 %v5931
    %v9498 = vunpack.c.l.b16 %v5932
    %v9499 = vunpack.c.l.b16 %v5933
    %v9500 = vunpack.c.l.b16 %v5934
    %v9501 = vunpack.c.l.b16 %v5935
    %v9502 = vunpack.c.l.b16 %v5936
    %v9503 = vunpack.c.l.b16 %v5937
    %v9504 = vunpack.c.l.b16 %v5938
    %v9505 = vunpack.c.l.b16 %v5939
    %v9506 = vunpack.c.l.b16 %v5940
    %v9507 = vunpack.c.l.b16 %v5941
    %v9508 = vunpack.c.l.b16 %v5942
    %v9509 = vunpack.c.l.b16 %v5943
    %v9510 = vunpack.c.l.b16 %v5944
    %v9511 = vunpack.c.l.b16 %v5945
    %v9512 = vunpack.c.l.b16 %v5946
    %v9513 = vunpack.c.l.b16 %v5947
    %v9514 = vunpack.c.l.b16 %v5948
    %v9515 = vunpack.c.l.b16 %v5949
    %v9516 = vunpack.c.l.b16 %v5950
    %v9517 = vunpack.c.l.b16 %v5951
    %v9518 = vunpack.c.l.b16 %v5952
    %v9519 = vunpack.c.l.b16 %v5953
    %v9520 = vunpack.c.l.b16 %v5954
    %v9521 = vunpack.c.l.b16 %v5955
    %v9522 = vunpack.c.l.b16 %v5956
    %v9523 = vunpack.c.l.b16 %v5957
    %v9524 = vunpack.c.l.b16 %v5958
    %v9525 = vunpack.c.l.b16 %v5959
    %v9526 = vunpack.c.l.b16 %v5960
    %v9527 = vunpack.c.l.b16 %v5961
    %v9528 = vunpack.c.l.b16 %v5962
    %v9529 = vunpack.c.l.b16 %v5963
    %v9530 = vunpack.c.l.b16 %v5964
    %v9531 = vunpack.c.l.b16 %v5965
    %v9532 = vpack.c.b16 %v9277, %v9276
    %v9533 = vpack.c.b16 %v9279, %v9278
    %v9534 = vpack.c.b16 %v9281, %v9280
    %v9535 = vpack.c.b16 %v9283, %v9282
    %v9536 = vpack.c.b16 %v9285, %v9284
    %v9537 = vpack.c.b16 %v9287, %v9286
    %v9538 = vpack.c.b16 %v9289, %v9288
    %v9539 = vpack.c.b16 %v9291, %v9290
    %v9540 = vpack.c.b16 %v9293, %v9292
    %v9541 = vpack.c.b16 %v9295, %v9294
    %v9542 = vpack.c.b16 %v9297, %v9296
    %v9543 = vpack.c.b16 %v9299, %v9298
    %v9544 = vpack.c.b16 %v9301, %v9300
    %v9545 = vpack.c.b16 %v9303, %v9302
    %v9546 = vpack.c.b16 %v9305, %v9304
    %v9547 = vpack.c.b16 %v9307, %v9306
    %v9548 = vpack.c.b16 %v9309, %v9308
    %v9549 = vpack.c.b16 %v9311, %v9310
    %v9550 = vpack.c.b16 %v9313, %v9312
    %v9551 = vpack.c.b16 %v9315, %v9314
    %v9552 = vpack.c.b16 %v9317, %v9316
    %v9553 = vpack.c.b16 %v9319, %v9318
    %v9554 = vpack.c.b16 %v9321, %v9320
    %v9555 = vpack.c.b16 %v9323, %v9322
    %v9556 = vpack.c.b16 %v9325, %v9324
    %v9557 = vpack.c.b16 %v9327, %v9326
    %v9558 = vpack.c.b16 %v9329, %v9328
    %v9559 = vpack.c.b16 %v9331, %v9330
    %v9560 = vpack.c.b16 %v9333, %v9332
    %v9561 = vpack.c.b16 %v9335, %v9334
    %v9562 = vpack.c.b16 %v9337, %v9336
    %v9563 = vpack.c.b16 %v9339, %v9338
    %v9564 = vpack.c.b16 %v9341, %v9340
    %v9565 = vpack.c.b16 %v9343, %v9342
    %v9566 = vpack.c.b16 %v9345, %v9344
    %v9567 = vpack.c.b16 %v9347, %v9346
    %v9568 = vpack.c.b16 %v9349, %v9348
    %v9569 = vpack.c.b16 %v9351, %v9350
    %v9570 = vpack.c.b16 %v9353, %v9352
    %v9571 = vpack.c.b16 %v9355, %v9354
    %v9572 = vpack.c.b16 %v9357, %v9356
    %v9573 = vpack.c.b16 %v9359, %v9358
    %v9574 = vpack.c.b16 %v9361, %v9360
    %v9575 = vpack.c.b16 %v9363, %v9362
    %v9576 = vpack.c.b16 %v9365, %v9364
    %v9577 = vpack.c.b16 %v9367, %v9366
    %v9578 = vpack.c.b16 %v9369, %v9368
    %v9579 = vpack.c.b16 %v9371, %v9370
    %v9580 = vpack.c.b16 %v9373, %v9372
    %v9581 = vpack.c.b16 %v9375, %v9374
    %v9582 = vpack.c.b16 %v9377, %v9376
    %v9583 = vpack.c.b16 %v9379, %v9378
    %v9584 = vpack.c.b16 %v9381, %v9380
    %v9585 = vpack.c.b16 %v9383, %v9382
    %v9586 = vpack.c.b16 %v9385, %v9384
    %v9587 = vpack.c.b16 %v9387, %v9386
    %v9588 = vpack.c.b16 %v9389, %v9388
    %v9589 = vpack.c.b16 %v9391, %v9390
    %v9590 = vpack.c.b16 %v9393, %v9392
    %v9591 = vpack.c.b16 %v9395, %v9394
    %v9592 = vpack.c.b16 %v9397, %v9396
    %v9593 = vpack.c.b16 %v9399, %v9398
    %v9594 = vpack.c.b16 %v9401, %v9400
    %v9595 = vpack.c.b16 %v9403, %v9402
    %v9596 = vpack.c.b16 %v9405, %v9404
    %v9597 = vpack.c.b16 %v9407, %v9406
    %v9598 = vpack.c.b16 %v9409, %v9408
    %v9599 = vpack.c.b16 %v9411, %v9410
    %v9600 = vpack.c.b16 %v9413, %v9412
    %v9601 = vpack.c.b16 %v9415, %v9414
    %v9602 = vpack.c.b16 %v9417, %v9416
    %v9603 = vpack.c.b16 %v9419, %v9418
    %v9604 = vpack.c.b16 %v9421, %v9420
    %v9605 = vpack.c.b16 %v9423, %v9422
    %v9606 = vpack.c.b16 %v9425, %v9424
    %v9607 = vpack.c.b16 %v9427, %v9426
    %v9608 = vpack.c.b16 %v9429, %v9428
    %v9609 = vpack.c.b16 %v9431, %v9430
    %v9610 = vpack.c.b16 %v9433, %v9432
    %v9611 = vpack.c.b16 %v9435, %v9434
    %v9612 = vpack.c.b16 %v9437, %v9436
    %v9613 = vpack.c.b16 %v9439, %v9438
    %v9614 = vpack.c.b16 %v9441, %v9440
    %v9615 = vpack.c.b16 %v9443, %v9442
    %v9616 = vpack.c.b16 %v9445, %v9444
    %v9617 = vpack.c.b16 %v9447, %v9446
    %v9618 = vpack.c.b16 %v9449, %v9448
    %v9619 = vpack.c.b16 %v9451, %v9450
    %v9620 = vpack.c.b16 %v9453, %v9452
    %v9621 = vpack.c.b16 %v9455, %v9454
    %v9622 = vpack.c.b16 %v9457, %v9456
    %v9623 = vpack.c.b16 %v9459, %v9458
    %v9624 = vpack.c.b16 %v9461, %v9460
    %v9625 = vpack.c.b16 %v9463, %v9462
    %v9626 = vpack.c.b16 %v9465, %v9464
    %v9627 = vpack.c.b16 %v9467, %v9466
    %v9628 = vpack.c.b16 %v9469, %v9468
    %v9629 = vpack.c.b16 %v9471, %v9470
    %v9630 = vpack.c.b16 %v9473, %v9472
    %v9631 = vpack.c.b16 %v9475, %v9474
    %v9632 = vpack.c.b16 %v9477, %v9476
    %v9633 = vpack.c.b16 %v9479, %v9478
    %v9634 = vpack.c.b16 %v9481, %v9480
    %v9635 = vpack.c.b16 %v9483, %v9482
    %v9636 = vpack.c.b16 %v9485, %v9484
    %v9637 = vpack.c.b16 %v9487, %v9486
    %v9638 = vpack.c.b16 %v9489, %v9488
    %v9639 = vpack.c.b16 %v9491, %v9490
    %v9640 = vpack.c.b16 %v9493, %v9492
    %v9641 = vpack.c.b16 %v9495, %v9494
    %v9642 = vpack.c.b16 %v9497, %v9496
    %v9643 = vpack.c.b16 %v9499, %v9498
    %v9644 = vpack.c.b16 %v9501, %v9500
    %v9645 = vpack.c.b16 %v9503, %v9502
    %v9646 = vpack.c.b16 %v9505, %v9504
    %v9647 = vpack.c.b16 %v9507, %v9506
    %v9648 = vpack.c.b16 %v9509, %v9508
    %v9649 = vpack.c.b16 %v9511, %v9510
    %v9650 = vpack.c.b16 %v9513, %v9512
    %v9651 = vpack.c.b16 %v9515, %v9514
    %v9652 = vpack.c.b16 %v9517, %v9516
    %v9653 = vpack.c.b16 %v9519, %v9518
    %v9654 = vpack.c.b16 %v9521, %v9520
    %v9655 = vpack.c.b16 %v9523, %v9522
    %v9656 = vpack.c.b16 %v9525, %v9524
    %v9657 = vpack.c.b16 %v9527, %v9526
    %v9658 = vpack.c.b16 %v9529, %v9528
    %v9659 = vpack.c.b16 %v9531, %v9530
    %9788 = vmatprep.subr.bf16.mxu0 0
    %9789 = vmatpush1.bf16.xpose.msra.mxu0 %v9532
    %9790 = vmatprep.subr.bf16.mxu0 0
    %9791 = vmatpush1.bf16.xpose.msra.mxu0 %v9533
    %9792 = vmatprep.subr.bf16.mxu0 0
    %9793 = vmatpush1.bf16.xpose.msra.mxu0 %v9534
    %9794 = vmatprep.subr.bf16.mxu0 0
    %9795 = vmatpush1.bf16.xpose.msra.mxu0 %v9535
    %9796 = vmatprep.subr.bf16.mxu0 0
    %9797 = vmatpush1.bf16.xpose.msra.mxu0 %v9536
    %9798 = vmatprep.subr.bf16.mxu0 0
    %9799 = vmatpush1.bf16.xpose.msra.mxu0 %v9537
    %9800 = vmatprep.subr.bf16.mxu0 0
    %9801 = vmatpush1.bf16.xpose.msra.mxu0 %v9538
    %9802 = vmatprep.subr.bf16.mxu0 0
    %9803 = vmatpush1.bf16.xpose.msra.mxu0 %v9539
    %9804 = vmatprep.subr.bf16.mxu0 0
    %9805 = vmatpush1.bf16.xpose.msra.mxu0 %v9540
    %9806 = vmatprep.subr.bf16.mxu0 0
    %9807 = vmatpush1.bf16.xpose.msra.mxu0 %v9541
    %9808 = vmatprep.subr.bf16.mxu0 0
    %9809 = vmatpush1.bf16.xpose.msra.mxu0 %v9542
    %9810 = vmatprep.subr.bf16.mxu0 0
    %9811 = vmatpush1.bf16.xpose.msra.mxu0 %v9543
    %9812 = vmatprep.subr.bf16.mxu0 0
    %9813 = vmatpush1.bf16.xpose.msra.mxu0 %v9544
    %9814 = vmatprep.subr.bf16.mxu0 0
    %9815 = vmatpush1.bf16.xpose.msra.mxu0 %v9545
    %9816 = vmatprep.subr.bf16.mxu0 0
    %9817 = vmatpush1.bf16.xpose.msra.mxu0 %v9546
    %9818 = vmatprep.subr.bf16.mxu0 0
    %9819 = vmatpush1.bf16.xpose.msra.mxu0 %v9547
    %9820 = vmatprep.mubr.bf16.mxu0 0
    %9821 = vmatmul.mubr.bf16.gmra.mrb[0].mxu0 %v8875
    %v9822 = vpop.f32.mrb[0].mxu0
    %v9823 = vadd.f32 %v8959, %v9822
    %v9824 = vpop.f32.mrb[0].mxu0
    %v9825 = vadd.f32 %v8963, %v9824
    %v9826 = vpop.f32.mrb[0].mxu0
    %v9827 = vadd.f32 %v8959, %v9826
    %v9828 = vpop.f32.mrb[0].mxu0
    %v9829 = vadd.f32 %v8963, %v9828
    %9830 = vdwg.mxu0
    %9831 = vmatprep.subr.bf16.mxu0 0
    %9832 = vmatpush1.bf16.xpose.msra.mxu0 %v9548
    %9833 = vmatprep.subr.bf16.mxu0 0
    %9834 = vmatpush1.bf16.xpose.msra.mxu0 %v9549
    %9835 = vmatprep.subr.bf16.mxu0 0
    %9836 = vmatpush1.bf16.xpose.msra.mxu0 %v9550
    %9837 = vmatprep.subr.bf16.mxu0 0
    %9838 = vmatpush1.bf16.xpose.msra.mxu0 %v9551
    %9839 = vmatprep.subr.bf16.mxu0 0
    %9840 = vmatpush1.bf16.xpose.msra.mxu0 %v9552
    %9841 = vmatprep.subr.bf16.mxu0 0
    %9842 = vmatpush1.bf16.xpose.msra.mxu0 %v9553
    %9843 = vmatprep.subr.bf16.mxu0 0
    %9844 = vmatpush1.bf16.xpose.msra.mxu0 %v9554
    %9845 = vmatprep.subr.bf16.mxu0 0
    %9846 = vmatpush1.bf16.xpose.msra.mxu0 %v9555
    %9847 = vmatprep.subr.bf16.mxu0 0
    %9848 = vmatpush1.bf16.xpose.msra.mxu0 %v9556
    %9849 = vmatprep.subr.bf16.mxu0 0
    %9850 = vmatpush1.bf16.xpose.msra.mxu0 %v9557
    %9851 = vmatprep.subr.bf16.mxu0 0
    %9852 = vmatpush1.bf16.xpose.msra.mxu0 %v9558
    %9853 = vmatprep.subr.bf16.mxu0 0
    %9854 = vmatpush1.bf16.xpose.msra.mxu0 %v9559
    %9855 = vmatprep.subr.bf16.mxu0 0
    %9856 = vmatpush1.bf16.xpose.msra.mxu0 %v9560
    %9857 = vmatprep.subr.bf16.mxu0 0
    %9858 = vmatpush1.bf16.xpose.msra.mxu0 %v9561
    %9859 = vmatprep.subr.bf16.mxu0 0
    %9860 = vmatpush1.bf16.xpose.msra.mxu0 %v9562
    %9861 = vmatprep.subr.bf16.mxu0 0
    %9862 = vmatpush1.bf16.xpose.msra.mxu0 %v9563
    %9863 = vmatprep.mubr.bf16.mxu0 0
    %9864 = vmatmul.mubr.bf16.gmra.mrb[0].mxu0 %v8875
    %v9865 = vpop.f32.mrb[0].mxu0
    %v9866 = vadd.f32 %v8967, %v9865
    %v9867 = vpop.f32.mrb[0].mxu0
    %v9868 = vadd.f32 %v8971, %v9867
    %v9869 = vpop.f32.mrb[0].mxu0
    %v9870 = vadd.f32 %v8967, %v9869
    %v9871 = vpop.f32.mrb[0].mxu0
    %v9872 = vadd.f32 %v8971, %v9871
    %9873 = vdwg.mxu0
    %9874 = vmatprep.subr.bf16.mxu0 0
    %9875 = vmatpush1.bf16.xpose.msra.mxu0 %v9564
    %9876 = vmatprep.subr.bf16.mxu0 0
    %9877 = vmatpush1.bf16.xpose.msra.mxu0 %v9565
    %9878 = vmatprep.subr.bf16.mxu0 0
    %9879 = vmatpush1.bf16.xpose.msra.mxu0 %v9566
    %9880 = vmatprep.subr.bf16.mxu0 0
    %9881 = vmatpush1.bf16.xpose.msra.mxu0 %v9567
    %9882 = vmatprep.subr.bf16.mxu0 0
    %9883 = vmatpush1.bf16.xpose.msra.mxu0 %v9568
    %9884 = vmatprep.subr.bf16.mxu0 0
    %9885 = vmatpush1.bf16.xpose.msra.mxu0 %v9569
    %9886 = vmatprep.subr.bf16.mxu0 0
    %9887 = vmatpush1.bf16.xpose.msra.mxu0 %v9570
    %9888 = vmatprep.subr.bf16.mxu0 0
    %9889 = vmatpush1.bf16.xpose.msra.mxu0 %v9571
    %9890 = vmatprep.subr.bf16.mxu0 0
    %9891 = vmatpush1.bf16.xpose.msra.mxu0 %v9572
    %9892 = vmatprep.subr.bf16.mxu0 0
    %9893 = vmatpush1.bf16.xpose.msra.mxu0 %v9573
    %9894 = vmatprep.subr.bf16.mxu0 0
    %9895 = vmatpush1.bf16.xpose.msra.mxu0 %v9574
    %9896 = vmatprep.subr.bf16.mxu0 0
    %9897 = vmatpush1.bf16.xpose.msra.mxu0 %v9575
    %9898 = vmatprep.subr.bf16.mxu0 0
    %9899 = vmatpush1.bf16.xpose.msra.mxu0 %v9576
    %9900 = vmatprep.subr.bf16.mxu0 0
    %9901 = vmatpush1.bf16.xpose.msra.mxu0 %v9577
    %9902 = vmatprep.subr.bf16.mxu0 0
    %9903 = vmatpush1.bf16.xpose.msra.mxu0 %v9578
    %9904 = vmatprep.subr.bf16.mxu0 0
    %9905 = vmatpush1.bf16.xpose.msra.mxu0 %v9579
    %9906 = vmatprep.mubr.bf16.mxu0 0
    %9907 = vmatmul.mubr.bf16.gmra.mrb[0].mxu0 %v8875
    %v9908 = vpop.f32.mrb[0].mxu0
    %v9909 = vadd.f32 %v8975, %v9908
    %v9910 = vpop.f32.mrb[0].mxu0
    %v9911 = vadd.f32 %v8979, %v9910
    %v9912 = vpop.f32.mrb[0].mxu0
    %v9913 = vadd.f32 %v8975, %v9912
    %v9914 = vpop.f32.mrb[0].mxu0
    %v9915 = vadd.f32 %v8979, %v9914
    %9916 = vdwg.mxu0
    %9917 = vmatprep.subr.bf16.mxu0 0
    %9918 = vmatpush1.bf16.xpose.msra.mxu0 %v9580
    %9919 = vmatprep.subr.bf16.mxu0 0
    %9920 = vmatpush1.bf16.xpose.msra.mxu0 %v9581
    %9921 = vmatprep.subr.bf16.mxu0 0
    %9922 = vmatpush1.bf16.xpose.msra.mxu0 %v9582
    %9923 = vmatprep.subr.bf16.mxu0 0
    %9924 = vmatpush1.bf16.xpose.msra.mxu0 %v9583
    %9925 = vmatprep.subr.bf16.mxu0 0
    %9926 = vmatpush1.bf16.xpose.msra.mxu0 %v9584
    %9927 = vmatprep.subr.bf16.mxu0 0
    %9928 = vmatpush1.bf16.xpose.msra.mxu0 %v9585
    %9929 = vmatprep.subr.bf16.mxu0 0
    %9930 = vmatpush1.bf16.xpose.msra.mxu0 %v9586
    %9931 = vmatprep.subr.bf16.mxu0 0
    %9932 = vmatpush1.bf16.xpose.msra.mxu0 %v9587
    %9933 = vmatprep.subr.bf16.mxu0 0
    %9934 = vmatpush1.bf16.xpose.msra.mxu0 %v9588
    %9935 = vmatprep.subr.bf16.mxu0 0
    %9936 = vmatpush1.bf16.xpose.msra.mxu0 %v9589
    %9937 = vmatprep.subr.bf16.mxu0 0
    %9938 = vmatpush1.bf16.xpose.msra.mxu0 %v9590
    %9939 = vmatprep.subr.bf16.mxu0 0
    %9940 = vmatpush1.bf16.xpose.msra.mxu0 %v9591
    %9941 = vmatprep.subr.bf16.mxu0 0
    %9942 = vmatpush1.bf16.xpose.msra.mxu0 %v9592
    %9943 = vmatprep.subr.bf16.mxu0 0
    %9944 = vmatpush1.bf16.xpose.msra.mxu0 %v9593
    %9945 = vmatprep.subr.bf16.mxu0 0
    %9946 = vmatpush1.bf16.xpose.msra.mxu0 %v9594
    %9947 = vmatprep.subr.bf16.mxu0 0
    %9948 = vmatpush1.bf16.xpose.msra.mxu0 %v9595
    %9949 = vmatprep.mubr.bf16.mxu0 0
    %9950 = vmatmul.mubr.bf16.gmra.mrb[0].mxu0 %v8875
    %v9951 = vpop.f32.mrb[0].mxu0
    %v9952 = vadd.f32 %v8983, %v9951
    %v9953 = vpop.f32.mrb[0].mxu0
    %v9954 = vadd.f32 %v8987, %v9953
    %v9955 = vpop.f32.mrb[0].mxu0
    %v9956 = vadd.f32 %v8983, %v9955
    %v9957 = vpop.f32.mrb[0].mxu0
    %v9958 = vadd.f32 %v8987, %v9957
    %9959 = vdwg.mxu0
    %9960 = vmatprep.subr.bf16.mxu0 0
    %9961 = vmatpush1.bf16.xpose.msra.mxu0 %v9596
    %9962 = vmatprep.subr.bf16.mxu0 0
    %9963 = vmatpush1.bf16.xpose.msra.mxu0 %v9597
    %9964 = vmatprep.subr.bf16.mxu0 0
    %9965 = vmatpush1.bf16.xpose.msra.mxu0 %v9598
    %9966 = vmatprep.subr.bf16.mxu0 0
    %9967 = vmatpush1.bf16.xpose.msra.mxu0 %v9599
    %9968 = vmatprep.subr.bf16.mxu0 0
    %9969 = vmatpush1.bf16.xpose.msra.mxu0 %v9600
    %9970 = vmatprep.subr.bf16.mxu0 0
    %9971 = vmatpush1.bf16.xpose.msra.mxu0 %v9601
    %9972 = vmatprep.subr.bf16.mxu0 0
    %9973 = vmatpush1.bf16.xpose.msra.mxu0 %v9602
    %9974 = vmatprep.subr.bf16.mxu0 0
    %9975 = vmatpush1.bf16.xpose.msra.mxu0 %v9603
    %9976 = vmatprep.subr.bf16.mxu0 0
    %9977 = vmatpush1.bf16.xpose.msra.mxu0 %v9604
    %9978 = vmatprep.subr.bf16.mxu0 0
    %9979 = vmatpush1.bf16.xpose.msra.mxu0 %v9605
    %9980 = vmatprep.subr.bf16.mxu0 0
    %9981 = vmatpush1.bf16.xpose.msra.mxu0 %v9606
    %9982 = vmatprep.subr.bf16.mxu0 0
    %9983 = vmatpush1.bf16.xpose.msra.mxu0 %v9607
    %9984 = vmatprep.subr.bf16.mxu0 0
    %9985 = vmatpush1.bf16.xpose.msra.mxu0 %v9608
    %9986 = vmatprep.subr.bf16.mxu0 0
    %9987 = vmatpush1.bf16.xpose.msra.mxu0 %v9609
    %9988 = vmatprep.subr.bf16.mxu0 0
    %9989 = vmatpush1.bf16.xpose.msra.mxu0 %v9610
    %9990 = vmatprep.subr.bf16.mxu0 0
    %9991 = vmatpush1.bf16.xpose.msra.mxu0 %v9611
    %9992 = vmatprep.mubr.bf16.mxu0 0
    %9993 = vmatmul.mubr.bf16.gmra.mrb[0].mxu0 %v8875
    %v9994 = vpop.f32.mrb[0].mxu0
    %v9995 = vadd.f32 %v8991, %v9994
    %v9996 = vpop.f32.mrb[0].mxu0
    %v9997 = vadd.f32 %v8995, %v9996
    %v9998 = vpop.f32.mrb[0].mxu0
    %v9999 = vadd.f32 %v8991, %v9998
    %v10000 = vpop.f32.mrb[0].mxu0
    %v10001 = vadd.f32 %v8995, %v10000
    %10002 = vdwg.mxu0
    %10003 = vmatprep.subr.bf16.mxu0 0
    %10004 = vmatpush1.bf16.xpose.msra.mxu0 %v9612
    %10005 = vmatprep.subr.bf16.mxu0 0
    %10006 = vmatpush1.bf16.xpose.msra.mxu0 %v9613
    %10007 = vmatprep.subr.bf16.mxu0 0
    %10008 = vmatpush1.bf16.xpose.msra.mxu0 %v9614
    %10009 = vmatprep.subr.bf16.mxu0 0
    %10010 = vmatpush1.bf16.xpose.msra.mxu0 %v9615
    %10011 = vmatprep.subr.bf16.mxu0 0
    %10012 = vmatpush1.bf16.xpose.msra.mxu0 %v9616
    %10013 = vmatprep.subr.bf16.mxu0 0
    %10014 = vmatpush1.bf16.xpose.msra.mxu0 %v9617
    %10015 = vmatprep.subr.bf16.mxu0 0
    %10016 = vmatpush1.bf16.xpose.msra.mxu0 %v9618
    %10017 = vmatprep.subr.bf16.mxu0 0
    %10018 = vmatpush1.bf16.xpose.msra.mxu0 %v9619
    %10019 = vmatprep.subr.bf16.mxu0 0
    %10020 = vmatpush1.bf16.xpose.msra.mxu0 %v9620
    %10021 = vmatprep.subr.bf16.mxu0 0
    %10022 = vmatpush1.bf16.xpose.msra.mxu0 %v9621
    %10023 = vmatprep.subr.bf16.mxu0 0
    %10024 = vmatpush1.bf16.xpose.msra.mxu0 %v9622
    %10025 = vmatprep.subr.bf16.mxu0 0
    %10026 = vmatpush1.bf16.xpose.msra.mxu0 %v9623
    %10027 = vmatprep.subr.bf16.mxu0 0
    %10028 = vmatpush1.bf16.xpose.msra.mxu0 %v9624
    %10029 = vmatprep.subr.bf16.mxu0 0
    %10030 = vmatpush1.bf16.xpose.msra.mxu0 %v9625
    %10031 = vmatprep.subr.bf16.mxu0 0
    %10032 = vmatpush1.bf16.xpose.msra.mxu0 %v9626
    %10033 = vmatprep.subr.bf16.mxu0 0
    %10034 = vmatpush1.bf16.xpose.msra.mxu0 %v9627
    %10035 = vmatprep.mubr.bf16.mxu0 0
    %10036 = vmatmul.mubr.bf16.gmra.mrb[0].mxu0 %v8875
    %v10037 = vpop.f32.mrb[0].mxu0
    %v10038 = vadd.f32 %v8999, %v10037
    %v10039 = vpop.f32.mrb[0].mxu0
    %v10040 = vadd.f32 %v9003, %v10039
    %v10041 = vpop.f32.mrb[0].mxu0
    %v10042 = vadd.f32 %v8999, %v10041
    %v10043 = vpop.f32.mrb[0].mxu0
    %v10044 = vadd.f32 %v9003, %v10043
    %10045 = vdwg.mxu0
    %10046 = vmatprep.subr.bf16.mxu0 0
    %10047 = vmatpush1.bf16.xpose.msra.mxu0 %v9628
    %10048 = vmatprep.subr.bf16.mxu0 0
    %10049 = vmatpush1.bf16.xpose.msra.mxu0 %v9629
    %10050 = vmatprep.subr.bf16.mxu0 0
    %10051 = vmatpush1.bf16.xpose.msra.mxu0 %v9630
    %10052 = vmatprep.subr.bf16.mxu0 0
    %10053 = vmatpush1.bf16.xpose.msra.mxu0 %v9631
    %10054 = vmatprep.subr.bf16.mxu0 0
    %10055 = vmatpush1.bf16.xpose.msra.mxu0 %v9632
    %10056 = vmatprep.subr.bf16.mxu0 0
    %10057 = vmatpush1.bf16.xpose.msra.mxu0 %v9633
    %10058 = vmatprep.subr.bf16.mxu0 0
    %10059 = vmatpush1.bf16.xpose.msra.mxu0 %v9634
    %10060 = vmatprep.subr.bf16.mxu0 0
    %10061 = vmatpush1.bf16.xpose.msra.mxu0 %v9635
    %10062 = vmatprep.subr.bf16.mxu0 0
    %10063 = vmatpush1.bf16.xpose.msra.mxu0 %v9636
    %10064 = vmatprep.subr.bf16.mxu0 0
    %10065 = vmatpush1.bf16.xpose.msra.mxu0 %v9637
    %10066 = vmatprep.subr.bf16.mxu0 0
    %10067 = vmatpush1.bf16.xpose.msra.mxu0 %v9638
    %10068 = vmatprep.subr.bf16.mxu0 0
    %10069 = vmatpush1.bf16.xpose.msra.mxu0 %v9639
    %10070 = vmatprep.subr.bf16.mxu0 0
    %10071 = vmatpush1.bf16.xpose.msra.mxu0 %v9640
    %10072 = vmatprep.subr.bf16.mxu0 0
    %10073 = vmatpush1.bf16.xpose.msra.mxu0 %v9641
    %10074 = vmatprep.subr.bf16.mxu0 0
    %10075 = vmatpush1.bf16.xpose.msra.mxu0 %v9642
    %10076 = vmatprep.subr.bf16.mxu0 0
    %10077 = vmatpush1.bf16.xpose.msra.mxu0 %v9643
    %10078 = vmatprep.mubr.bf16.mxu0 0
    %10079 = vmatmul.mubr.bf16.gmra.mrb[0].mxu0 %v8875
    %v10080 = vpop.f32.mrb[0].mxu0
    %v10081 = vadd.f32 %v9007, %v10080
    %v10082 = vpop.f32.mrb[0].mxu0
    %v10083 = vadd.f32 %v9011, %v10082
    %v10084 = vpop.f32.mrb[0].mxu0
    %v10085 = vadd.f32 %v9007, %v10084
    %v10086 = vpop.f32.mrb[0].mxu0
    %v10087 = vadd.f32 %v9011, %v10086
    %10088 = vdwg.mxu0
    %10089 = vmatprep.subr.bf16.mxu0 0
    %10090 = vmatpush1.bf16.xpose.msra.mxu0 %v9644
    %10091 = vmatprep.subr.bf16.mxu0 0
    %10092 = vmatpush1.bf16.xpose.msra.mxu0 %v9645
    %10093 = vmatprep.subr.bf16.mxu0 0
    %10094 = vmatpush1.bf16.xpose.msra.mxu0 %v9646
    %10095 = vmatprep.subr.bf16.mxu0 0
    %10096 = vmatpush1.bf16.xpose.msra.mxu0 %v9647
    %10097 = vmatprep.subr.bf16.mxu0 0
    %10098 = vmatpush1.bf16.xpose.msra.mxu0 %v9648
    %10099 = vmatprep.subr.bf16.mxu0 0
    %10100 = vmatpush1.bf16.xpose.msra.mxu0 %v9649
    %10101 = vmatprep.subr.bf16.mxu0 0
    %10102 = vmatpush1.bf16.xpose.msra.mxu0 %v9650
    %10103 = vmatprep.subr.bf16.mxu0 0
    %10104 = vmatpush1.bf16.xpose.msra.mxu0 %v9651
    %10105 = vmatprep.subr.bf16.mxu0 0
    %10106 = vmatpush1.bf16.xpose.msra.mxu0 %v9652
    %10107 = vmatprep.subr.bf16.mxu0 0
    %10108 = vmatpush1.bf16.xpose.msra.mxu0 %v9653
    %10109 = vmatprep.subr.bf16.mxu0 0
    %10110 = vmatpush1.bf16.xpose.msra.mxu0 %v9654
    %10111 = vmatprep.subr.bf16.mxu0 0
    %10112 = vmatpush1.bf16.xpose.msra.mxu0 %v9655
    %10113 = vmatprep.subr.bf16.mxu0 0
    %10114 = vmatpush1.bf16.xpose.msra.mxu0 %v9656
    %10115 = vmatprep.subr.bf16.mxu0 0
    %10116 = vmatpush1.bf16.xpose.msra.mxu0 %v9657
    %10117 = vmatprep.subr.bf16.mxu0 0
    %10118 = vmatpush1.bf16.xpose.msra.mxu0 %v9658
    %10119 = vmatprep.subr.bf16.mxu0 0
    %10120 = vmatpush1.bf16.xpose.msra.mxu0 %v9659
    %10121 = vmatprep.mubr.bf16.mxu0 0
    %10122 = vmatmul.mubr.bf16.gmra.mrb[0].mxu0 %v8875
    %v10123 = vpop.f32.mrb[0].mxu0
    %v10124 = vadd.f32 %v9015, %v10123
    %v10125 = vpop.f32.mrb[0].mxu0
    %v10126 = vadd.f32 %v9019, %v10125
    %v10127 = vpop.f32.mrb[0].mxu0
    %v10128 = vadd.f32 %v9015, %v10127
    %v10129 = vpop.f32.mrb[0].mxu0
    %v10130 = vadd.f32 %v9019, %v10129
    %10131 = vdwg.mxu0
    %v10132 = vmax.f32 %v9823, 0.0
    %v10133 = vmax.f32 %v9825, 0.0
    %v10134 = vmax.f32 %v9866, 0.0
    %v10135 = vmax.f32 %v9868, 0.0
    %v10136 = vmax.f32 %v9909, 0.0
    %v10137 = vmax.f32 %v9911, 0.0
    %v10138 = vmax.f32 %v9952, 0.0
    %v10139 = vmax.f32 %v9954, 0.0
    %v10140 = vmax.f32 %v9995, 0.0
    %v10141 = vmax.f32 %v9997, 0.0
    %v10142 = vmax.f32 %v10038, 0.0
    %v10143 = vmax.f32 %v10040, 0.0
    %v10144 = vmax.f32 %v10081, 0.0
    %v10145 = vmax.f32 %v10083, 0.0
    %v10146 = vmax.f32 %v10124, 0.0
    %v10147 = vmax.f32 %v10126, 0.0
    %v10148 = vmax.f32 %v9827, 0.0
    %v10149 = vmax.f32 %v9829, 0.0
    %v10150 = vmax.f32 %v9870, 0.0
    %v10151 = vmax.f32 %v9872, 0.0
    %v10152 = vmax.f32 %v9913, 0.0
    %v10153 = vmax.f32 %v9915, 0.0
    %v10154 = vmax.f32 %v9956, 0.0
    %v10155 = vmax.f32 %v9958, 0.0
    %v10156 = vmax.f32 %v9999, 0.0
    %v10157 = vmax.f32 %v10001, 0.0
    %v10158 = vmax.f32 %v10042, 0.0
    %v10159 = vmax.f32 %v10044, 0.0
    %v10160 = vmax.f32 %v10085, 0.0
    %v10161 = vmax.f32 %v10087, 0.0
    %v10162 = vmax.f32 %v10128, 0.0
    %v10163 = vmax.f32 %v10130, 0.0
    %v10164 = vpack.c.bf16 %v10148, %v10132
    %v10165 = vpack.c.bf16 %v10149, %v10133
    %v10166 = vpack.c.bf16 %v10150, %v10134
    %v10167 = vpack.c.bf16 %v10151, %v10135
    %v10168 = vpack.c.bf16 %v10152, %v10136
    %v10169 = vpack.c.bf16 %v10153, %v10137
    %v10170 = vpack.c.bf16 %v10154, %v10138
    %v10171 = vpack.c.bf16 %v10155, %v10139
    %v10172 = vpack.c.bf16 %v10156, %v10140
    %v10173 = vpack.c.bf16 %v10157, %v10141
    %v10174 = vpack.c.bf16 %v10158, %v10142
    %v10175 = vpack.c.bf16 %v10159, %v10143
    %v10176 = vpack.c.bf16 %v10160, %v10144
    %v10177 = vpack.c.bf16 %v10161, %v10145
    %v10178 = vpack.c.bf16 %v10162, %v10146
    %v10179 = vpack.c.bf16 %v10163, %v10147
    %v10180 = vlaneseq
    %v10181 = vshrl.u32 %v10180, 7
    %v10182 = vsub.s32 1, %v10181
    %v10183 = vrot.slane %v92, %v10182
    %v10312 = vunpack.c.l.b16 %v5967
    %v10313 = vunpack.c.h.b16 %v5967
    %v10314 = vunpack.c.l.b16 %v5968
    %v10315 = vunpack.c.h.b16 %v5968
    %v10316 = vunpack.c.l.b16 %v5969
    %v10317 = vunpack.c.h.b16 %v5969
    %v10318 = vunpack.c.l.b16 %v5970
    %v10319 = vunpack.c.h.b16 %v5970
    %v10320 = vunpack.c.l.b16 %v5971
    %v10321 = vunpack.c.h.b16 %v5971
    %v10322 = vunpack.c.l.b16 %v5972
    %v10323 = vunpack.c.h.b16 %v5972
    %v10324 = vunpack.c.l.b16 %v5973
    %v10325 = vunpack.c.h.b16 %v5973
    %v10326 = vunpack.c.l.b16 %v5974
    %v10327 = vunpack.c.h.b16 %v5974
    %v10328 = vunpack.c.l.b16 %v5975
    %v10329 = vunpack.c.h.b16 %v5975
    %v10330 = vunpack.c.l.b16 %v5976
    %v10331 = vunpack.c.h.b16 %v5976
    %v10332 = vunpack.c.l.b16 %v5977
    %v10333 = vunpack.c.h.b16 %v5977
    %v10334 = vunpack.c.l.b16 %v5978
    %v10335 = vunpack.c.h.b16 %v5978
    %v10336 = vunpack.c.l.b16 %v5979
    %v10337 = vunpack.c.h.b16 %v5979
    %v10338 = vunpack.c.l.b16 %v5980
    %v10339 = vunpack.c.h.b16 %v5980
    %v10340 = vunpack.c.l.b16 %v5981
    %v10341 = vunpack.c.h.b16 %v5981
    %v10342 = vunpack.c.l.b16 %v5982
    %v10343 = vunpack.c.h.b16 %v5982
    %v10344 = vunpack.c.l.b16 %v5983
    %v10345 = vunpack.c.h.b16 %v5983
    %v10346 = vunpack.c.l.b16 %v5984
    %v10347 = vunpack.c.h.b16 %v5984
    %v10348 = vunpack.c.l.b16 %v5985
    %v10349 = vunpack.c.h.b16 %v5985
    %v10350 = vunpack.c.l.b16 %v5986
    %v10351 = vunpack.c.h.b16 %v5986
    %v10352 = vunpack.c.l.b16 %v5987
    %v10353 = vunpack.c.h.b16 %v5987
    %v10354 = vunpack.c.l.b16 %v5988
    %v10355 = vunpack.c.h.b16 %v5988
    %v10356 = vunpack.c.l.b16 %v5989
    %v10357 = vunpack.c.h.b16 %v5989
    %v10358 = vunpack.c.l.b16 %v5990
    %v10359 = vunpack.c.h.b16 %v5990
    %v10360 = vunpack.c.l.b16 %v5991
    %v10361 = vunpack.c.h.b16 %v5991
    %v10362 = vunpack.c.l.b16 %v5992
    %v10363 = vunpack.c.h.b16 %v5992
    %v10364 = vunpack.c.l.b16 %v5993
    %v10365 = vunpack.c.h.b16 %v5993
    %v10366 = vunpack.c.l.b16 %v5994
    %v10367 = vunpack.c.h.b16 %v5994
    %v10368 = vunpack.c.l.b16 %v5995
    %v10369 = vunpack.c.h.b16 %v5995
    %v10370 = vunpack.c.l.b16 %v5996
    %v10371 = vunpack.c.h.b16 %v5996
    %v10372 = vunpack.c.l.b16 %v5997
    %v10373 = vunpack.c.h.b16 %v5997
    %v10374 = vunpack.c.l.b16 %v5998
    %v10375 = vunpack.c.h.b16 %v5998
    %v10376 = vunpack.c.l.b16 %v5999
    %v10377 = vunpack.c.h.b16 %v5999
    %v10378 = vunpack.c.l.b16 %v6000
    %v10379 = vunpack.c.h.b16 %v6000
    %v10380 = vunpack.c.l.b16 %v6001
    %v10381 = vunpack.c.h.b16 %v6001
    %v10382 = vunpack.c.l.b16 %v6002
    %v10383 = vunpack.c.h.b16 %v6002
    %v10384 = vunpack.c.l.b16 %v6003
    %v10385 = vunpack.c.h.b16 %v6003
    %v10386 = vunpack.c.l.b16 %v6004
    %v10387 = vunpack.c.h.b16 %v6004
    %v10388 = vunpack.c.l.b16 %v6005
    %v10389 = vunpack.c.h.b16 %v6005
    %v10390 = vunpack.c.l.b16 %v6006
    %v10391 = vunpack.c.h.b16 %v6006
    %v10392 = vunpack.c.l.b16 %v6007
    %v10393 = vunpack.c.h.b16 %v6007
    %v10394 = vunpack.c.l.b16 %v6008
    %v10395 = vunpack.c.h.b16 %v6008
    %v10396 = vunpack.c.l.b16 %v6009
    %v10397 = vunpack.c.h.b16 %v6009
    %v10398 = vunpack.c.l.b16 %v6010
    %v10399 = vunpack.c.h.b16 %v6010
    %v10400 = vunpack.c.l.b16 %v6011
    %v10401 = vunpack.c.h.b16 %v6011
    %v10402 = vunpack.c.l.b16 %v6012
    %v10403 = vunpack.c.h.b16 %v6012
    %v10404 = vunpack.c.l.b16 %v6013
    %v10405 = vunpack.c.h.b16 %v6013
    %v10406 = vunpack.c.l.b16 %v6014
    %v10407 = vunpack.c.h.b16 %v6014
    %v10408 = vunpack.c.l.b16 %v6015
    %v10409 = vunpack.c.h.b16 %v6015
    %v10410 = vunpack.c.l.b16 %v6016
    %v10411 = vunpack.c.h.b16 %v6016
    %v10412 = vunpack.c.l.b16 %v6017
    %v10413 = vunpack.c.h.b16 %v6017
    %v10414 = vunpack.c.l.b16 %v6018
    %v10415 = vunpack.c.h.b16 %v6018
    %v10416 = vunpack.c.l.b16 %v6019
    %v10417 = vunpack.c.h.b16 %v6019
    %v10418 = vunpack.c.l.b16 %v6020
    %v10419 = vunpack.c.h.b16 %v6020
    %v10420 = vunpack.c.l.b16 %v6021
    %v10421 = vunpack.c.h.b16 %v6021
    %v10422 = vunpack.c.l.b16 %v6022
    %v10423 = vunpack.c.h.b16 %v6022
    %v10424 = vunpack.c.l.b16 %v6023
    %v10425 = vunpack.c.h.b16 %v6023
    %v10426 = vunpack.c.l.b16 %v6024
    %v10427 = vunpack.c.h.b16 %v6024
    %v10428 = vunpack.c.l.b16 %v6025
    %v10429 = vunpack.c.h.b16 %v6025
    %v10430 = vunpack.c.l.b16 %v6026
    %v10431 = vunpack.c.h.b16 %v6026
    %v10432 = vunpack.c.l.b16 %v6027
    %v10433 = vunpack.c.h.b16 %v6027
    %v10434 = vunpack.c.l.b16 %v6028
    %v10435 = vunpack.c.h.b16 %v6028
    %v10436 = vunpack.c.l.b16 %v6029
    %v10437 = vunpack.c.h.b16 %v6029
    %v10438 = vunpack.c.l.b16 %v6030
    %v10439 = vunpack.c.h.b16 %v6030
    %v10440 = vunpack.c.l.b16 %v6031
    %v10441 = vunpack.c.h.b16 %v6031
    %v10442 = vunpack.c.l.b16 %v6032
    %v10443 = vunpack.c.h.b16 %v6032
    %v10444 = vunpack.c.l.b16 %v6033
    %v10445 = vunpack.c.h.b16 %v6033
    %v10446 = vunpack.c.l.b16 %v6034
    %v10447 = vunpack.c.h.b16 %v6034
    %v10448 = vunpack.c.l.b16 %v6035
    %v10449 = vunpack.c.h.b16 %v6035
    %v10450 = vunpack.c.l.b16 %v6036
    %v10451 = vunpack.c.h.b16 %v6036
    %v10452 = vunpack.c.l.b16 %v6037
    %v10453 = vunpack.c.h.b16 %v6037
    %v10454 = vunpack.c.l.b16 %v6038
    %v10455 = vunpack.c.h.b16 %v6038
    %v10456 = vunpack.c.l.b16 %v6039
    %v10457 = vunpack.c.h.b16 %v6039
    %v10458 = vunpack.c.l.b16 %v6040
    %v10459 = vunpack.c.h.b16 %v6040
    %v10460 = vunpack.c.l.b16 %v6041
    %v10461 = vunpack.c.h.b16 %v6041
    %v10462 = vunpack.c.l.b16 %v6042
    %v10463 = vunpack.c.h.b16 %v6042
    %v10464 = vunpack.c.l.b16 %v6043
    %v10465 = vunpack.c.h.b16 %v6043
    %v10466 = vunpack.c.l.b16 %v6044
    %v10467 = vunpack.c.h.b16 %v6044
    %v10468 = vunpack.c.l.b16 %v6045
    %v10469 = vunpack.c.h.b16 %v6045
    %v10470 = vunpack.c.l.b16 %v6046
    %v10471 = vunpack.c.h.b16 %v6046
    %v10472 = vunpack.c.l.b16 %v6047
    %v10473 = vunpack.c.h.b16 %v6047
    %v10474 = vunpack.c.l.b16 %v6048
    %v10475 = vunpack.c.h.b16 %v6048
    %v10476 = vunpack.c.l.b16 %v6049
    %v10477 = vunpack.c.h.b16 %v6049
    %v10478 = vunpack.c.l.b16 %v6050
    %v10479 = vunpack.c.h.b16 %v6050
    %v10480 = vunpack.c.l.b16 %v6051
    %v10481 = vunpack.c.h.b16 %v6051
    %v10482 = vunpack.c.l.b16 %v6052
    %v10483 = vunpack.c.h.b16 %v6052
    %v10484 = vunpack.c.l.b16 %v6053
    %v10485 = vunpack.c.h.b16 %v6053
    %v10486 = vunpack.c.l.b16 %v6054
    %v10487 = vunpack.c.h.b16 %v6054
    %v10488 = vunpack.c.l.b16 %v6055
    %v10489 = vunpack.c.h.b16 %v6055
    %v10490 = vunpack.c.l.b16 %v6056
    %v10491 = vunpack.c.h.b16 %v6056
    %v10492 = vunpack.c.l.b16 %v6057
    %v10493 = vunpack.c.h.b16 %v6057
    %v10494 = vunpack.c.l.b16 %v6058
    %v10495 = vunpack.c.h.b16 %v6058
    %v10496 = vunpack.c.l.b16 %v6059
    %v10497 = vunpack.c.h.b16 %v6059
    %v10498 = vunpack.c.l.b16 %v6060
    %v10499 = vunpack.c.h.b16 %v6060
    %v10500 = vunpack.c.l.b16 %v6061
    %v10501 = vunpack.c.h.b16 %v6061
    %v10502 = vunpack.c.l.b16 %v6062
    %v10503 = vunpack.c.h.b16 %v6062
    %v10504 = vunpack.c.l.b16 %v6063
    %v10505 = vunpack.c.h.b16 %v6063
    %v10506 = vunpack.c.l.b16 %v6064
    %v10507 = vunpack.c.h.b16 %v6064
    %v10508 = vunpack.c.l.b16 %v6065
    %v10509 = vunpack.c.h.b16 %v6065
    %v10510 = vunpack.c.l.b16 %v6066
    %v10511 = vunpack.c.h.b16 %v6066
    %v10512 = vunpack.c.l.b16 %v6067
    %v10513 = vunpack.c.h.b16 %v6067
    %v10514 = vunpack.c.l.b16 %v6068
    %v10515 = vunpack.c.h.b16 %v6068
    %v10516 = vunpack.c.l.b16 %v6069
    %v10517 = vunpack.c.h.b16 %v6069
    %v10518 = vunpack.c.l.b16 %v6070
    %v10519 = vunpack.c.h.b16 %v6070
    %v10520 = vunpack.c.l.b16 %v6071
    %v10521 = vunpack.c.h.b16 %v6071
    %v10522 = vunpack.c.l.b16 %v6072
    %v10523 = vunpack.c.h.b16 %v6072
    %v10524 = vunpack.c.l.b16 %v6073
    %v10525 = vunpack.c.h.b16 %v6073
    %v10526 = vunpack.c.l.b16 %v6074
    %v10527 = vunpack.c.h.b16 %v6074
    %v10528 = vunpack.c.l.b16 %v6075
    %v10529 = vunpack.c.h.b16 %v6075
    %v10530 = vunpack.c.l.b16 %v6076
    %v10531 = vunpack.c.h.b16 %v6076
    %v10532 = vunpack.c.l.b16 %v6077
    %v10533 = vunpack.c.h.b16 %v6077
    %v10534 = vunpack.c.l.b16 %v6078
    %v10535 = vunpack.c.h.b16 %v6078
    %v10536 = vunpack.c.l.b16 %v6079
    %v10537 = vunpack.c.h.b16 %v6079
    %v10538 = vunpack.c.l.b16 %v6080
    %v10539 = vunpack.c.h.b16 %v6080
    %v10540 = vunpack.c.l.b16 %v6081
    %v10541 = vunpack.c.h.b16 %v6081
    %v10542 = vunpack.c.l.b16 %v6082
    %v10543 = vunpack.c.h.b16 %v6082
    %v10544 = vunpack.c.l.b16 %v6083
    %v10545 = vunpack.c.h.b16 %v6083
    %v10546 = vunpack.c.l.b16 %v6084
    %v10547 = vunpack.c.h.b16 %v6084
    %v10548 = vunpack.c.l.b16 %v6085
    %v10549 = vunpack.c.h.b16 %v6085
    %v10550 = vunpack.c.l.b16 %v6086
    %v10551 = vunpack.c.h.b16 %v6086
    %v10552 = vunpack.c.l.b16 %v6087
    %v10553 = vunpack.c.h.b16 %v6087
    %v10554 = vunpack.c.l.b16 %v6088
    %v10555 = vunpack.c.h.b16 %v6088
    %v10556 = vunpack.c.l.b16 %v6089
    %v10557 = vunpack.c.h.b16 %v6089
    %v10558 = vunpack.c.l.b16 %v6090
    %v10559 = vunpack.c.h.b16 %v6090
    %v10560 = vunpack.c.l.b16 %v6091
    %v10561 = vunpack.c.h.b16 %v6091
    %v10562 = vunpack.c.l.b16 %v6092
    %v10563 = vunpack.c.h.b16 %v6092
    %v10564 = vunpack.c.l.b16 %v6093
    %v10565 = vunpack.c.h.b16 %v6093
    %v10566 = vunpack.c.l.b16 %v6094
    %v10567 = vunpack.c.h.b16 %v6094
    %v10568 = vpack.c.b16 %v10328, %v10312
    %v10569 = vpack.c.b16 %v10329, %v10313
    %v10570 = vpack.c.b16 %v10330, %v10314
    %v10571 = vpack.c.b16 %v10331, %v10315
    %v10572 = vpack.c.b16 %v10332, %v10316
    %v10573 = vpack.c.b16 %v10333, %v10317
    %v10574 = vpack.c.b16 %v10334, %v10318
    %v10575 = vpack.c.b16 %v10335, %v10319
    %v10576 = vpack.c.b16 %v10336, %v10320
    %v10577 = vpack.c.b16 %v10337, %v10321
    %v10578 = vpack.c.b16 %v10338, %v10322
    %v10579 = vpack.c.b16 %v10339, %v10323
    %v10580 = vpack.c.b16 %v10340, %v10324
    %v10581 = vpack.c.b16 %v10341, %v10325
    %v10582 = vpack.c.b16 %v10342, %v10326
    %v10583 = vpack.c.b16 %v10343, %v10327
    %v10584 = vpack.c.b16 %v10360, %v10344
    %v10585 = vpack.c.b16 %v10361, %v10345
    %v10586 = vpack.c.b16 %v10362, %v10346
    %v10587 = vpack.c.b16 %v10363, %v10347
    %v10588 = vpack.c.b16 %v10364, %v10348
    %v10589 = vpack.c.b16 %v10365, %v10349
    %v10590 = vpack.c.b16 %v10366, %v10350
    %v10591 = vpack.c.b16 %v10367, %v10351
    %v10592 = vpack.c.b16 %v10368, %v10352
    %v10593 = vpack.c.b16 %v10369, %v10353
    %v10594 = vpack.c.b16 %v10370, %v10354
    %v10595 = vpack.c.b16 %v10371, %v10355
    %v10596 = vpack.c.b16 %v10372, %v10356
    %v10597 = vpack.c.b16 %v10373, %v10357
    %v10598 = vpack.c.b16 %v10374, %v10358
    %v10599 = vpack.c.b16 %v10375, %v10359
    %v10600 = vpack.c.b16 %v10392, %v10376
    %v10601 = vpack.c.b16 %v10393, %v10377
    %v10602 = vpack.c.b16 %v10394, %v10378
    %v10603 = vpack.c.b16 %v10395, %v10379
    %v10604 = vpack.c.b16 %v10396, %v10380
    %v10605 = vpack.c.b16 %v10397, %v10381
    %v10606 = vpack.c.b16 %v10398, %v10382
    %v10607 = vpack.c.b16 %v10399, %v10383
    %v10608 = vpack.c.b16 %v10400, %v10384
    %v10609 = vpack.c.b16 %v10401, %v10385
    %v10610 = vpack.c.b16 %v10402, %v10386
    %v10611 = vpack.c.b16 %v10403, %v10387
    %v10612 = vpack.c.b16 %v10404, %v10388
    %v10613 = vpack.c.b16 %v10405, %v10389
    %v10614 = vpack.c.b16 %v10406, %v10390
    %v10615 = vpack.c.b16 %v10407, %v10391
    %v10616 = vpack.c.b16 %v10424, %v10408
    %v10617 = vpack.c.b16 %v10425, %v10409
    %v10618 = vpack.c.b16 %v10426, %v10410
    %v10619 = vpack.c.b16 %v10427, %v10411
    %v10620 = vpack.c.b16 %v10428, %v10412
    %v10621 = vpack.c.b16 %v10429, %v10413
    %v10622 = vpack.c.b16 %v10430, %v10414
    %v10623 = vpack.c.b16 %v10431, %v10415
    %v10624 = vpack.c.b16 %v10432, %v10416
    %v10625 = vpack.c.b16 %v10433, %v10417
    %v10626 = vpack.c.b16 %v10434, %v10418
    %v10627 = vpack.c.b16 %v10435, %v10419
    %v10628 = vpack.c.b16 %v10436, %v10420
    %v10629 = vpack.c.b16 %v10437, %v10421
    %v10630 = vpack.c.b16 %v10438, %v10422
    %v10631 = vpack.c.b16 %v10439, %v10423
    %v10632 = vpack.c.b16 %v10456, %v10440
    %v10633 = vpack.c.b16 %v10457, %v10441
    %v10634 = vpack.c.b16 %v10458, %v10442
    %v10635 = vpack.c.b16 %v10459, %v10443
    %v10636 = vpack.c.b16 %v10460, %v10444
    %v10637 = vpack.c.b16 %v10461, %v10445
    %v10638 = vpack.c.b16 %v10462, %v10446
    %v10639 = vpack.c.b16 %v10463, %v10447
    %v10640 = vpack.c.b16 %v10464, %v10448
    %v10641 = vpack.c.b16 %v10465, %v10449
    %v10642 = vpack.c.b16 %v10466, %v10450
    %v10643 = vpack.c.b16 %v10467, %v10451
    %v10644 = vpack.c.b16 %v10468, %v10452
    %v10645 = vpack.c.b16 %v10469, %v10453
    %v10646 = vpack.c.b16 %v10470, %v10454
    %v10647 = vpack.c.b16 %v10471, %v10455
    %v10648 = vpack.c.b16 %v10488, %v10472
    %v10649 = vpack.c.b16 %v10489, %v10473
    %v10650 = vpack.c.b16 %v10490, %v10474
    %v10651 = vpack.c.b16 %v10491, %v10475
    %v10652 = vpack.c.b16 %v10492, %v10476
    %v10653 = vpack.c.b16 %v10493, %v10477
    %v10654 = vpack.c.b16 %v10494, %v10478
    %v10655 = vpack.c.b16 %v10495, %v10479
    %v10656 = vpack.c.b16 %v10496, %v10480
    %v10657 = vpack.c.b16 %v10497, %v10481
    %v10658 = vpack.c.b16 %v10498, %v10482
    %v10659 = vpack.c.b16 %v10499, %v10483
    %v10660 = vpack.c.b16 %v10500, %v10484
    %v10661 = vpack.c.b16 %v10501, %v10485
    %v10662 = vpack.c.b16 %v10502, %v10486
    %v10663 = vpack.c.b16 %v10503, %v10487
    %v10664 = vpack.c.b16 %v10520, %v10504
    %v10665 = vpack.c.b16 %v10521, %v10505
    %v10666 = vpack.c.b16 %v10522, %v10506
    %v10667 = vpack.c.b16 %v10523, %v10507
    %v10668 = vpack.c.b16 %v10524, %v10508
    %v10669 = vpack.c.b16 %v10525, %v10509
    %v10670 = vpack.c.b16 %v10526, %v10510
    %v10671 = vpack.c.b16 %v10527, %v10511
    %v10672 = vpack.c.b16 %v10528, %v10512
    %v10673 = vpack.c.b16 %v10529, %v10513
    %v10674 = vpack.c.b16 %v10530, %v10514
    %v10675 = vpack.c.b16 %v10531, %v10515
    %v10676 = vpack.c.b16 %v10532, %v10516
    %v10677 = vpack.c.b16 %v10533, %v10517
    %v10678 = vpack.c.b16 %v10534, %v10518
    %v10679 = vpack.c.b16 %v10535, %v10519
    %v10680 = vpack.c.b16 %v10552, %v10536
    %v10681 = vpack.c.b16 %v10553, %v10537
    %v10682 = vpack.c.b16 %v10554, %v10538
    %v10683 = vpack.c.b16 %v10555, %v10539
    %v10684 = vpack.c.b16 %v10556, %v10540
    %v10685 = vpack.c.b16 %v10557, %v10541
    %v10686 = vpack.c.b16 %v10558, %v10542
    %v10687 = vpack.c.b16 %v10559, %v10543
    %v10688 = vpack.c.b16 %v10560, %v10544
    %v10689 = vpack.c.b16 %v10561, %v10545
    %v10690 = vpack.c.b16 %v10562, %v10546
    %v10691 = vpack.c.b16 %v10563, %v10547
    %v10692 = vpack.c.b16 %v10564, %v10548
    %v10693 = vpack.c.b16 %v10565, %v10549
    %v10694 = vpack.c.b16 %v10566, %v10550
    %v10695 = vpack.c.b16 %v10567, %v10551
    %10824 = vmatprep.subr.bf16.mxu0 %v10569
    %10825 = vmatpush1.bf16.xpose.msra.mxu0 %v10568
    %10826 = vmatprep.subr.bf16.mxu0 %v10585
    %10827 = vmatpush1.bf16.xpose.msra.mxu0 %v10584
    %10828 = vmatprep.subr.bf16.mxu0 %v10601
    %10829 = vmatpush1.bf16.xpose.msra.mxu0 %v10600
    %10830 = vmatprep.subr.bf16.mxu0 %v10617
    %10831 = vmatpush1.bf16.xpose.msra.mxu0 %v10616
    %10832 = vmatprep.subr.bf16.mxu0 %v10633
    %10833 = vmatpush1.bf16.xpose.msra.mxu0 %v10632
    %10834 = vmatprep.subr.bf16.mxu0 %v10649
    %10835 = vmatpush1.bf16.xpose.msra.mxu0 %v10648
    %10836 = vmatprep.subr.bf16.mxu0 %v10665
    %10837 = vmatpush1.bf16.xpose.msra.mxu0 %v10664
    %10838 = vmatprep.subr.bf16.mxu0 %v10681
    %10839 = vmatpush1.bf16.xpose.msra.mxu0 %v10680
    %10840 = vmatprep.subr.bf16.mxu0 0
    %10841 = vmatpush1.bf16.xpose.msra.mxu0 0
    %10842 = vmatprep.subr.bf16.mxu0 0
    %10843 = vmatpush1.bf16.xpose.msra.mxu0 0
    %10844 = vmatprep.subr.bf16.mxu0 0
    %10845 = vmatpush1.bf16.xpose.msra.mxu0 0
    %10846 = vmatprep.subr.bf16.mxu0 0
    %10847 = vmatpush1.bf16.xpose.msra.mxu0 0
    %10848 = vmatprep.subr.bf16.mxu0 0
    %10849 = vmatpush1.bf16.xpose.msra.mxu0 0
    %10850 = vmatprep.subr.bf16.mxu0 0
    %10851 = vmatpush1.bf16.xpose.msra.mxu0 0
    %10852 = vmatprep.subr.bf16.mxu0 0
    %10853 = vmatpush1.bf16.xpose.msra.mxu0 0
    %10854 = vmatprep.subr.bf16.mxu0 0
    %10855 = vmatpush1.bf16.xpose.msra.mxu0 0
    %10856 = vmatprep.mubr.bf16.mxu0 %v10165
    %10857 = vmatmul.mubr.bf16.gmra.mrb[0].mxu0 %v10164
    %v10858 = vpop.f32.mrb[0].mxu0
    %v10859 = vadd.f32 %v10183, %v10858
    %v10860 = vpop.f32.mrb[0].mxu0
    %v10861 = vpop.f32.mrb[0].mxu0
    %v10862 = vadd.f32 %v10183, %v10861
    %v10863 = vpop.f32.mrb[0].mxu0
    %10864 = vdwg.mxu0
    %10865 = vmatprep.subr.bf16.mxu0 %v10571
    %10866 = vmatpush1.bf16.xpose.msra.mxu0 %v10570
    %10867 = vmatprep.subr.bf16.mxu0 %v10587
    %10868 = vmatpush1.bf16.xpose.msra.mxu0 %v10586
    %10869 = vmatprep.subr.bf16.mxu0 %v10603
    %10870 = vmatpush1.bf16.xpose.msra.mxu0 %v10602
    %10871 = vmatprep.subr.bf16.mxu0 %v10619
    %10872 = vmatpush1.bf16.xpose.msra.mxu0 %v10618
    %10873 = vmatprep.subr.bf16.mxu0 %v10635
    %10874 = vmatpush1.bf16.xpose.msra.mxu0 %v10634
    %10875 = vmatprep.subr.bf16.mxu0 %v10651
    %10876 = vmatpush1.bf16.xpose.msra.mxu0 %v10650
    %10877 = vmatprep.subr.bf16.mxu0 %v10667
    %10878 = vmatpush1.bf16.xpose.msra.mxu0 %v10666
    %10879 = vmatprep.subr.bf16.mxu0 %v10683
    %10880 = vmatpush1.bf16.xpose.msra.mxu0 %v10682
    %10881 = vmatprep.subr.bf16.mxu0 0
    %10882 = vmatpush1.bf16.xpose.msra.mxu0 0
    %10883 = vmatprep.subr.bf16.mxu0 0
    %10884 = vmatpush1.bf16.xpose.msra.mxu0 0
    %10885 = vmatprep.subr.bf16.mxu0 0
    %10886 = vmatpush1.bf16.xpose.msra.mxu0 0
    %10887 = vmatprep.subr.bf16.mxu0 0
    %10888 = vmatpush1.bf16.xpose.msra.mxu0 0
    %10889 = vmatprep.subr.bf16.mxu0 0
    %10890 = vmatpush1.bf16.xpose.msra.mxu0 0
    %10891 = vmatprep.subr.bf16.mxu0 0
    %10892 = vmatpush1.bf16.xpose.msra.mxu0 0
    %10893 = vmatprep.subr.bf16.mxu0 0
    %10894 = vmatpush1.bf16.xpose.msra.mxu0 0
    %10895 = vmatprep.subr.bf16.mxu0 0
    %10896 = vmatpush1.bf16.xpose.msra.mxu0 0
    %10897 = vmatprep.mubr.bf16.mxu0 %v10167
    %10898 = vmatmul.mubr.bf16.gmra.mrb[0].mxu0 %v10166
    %v10899 = vpop.f32.mrb[0].mxu0
    %v10900 = vadd.f32 %v10859, %v10899
    %v10901 = vpop.f32.mrb[0].mxu0
    %v10902 = vpop.f32.mrb[0].mxu0
    %v10903 = vadd.f32 %v10862, %v10902
    %v10904 = vpop.f32.mrb[0].mxu0
    %10905 = vdwg.mxu0
    %10906 = vmatprep.subr.bf16.mxu0 %v10573
    %10907 = vmatpush1.bf16.xpose.msra.mxu0 %v10572
    %10908 = vmatprep.subr.bf16.mxu0 %v10589
    %10909 = vmatpush1.bf16.xpose.msra.mxu0 %v10588
    %10910 = vmatprep.subr.bf16.mxu0 %v10605
    %10911 = vmatpush1.bf16.xpose.msra.mxu0 %v10604
    %10912 = vmatprep.subr.bf16.mxu0 %v10621
    %10913 = vmatpush1.bf16.xpose.msra.mxu0 %v10620
    %10914 = vmatprep.subr.bf16.mxu0 %v10637
    %10915 = vmatpush1.bf16.xpose.msra.mxu0 %v10636
    %10916 = vmatprep.subr.bf16.mxu0 %v10653
    %10917 = vmatpush1.bf16.xpose.msra.mxu0 %v10652
    %10918 = vmatprep.subr.bf16.mxu0 %v10669
    %10919 = vmatpush1.bf16.xpose.msra.mxu0 %v10668
    %10920 = vmatprep.subr.bf16.mxu0 %v10685
    %10921 = vmatpush1.bf16.xpose.msra.mxu0 %v10684
    %10922 = vmatprep.subr.bf16.mxu0 0
    %10923 = vmatpush1.bf16.xpose.msra.mxu0 0
    %10924 = vmatprep.subr.bf16.mxu0 0
    %10925 = vmatpush1.bf16.xpose.msra.mxu0 0
    %10926 = vmatprep.subr.bf16.mxu0 0
    %10927 = vmatpush1.bf16.xpose.msra.mxu0 0
    %10928 = vmatprep.subr.bf16.mxu0 0
    %10929 = vmatpush1.bf16.xpose.msra.mxu0 0
    %10930 = vmatprep.subr.bf16.mxu0 0
    %10931 = vmatpush1.bf16.xpose.msra.mxu0 0
    %10932 = vmatprep.subr.bf16.mxu0 0
    %10933 = vmatpush1.bf16.xpose.msra.mxu0 0
    %10934 = vmatprep.subr.bf16.mxu0 0
    %10935 = vmatpush1.bf16.xpose.msra.mxu0 0
    %10936 = vmatprep.subr.bf16.mxu0 0
    %10937 = vmatpush1.bf16.xpose.msra.mxu0 0
    %10938 = vmatprep.mubr.bf16.mxu0 %v10169
    %10939 = vmatmul.mubr.bf16.gmra.mrb[0].mxu0 %v10168
    %v10940 = vpop.f32.mrb[0].mxu0
    %v10941 = vadd.f32 %v10900, %v10940
    %v10942 = vpop.f32.mrb[0].mxu0
    %v10943 = vpop.f32.mrb[0].mxu0
    %v10944 = vadd.f32 %v10903, %v10943
    %v10945 = vpop.f32.mrb[0].mxu0
    %10946 = vdwg.mxu0
    %10947 = vmatprep.subr.bf16.mxu0 %v10575
    %10948 = vmatpush1.bf16.xpose.msra.mxu0 %v10574
    %10949 = vmatprep.subr.bf16.mxu0 %v10591
    %10950 = vmatpush1.bf16.xpose.msra.mxu0 %v10590
    %10951 = vmatprep.subr.bf16.mxu0 %v10607
    %10952 = vmatpush1.bf16.xpose.msra.mxu0 %v10606
    %10953 = vmatprep.subr.bf16.mxu0 %v10623
    %10954 = vmatpush1.bf16.xpose.msra.mxu0 %v10622
    %10955 = vmatprep.subr.bf16.mxu0 %v10639
    %10956 = vmatpush1.bf16.xpose.msra.mxu0 %v10638
    %10957 = vmatprep.subr.bf16.mxu0 %v10655
    %10958 = vmatpush1.bf16.xpose.msra.mxu0 %v10654
    %10959 = vmatprep.subr.bf16.mxu0 %v10671
    %10960 = vmatpush1.bf16.xpose.msra.mxu0 %v10670
    %10961 = vmatprep.subr.bf16.mxu0 %v10687
    %10962 = vmatpush1.bf16.xpose.msra.mxu0 %v10686
    %10963 = vmatprep.subr.bf16.mxu0 0
    %10964 = vmatpush1.bf16.xpose.msra.mxu0 0
    %10965 = vmatprep.subr.bf16.mxu0 0
    %10966 = vmatpush1.bf16.xpose.msra.mxu0 0
    %10967 = vmatprep.subr.bf16.mxu0 0
    %10968 = vmatpush1.bf16.xpose.msra.mxu0 0
    %10969 = vmatprep.subr.bf16.mxu0 0
    %10970 = vmatpush1.bf16.xpose.msra.mxu0 0
    %10971 = vmatprep.subr.bf16.mxu0 0
    %10972 = vmatpush1.bf16.xpose.msra.mxu0 0
    %10973 = vmatprep.subr.bf16.mxu0 0
    %10974 = vmatpush1.bf16.xpose.msra.mxu0 0
    %10975 = vmatprep.subr.bf16.mxu0 0
    %10976 = vmatpush1.bf16.xpose.msra.mxu0 0
    %10977 = vmatprep.subr.bf16.mxu0 0
    %10978 = vmatpush1.bf16.xpose.msra.mxu0 0
    %10979 = vmatprep.mubr.bf16.mxu0 %v10171
    %10980 = vmatmul.mubr.bf16.gmra.mrb[0].mxu0 %v10170
    %v10981 = vpop.f32.mrb[0].mxu0
    %v10982 = vadd.f32 %v10941, %v10981
    %v10983 = vpop.f32.mrb[0].mxu0
    %v10984 = vpop.f32.mrb[0].mxu0
    %v10985 = vadd.f32 %v10944, %v10984
    %v10986 = vpop.f32.mrb[0].mxu0
    %10987 = vdwg.mxu0
    %10988 = vmatprep.subr.bf16.mxu0 %v10577
    %10989 = vmatpush1.bf16.xpose.msra.mxu0 %v10576
    %10990 = vmatprep.subr.bf16.mxu0 %v10593
    %10991 = vmatpush1.bf16.xpose.msra.mxu0 %v10592
    %10992 = vmatprep.subr.bf16.mxu0 %v10609
    %10993 = vmatpush1.bf16.xpose.msra.mxu0 %v10608
    %10994 = vmatprep.subr.bf16.mxu0 %v10625
    %10995 = vmatpush1.bf16.xpose.msra.mxu0 %v10624
    %10996 = vmatprep.subr.bf16.mxu0 %v10641
    %10997 = vmatpush1.bf16.xpose.msra.mxu0 %v10640
    %10998 = vmatprep.subr.bf16.mxu0 %v10657
    %10999 = vmatpush1.bf16.xpose.msra.mxu0 %v10656
    %11000 = vmatprep.subr.bf16.mxu0 %v10673
    %11001 = vmatpush1.bf16.xpose.msra.mxu0 %v10672
    %11002 = vmatprep.subr.bf16.mxu0 %v10689
    %11003 = vmatpush1.bf16.xpose.msra.mxu0 %v10688
    %11004 = vmatprep.subr.bf16.mxu0 0
    %11005 = vmatpush1.bf16.xpose.msra.mxu0 0
    %11006 = vmatprep.subr.bf16.mxu0 0
    %11007 = vmatpush1.bf16.xpose.msra.mxu0 0
    %11008 = vmatprep.subr.bf16.mxu0 0
    %11009 = vmatpush1.bf16.xpose.msra.mxu0 0
    %11010 = vmatprep.subr.bf16.mxu0 0
    %11011 = vmatpush1.bf16.xpose.msra.mxu0 0
    %11012 = vmatprep.subr.bf16.mxu0 0
    %11013 = vmatpush1.bf16.xpose.msra.mxu0 0
    %11014 = vmatprep.subr.bf16.mxu0 0
    %11015 = vmatpush1.bf16.xpose.msra.mxu0 0
    %11016 = vmatprep.subr.bf16.mxu0 0
    %11017 = vmatpush1.bf16.xpose.msra.mxu0 0
    %11018 = vmatprep.subr.bf16.mxu0 0
    %11019 = vmatpush1.bf16.xpose.msra.mxu0 0
    %11020 = vmatprep.mubr.bf16.mxu0 %v10173
    %11021 = vmatmul.mubr.bf16.gmra.mrb[0].mxu0 %v10172
    %v11022 = vpop.f32.mrb[0].mxu0
    %v11023 = vadd.f32 %v10982, %v11022
    %v11024 = vpop.f32.mrb[0].mxu0
    %v11025 = vpop.f32.mrb[0].mxu0
    %v11026 = vadd.f32 %v10985, %v11025
    %v11027 = vpop.f32.mrb[0].mxu0
    %11028 = vdwg.mxu0
    %11029 = vmatprep.subr.bf16.mxu0 %v10579
    %11030 = vmatpush1.bf16.xpose.msra.mxu0 %v10578
    %11031 = vmatprep.subr.bf16.mxu0 %v10595
    %11032 = vmatpush1.bf16.xpose.msra.mxu0 %v10594
    %11033 = vmatprep.subr.bf16.mxu0 %v10611
    %11034 = vmatpush1.bf16.xpose.msra.mxu0 %v10610
    %11035 = vmatprep.subr.bf16.mxu0 %v10627
    %11036 = vmatpush1.bf16.xpose.msra.mxu0 %v10626
    %11037 = vmatprep.subr.bf16.mxu0 %v10643
    %11038 = vmatpush1.bf16.xpose.msra.mxu0 %v10642
    %11039 = vmatprep.subr.bf16.mxu0 %v10659
    %11040 = vmatpush1.bf16.xpose.msra.mxu0 %v10658
    %11041 = vmatprep.subr.bf16.mxu0 %v10675
    %11042 = vmatpush1.bf16.xpose.msra.mxu0 %v10674
    %11043 = vmatprep.subr.bf16.mxu0 %v10691
    %11044 = vmatpush1.bf16.xpose.msra.mxu0 %v10690
    %11045 = vmatprep.subr.bf16.mxu0 0
    %11046 = vmatpush1.bf16.xpose.msra.mxu0 0
    %11047 = vmatprep.subr.bf16.mxu0 0
    %11048 = vmatpush1.bf16.xpose.msra.mxu0 0
    %11049 = vmatprep.subr.bf16.mxu0 0
    %11050 = vmatpush1.bf16.xpose.msra.mxu0 0
    %11051 = vmatprep.subr.bf16.mxu0 0
    %11052 = vmatpush1.bf16.xpose.msra.mxu0 0
    %11053 = vmatprep.subr.bf16.mxu0 0
    %11054 = vmatpush1.bf16.xpose.msra.mxu0 0
    %11055 = vmatprep.subr.bf16.mxu0 0
    %11056 = vmatpush1.bf16.xpose.msra.mxu0 0
    %11057 = vmatprep.subr.bf16.mxu0 0
    %11058 = vmatpush1.bf16.xpose.msra.mxu0 0
    %11059 = vmatprep.subr.bf16.mxu0 0
    %11060 = vmatpush1.bf16.xpose.msra.mxu0 0
    %11061 = vmatprep.mubr.bf16.mxu0 %v10175
    %11062 = vmatmul.mubr.bf16.gmra.mrb[0].mxu0 %v10174
    %v11063 = vpop.f32.mrb[0].mxu0
    %v11064 = vadd.f32 %v11023, %v11063
    %v11065 = vpop.f32.mrb[0].mxu0
    %v11066 = vpop.f32.mrb[0].mxu0
    %v11067 = vadd.f32 %v11026, %v11066
    %v11068 = vpop.f32.mrb[0].mxu0
    %11069 = vdwg.mxu0
    %11070 = vmatprep.subr.bf16.mxu0 %v10581
    %11071 = vmatpush1.bf16.xpose.msra.mxu0 %v10580
    %11072 = vmatprep.subr.bf16.mxu0 %v10597
    %11073 = vmatpush1.bf16.xpose.msra.mxu0 %v10596
    %11074 = vmatprep.subr.bf16.mxu0 %v10613
    %11075 = vmatpush1.bf16.xpose.msra.mxu0 %v10612
    %11076 = vmatprep.subr.bf16.mxu0 %v10629
    %11077 = vmatpush1.bf16.xpose.msra.mxu0 %v10628
    %11078 = vmatprep.subr.bf16.mxu0 %v10645
    %11079 = vmatpush1.bf16.xpose.msra.mxu0 %v10644
    %11080 = vmatprep.subr.bf16.mxu0 %v10661
    %11081 = vmatpush1.bf16.xpose.msra.mxu0 %v10660
    %11082 = vmatprep.subr.bf16.mxu0 %v10677
    %11083 = vmatpush1.bf16.xpose.msra.mxu0 %v10676
    %11084 = vmatprep.subr.bf16.mxu0 %v10693
    %11085 = vmatpush1.bf16.xpose.msra.mxu0 %v10692
    %11086 = vmatprep.subr.bf16.mxu0 0
    %11087 = vmatpush1.bf16.xpose.msra.mxu0 0
    %11088 = vmatprep.subr.bf16.mxu0 0
    %11089 = vmatpush1.bf16.xpose.msra.mxu0 0
    %11090 = vmatprep.subr.bf16.mxu0 0
    %11091 = vmatpush1.bf16.xpose.msra.mxu0 0
    %11092 = vmatprep.subr.bf16.mxu0 0
    %11093 = vmatpush1.bf16.xpose.msra.mxu0 0
    %11094 = vmatprep.subr.bf16.mxu0 0
    %11095 = vmatpush1.bf16.xpose.msra.mxu0 0
    %11096 = vmatprep.subr.bf16.mxu0 0
    %11097 = vmatpush1.bf16.xpose.msra.mxu0 0
    %11098 = vmatprep.subr.bf16.mxu0 0
    %11099 = vmatpush1.bf16.xpose.msra.mxu0 0
    %11100 = vmatprep.subr.bf16.mxu0 0
    %11101 = vmatpush1.bf16.xpose.msra.mxu0 0
    %11102 = vmatprep.mubr.bf16.mxu0 %v10177
    %11103 = vmatmul.mubr.bf16.gmra.mrb[0].mxu0 %v10176
    %v11104 = vpop.f32.mrb[0].mxu0
    %v11105 = vadd.f32 %v11064, %v11104
    %v11106 = vpop.f32.mrb[0].mxu0
    %v11107 = vpop.f32.mrb[0].mxu0
    %v11108 = vadd.f32 %v11067, %v11107
    %v11109 = vpop.f32.mrb[0].mxu0
    %11110 = vdwg.mxu0
    %11111 = vmatprep.subr.bf16.mxu0 %v10583
    %11112 = vmatpush1.bf16.xpose.msra.mxu0 %v10582
    %11113 = vmatprep.subr.bf16.mxu0 %v10599
    %11114 = vmatpush1.bf16.xpose.msra.mxu0 %v10598
    %11115 = vmatprep.subr.bf16.mxu0 %v10615
    %11116 = vmatpush1.bf16.xpose.msra.mxu0 %v10614
    %11117 = vmatprep.subr.bf16.mxu0 %v10631
    %11118 = vmatpush1.bf16.xpose.msra.mxu0 %v10630
    %11119 = vmatprep.subr.bf16.mxu0 %v10647
    %11120 = vmatpush1.bf16.xpose.msra.mxu0 %v10646
    %11121 = vmatprep.subr.bf16.mxu0 %v10663
    %11122 = vmatpush1.bf16.xpose.msra.mxu0 %v10662
    %11123 = vmatprep.subr.bf16.mxu0 %v10679
    %11124 = vmatpush1.bf16.xpose.msra.mxu0 %v10678
    %11125 = vmatprep.subr.bf16.mxu0 %v10695
    %11126 = vmatpush1.bf16.xpose.msra.mxu0 %v10694
    %11127 = vmatprep.subr.bf16.mxu0 0
    %11128 = vmatpush1.bf16.xpose.msra.mxu0 0
    %11129 = vmatprep.subr.bf16.mxu0 0
    %11130 = vmatpush1.bf16.xpose.msra.mxu0 0
    %11131 = vmatprep.subr.bf16.mxu0 0
    %11132 = vmatpush1.bf16.xpose.msra.mxu0 0
    %11133 = vmatprep.subr.bf16.mxu0 0
    %11134 = vmatpush1.bf16.xpose.msra.mxu0 0
    %11135 = vmatprep.subr.bf16.mxu0 0
    %11136 = vmatpush1.bf16.xpose.msra.mxu0 0
    %11137 = vmatprep.subr.bf16.mxu0 0
    %11138 = vmatpush1.bf16.xpose.msra.mxu0 0
    %11139 = vmatprep.subr.bf16.mxu0 0
    %11140 = vmatpush1.bf16.xpose.msra.mxu0 0
    %11141 = vmatprep.subr.bf16.mxu0 0
    %11142 = vmatpush1.bf16.xpose.msra.mxu0 0
    %11143 = vmatprep.mubr.bf16.mxu0 %v10179
    %11144 = vmatmul.mubr.bf16.gmra.mrb[0].mxu0 %v10178
    %v11145 = vpop.f32.mrb[0].mxu0
    %v11146 = vadd.f32 %v11105, %v11145
    %v11147 = vpop.f32.mrb[0].mxu0
    %v11148 = vpop.f32.mrb[0].mxu0
    %v11149 = vadd.f32 %v11108, %v11148
    %v11150 = vpop.f32.mrb[0].mxu0
    %11151 = vdwg.mxu0
    %v11152 = vadd.f32 %v8873, %v11146
    %v11153 = vadd.f32 %v8874, %v11149
    %11154 = vadd.xlane.f32.xlu0 %v11152
    %v11155 = vpop.xlane.xlu0 %11154
    %11156 = vadd.xlane.f32.xlu0 %v11153
    %v11157 = vpop.xlane.xlu0 %11156
    %v11158 = vmul.f32 %v11155, %v3295
    %v11159 = vmul.f32 %v11157, %v3295
    %v11160 = vsub.f32 %v11152, %v11158
    %v11161 = vsub.f32 %v11153, %v11159
    %v11162 = vmul.f32 %v11160, %v11160
    %v11163 = vmul.f32 %v11161, %v11161
    %11164 = vadd.xlane.f32.xlu0 %v11162
    %v11165 = vpop.xlane.xlu0 %11164
    %11166 = vadd.xlane.f32.xlu0 %v11163
    %v11167 = vpop.xlane.xlu0 %11166
    %v11168 = vmul.f32 %v11165, %v3295
    %v11169 = vmul.f32 %v11167, %v3295
    %v11170 = vadd.f32 %v11168, 1e-05
    %v11171 = vadd.f32 %v11169, 1e-05
    %v11172 = vrsqrt.pop %v11170
    %v11173 = vrsqrt.pop %v11171
    %v11174 = vmul.f32 %v11160, %v11172
    %v11175 = vmul.f32 %v11161, %v11173
    %v11176 = vlaneseq
    %v11177 = vshrl.u32 %v11176, 7
    %v11178 = vsub.s32 1, %v11177
    %v11179 = vrot.slane %v86, %v11178
    %v11180 = vmul.f32 %v11174, %v11179
    %v11181 = vmul.f32 %v11175, %v11179
    %v11182 = vlaneseq
    %v11183 = vshrl.u32 %v11182, 7
    %v11184 = vsub.s32 1, %v11183
    %v11185 = vrot.slane %v87, %v11184
    %v11186 = vadd.f32 %v11180, %v11185
    %v11187 = vadd.f32 %v11181, %v11185
    %v11188 = vrot.slane %v11186, 4
    %v11189 = vadd.f32 %v11186, %v11188
    %v11190 = vrot.slane %v11189, 2
    %v11191 = vadd.f32 %v11189, %v11190
    %v11192 = vrot.slane %v11191, 1
    %v11193 = vadd.f32 %v11191, %v11192
    %v11194 = vrot.slane %v11187, 4
    %v11195 = vadd.f32 %v11187, %v11194
    %v11196 = vrot.slane %v11195, 2
    %v11197 = vadd.f32 %v11195, %v11196
    %v11198 = vrot.slane %v11197, 1
    %v11199 = vadd.f32 %v11197, %v11198
    %v11200 = vmul.f32 %v11193, 0.35355338
    %v11201 = vmul.f32 %v11199, 0.35355338
    %v11202 = vpack.c.bf16 %v11200, %v11200
    %v11203 = vpack.c.bf16 %v11201, %v11201
    %v11204 = vld [vmem:[%s13] sm:$0x1]
    %v11205 = vld [vmem:[%s14] sm:$0x1]
    %v11207 = vlaneseq
    %v11208 = vshrl.u32 %v11207, 7
    %v11209 = vsub.s32 0, %v11208
    %v11210 = vrot.slane %v11205, %v11209
    %v11214 = vunpack.c.l.b16 %v11202
    %v11215 = vunpack.c.l.b16 %v11203
    %vm11216 = vcmask 1041409
    %v11217 = vsel %vm11216, %v11215, %v11214
    %v11218 = vpack.c.b16 %v11217, %v11217
    %11220 = vmatprep.subr.bf16.mxu0 0
    %11221 = vmatpush1.bf16.xpose.msra.mxu0 %v11204
    %11222 = vmatprep.subr.bf16.mxu0 0
    %11223 = vmatpush1.bf16.xpose.msra.mxu0 0
    %11224 = vmatprep.subr.bf16.mxu0 0
    %11225 = vmatpush1.bf16.xpose.msra.mxu0 0
    %11226 = vmatprep.subr.bf16.mxu0 0
    %11227 = vmatpush1.bf16.xpose.msra.mxu0 0
    %11228 = vmatprep.subr.bf16.mxu0 0
    %11229 = vmatpush1.bf16.xpose.msra.mxu0 0
    %11230 = vmatprep.subr.bf16.mxu0 0
    %11231 = vmatpush1.bf16.xpose.msra.mxu0 0
    %11232 = vmatprep.subr.bf16.mxu0 0
    %11233 = vmatpush1.bf16.xpose.msra.mxu0 0
    %11234 = vmatprep.subr.bf16.mxu0 0
    %11235 = vmatpush1.bf16.xpose.msra.mxu0 0
    %11236 = vmatprep.subr.bf16.mxu0 0
    %11237 = vmatpush1.bf16.xpose.msra.mxu0 0
    %11238 = vmatprep.subr.bf16.mxu0 0
    %11239 = vmatpush1.bf16.xpose.msra.mxu0 0
    %11240 = vmatprep.subr.bf16.mxu0 0
    %11241 = vmatpush1.bf16.xpose.msra.mxu0 0
    %11242 = vmatprep.subr.bf16.mxu0 0
    %11243 = vmatpush1.bf16.xpose.msra.mxu0 0
    %11244 = vmatprep.subr.bf16.mxu0 0
    %11245 = vmatpush1.bf16.xpose.msra.mxu0 0
    %11246 = vmatprep.subr.bf16.mxu0 0
    %11247 = vmatpush1.bf16.xpose.msra.mxu0 0
    %11248 = vmatprep.subr.bf16.mxu0 0
    %11249 = vmatpush1.bf16.xpose.msra.mxu0 0
    %11250 = vmatprep.subr.bf16.mxu0 0
    %11251 = vmatpush1.bf16.xpose.msra.mxu0 0
    %11252 = vmatprep.mubr.bf16.mxu0 0
    %11253 = vmatmul.mubr.bf16.gmra.mrb[0].mxu0 %v11218
    %v11254 = vpop.f32.mrb[0].mxu0
    %v11255 = vadd.f32 %v11210, %v11254
    %v11256 = vpop.f32.mrb[0].mxu0
    %v11257 = vpop.f32.mrb[0].mxu0
    %v11258 = vpop.f32.mrb[0].mxu0
    %11259 = vdwg.mxu0
    %vm11260 = vcmask 9216
    %11261 = vst.msk [vmem:[#allocation7] sm:$0x3] %vm11260, %v11255
    // Predicated region
    $region70: #{transformer_classifier_forward.1} parent=1 // pred_check
      _
    $region71: #{transformer_classifier_forward.1} parent=1 // pred_check_branch
      %11263 = sbr.rel (0) target = $region73
    $region72: #{transformer_classifier_forward.1} parent=1 // pred_region
      %s11265 = ssub.s32 32, 32
      %11266 = vsyncadd [#allocation4], %s11265
      %s11268 = sshll.u32 [#allocation7], 4
      %s11269 = int_to_ptr.vmem [resolvable:$true] %s11268
      %11271 = dma.vmem_to_hbm [thread:$0]  %s11269, 32, %s15, [#allocation4]
    $region73: #{transformer_classifier_forward.1} parent=1 // pred_fallthru
      _
    // Predicated region
    $region74: #{transformer_classifier_forward.1} parent=1 // pred_check
      _
    $region75: #{transformer_classifier_forward.1} parent=1 // pred_check_branch
      %11273 = sbr.rel (0) target = $region77
    $region76: #{transformer_classifier_forward.1} parent=1 // pred_region
      %11274 = dma.done [#allocation4], 32
    $region77: #{transformer_classifier_forward.1} parent=1 // pred_fallthru
      _
    %11275 = vsyncpa [#allocation3], 1
    %11276 = vsyncpa [#allocation6], 1
    %11277 = vsyncpa [#allocation4], 1

</llo_original>
